<compile_context>
chip_gen: v7x
topology: tpu7x:2x2x1
jax: 0.10.0
libtpu: 0.0.40
codegen_flags: <defaults>
</compile_context>

<pallas_src>
import functools
import math

import jax
import jax.numpy as jnp
from jax.experimental import pallas as pl
from jax.experimental.pallas import tpu as pltpu


# ----------------------------------------------------------------------------
# helpers
# ----------------------------------------------------------------------------

def _round_up(x, m):
    return ((x + m - 1) // m) * m


# ----------------------------------------------------------------------------
# Pallas kernels
# ----------------------------------------------------------------------------

def _offset_conv_kernel(x_ref, w_ref, o_ref, *, w4p, n_rows):
    """3x3 offset-prediction conv as 9 accumulated shifted-window matmuls.

    x_ref: (1, rows_in, Cp)  f32   flattened, spatially padded NHWC image
    w_ref: (9, Cp, tn)       bf16  per-tap weights (tap = ky*3 + kx)
    o_ref: (1, n_rows, tn)   f32   flattened conv output (width-padded rows)
    """
    tn = o_ref.shape[-1]
    acc = jnp.zeros((n_rows, tn), jnp.float32)
    for ky in range(3):
        for kx in range(3):
            start = ky * w4p + kx
            lhs = x_ref[0, start:start + n_rows, :].astype(jnp.bfloat16)
            acc = acc + jnp.dot(lhs, w_ref[ky * 3 + kx],
                                preferred_element_type=jnp.float32)
    o_ref[0] = acc


def _pw_bn_relu_kernel(x_ref, si_ref, bi_ref, w_ref, so_ref, bo_ref, o_ref):
    # prologue: separable-conv BN + ReLU ; matmul ; epilogue: block BN + ReLU
    x = jnp.maximum(x_ref[...] * si_ref[...] + bi_ref[...], 0.0)
    y = jnp.dot(x.astype(jnp.bfloat16), w_ref[...],
                preferred_element_type=jnp.float32)
    o_ref[...] = jnp.maximum(y * so_ref[...] + bo_ref[...], 0.0)


def _pw_bn_residual_kernel(x_ref, si_ref, bi_ref, w_ref, so_ref, bo_ref,
                           r_ref, o_ref):
    # prologue: separable-conv BN + ReLU ; matmul ; epilogue: BN3 + skip add
    x = jnp.maximum(x_ref[...] * si_ref[...] + bi_ref[...], 0.0)
    y = jnp.dot(x.astype(jnp.bfloat16), w_ref[...],
                preferred_element_type=jnp.float32)
    o_ref[...] = y * so_ref[...] + bo_ref[...] + r_ref[...]


# ----------------------------------------------------------------------------
# pallas_call wrappers
# ----------------------------------------------------------------------------

_VMEM_LIMIT = 32 * 1024 * 1024   # safe on v5e/v6e (128 MiB) and v7x (64 MiB)


def pallas_offset_conv(x_flat, w_off, h_out, w4p):
    """Offset conv without im2col: grid over (batch, out-channel tiles)."""
    B, rows_in, Cp = x_flat.shape
    _, _, Cop = w_off.shape
    n_rows = h_out * w4p
    tn = 256 if Cop % 256 == 0 else 128        # 128-multiples only (v5e MXU)
    grid = (B, Cop // tn)
    kernel = functools.partial(_offset_conv_kernel, w4p=w4p, n_rows=n_rows)
    return pl.pallas_call(
        kernel,
        out_shape=jax.ShapeDtypeStruct((B, n_rows, Cop), jnp.float32),
        grid=grid,
        in_specs=[pl.BlockSpec((1, rows_in, Cp), lambda b, n: (b, 0, 0)),
                  pl.BlockSpec((9, Cp, tn), lambda b, n: (0, 0, n))],
        out_specs=pl.BlockSpec((1, n_rows, tn), lambda b, n: (b, 0, n)),
        compiler_params=pltpu.CompilerParams(
            dimension_semantics=("parallel", "parallel"),
            vmem_limit_bytes=_VMEM_LIMIT),
    )(x_flat, w_off)


def pallas_pointwise(x_flat, w_pw, si, bi, so, bo, residual=None, tm=256):
    """Fused (BN+ReLU) -> 1x1 conv -> (BN+ReLU | BN+residual), row-tiled."""
    N, Cp = x_flat.shape
    Cpo = w_pw.shape[1]
    Np = _round_up(N, tm)
    if Np != N:                                   # pad rows so the grid divides
        x_flat = jnp.pad(x_flat, ((0, Np - N), (0, 0)))
    grid = (Np // tm,)
    in_specs = [pl.BlockSpec((tm, Cp), lambda i: (i, 0)),
                pl.BlockSpec((1, Cp), lambda i: (0, 0)),
                pl.BlockSpec((1, Cp), lambda i: (0, 0)),
                pl.BlockSpec((Cp, Cpo), lambda i: (0, 0)),
                pl.BlockSpec((1, Cpo), lambda i: (0, 0)),
                pl.BlockSpec((1, Cpo), lambda i: (0, 0))]
    out_spec = pl.BlockSpec((tm, Cpo), lambda i: (i, 0))
    cparams = pltpu.CompilerParams(dimension_semantics=("parallel",),
                                   vmem_limit_bytes=_VMEM_LIMIT)
    if residual is None:
        out = pl.pallas_call(
            _pw_bn_relu_kernel,
            out_shape=jax.ShapeDtypeStruct((Np, Cpo), jnp.float32),
            grid=grid, in_specs=in_specs, out_specs=out_spec,
            compiler_params=cparams,
        )(x_flat, si, bi, w_pw, so, bo)
    else:
        res = residual if Np == N else jnp.pad(residual, ((0, Np - N), (0, 0)))
        out = pl.pallas_call(
            _pw_bn_residual_kernel,
            out_shape=jax.ShapeDtypeStruct((Np, Cpo), jnp.float32),
            grid=grid,
            in_specs=in_specs + [pl.BlockSpec((tm, Cpo), lambda i: (i, 0))],
            out_specs=out_spec,
            compiler_params=cparams,
            input_output_aliases={6: 0},          # write result over residual
        )(x_flat, si, bi, w_pw, so, bo, res)
    return out[:N] if Np != N else out


# ----------------------------------------------------------------------------
# JAX glue: deformable bilinear sampling + layout plumbing
# ----------------------------------------------------------------------------

def deform_bilinear_sample(x_nchw, offsets_bc):
    """Replicates ConvOffset2D / th_batch_map_offsets bilinear sampling."""
    # TODO(synk): data-dependent per-pixel gather stays in plain JAX; a Pallas
    # version needs per-index manual DMA (or a dense one-hot matmul) on TPU.
    b, c, hp, wp = x_nchw.shape
    n = hp * wp
    x_bc = x_nchw.reshape(b * c, n)

    gy, gx = jnp.meshgrid(jnp.arange(hp, dtype=x_nchw.dtype),
                          jnp.arange(wp, dtype=x_nchw.dtype), indexing='ij')
    off = offsets_bc.reshape(b * c, n, 2)
    cy = jnp.clip(off[..., 0] + gy.reshape(1, n), 0.0, hp - 1)
    cx = jnp.clip(off[..., 1] + gx.reshape(1, n), 0.0, wp - 1)

    y0 = jnp.floor(cy)
    x0 = jnp.floor(cx)
    y0i = y0.astype(jnp.int32)
    x0i = x0.astype(jnp.int32)
    # ceil == floor+1 except at integers, where the bilinear weight is 0, so
    # the clamped +1 neighbour is equivalent to torch's ceil-based corners.
    y1i = jnp.minimum(y0i + 1, hp - 1)
    x1i = jnp.minimum(x0i + 1, wp - 1)

    # single fused gather of all four bilinear corners (lt, rt, lb, rb)
    idx4 = jnp.stack([y0i * wp + x0i, y1i * wp + x0i,
                      y0i * wp + x1i, y1i * wp + x1i], axis=0)     # (4, bc, n)
    bidx = jnp.arange(b * c)[None, :, None]                        # (1, bc, 1)
    vals = x_bc[bidx, idx4]                                        # (4, bc, n)
    v_lt, v_rt, v_lb, v_rb = vals[0], vals[1], vals[2], vals[3]

    fy = cy - y0
    fx = cx - x0
    vals_t = v_lt + fy * (v_rt - v_lt)
    vals_b = v_lb + fy * (v_rb - v_lb)
    out = vals_t + fx * (vals_b - vals_t)
    return out.reshape(b, c, hp, wp)


def separable_conv2d_deform(a, c_real, sep_p):
    """fixed_padding -> ConvOffset2D (Pallas offset conv + deform sample) -> crop.

    a: (B, H, W, Cp) already-activated input, padded channels are zero.
    Returns the flattened (B*H*W, Cp) sampled tensor; the separable conv's
    BN+ReLU and the 1x1 pointwise conv run fused inside pallas_pointwise.
    """
    B, H, W, Cp = a.shape
    h_out, w_out = H + 2, W + 2                  # spatial size after fixed_padding
    w4p = _round_up(W + 4, 8)                    # sublane-friendly padded width

    # fixed_padding(kernel=3, dilation=1) result — this is what gets sampled
    a1 = jnp.pad(a, ((0, 0), (1, 1), (1, 1), (0, 0)))

    # offset-conv input: +1 more pad (Conv2d padding=1) plus extra rows/cols so
    # the flattened shifted-window matmul never reads out of bounds
    a2 = jnp.pad(a, ((0, 0), (2, 3), (2, w4p - W - 2), (0, 0)))
    a2_flat = a2.reshape(B, (H + 5) * w4p, Cp)

    offs = pallas_offset_conv(a2_flat, sep_p['w_off'], h_out, w4p)
    offs = offs.reshape(B, h_out, w4p, -1)[:, :, :w_out, :2 * c_real]
    # torch ConvOffset2D view semantics: (b, 2c, h, w) contiguous -> (b*c, h, w, 2)
    offs_bc = jnp.transpose(offs, (0, 3, 1, 2)).reshape(B * c_real, h_out, w_out, 2)

    x_nchw = jnp.transpose(a1[..., :c_real], (0, 3, 1, 2))         # (B,C,H+2,W+2)
    sampled = deform_bilinear_sample(x_nchw, offs_bc)              # (B,C,H+2,W+2)
    sampled = sampled[:, :, 1:-1, 1:-1]                            # crop (reference)
    x_flat = jnp.transpose(sampled, (0, 2, 3, 1)).reshape(B * H * W, c_real)
    return jnp.pad(x_flat, ((0, 0), (0, Cp - c_real)))


def block_deform_forward(inp, params):
    """inp: (B, C, H, W) NCHW float32, inplanes == planes (residual add)."""
    B, C, H, W = inp.shape
    Cp = _round_up(C, 128)
    N = B * H * W

    # single NCHW -> channels-last (+ lane padding to 128) conversion
    inp_nhwc = jnp.pad(jnp.transpose(inp, (0, 2, 3, 1)),
                       ((0, 0), (0, 0), (0, 0), (0, Cp - C)))
    res_flat = inp_nhwc.reshape(N, Cp)

    # x = relu(inp): plain jnp, fused by XLA into the first stage's padding
    a = jnp.maximum(inp_nhwc, 0.0)

    # --- SeparableConv2d_deform 1, then bn1 + relu fused into the pw epilogue
    x = separable_conv2d_deform(a, C, params['sep1'])
    a = pallas_pointwise(x, params['sep1']['w_pw'],
                         params['sep1']['bn_scale'], params['sep1']['bn_shift'],
                         params['bn1_scale'], params['bn1_shift']
                         ).reshape(B, H, W, Cp)

    # --- SeparableConv2d_deform 2, then bn2 + relu fused into the pw epilogue
    x = separable_conv2d_deform(a, C, params['sep2'])
    a = pallas_pointwise(x, params['sep2']['w_pw'],
                         params['sep2']['bn_scale'], params['sep2']['bn_shift'],
                         params['bn2_scale'], params['bn2_shift']
                         ).reshape(B, H, W, Cp)

    # --- SeparableConv2d_deform 3, then bn3 + residual fused into the epilogue
    x = separable_conv2d_deform(a, C, params['sep3'])
    out_flat = pallas_pointwise(x, params['sep3']['w_pw'],
                                params['sep3']['bn_scale'],
                                params['sep3']['bn_shift'],
                                params['bn3_scale'], params['bn3_shift'],
                                residual=res_flat)

    out = out_flat.reshape(B, H, W, Cp)[..., :C]
    return jnp.transpose(out, (0, 3, 1, 2))


# ----------------------------------------------------------------------------
# Deterministic synthetic parameters (channel axis zero-padded to Cp / Cop)
# ----------------------------------------------------------------------------

def make_bn_params(key, c, cp):
    k1, k2, k3, k4 = jax.random.split(key, 4)
    gamma = 1.0 + 0.1 * jax.random.normal(k1, (c,))
    beta = 0.1 * jax.random.normal(k2, (c,))
    mean = 0.1 * jax.random.normal(k3, (c,))
    var = 1.0 + 0.1 * jax.random.uniform(k4, (c,))
    eps = 1e-5
    scale = (gamma / jnp.sqrt(var + eps)).astype(jnp.float32)
    shift = (beta - mean * scale).astype(jnp.float32)
    scale_p = jnp.zeros((1, cp), jnp.float32).at[0, :c].set(scale)
    shift_p = jnp.zeros((1, cp), jnp.float32).at[0, :c].set(shift)
    return scale_p, shift_p


def make_sep_params(key, c, cp):
    k1, k2, k3 = jax.random.split(key, 3)
    cop = _round_up(2 * c, 128)
    # ConvOffset2D weight: torch layout (2c, c, 3, 3), std 0.01, no bias
    w_off_t = 0.01 * jax.random.normal(k1, (2 * c, c, 3, 3))
    w = jnp.transpose(w_off_t, (2, 3, 1, 0))                 # (3, 3, cin, cout)
    w = jnp.pad(w, ((0, 0), (0, 0), (0, cp - c), (0, cop - 2 * c)))
    w_off = w.reshape(9, cp, cop).astype(jnp.bfloat16)       # bf16 MXU operand
    # pointwise 1x1: torch layout (cout, cin, 1, 1), no bias
    w_pw_t = jax.random.normal(k2, (c, c, 1, 1)) / math.sqrt(c)
    w_pw = jnp.transpose(w_pw_t[:, :, 0, 0], (1, 0))
    w_pw = jnp.pad(w_pw, ((0, cp - c), (0, cp - c))).astype(jnp.bfloat16)
    s, b = make_bn_params(k3, c, cp)
    return dict(w_off=w_off, w_pw=w_pw, bn_scale=s, bn_shift=b)


def init_params(key, c, cp):
    ks = jax.random.split(key, 6)
    p = {
        'sep1': make_sep_params(ks[0], c, cp),
        'sep2': make_sep_params(ks[1], c, cp),
        'sep3': make_sep_params(ks[2], c, cp),
    }
    p['bn1_scale'], p['bn1_shift'] = make_bn_params(ks[3], c, cp)
    p['bn2_scale'], p['bn2_shift'] = make_bn_params(ks[4], c, cp)
    p['bn3_scale'], p['bn3_shift'] = make_bn_params(ks[5], c, cp)
    return p


if __name__ == "__main__":
    key = jax.random.PRNGKey(0)
    kx_, kp_ = jax.random.split(key)

    B, C, H, W = 2, 8, 16, 16          # inplanes == planes (residual add)
    CP = _round_up(C, 128)
    inp = jax.random.normal(kx_, (B, C, H, W), dtype=jnp.float32)
    params = init_params(kp_, C, CP)

    out = jax.jit(block_deform_forward)(inp, params)
    out = jax.block_until_ready(out)
    assert out.shape == inp.shape and out.dtype == jnp.float32
    print("KERNEL_OK")
</pallas_src>

<mosaic_0001>
module attributes {stable_mosaic.version = 11 : i64} {
  func.func @_offset_conv_kernel(%arg0: i32, %arg1: i32, %arg2: memref<1x504x128xf32, #tpu.memory_space<vmem>>, %arg3: memref<9x128x128xbf16, #tpu.memory_space<vmem>>, %arg4: memref<1x432x128xf32, #tpu.memory_space<vmem>>) attributes {dimension_semantics = [#tpu.dimension_semantics<parallel>, #tpu.dimension_semantics<parallel>], iteration_bounds = array<i64: 2, 1>, scalar_prefetch = 0 : i64, scratch_operands = 0 : i64, tpu.core_type = #tpu.core_type<tc>, window_params = [{transform_indices = @transform_0, window_bounds = array<i64: 1, 504, 128>}, {transform_indices = @transform_1, window_bounds = array<i64: 9, 128, 128>}, {transform_indices = @transform_2, window_bounds = array<i64: 1, 432, 128>}]} {
    %cst = arith.constant 0.000000e+00 : f32
    %0 = vector.broadcast %cst : f32 to vector<432x128xf32>
    %c0 = arith.constant 0 : index
    %c0_0 = arith.constant 0 : index
    %c0_1 = arith.constant 0 : index
    %1 = vector.load %arg2[%c0, %c0_0, %c0_1] : memref<1x504x128xf32, #tpu.memory_space<vmem>>, vector<1x432x128xf32>
    %2 = vector.shape_cast %1 : vector<1x432x128xf32> to vector<432x128xf32>
    %3 = arith.truncf %2 : vector<432x128xf32> to vector<432x128xbf16>
    %c0_2 = arith.constant 0 : index
    %c0_3 = arith.constant 0 : index
    %c0_4 = arith.constant 0 : index
    %4 = vector.load %arg3[%c0_2, %c0_3, %c0_4] : memref<9x128x128xbf16, #tpu.memory_space<vmem>>, vector<1x128x128xbf16>
    %5 = vector.shape_cast %4 : vector<1x128x128xbf16> to vector<128x128xbf16>
    %cst_5 = arith.constant dense<0.000000e+00> : vector<432x128xf32>
    %6 = tpu.matmul %3, %5, %cst_5 {dimension_numbers = #tpu.dot_dimension_numbers<[1], [0], [0], [1], [0, 0, 1, 1], [], []>} : vector<432x128xbf16>, vector<128x128xbf16>, vector<432x128xf32> -> vector<432x128xf32>
    %7 = arith.addf %0, %6 : vector<432x128xf32>
    %c0_6 = arith.constant 0 : index
    %c1 = arith.constant 1 : index
    %c0_7 = arith.constant 0 : index
    %8 = vector.load %arg2[%c0_6, %c1, %c0_7] : memref<1x504x128xf32, #tpu.memory_space<vmem>>, vector<1x432x128xf32>
    %9 = vector.shape_cast %8 : vector<1x432x128xf32> to vector<432x128xf32>
    %10 = arith.truncf %9 : vector<432x128xf32> to vector<432x128xbf16>
    %c1_8 = arith.constant 1 : index
    %c0_9 = arith.constant 0 : index
    %c0_10 = arith.constant 0 : index
    %11 = vector.load %arg3[%c1_8, %c0_9, %c0_10] : memref<9x128x128xbf16, #tpu.memory_space<vmem>>, vector<1x128x128xbf16>
    %12 = vector.shape_cast %11 : vector<1x128x128xbf16> to vector<128x128xbf16>
    %cst_11 = arith.constant dense<0.000000e+00> : vector<432x128xf32>
    %13 = tpu.matmul %10, %12, %cst_11 {dimension_numbers = #tpu.dot_dimension_numbers<[1], [0], [0], [1], [0, 0, 1, 1], [], []>} : vector<432x128xbf16>, vector<128x128xbf16>, vector<432x128xf32> -> vector<432x128xf32>
    %14 = arith.addf %7, %13 : vector<432x128xf32>
    %c0_12 = arith.constant 0 : index
    %c2 = arith.constant 2 : index
    %c0_13 = arith.constant 0 : index
    %15 = vector.load %arg2[%c0_12, %c2, %c0_13] : memref<1x504x128xf32, #tpu.memory_space<vmem>>, vector<1x432x128xf32>
    %16 = vector.shape_cast %15 : vector<1x432x128xf32> to vector<432x128xf32>
    %17 = arith.truncf %16 : vector<432x128xf32> to vector<432x128xbf16>
    %c2_14 = arith.constant 2 : index
    %c0_15 = arith.constant 0 : index
    %c0_16 = arith.constant 0 : index
    %18 = vector.load %arg3[%c2_14, %c0_15, %c0_16] : memref<9x128x128xbf16, #tpu.memory_space<vmem>>, vector<1x128x128xbf16>
    %19 = vector.shape_cast %18 : vector<1x128x128xbf16> to vector<128x128xbf16>
    %cst_17 = arith.constant dense<0.000000e+00> : vector<432x128xf32>
    %20 = tpu.matmul %17, %19, %cst_17 {dimension_numbers = #tpu.dot_dimension_numbers<[1], [0], [0], [1], [0, 0, 1, 1], [], []>} : vector<432x128xbf16>, vector<128x128xbf16>, vector<432x128xf32> -> vector<432x128xf32>
    %21 = arith.addf %14, %20 : vector<432x128xf32>
    %c0_18 = arith.constant 0 : index
    %c24 = arith.constant 24 : index
    %c0_19 = arith.constant 0 : index
    %22 = vector.load %arg2[%c0_18, %c24, %c0_19] : memref<1x504x128xf32, #tpu.memory_space<vmem>>, vector<1x432x128xf32>
    %23 = vector.shape_cast %22 : vector<1x432x128xf32> to vector<432x128xf32>
    %24 = arith.truncf %23 : vector<432x128xf32> to vector<432x128xbf16>
    %c3 = arith.constant 3 : index
    %c0_20 = arith.constant 0 : index
    %c0_21 = arith.constant 0 : index
    %25 = vector.load %arg3[%c3, %c0_20, %c0_21] : memref<9x128x128xbf16, #tpu.memory_space<vmem>>, vector<1x128x128xbf16>
    %26 = vector.shape_cast %25 : vector<1x128x128xbf16> to vector<128x128xbf16>
    %cst_22 = arith.constant dense<0.000000e+00> : vector<432x128xf32>
    %27 = tpu.matmul %24, %26, %cst_22 {dimension_numbers = #tpu.dot_dimension_numbers<[1], [0], [0], [1], [0, 0, 1, 1], [], []>} : vector<432x128xbf16>, vector<128x128xbf16>, vector<432x128xf32> -> vector<432x128xf32>
    %28 = arith.addf %21, %27 : vector<432x128xf32>
    %c0_23 = arith.constant 0 : index
    %c25 = arith.constant 25 : index
    %c0_24 = arith.constant 0 : index
    %29 = vector.load %arg2[%c0_23, %c25, %c0_24] : memref<1x504x128xf32, #tpu.memory_space<vmem>>, vector<1x432x128xf32>
    %30 = vector.shape_cast %29 : vector<1x432x128xf32> to vector<432x128xf32>
    %31 = arith.truncf %30 : vector<432x128xf32> to vector<432x128xbf16>
    %c4 = arith.constant 4 : index
    %c0_25 = arith.constant 0 : index
    %c0_26 = arith.constant 0 : index
    %32 = vector.load %arg3[%c4, %c0_25, %c0_26] : memref<9x128x128xbf16, #tpu.memory_space<vmem>>, vector<1x128x128xbf16>
    %33 = vector.shape_cast %32 : vector<1x128x128xbf16> to vector<128x128xbf16>
    %cst_27 = arith.constant dense<0.000000e+00> : vector<432x128xf32>
    %34 = tpu.matmul %31, %33, %cst_27 {dimension_numbers = #tpu.dot_dimension_numbers<[1], [0], [0], [1], [0, 0, 1, 1], [], []>} : vector<432x128xbf16>, vector<128x128xbf16>, vector<432x128xf32> -> vector<432x128xf32>
    %35 = arith.addf %28, %34 : vector<432x128xf32>
    %c0_28 = arith.constant 0 : index
    %c26 = arith.constant 26 : index
    %c0_29 = arith.constant 0 : index
    %36 = vector.load %arg2[%c0_28, %c26, %c0_29] : memref<1x504x128xf32, #tpu.memory_space<vmem>>, vector<1x432x128xf32>
    %37 = vector.shape_cast %36 : vector<1x432x128xf32> to vector<432x128xf32>
    %38 = arith.truncf %37 : vector<432x128xf32> to vector<432x128xbf16>
    %c5 = arith.constant 5 : index
    %c0_30 = arith.constant 0 : index
    %c0_31 = arith.constant 0 : index
    %39 = vector.load %arg3[%c5, %c0_30, %c0_31] : memref<9x128x128xbf16, #tpu.memory_space<vmem>>, vector<1x128x128xbf16>
    %40 = vector.shape_cast %39 : vector<1x128x128xbf16> to vector<128x128xbf16>
    %cst_32 = arith.constant dense<0.000000e+00> : vector<432x128xf32>
    %41 = tpu.matmul %38, %40, %cst_32 {dimension_numbers = #tpu.dot_dimension_numbers<[1], [0], [0], [1], [0, 0, 1, 1], [], []>} : vector<432x128xbf16>, vector<128x128xbf16>, vector<432x128xf32> -> vector<432x128xf32>
    %42 = arith.addf %35, %41 : vector<432x128xf32>
    %c0_33 = arith.constant 0 : index
    %c48 = arith.constant 48 : index
    %c0_34 = arith.constant 0 : index
    %43 = vector.load %arg2[%c0_33, %c48, %c0_34] : memref<1x504x128xf32, #tpu.memory_space<vmem>>, vector<1x432x128xf32>
    %44 = vector.shape_cast %43 : vector<1x432x128xf32> to vector<432x128xf32>
    %45 = arith.truncf %44 : vector<432x128xf32> to vector<432x128xbf16>
    %c6 = arith.constant 6 : index
    %c0_35 = arith.constant 0 : index
    %c0_36 = arith.constant 0 : index
    %46 = vector.load %arg3[%c6, %c0_35, %c0_36] : memref<9x128x128xbf16, #tpu.memory_space<vmem>>, vector<1x128x128xbf16>
    %47 = vector.shape_cast %46 : vector<1x128x128xbf16> to vector<128x128xbf16>
    %cst_37 = arith.constant dense<0.000000e+00> : vector<432x128xf32>
    %48 = tpu.matmul %45, %47, %cst_37 {dimension_numbers = #tpu.dot_dimension_numbers<[1], [0], [0], [1], [0, 0, 1, 1], [], []>} : vector<432x128xbf16>, vector<128x128xbf16>, vector<432x128xf32> -> vector<432x128xf32>
    %49 = arith.addf %42, %48 : vector<432x128xf32>
    %c0_38 = arith.constant 0 : index
    %c49 = arith.constant 49 : index
    %c0_39 = arith.constant 0 : index
    %50 = vector.load %arg2[%c0_38, %c49, %c0_39] : memref<1x504x128xf32, #tpu.memory_space<vmem>>, vector<1x432x128xf32>
    %51 = vector.shape_cast %50 : vector<1x432x128xf32> to vector<432x128xf32>
    %52 = arith.truncf %51 : vector<432x128xf32> to vector<432x128xbf16>
    %c7 = arith.constant 7 : index
    %c0_40 = arith.constant 0 : index
    %c0_41 = arith.constant 0 : index
    %53 = vector.load %arg3[%c7, %c0_40, %c0_41] : memref<9x128x128xbf16, #tpu.memory_space<vmem>>, vector<1x128x128xbf16>
    %54 = vector.shape_cast %53 : vector<1x128x128xbf16> to vector<128x128xbf16>
    %cst_42 = arith.constant dense<0.000000e+00> : vector<432x128xf32>
    %55 = tpu.matmul %52, %54, %cst_42 {dimension_numbers = #tpu.dot_dimension_numbers<[1], [0], [0], [1], [0, 0, 1, 1], [], []>} : vector<432x128xbf16>, vector<128x128xbf16>, vector<432x128xf32> -> vector<432x128xf32>
    %56 = arith.addf %49, %55 : vector<432x128xf32>
    %c0_43 = arith.constant 0 : index
    %c50 = arith.constant 50 : index
    %c0_44 = arith.constant 0 : index
    %57 = vector.load %arg2[%c0_43, %c50, %c0_44] : memref<1x504x128xf32, #tpu.memory_space<vmem>>, vector<1x432x128xf32>
    %58 = vector.shape_cast %57 : vector<1x432x128xf32> to vector<432x128xf32>
    %59 = arith.truncf %58 : vector<432x128xf32> to vector<432x128xbf16>
    %c8 = arith.constant 8 : index
    %c0_45 = arith.constant 0 : index
    %c0_46 = arith.constant 0 : index
    %60 = vector.load %arg3[%c8, %c0_45, %c0_46] : memref<9x128x128xbf16, #tpu.memory_space<vmem>>, vector<1x128x128xbf16>
    %61 = vector.shape_cast %60 : vector<1x128x128xbf16> to vector<128x128xbf16>
    %cst_47 = arith.constant dense<0.000000e+00> : vector<432x128xf32>
    %62 = tpu.matmul %59, %61, %cst_47 {dimension_numbers = #tpu.dot_dimension_numbers<[1], [0], [0], [1], [0, 0, 1, 1], [], []>} : vector<432x128xbf16>, vector<128x128xbf16>, vector<432x128xf32> -> vector<432x128xf32>
    %63 = arith.addf %56, %62 : vector<432x128xf32>
    %c0_48 = arith.constant 0 : index
    %c0_49 = arith.constant 0 : index
    %c0_50 = arith.constant 0 : index
    %64 = vector.load %arg4[%c0_48, %c0_49, %c0_50] : memref<1x432x128xf32, #tpu.memory_space<vmem>>, vector<1x432x128xf32>
    %65 = vector.shape_cast %64 : vector<1x432x128xf32> to vector<432x128xf32>
    %66 = vector.shape_cast %63 : vector<432x128xf32> to vector<1x432x128xf32>
    tpu.vector_store %arg4[%c0_48, %c0_49, %c0_50], %66 {strides = array<i32>} : memref<1x432x128xf32, #tpu.memory_space<vmem>>, vector<1x432x128xf32>,
    return
  }
  func.func @transform_0(%arg0: i32, %arg1: i32) -> (i32, i32, i32) {
    %c0_i32 = arith.constant 0 : i32
    %c0_i32_0 = arith.constant 0 : i32
    %c0_i32_1 = arith.constant 0 : i32
    return %arg0, %c0_i32, %c0_i32_0 : i32, i32, i32
  }
  func.func @transform_1(%arg0: i32, %arg1: i32) -> (i32, i32, i32) {
    %c0_i32 = arith.constant 0 : i32
    %c0_i32_0 = arith.constant 0 : i32
    %c0_i32_1 = arith.constant 0 : i32
    return %c0_i32, %c0_i32_0, %arg1 : i32, i32, i32
  }
  func.func @transform_2(%arg0: i32, %arg1: i32) -> (i32, i32, i32) {
    %c0_i32 = arith.constant 0 : i32
    %c0_i32_0 = arith.constant 0 : i32
    return %arg0, %c0_i32, %arg1 : i32, i32, i32
  }
}

module attributes {stable_mosaic.version = 11 : i64} {
  func.func @_pw_bn_relu_kernel(%arg0: i32, %arg1: memref<256x128xf32, #tpu.memory_space<vmem>>, %arg2: memref<1x128xf32, #tpu.memory_space<vmem>>, %arg3: memref<1x128xf32, #tpu.memory_space<vmem>>, %arg4: memref<128x128xbf16, #tpu.memory_space<vmem>>, %arg5: memref<1x128xf32, #tpu.memory_space<vmem>>, %arg6: memref<1x128xf32, #tpu.memory_space<vmem>>, %arg7: memref<256x128xf32, #tpu.memory_space<vmem>>) attributes {dimension_semantics = [#tpu.dimension_semantics<parallel>], iteration_bounds = array<i64: 2>, scalar_prefetch = 0 : i64, scratch_operands = 0 : i64, tpu.core_type = #tpu.core_type<tc>, window_params = [{transform_indices = @transform_0, window_bounds = array<i64: 256, 128>}, {pipeline_mode = #tpu.pipeline_mode<synchronous>, transform_indices = @transform_1, window_bounds = array<i64: 1, 128>}, {pipeline_mode = #tpu.pipeline_mode<synchronous>, transform_indices = @transform_2, window_bounds = array<i64: 1, 128>}, {pipeline_mode = #tpu.pipeline_mode<synchronous>, transform_indices = @transform_3, window_bounds = array<i64: 128, 128>}, {pipeline_mode = #tpu.pipeline_mode<synchronous>, transform_indices = @transform_4, window_bounds = array<i64: 1, 128>}, {pipeline_mode = #tpu.pipeline_mode<synchronous>, transform_indices = @transform_5, window_bounds = array<i64: 1, 128>}, {transform_indices = @transform_6, window_bounds = array<i64: 256, 128>}]} {
    %c0 = arith.constant 0 : index
    %c0_0 = arith.constant 0 : index
    %0 = vector.load %arg1[%c0, %c0_0] : memref<256x128xf32, #tpu.memory_space<vmem>>, vector<256x128xf32>
    %c0_1 = arith.constant 0 : index
    %c0_2 = arith.constant 0 : index
    %1 = vector.load %arg2[%c0_1, %c0_2] : memref<1x128xf32, #tpu.memory_space<vmem>>, vector<1x128xf32>
    %2 = vector.broadcast %1 : vector<1x128xf32> to vector<256x128xf32>
    %3 = arith.mulf %0, %2 : vector<256x128xf32>
    %c0_3 = arith.constant 0 : index
    %c0_4 = arith.constant 0 : index
    %4 = vector.load %arg3[%c0_3, %c0_4] : memref<1x128xf32, #tpu.memory_space<vmem>>, vector<1x128xf32>
    %5 = vector.broadcast %4 : vector<1x128xf32> to vector<256x128xf32>
    %6 = arith.addf %3, %5 : vector<256x128xf32>
    %cst = arith.constant 0.000000e+00 : f32
    %7 = vector.broadcast %cst : f32 to vector<256x128xf32>
    %8 = arith.maximumf %6, %7 : vector<256x128xf32>
    %9 = arith.truncf %8 : vector<256x128xf32> to vector<256x128xbf16>
    %c0_5 = arith.constant 0 : index
    %c0_6 = arith.constant 0 : index
    %10 = vector.load %arg4[%c0_5, %c0_6] : memref<128x128xbf16, #tpu.memory_space<vmem>>, vector<128x128xbf16>
    %cst_7 = arith.constant dense<0.000000e+00> : vector<256x128xf32>
    %11 = tpu.matmul %9, %10, %cst_7 {dimension_numbers = #tpu.dot_dimension_numbers<[1], [0], [0], [1], [0, 0, 1, 1], [], []>} : vector<256x128xbf16>, vector<128x128xbf16>, vector<256x128xf32> -> vector<256x128xf32>
    %c0_8 = arith.constant 0 : index
    %c0_9 = arith.constant 0 : index
    %12 = vector.load %arg5[%c0_8, %c0_9] : memref<1x128xf32, #tpu.memory_space<vmem>>, vector<1x128xf32>
    %13 = vector.broadcast %12 : vector<1x128xf32> to vector<256x128xf32>
    %14 = arith.mulf %11, %13 : vector<256x128xf32>
    %c0_10 = arith.constant 0 : index
    %c0_11 = arith.constant 0 : index
    %15 = vector.load %arg6[%c0_10, %c0_11] : memref<1x128xf32, #tpu.memory_space<vmem>>, vector<1x128xf32>
    %16 = vector.broadcast %15 : vector<1x128xf32> to vector<256x128xf32>
    %17 = arith.addf %14, %16 : vector<256x128xf32>
    %cst_12 = arith.constant 0.000000e+00 : f32
    %18 = vector.broadcast %cst_12 : f32 to vector<256x128xf32>
    %19 = arith.maximumf %17, %18 : vector<256x128xf32>
    %c0_13 = arith.constant 0 : index
    %c0_14 = arith.constant 0 : index
    %20 = vector.load %arg7[%c0_13, %c0_14] : memref<256x128xf32, #tpu.memory_space<vmem>>, vector<256x128xf32>
    tpu.vector_store %arg7[%c0_13, %c0_14], %19 {strides = array<i32>} : memref<256x128xf32, #tpu.memory_space<vmem>>, vector<256x128xf32>,
    return
  }
  func.func @transform_0(%arg0: i32) -> (i32, i32) {
    %c0_i32 = arith.constant 0 : i32
    %c0_i32_0 = arith.constant 0 : i32
    return %arg0, %c0_i32 : i32, i32
  }
  func.func @transform_1(%arg0: i32) -> (i32, i32) {
    %c0_i32 = arith.constant 0 : i32
    %c0_i32_0 = arith.constant 0 : i32
    %c0_i32_1 = arith.constant 0 : i32
    return %c0_i32, %c0_i32_0 : i32, i32
  }
  func.func @transform_2(%arg0: i32) -> (i32, i32) {
    %c0_i32 = arith.constant 0 : i32
    %c0_i32_0 = arith.constant 0 : i32
    %c0_i32_1 = arith.constant 0 : i32
    return %c0_i32, %c0_i32_0 : i32, i32
  }
  func.func @transform_3(%arg0: i32) -> (i32, i32) {
    %c0_i32 = arith.constant 0 : i32
    %c0_i32_0 = arith.constant 0 : i32
    %c0_i32_1 = arith.constant 0 : i32
    return %c0_i32, %c0_i32_0 : i32, i32
  }
  func.func @transform_4(%arg0: i32) -> (i32, i32) {
    %c0_i32 = arith.constant 0 : i32
    %c0_i32_0 = arith.constant 0 : i32
    %c0_i32_1 = arith.constant 0 : i32
    return %c0_i32, %c0_i32_0 : i32, i32
  }
  func.func @transform_5(%arg0: i32) -> (i32, i32) {
    %c0_i32 = arith.constant 0 : i32
    %c0_i32_0 = arith.constant 0 : i32
    %c0_i32_1 = arith.constant 0 : i32
    return %c0_i32, %c0_i32_0 : i32, i32
  }
  func.func @transform_6(%arg0: i32) -> (i32, i32) {
    %c0_i32 = arith.constant 0 : i32
    %c0_i32_0 = arith.constant 0 : i32
    return %arg0, %c0_i32 : i32, i32
  }
}

module attributes {stable_mosaic.version = 11 : i64} {
  func.func @_pw_bn_residual_kernel(%arg0: i32, %arg1: memref<256x128xf32, #tpu.memory_space<vmem>>, %arg2: memref<1x128xf32, #tpu.memory_space<vmem>>, %arg3: memref<1x128xf32, #tpu.memory_space<vmem>>, %arg4: memref<128x128xbf16, #tpu.memory_space<vmem>>, %arg5: memref<1x128xf32, #tpu.memory_space<vmem>>, %arg6: memref<1x128xf32, #tpu.memory_space<vmem>>, %arg7: memref<256x128xf32, #tpu.memory_space<vmem>>, %arg8: memref<256x128xf32, #tpu.memory_space<vmem>>) attributes {dimension_semantics = [#tpu.dimension_semantics<parallel>], iteration_bounds = array<i64: 2>, scalar_prefetch = 0 : i64, scratch_operands = 0 : i64, tpu.core_type = #tpu.core_type<tc>, window_params = [{transform_indices = @transform_0, window_bounds = array<i64: 256, 128>}, {pipeline_mode = #tpu.pipeline_mode<synchronous>, transform_indices = @transform_1, window_bounds = array<i64: 1, 128>}, {pipeline_mode = #tpu.pipeline_mode<synchronous>, transform_indices = @transform_2, window_bounds = array<i64: 1, 128>}, {pipeline_mode = #tpu.pipeline_mode<synchronous>, transform_indices = @transform_3, window_bounds = array<i64: 128, 128>}, {pipeline_mode = #tpu.pipeline_mode<synchronous>, transform_indices = @transform_4, window_bounds = array<i64: 1, 128>}, {pipeline_mode = #tpu.pipeline_mode<synchronous>, transform_indices = @transform_5, window_bounds = array<i64: 1, 128>}, {transform_indices = @transform_6, window_bounds = array<i64: 256, 128>}, {transform_indices = @transform_7, window_bounds = array<i64: 256, 128>}]} {
    %c0 = arith.constant 0 : index
    %c0_0 = arith.constant 0 : index
    %0 = vector.load %arg1[%c0, %c0_0] : memref<256x128xf32, #tpu.memory_space<vmem>>, vector<256x128xf32>
    %c0_1 = arith.constant 0 : index
    %c0_2 = arith.constant 0 : index
    %1 = vector.load %arg2[%c0_1, %c0_2] : memref<1x128xf32, #tpu.memory_space<vmem>>, vector<1x128xf32>
    %2 = vector.broadcast %1 : vector<1x128xf32> to vector<256x128xf32>
    %3 = arith.mulf %0, %2 : vector<256x128xf32>
    %c0_3 = arith.constant 0 : index
    %c0_4 = arith.constant 0 : index
    %4 = vector.load %arg3[%c0_3, %c0_4] : memref<1x128xf32, #tpu.memory_space<vmem>>, vector<1x128xf32>
    %5 = vector.broadcast %4 : vector<1x128xf32> to vector<256x128xf32>
    %6 = arith.addf %3, %5 : vector<256x128xf32>
    %cst = arith.constant 0.000000e+00 : f32
    %7 = vector.broadcast %cst : f32 to vector<256x128xf32>
    %8 = arith.maximumf %6, %7 : vector<256x128xf32>
    %9 = arith.truncf %8 : vector<256x128xf32> to vector<256x128xbf16>
    %c0_5 = arith.constant 0 : index
    %c0_6 = arith.constant 0 : index
    %10 = vector.load %arg4[%c0_5, %c0_6] : memref<128x128xbf16, #tpu.memory_space<vmem>>, vector<128x128xbf16>
    %cst_7 = arith.constant dense<0.000000e+00> : vector<256x128xf32>
    %11 = tpu.matmul %9, %10, %cst_7 {dimension_numbers = #tpu.dot_dimension_numbers<[1], [0], [0], [1], [0, 0, 1, 1], [], []>} : vector<256x128xbf16>, vector<128x128xbf16>, vector<256x128xf32> -> vector<256x128xf32>
    %c0_8 = arith.constant 0 : index
    %c0_9 = arith.constant 0 : index
    %12 = vector.load %arg5[%c0_8, %c0_9] : memref<1x128xf32, #tpu.memory_space<vmem>>, vector<1x128xf32>
    %13 = vector.broadcast %12 : vector<1x128xf32> to vector<256x128xf32>
    %14 = arith.mulf %11, %13 : vector<256x128xf32>
    %c0_10 = arith.constant 0 : index
    %c0_11 = arith.constant 0 : index
    %15 = vector.load %arg6[%c0_10, %c0_11] : memref<1x128xf32, #tpu.memory_space<vmem>>, vector<1x128xf32>
    %16 = vector.broadcast %15 : vector<1x128xf32> to vector<256x128xf32>
    %17 = arith.addf %14, %16 : vector<256x128xf32>
    %c0_12 = arith.constant 0 : index
    %c0_13 = arith.constant 0 : index
    %18 = vector.load %arg7[%c0_12, %c0_13] : memref<256x128xf32, #tpu.memory_space<vmem>>, vector<256x128xf32>
    %19 = arith.addf %17, %18 : vector<256x128xf32>
    %c0_14 = arith.constant 0 : index
    %c0_15 = arith.constant 0 : index
    %20 = vector.load %arg8[%c0_14, %c0_15] : memref<256x128xf32, #tpu.memory_space<vmem>>, vector<256x128xf32>
    tpu.vector_store %arg8[%c0_14, %c0_15], %19 {strides = array<i32>} : memref<256x128xf32, #tpu.memory_space<vmem>>, vector<256x128xf32>,
    return
  }
  func.func @transform_0(%arg0: i32) -> (i32, i32) {
    %c0_i32 = arith.constant 0 : i32
    %c0_i32_0 = arith.constant 0 : i32
    return %arg0, %c0_i32 : i32, i32
  }
  func.func @transform_1(%arg0: i32) -> (i32, i32) {
    %c0_i32 = arith.constant 0 : i32
    %c0_i32_0 = arith.constant 0 : i32
    %c0_i32_1 = arith.constant 0 : i32
    return %c0_i32, %c0_i32_0 : i32, i32
  }
  func.func @transform_2(%arg0: i32) -> (i32, i32) {
    %c0_i32 = arith.constant 0 : i32
    %c0_i32_0 = arith.constant 0 : i32
    %c0_i32_1 = arith.constant 0 : i32
    return %c0_i32, %c0_i32_0 : i32, i32
  }
  func.func @transform_3(%arg0: i32) -> (i32, i32) {
    %c0_i32 = arith.constant 0 : i32
    %c0_i32_0 = arith.constant 0 : i32
    %c0_i32_1 = arith.constant 0 : i32
    return %c0_i32, %c0_i32_0 : i32, i32
  }
  func.func @transform_4(%arg0: i32) -> (i32, i32) {
    %c0_i32 = arith.constant 0 : i32
    %c0_i32_0 = arith.constant 0 : i32
    %c0_i32_1 = arith.constant 0 : i32
    return %c0_i32, %c0_i32_0 : i32, i32
  }
  func.func @transform_5(%arg0: i32) -> (i32, i32) {
    %c0_i32 = arith.constant 0 : i32
    %c0_i32_0 = arith.constant 0 : i32
    %c0_i32_1 = arith.constant 0 : i32
    return %c0_i32, %c0_i32_0 : i32, i32
  }
  func.func @transform_6(%arg0: i32) -> (i32, i32) {
    %c0_i32 = arith.constant 0 : i32
    %c0_i32_0 = arith.constant 0 : i32
    return %arg0, %c0_i32 : i32, i32
  }
  func.func @transform_7(%arg0: i32) -> (i32, i32) {
    %c0_i32 = arith.constant 0 : i32
    %c0_i32_0 = arith.constant 0 : i32
    return %arg0, %c0_i32 : i32, i32
  }
}

</mosaic_0001>

<llo_original>
// kernel: block_deform_forward.6
$region0: #{block_deform_forward.6}
  #allocation0 [shape = 'u32[]', space=smem, size = 0x4, offset = 0x4, fixed_abs, tag = 'smem constant byte address 0x4 - core index']
  #allocation1 [shape = 'u32[144,128]{1,0:T(1,128)}', space=vmem, size = 0x12000, scoped, tag = 'internal scratch']
  %s0 = inlined_call_operand.vmem [shape: f32[2,504,128], index: 0, kind: input, shape index: {}]
  %s1 = inlined_call_operand.vmem [shape: bf16[9,128,128], index: 1, kind: input, shape index: {}]
  %s2 = inlined_call_operand.vmem [shape: f32[2,432,128], index: 2, kind: output, shape index: {}]
  %s3 = sld [smem:[#allocation0]]
  $region41: #{block_deform_forward.6} parent=0
    _
  %s5 = ssub.s32 1, %s3
  %s6 = scalar_select 0, %s5, %s3
  loop: start=0, step=1, limit=4
  $region2: #{block_deform_forward.6} parent=0 // loop_pre_header
    _
  $region3: #{block_deform_forward.6} parent=0 // loop_header
    %s8 = sphi 0, %s12
    %p9 = scmp.ge.s32.totalorder %s8, 4
    %s15 = sphi 0, %s27
    %s16 = sphi 0, %s23
    %s17 = sphi 0, %s15
    %s18 = sphi 0, %s16
    %s19 = sphi 0, %s17
    %s20 = sphi 0, %s18
    %s30 = sphi 0, %s32
    %s33 = sphi 0, %s30
    %s34 = sphi 0, %s33
    %s50 = sphi 0, %s34
    %s56 = sphi 0, %s58
    %s59 = sphi 0, %s56
    %s60 = sphi 0, %s59
    %s76 = sphi 0, %s60
    %s84 = sphi 0, %s86
    %s87 = sphi 0, %s84
    %s88 = sphi 0, %s87
    %s104 = sphi 0, %s88
  $region4: #{block_deform_forward.6} parent=0 // loop_header_branch
    %11 = sbr.rel (%p9) target = $region8
  $region5: #{block_deform_forward.6} parent=0 // loop_body
    %s13 = ssub.s32 %s8, 1
    %s14 = ssub.s32 %s8, 2
    %s21 = sadd.s32 1, %s16
    %p22 = scmp.ge.s32.totalorder %s21, 1
    %s23 = scalar_select %p22, 0, %s21
    %s24 = sadd.s32 1, %s15
    %s25 = scalar_select %p22, %s24, %s15
    %p26 = scmp.ge.s32.totalorder %s25, 2
    %s27 = scalar_select %p26, 0, %s25
    %s28 = ssub.s32 %s15, %s27
    %p29 = scmp.eq.s32.totalorder %s28, 0
    %s31 = sadd.s32 %s30, 1
    %s32 = scalar_select %p29, %s30, %s31
    %p35 = pneg %p29
    %p36 = scmp.eq.s32.totalorder %s8, 1
    %p37 = por %p35, %p36
    %p38 = scmp.ne.s32.totalorder %s30, %s33
    %p39 = scmp.eq.s32.totalorder %s8, 0
    %p40 = por %p38, %p39
    %p41 = scmp.ne.s32.totalorder %s30, %s33
    %p42 = scmp.eq.s32.totalorder %s13, 1
    %p43 = por %p41, %p42
    %p44 = scmp.ne.s32.totalorder %s33, %s34
    %p45 = scmp.eq.s32.totalorder %s13, 0
    %p46 = por %p44, %p45
    %p47 = scmp.ne.s32.totalorder %s33, %s34
    %p48 = scmp.eq.s32.totalorder %s14, 1
    %p49 = por %p47, %p48
    %p51 = scmp.ne.s32.totalorder %s34, %s50
    %p52 = scmp.eq.s32.totalorder %s14, 0
    %p53 = por %p51, %p52
    %s54 = ssub.s32 %s16, %s23
    %p55 = scmp.eq.s32.totalorder %s54, 0
    %s57 = sadd.s32 %s56, 1
    %s58 = scalar_select %p55, %s56, %s57
    %p61 = pneg %p55
    %p62 = scmp.eq.s32.totalorder %s8, 1
    %p63 = por %p61, %p62
    %p64 = scmp.ne.s32.totalorder %s56, %s59
    %p65 = scmp.eq.s32.totalorder %s8, 0
    %p66 = por %p64, %p65
    %p67 = scmp.ne.s32.totalorder %s56, %s59
    %p68 = scmp.eq.s32.totalorder %s13, 1
    %p69 = por %p67, %p68
    %p70 = scmp.ne.s32.totalorder %s59, %s60
    %p71 = scmp.eq.s32.totalorder %s13, 0
    %p72 = por %p70, %p71
    %p73 = scmp.ne.s32.totalorder %s59, %s60
    %p74 = scmp.eq.s32.totalorder %s14, 1
    %p75 = por %p73, %p74
    %p77 = scmp.ne.s32.totalorder %s60, %s76
    %p78 = scmp.eq.s32.totalorder %s14, 0
    %p79 = por %p77, %p78
    %s80 = ssub.s32 %s15, %s27
    %s81 = ssub.s32 %s16, %s23
    %s82 = sor.u32 %s80, %s81
    %p83 = scmp.eq.s32.totalorder %s82, 0
    %s85 = sadd.s32 %s84, 1
    %s86 = scalar_select %p83, %s84, %s85
    %p89 = pneg %p83
    %p90 = scmp.eq.s32.totalorder %s8, 1
    %p91 = por %p89, %p90
    %p92 = scmp.ne.s32.totalorder %s84, %s87
    %p93 = scmp.eq.s32.totalorder %s8, 0
    %p94 = por %p92, %p93
    %p95 = scmp.ne.s32.totalorder %s84, %s87
    %p96 = scmp.eq.s32.totalorder %s13, 1
    %p97 = por %p95, %p96
    %p98 = scmp.ne.s32.totalorder %s87, %s88
    %p99 = scmp.eq.s32.totalorder %s13, 0
    %p100 = por %p98, %p99
    %p101 = scmp.ne.s32.totalorder %s87, %s88
    %p102 = scmp.eq.s32.totalorder %s14, 1
    %p103 = por %p101, %p102
    %p105 = scmp.ne.s32.totalorder %s88, %s104
    %p106 = scmp.eq.s32.totalorder %s14, 0
    %p107 = por %p105, %p106
    %p108 = scmp.le.s32.totalorder 1, %s8
    %p109 = scmp.lt.s32.totalorder %s8, 3
    %p110 = pnand %p108, %p109
    %p111 = pneg %p110
    // Predicated region
    $region9: #{block_deform_forward.6} parent=5 // pred_check
      _
    $region10: #{block_deform_forward.6} parent=5 // pred_check_branch
      %113 = sbr.rel (%p110) target = $region12
    $region11: #{block_deform_forward.6} parent=5 // pred_region
      %s114 = ssub.s32 %s8, 1
      // Predicated region
      $region13: #{block_deform_forward.6} parent=11 // pred_check
        %p115 = pneg %p72
      $region14: #{block_deform_forward.6} parent=11 // pred_check_branch
        %117 = sbr.rel (%p115) target = $region16
      $region15: #{block_deform_forward.6} parent=11 // pred_region
        %p118 = scmp.lt.s32.totalorder %s18, 0
        %s119 = scalar_select %p118, %s18, 0
        %s120 = smul.addr %s119, 4
        %s121 = scalar_lea.vmem %s1, %s120
      $region16: #{block_deform_forward.6} parent=11 // pred_fallthru
        _
    $region12: #{block_deform_forward.6} parent=5 // pred_fallthru
      _
    %p122 = scmp.lt.s32.totalorder %s8, 2
    // Predicated region
    $region17: #{block_deform_forward.6} parent=5 // pred_check
      %p123 = pneg %p122
    $region18: #{block_deform_forward.6} parent=5 // pred_check_branch
      %125 = sbr.rel (%p123) target = $region20
    $region19: #{block_deform_forward.6} parent=5 // pred_region
      // Predicated region
      $region21: #{block_deform_forward.6} parent=19 // pred_check
        %p126 = pneg %p40
      $region22: #{block_deform_forward.6} parent=19 // pred_check_branch
        %128 = sbr.rel (%p126) target = $region24
      $region23: #{block_deform_forward.6} parent=19 // pred_region
        %p129 = scmp.lt.s32.totalorder %s15, 1
        %s130 = scalar_select %p129, %s15, 1
        %s131 = smul.addr %s130, 63
        %s132 = smul.addr %s131, 8
        %s133 = scalar_lea.vmem %s0, %s132
      $region24: #{block_deform_forward.6} parent=19 // pred_fallthru
        _
    $region20: #{block_deform_forward.6} parent=5 // pred_fallthru
      _
    %p134 = scmp.le.s32.totalorder 1, %s8
    %p135 = scmp.lt.s32.totalorder %s8, 3
    %p136 = pnand %p134, %p135
    %p137 = pneg %p136
    // Predicated region
    $region25: #{block_deform_forward.6} parent=5 // pred_check
      _
    $region26: #{block_deform_forward.6} parent=5 // pred_check_branch
      %139 = sbr.rel (%p136) target = $region28
    $region27: #{block_deform_forward.6} parent=5 // pred_region
      %s140 = ssub.s32 %s8, 1
      %p141 = scmp.lt.s32.totalorder %s17, 1
      %s142 = scalar_select %p141, %s17, 1
      %s143 = smul.addr %s142, 63
      %s144 = smul.addr %s143, 8
      %s145 = scalar_lea.vmem %s0, %s144
      %p146 = pneg %p46
      %p147 = pneg %p43
      %p148 = scmp.lt.s32.totalorder %s18, 0
      %s149 = scalar_select %p148, %s18, 0
      %s150 = smul.addr %s149, 4
      %s151 = scalar_lea.vmem %s1, %s150
      %p152 = pneg %p72
      %p153 = pneg %p69
      %p154 = pneg %p100
      %p155 = pneg %p97
      %p156 = scmp.lt.s32.totalorder %s17, 1
      %s157 = scalar_select %p156, %s17, 1
      %p158 = scmp.lt.s32.totalorder %s18, 0
      %s159 = scalar_select %p158, %s18, 0
      %s160 = smul.addr %s157, 54
      %s161 = sadd.s32 %s159, %s160
      %s162 = smul.addr %s161, 8
      %s163 = scalar_lea.vmem %s2, %s162
      %p164 = scmp.lt.s32.totalorder %s17, 1
      %s165 = scalar_select %p164, %s17, 1
      %s166 = smul.addr %s165, 63
      %s167 = smul.addr %s166, 8
      %s168 = scalar_lea.vmem %s0, %s167
      %p169 = scmp.lt.s32.totalorder %s18, 0
      %s170 = scalar_select %p169, %s18, 0
      %s171 = smul.addr %s170, 4
      %s172 = scalar_lea.vmem %s1, %s171
      %p173 = scmp.lt.s32.totalorder %s17, 1
      %s174 = scalar_select %p173, %s17, 1
      %p175 = scmp.lt.s32.totalorder %s18, 0
      %s176 = scalar_select %p175, %s18, 0
      %s177 = smul.addr %s174, 54
      %s178 = sadd.s32 %s176, %s177
      %s179 = smul.addr %s178, 8
      %s180 = scalar_lea.vmem %s2, %s179
      %v182 = vld [vmem:[%s168] sm:$0xff]
      %v183 = vld [vmem:[%s168 + $0x8] sm:$0xff]
      %v184 = vld [vmem:[%s168 + $0x10] sm:$0xff]
      %v185 = vld [vmem:[%s168 + $0x18] sm:$0xff]
      %v186 = vld [vmem:[%s168 + $0x20] sm:$0xff]
      %v187 = vld [vmem:[%s168 + $0x28] sm:$0xff]
      %v188 = vld [vmem:[%s168 + $0x30] sm:$0xff]
      %v189 = vld [vmem:[%s168 + $0x38] sm:$0xff]
      %v190 = vld [vmem:[%s168 + $0x40] sm:$0xff]
      %v191 = vld [vmem:[%s168 + $0x48] sm:$0xff]
      %v192 = vld [vmem:[%s168 + $0x50] sm:$0xff]
      %v193 = vld [vmem:[%s168 + $0x58] sm:$0xff]
      %v194 = vld [vmem:[%s168 + $0x60] sm:$0xff]
      %v195 = vld [vmem:[%s168 + $0x68] sm:$0xff]
      %v196 = vld [vmem:[%s168 + $0x70] sm:$0xff]
      %v197 = vld [vmem:[%s168 + $0x78] sm:$0xff]
      %v198 = vld [vmem:[%s168 + $0x80] sm:$0xff]
      %v199 = vld [vmem:[%s168 + $0x88] sm:$0xff]
      %v200 = vld [vmem:[%s168 + $0x90] sm:$0xff]
      %v201 = vld [vmem:[%s168 + $0x98] sm:$0xff]
      %v202 = vld [vmem:[%s168 + $0xa0] sm:$0xff]
      %v203 = vld [vmem:[%s168 + $0xa8] sm:$0xff]
      %v204 = vld [vmem:[%s168 + $0xb0] sm:$0xff]
      %v205 = vld [vmem:[%s168 + $0xb8] sm:$0xff]
      %v206 = vld [vmem:[%s168 + $0xc0] sm:$0xff]
      %v207 = vld [vmem:[%s168 + $0xc8] sm:$0xff]
      %v208 = vld [vmem:[%s168 + $0xd0] sm:$0xff]
      %v209 = vld [vmem:[%s168 + $0xd8] sm:$0xff]
      %v210 = vld [vmem:[%s168 + $0xe0] sm:$0xff]
      %v211 = vld [vmem:[%s168 + $0xe8] sm:$0xff]
      %v212 = vld [vmem:[%s168 + $0xf0] sm:$0xff]
      %v213 = vld [vmem:[%s168 + $0xf8] sm:$0xff]
      %v214 = vld [vmem:[%s168 + $0x100] sm:$0xff]
      %v215 = vld [vmem:[%s168 + $0x108] sm:$0xff]
      %v216 = vld [vmem:[%s168 + $0x110] sm:$0xff]
      %v217 = vld [vmem:[%s168 + $0x118] sm:$0xff]
      %v218 = vld [vmem:[%s168 + $0x120] sm:$0xff]
      %v219 = vld [vmem:[%s168 + $0x128] sm:$0xff]
      %v220 = vld [vmem:[%s168 + $0x130] sm:$0xff]
      %v221 = vld [vmem:[%s168 + $0x138] sm:$0xff]
      %v222 = vld [vmem:[%s168 + $0x140] sm:$0xff]
      %v223 = vld [vmem:[%s168 + $0x148] sm:$0xff]
      %v224 = vld [vmem:[%s168 + $0x150] sm:$0xff]
      %v225 = vld [vmem:[%s168 + $0x158] sm:$0xff]
      %v226 = vld [vmem:[%s168 + $0x160] sm:$0xff]
      %v227 = vld [vmem:[%s168 + $0x168] sm:$0xff]
      %v228 = vld [vmem:[%s168 + $0x170] sm:$0xff]
      %v229 = vld [vmem:[%s168 + $0x178] sm:$0xff]
      %v230 = vld [vmem:[%s168 + $0x180] sm:$0xff]
      %v231 = vld [vmem:[%s168 + $0x188] sm:$0xff]
      %v232 = vld [vmem:[%s168 + $0x190] sm:$0xff]
      %v233 = vld [vmem:[%s168 + $0x198] sm:$0xff]
      %v234 = vld [vmem:[%s168 + $0x1a0] sm:$0xff]
      %v235 = vld [vmem:[%s168 + $0x1a8] sm:$0xff]
      %v236 = vpack.c.bf16 %v183, %v182
      %v237 = vpack.c.bf16 %v185, %v184
      %v238 = vpack.c.bf16 %v187, %v186
      %v239 = vpack.c.bf16 %v189, %v188
      %v240 = vpack.c.bf16 %v191, %v190
      %v241 = vpack.c.bf16 %v193, %v192
      %v242 = vpack.c.bf16 %v195, %v194
      %v243 = vpack.c.bf16 %v197, %v196
      %v244 = vpack.c.bf16 %v199, %v198
      %v245 = vpack.c.bf16 %v201, %v200
      %v246 = vpack.c.bf16 %v203, %v202
      %v247 = vpack.c.bf16 %v205, %v204
      %v248 = vpack.c.bf16 %v207, %v206
      %v249 = vpack.c.bf16 %v209, %v208
      %v250 = vpack.c.bf16 %v211, %v210
      %v251 = vpack.c.bf16 %v213, %v212
      %v252 = vpack.c.bf16 %v215, %v214
      %v253 = vpack.c.bf16 %v217, %v216
      %v254 = vpack.c.bf16 %v219, %v218
      %v255 = vpack.c.bf16 %v221, %v220
      %v256 = vpack.c.bf16 %v223, %v222
      %v257 = vpack.c.bf16 %v225, %v224
      %v258 = vpack.c.bf16 %v227, %v226
      %v259 = vpack.c.bf16 %v229, %v228
      %v260 = vpack.c.bf16 %v231, %v230
      %v261 = vpack.c.bf16 %v233, %v232
      %v262 = vpack.c.bf16 %v235, %v234
      %v263 = vld [vmem:[%s172] sm:$0xf]
      %v264 = vld [vmem:[%s172 + $0x4] sm:$0xf]
      %v265 = vld [vmem:[%s172 + $0x8] sm:$0xf]
      %v266 = vld [vmem:[%s172 + $0xc] sm:$0xf]
      %v267 = vld [vmem:[%s172 + $0x10] sm:$0xf]
      %v268 = vld [vmem:[%s172 + $0x14] sm:$0xf]
      %v269 = vld [vmem:[%s172 + $0x18] sm:$0xf]
      %v270 = vld [vmem:[%s172 + $0x1c] sm:$0xf]
      %v271 = vld [vmem:[%s172 + $0x20] sm:$0xf]
      %v272 = vld [vmem:[%s172 + $0x24] sm:$0xf]
      %v273 = vld [vmem:[%s172 + $0x28] sm:$0xf]
      %v274 = vld [vmem:[%s172 + $0x2c] sm:$0xf]
      %v275 = vld [vmem:[%s172 + $0x30] sm:$0xf]
      %v276 = vld [vmem:[%s172 + $0x34] sm:$0xf]
      %v277 = vld [vmem:[%s172 + $0x38] sm:$0xf]
      %v278 = vld [vmem:[%s172 + $0x3c] sm:$0xf]
      %v279 = vld [vmem:[%s168 + $0x1] sm:$0xff]
      %v280 = vld [vmem:[%s168 + $0x9] sm:$0xff]
      %v281 = vld [vmem:[%s168 + $0x11] sm:$0xff]
      %v282 = vld [vmem:[%s168 + $0x19] sm:$0xff]
      %v283 = vld [vmem:[%s168 + $0x21] sm:$0xff]
      %v284 = vld [vmem:[%s168 + $0x29] sm:$0xff]
      %v285 = vld [vmem:[%s168 + $0x31] sm:$0xff]
      %v286 = vld [vmem:[%s168 + $0x39] sm:$0xff]
      %v287 = vld [vmem:[%s168 + $0x41] sm:$0xff]
      %v288 = vld [vmem:[%s168 + $0x49] sm:$0xff]
      %v289 = vld [vmem:[%s168 + $0x51] sm:$0xff]
      %v290 = vld [vmem:[%s168 + $0x59] sm:$0xff]
      %v291 = vld [vmem:[%s168 + $0x61] sm:$0xff]
      %v292 = vld [vmem:[%s168 + $0x69] sm:$0xff]
      %v293 = vld [vmem:[%s168 + $0x71] sm:$0xff]
      %v294 = vld [vmem:[%s168 + $0x79] sm:$0xff]
      %v295 = vld [vmem:[%s168 + $0x81] sm:$0xff]
      %v296 = vld [vmem:[%s168 + $0x89] sm:$0xff]
      %v297 = vld [vmem:[%s168 + $0x91] sm:$0xff]
      %v298 = vld [vmem:[%s168 + $0x99] sm:$0xff]
      %v299 = vld [vmem:[%s168 + $0xa1] sm:$0xff]
      %v300 = vld [vmem:[%s168 + $0xa9] sm:$0xff]
      %v301 = vld [vmem:[%s168 + $0xb1] sm:$0xff]
      %v302 = vld [vmem:[%s168 + $0xb9] sm:$0xff]
      %v303 = vld [vmem:[%s168 + $0xc1] sm:$0xff]
      %v304 = vld [vmem:[%s168 + $0xc9] sm:$0xff]
      %v305 = vld [vmem:[%s168 + $0xd1] sm:$0xff]
      %v306 = vld [vmem:[%s168 + $0xd9] sm:$0xff]
      %v307 = vld [vmem:[%s168 + $0xe1] sm:$0xff]
      %v308 = vld [vmem:[%s168 + $0xe9] sm:$0xff]
      %v309 = vld [vmem:[%s168 + $0xf1] sm:$0xff]
      %v310 = vld [vmem:[%s168 + $0xf9] sm:$0xff]
      %v311 = vld [vmem:[%s168 + $0x101] sm:$0xff]
      %v312 = vld [vmem:[%s168 + $0x109] sm:$0xff]
      %v313 = vld [vmem:[%s168 + $0x111] sm:$0xff]
      %v314 = vld [vmem:[%s168 + $0x119] sm:$0xff]
      %v315 = vld [vmem:[%s168 + $0x121] sm:$0xff]
      %v316 = vld [vmem:[%s168 + $0x129] sm:$0xff]
      %v317 = vld [vmem:[%s168 + $0x131] sm:$0xff]
      %v318 = vld [vmem:[%s168 + $0x139] sm:$0xff]
      %v319 = vld [vmem:[%s168 + $0x141] sm:$0xff]
      %v320 = vld [vmem:[%s168 + $0x149] sm:$0xff]
      %v321 = vld [vmem:[%s168 + $0x151] sm:$0xff]
      %v322 = vld [vmem:[%s168 + $0x159] sm:$0xff]
      %v323 = vld [vmem:[%s168 + $0x161] sm:$0xff]
      %v324 = vld [vmem:[%s168 + $0x169] sm:$0xff]
      %v325 = vld [vmem:[%s168 + $0x171] sm:$0xff]
      %v326 = vld [vmem:[%s168 + $0x179] sm:$0xff]
      %v327 = vld [vmem:[%s168 + $0x181] sm:$0xff]
      %v328 = vld [vmem:[%s168 + $0x189] sm:$0xff]
      %v329 = vld [vmem:[%s168 + $0x191] sm:$0xff]
      %v330 = vld [vmem:[%s168 + $0x199] sm:$0xff]
      %v331 = vld [vmem:[%s168 + $0x1a1] sm:$0xff]
      %v332 = vld [vmem:[%s168 + $0x1a9] sm:$0xff]
      %v333 = vpack.c.bf16 %v280, %v279
      %v334 = vpack.c.bf16 %v282, %v281
      %v335 = vpack.c.bf16 %v284, %v283
      %v336 = vpack.c.bf16 %v286, %v285
      %v337 = vpack.c.bf16 %v288, %v287
      %v338 = vpack.c.bf16 %v290, %v289
      %v339 = vpack.c.bf16 %v292, %v291
      %v340 = vpack.c.bf16 %v294, %v293
      %v341 = vpack.c.bf16 %v296, %v295
      %v342 = vpack.c.bf16 %v298, %v297
      %v343 = vpack.c.bf16 %v300, %v299
      %v344 = vpack.c.bf16 %v302, %v301
      %v345 = vpack.c.bf16 %v304, %v303
      %v346 = vpack.c.bf16 %v306, %v305
      %v347 = vpack.c.bf16 %v308, %v307
      %v348 = vpack.c.bf16 %v310, %v309
      %v349 = vpack.c.bf16 %v312, %v311
      %v350 = vpack.c.bf16 %v314, %v313
      %v351 = vpack.c.bf16 %v316, %v315
      %v352 = vpack.c.bf16 %v318, %v317
      %v353 = vpack.c.bf16 %v320, %v319
      %v354 = vpack.c.bf16 %v322, %v321
      %v355 = vpack.c.bf16 %v324, %v323
      %v356 = vpack.c.bf16 %v326, %v325
      %v357 = vpack.c.bf16 %v328, %v327
      %v358 = vpack.c.bf16 %v330, %v329
      %v359 = vpack.c.bf16 %v332, %v331
      %s360 = scalar_lea.vmem %s172, 64
      %v361 = vld [vmem:[%s360] sm:$0xf]
      %v362 = vld [vmem:[%s360 + $0x4] sm:$0xf]
      %v363 = vld [vmem:[%s360 + $0x8] sm:$0xf]
      %v364 = vld [vmem:[%s360 + $0xc] sm:$0xf]
      %v365 = vld [vmem:[%s360 + $0x10] sm:$0xf]
      %v366 = vld [vmem:[%s360 + $0x14] sm:$0xf]
      %v367 = vld [vmem:[%s360 + $0x18] sm:$0xf]
      %v368 = vld [vmem:[%s360 + $0x1c] sm:$0xf]
      %v369 = vld [vmem:[%s360 + $0x20] sm:$0xf]
      %v370 = vld [vmem:[%s360 + $0x24] sm:$0xf]
      %v371 = vld [vmem:[%s360 + $0x28] sm:$0xf]
      %v372 = vld [vmem:[%s360 + $0x2c] sm:$0xf]
      %v373 = vld [vmem:[%s360 + $0x30] sm:$0xf]
      %v374 = vld [vmem:[%s360 + $0x34] sm:$0xf]
      %v375 = vld [vmem:[%s360 + $0x38] sm:$0xf]
      %v376 = vld [vmem:[%s360 + $0x3c] sm:$0xf]
      %v393 = vunpack.c.l.b16 %v361
      %v394 = vunpack.c.l.b16 %v362
      %v395 = vunpack.c.l.b16 %v363
      %v396 = vunpack.c.l.b16 %v364
      %v397 = vunpack.c.l.b16 %v365
      %v398 = vunpack.c.l.b16 %v366
      %v399 = vunpack.c.l.b16 %v367
      %v400 = vunpack.c.l.b16 %v368
      %v401 = vunpack.c.l.b16 %v369
      %v402 = vunpack.c.l.b16 %v370
      %v403 = vunpack.c.l.b16 %v371
      %v404 = vunpack.c.l.b16 %v372
      %v405 = vunpack.c.l.b16 %v373
      %v406 = vunpack.c.l.b16 %v374
      %v407 = vunpack.c.l.b16 %v375
      %v408 = vunpack.c.l.b16 %v376
      %v409 = vpack.c.b16 %v394, %v393
      %v410 = vpack.c.b16 %v396, %v395
      %v411 = vpack.c.b16 %v398, %v397
      %v412 = vpack.c.b16 %v400, %v399
      %v413 = vpack.c.b16 %v402, %v401
      %v414 = vpack.c.b16 %v404, %v403
      %v415 = vpack.c.b16 %v406, %v405
      %v416 = vpack.c.b16 %v408, %v407
      %425 = vmatprep.subr.bf16.mxu0 0
      %426 = vmatpush1.bf16.msra.mxu0 %v409
      %427 = vmatprep.subr.bf16.mxu0 0
      %428 = vmatpush1.bf16.msra.mxu0 %v410
      %429 = vmatprep.subr.bf16.mxu0 0
      %430 = vmatpush1.bf16.msra.mxu0 %v411
      %431 = vmatprep.subr.bf16.mxu0 0
      %432 = vmatpush1.bf16.msra.mxu0 %v412
      %433 = vmatprep.subr.bf16.mxu0 0
      %434 = vmatpush1.bf16.msra.mxu0 %v413
      %435 = vmatprep.subr.bf16.mxu0 0
      %436 = vmatpush1.bf16.msra.mxu0 %v414
      %437 = vmatprep.subr.bf16.mxu0 0
      %438 = vmatpush1.bf16.msra.mxu0 %v415
      %439 = vmatprep.subr.bf16.mxu0 0
      %440 = vmatpush1.bf16.msra.mxu0 %v416
      %441 = vmatprep.subr.bf16.mxu0 0
      %442 = vmatpush1.bf16.msra.mxu0 0
      %443 = vmatprep.subr.bf16.mxu0 0
      %444 = vmatpush1.bf16.msra.mxu0 0
      %445 = vmatprep.subr.bf16.mxu0 0
      %446 = vmatpush1.bf16.msra.mxu0 0
      %447 = vmatprep.subr.bf16.mxu0 0
      %448 = vmatpush1.bf16.msra.mxu0 0
      %449 = vmatprep.subr.bf16.mxu0 0
      %450 = vmatpush1.bf16.msra.mxu0 0
      %451 = vmatprep.subr.bf16.mxu0 0
      %452 = vmatpush1.bf16.msra.mxu0 0
      %453 = vmatprep.subr.bf16.mxu0 0
      %454 = vmatpush1.bf16.msra.mxu0 0
      %455 = vmatprep.subr.bf16.mxu0 0
      %456 = vmatpush1.bf16.msra.mxu0 0
      %457 = vmatprep.mubr.bf16.mxu0 0
      %458 = vmatmul.mubr.bf16.gmra.mrb[0].mxu0 %v333
      %v459 = vpop.f32.mrb[0].mxu0
      %v460 = vadd.f32 0.0, %v459
      %v461 = vpop.f32.mrb[0].mxu0
      %v462 = vpop.f32.mrb[0].mxu0
      %v463 = vadd.f32 0.0, %v462
      %v464 = vpop.f32.mrb[0].mxu0
      %465 = vmatprep.mubr.bf16.mxu0 0
      %466 = vmatmul.mubr.bf16.gmra.mrb[0].mxu0 %v334
      %v467 = vpop.f32.mrb[0].mxu0
      %v468 = vadd.f32 0.0, %v467
      %v469 = vpop.f32.mrb[0].mxu0
      %v470 = vpop.f32.mrb[0].mxu0
      %v471 = vadd.f32 0.0, %v470
      %v472 = vpop.f32.mrb[0].mxu0
      %473 = vmatprep.mubr.bf16.mxu0 0
      %474 = vmatmul.mubr.bf16.gmra.mrb[0].mxu0 %v335
      %v475 = vpop.f32.mrb[0].mxu0
      %v476 = vadd.f32 0.0, %v475
      %v477 = vpop.f32.mrb[0].mxu0
      %v478 = vpop.f32.mrb[0].mxu0
      %v479 = vadd.f32 0.0, %v478
      %v480 = vpop.f32.mrb[0].mxu0
      %481 = vmatprep.mubr.bf16.mxu0 0
      %482 = vmatmul.mubr.bf16.gmra.mrb[0].mxu0 %v336
      %v483 = vpop.f32.mrb[0].mxu0
      %v484 = vadd.f32 0.0, %v483
      %v485 = vpop.f32.mrb[0].mxu0
      %v486 = vpop.f32.mrb[0].mxu0
      %v487 = vadd.f32 0.0, %v486
      %v488 = vpop.f32.mrb[0].mxu0
      %489 = vmatprep.mubr.bf16.mxu0 0
      %490 = vmatmul.mubr.bf16.gmra.mrb[0].mxu0 %v337
      %v491 = vpop.f32.mrb[0].mxu0
      %v492 = vadd.f32 0.0, %v491
      %v493 = vpop.f32.mrb[0].mxu0
      %v494 = vpop.f32.mrb[0].mxu0
      %v495 = vadd.f32 0.0, %v494
      %v496 = vpop.f32.mrb[0].mxu0
      %497 = vmatprep.mubr.bf16.mxu0 0
      %498 = vmatmul.mubr.bf16.gmra.mrb[0].mxu0 %v338
      %v499 = vpop.f32.mrb[0].mxu0
      %v500 = vadd.f32 0.0, %v499
      %v501 = vpop.f32.mrb[0].mxu0
      %v502 = vpop.f32.mrb[0].mxu0
      %v503 = vadd.f32 0.0, %v502
      %v504 = vpop.f32.mrb[0].mxu0
      %505 = vmatprep.mubr.bf16.mxu0 0
      %506 = vmatmul.mubr.bf16.gmra.mrb[0].mxu0 %v339
      %v507 = vpop.f32.mrb[0].mxu0
      %v508 = vadd.f32 0.0, %v507
      %v509 = vpop.f32.mrb[0].mxu0
      %v510 = vpop.f32.mrb[0].mxu0
      %v511 = vadd.f32 0.0, %v510
      %v512 = vpop.f32.mrb[0].mxu0
      %513 = vmatprep.mubr.bf16.mxu0 0
      %514 = vmatmul.mubr.bf16.gmra.mrb[0].mxu0 %v340
      %v515 = vpop.f32.mrb[0].mxu0
      %v516 = vadd.f32 0.0, %v515
      %v517 = vpop.f32.mrb[0].mxu0
      %v518 = vpop.f32.mrb[0].mxu0
      %v519 = vadd.f32 0.0, %v518
      %v520 = vpop.f32.mrb[0].mxu0
      %521 = vmatprep.mubr.bf16.mxu0 0
      %522 = vmatmul.mubr.bf16.gmra.mrb[0].mxu0 %v341
      %v523 = vpop.f32.mrb[0].mxu0
      %v524 = vadd.f32 0.0, %v523
      %v525 = vpop.f32.mrb[0].mxu0
      %v526 = vpop.f32.mrb[0].mxu0
      %v527 = vadd.f32 0.0, %v526
      %v528 = vpop.f32.mrb[0].mxu0
      %529 = vmatprep.mubr.bf16.mxu0 0
      %530 = vmatmul.mubr.bf16.gmra.mrb[0].mxu0 %v342
      %v531 = vpop.f32.mrb[0].mxu0
      %v532 = vadd.f32 0.0, %v531
      %v533 = vpop.f32.mrb[0].mxu0
      %v534 = vpop.f32.mrb[0].mxu0
      %v535 = vadd.f32 0.0, %v534
      %v536 = vpop.f32.mrb[0].mxu0
      %537 = vmatprep.mubr.bf16.mxu0 0
      %538 = vmatmul.mubr.bf16.gmra.mrb[0].mxu0 %v343
      %v539 = vpop.f32.mrb[0].mxu0
      %v540 = vadd.f32 0.0, %v539
      %v541 = vpop.f32.mrb[0].mxu0
      %v542 = vpop.f32.mrb[0].mxu0
      %v543 = vadd.f32 0.0, %v542
      %v544 = vpop.f32.mrb[0].mxu0
      %545 = vmatprep.mubr.bf16.mxu0 0
      %546 = vmatmul.mubr.bf16.gmra.mrb[0].mxu0 %v344
      %v547 = vpop.f32.mrb[0].mxu0
      %v548 = vadd.f32 0.0, %v547
      %v549 = vpop.f32.mrb[0].mxu0
      %v550 = vpop.f32.mrb[0].mxu0
      %v551 = vadd.f32 0.0, %v550
      %v552 = vpop.f32.mrb[0].mxu0
      %553 = vmatprep.mubr.bf16.mxu0 0
      %554 = vmatmul.mubr.bf16.gmra.mrb[0].mxu0 %v345
      %v555 = vpop.f32.mrb[0].mxu0
      %v556 = vadd.f32 0.0, %v555
      %v557 = vpop.f32.mrb[0].mxu0
      %v558 = vpop.f32.mrb[0].mxu0
      %v559 = vadd.f32 0.0, %v558
      %v560 = vpop.f32.mrb[0].mxu0
      %561 = vmatprep.mubr.bf16.mxu0 0
      %562 = vmatmul.mubr.bf16.gmra.mrb[0].mxu0 %v346
      %v563 = vpop.f32.mrb[0].mxu0
      %v564 = vadd.f32 0.0, %v563
      %v565 = vpop.f32.mrb[0].mxu0
      %v566 = vpop.f32.mrb[0].mxu0
      %v567 = vadd.f32 0.0, %v566
      %v568 = vpop.f32.mrb[0].mxu0
      %569 = vmatprep.mubr.bf16.mxu0 0
      %570 = vmatmul.mubr.bf16.gmra.mrb[0].mxu0 %v347
      %v571 = vpop.f32.mrb[0].mxu0
      %v572 = vadd.f32 0.0, %v571
      %v573 = vpop.f32.mrb[0].mxu0
      %v574 = vpop.f32.mrb[0].mxu0
      %v575 = vadd.f32 0.0, %v574
      %v576 = vpop.f32.mrb[0].mxu0
      %577 = vmatprep.mubr.bf16.mxu0 0
      %578 = vmatmul.mubr.bf16.gmra.mrb[0].mxu0 %v348
      %v579 = vpop.f32.mrb[0].mxu0
      %v580 = vadd.f32 0.0, %v579
      %v581 = vpop.f32.mrb[0].mxu0
      %v582 = vpop.f32.mrb[0].mxu0
      %v583 = vadd.f32 0.0, %v582
      %v584 = vpop.f32.mrb[0].mxu0
      %585 = vmatprep.mubr.bf16.mxu0 0
      %586 = vmatmul.mubr.bf16.gmra.mrb[0].mxu0 %v349
      %v587 = vpop.f32.mrb[0].mxu0
      %v588 = vadd.f32 0.0, %v587
      %v589 = vpop.f32.mrb[0].mxu0
      %v590 = vpop.f32.mrb[0].mxu0
      %v591 = vadd.f32 0.0, %v590
      %v592 = vpop.f32.mrb[0].mxu0
      %593 = vmatprep.mubr.bf16.mxu0 0
      %594 = vmatmul.mubr.bf16.gmra.mrb[0].mxu0 %v350
      %v595 = vpop.f32.mrb[0].mxu0
      %v596 = vadd.f32 0.0, %v595
      %v597 = vpop.f32.mrb[0].mxu0
      %v598 = vpop.f32.mrb[0].mxu0
      %v599 = vadd.f32 0.0, %v598
      %v600 = vpop.f32.mrb[0].mxu0
      %601 = vmatprep.mubr.bf16.mxu0 0
      %602 = vmatmul.mubr.bf16.gmra.mrb[0].mxu0 %v351
      %v603 = vpop.f32.mrb[0].mxu0
      %v604 = vadd.f32 0.0, %v603
      %v605 = vpop.f32.mrb[0].mxu0
      %v606 = vpop.f32.mrb[0].mxu0
      %v607 = vadd.f32 0.0, %v606
      %v608 = vpop.f32.mrb[0].mxu0
      %609 = vmatprep.mubr.bf16.mxu0 0
      %610 = vmatmul.mubr.bf16.gmra.mrb[0].mxu0 %v352
      %v611 = vpop.f32.mrb[0].mxu0
      %v612 = vadd.f32 0.0, %v611
      %v613 = vpop.f32.mrb[0].mxu0
      %v614 = vpop.f32.mrb[0].mxu0
      %v615 = vadd.f32 0.0, %v614
      %v616 = vpop.f32.mrb[0].mxu0
      %617 = vmatprep.mubr.bf16.mxu0 0
      %618 = vmatmul.mubr.bf16.gmra.mrb[0].mxu0 %v353
      %v619 = vpop.f32.mrb[0].mxu0
      %v620 = vadd.f32 0.0, %v619
      %v621 = vpop.f32.mrb[0].mxu0
      %v622 = vpop.f32.mrb[0].mxu0
      %v623 = vadd.f32 0.0, %v622
      %v624 = vpop.f32.mrb[0].mxu0
      %625 = vmatprep.mubr.bf16.mxu0 0
      %626 = vmatmul.mubr.bf16.gmra.mrb[0].mxu0 %v354
      %v627 = vpop.f32.mrb[0].mxu0
      %v628 = vadd.f32 0.0, %v627
      %v629 = vpop.f32.mrb[0].mxu0
      %v630 = vpop.f32.mrb[0].mxu0
      %v631 = vadd.f32 0.0, %v630
      %v632 = vpop.f32.mrb[0].mxu0
      %633 = vmatprep.mubr.bf16.mxu0 0
      %634 = vmatmul.mubr.bf16.gmra.mrb[0].mxu0 %v355
      %v635 = vpop.f32.mrb[0].mxu0
      %v636 = vadd.f32 0.0, %v635
      %v637 = vpop.f32.mrb[0].mxu0
      %v638 = vpop.f32.mrb[0].mxu0
      %v639 = vadd.f32 0.0, %v638
      %v640 = vpop.f32.mrb[0].mxu0
      %641 = vmatprep.mubr.bf16.mxu0 0
      %642 = vmatmul.mubr.bf16.gmra.mrb[0].mxu0 %v356
      %v643 = vpop.f32.mrb[0].mxu0
      %v644 = vadd.f32 0.0, %v643
      %v645 = vpop.f32.mrb[0].mxu0
      %v646 = vpop.f32.mrb[0].mxu0
      %v647 = vadd.f32 0.0, %v646
      %v648 = vpop.f32.mrb[0].mxu0
      %649 = vmatprep.mubr.bf16.mxu0 0
      %650 = vmatmul.mubr.bf16.gmra.mrb[0].mxu0 %v357
      %v651 = vpop.f32.mrb[0].mxu0
      %v652 = vadd.f32 0.0, %v651
      %v653 = vpop.f32.mrb[0].mxu0
      %v654 = vpop.f32.mrb[0].mxu0
      %v655 = vadd.f32 0.0, %v654
      %v656 = vpop.f32.mrb[0].mxu0
      %657 = vmatprep.mubr.bf16.mxu0 0
      %658 = vmatmul.mubr.bf16.gmra.mrb[0].mxu0 %v358
      %v659 = vpop.f32.mrb[0].mxu0
      %v660 = vadd.f32 0.0, %v659
      %v661 = vpop.f32.mrb[0].mxu0
      %v662 = vpop.f32.mrb[0].mxu0
      %v663 = vadd.f32 0.0, %v662
      %v664 = vpop.f32.mrb[0].mxu0
      %665 = vmatprep.mubr.bf16.mxu0 0
      %666 = vmatmul.mubr.bf16.gmra.mrb[0].mxu0 %v359
      %v667 = vpop.f32.mrb[0].mxu0
      %v668 = vadd.f32 0.0, %v667
      %v669 = vpop.f32.mrb[0].mxu0
      %v670 = vpop.f32.mrb[0].mxu0
      %v671 = vadd.f32 0.0, %v670
      %v672 = vpop.f32.mrb[0].mxu0
      %673 = vdwg.mxu0
      %v690 = vunpack.c.l.b16 %v263
      %v691 = vunpack.c.l.b16 %v264
      %v692 = vunpack.c.l.b16 %v265
      %v693 = vunpack.c.l.b16 %v266
      %v694 = vunpack.c.l.b16 %v267
      %v695 = vunpack.c.l.b16 %v268
      %v696 = vunpack.c.l.b16 %v269
      %v697 = vunpack.c.l.b16 %v270
      %v698 = vunpack.c.l.b16 %v271
      %v699 = vunpack.c.l.b16 %v272
      %v700 = vunpack.c.l.b16 %v273
      %v701 = vunpack.c.l.b16 %v274
      %v702 = vunpack.c.l.b16 %v275
      %v703 = vunpack.c.l.b16 %v276
      %v704 = vunpack.c.l.b16 %v277
      %v705 = vunpack.c.l.b16 %v278
      %v706 = vpack.c.b16 %v691, %v690
      %v707 = vpack.c.b16 %v693, %v692
      %v708 = vpack.c.b16 %v695, %v694
      %v709 = vpack.c.b16 %v697, %v696
      %v710 = vpack.c.b16 %v699, %v698
      %v711 = vpack.c.b16 %v701, %v700
      %v712 = vpack.c.b16 %v703, %v702
      %v713 = vpack.c.b16 %v705, %v704
      %722 = vmatprep.subr.bf16.mxu0 0
      %723 = vmatpush1.bf16.msra.mxu0 %v706
      %724 = vmatprep.subr.bf16.mxu0 0
      %725 = vmatpush1.bf16.msra.mxu0 %v707
      %726 = vmatprep.subr.bf16.mxu0 0
      %727 = vmatpush1.bf16.msra.mxu0 %v708
      %728 = vmatprep.subr.bf16.mxu0 0
      %729 = vmatpush1.bf16.msra.mxu0 %v709
      %730 = vmatprep.subr.bf16.mxu0 0
      %731 = vmatpush1.bf16.msra.mxu0 %v710
      %732 = vmatprep.subr.bf16.mxu0 0
      %733 = vmatpush1.bf16.msra.mxu0 %v711
      %734 = vmatprep.subr.bf16.mxu0 0
      %735 = vmatpush1.bf16.msra.mxu0 %v712
      %736 = vmatprep.subr.bf16.mxu0 0
      %737 = vmatpush1.bf16.msra.mxu0 %v713
      %738 = vmatprep.subr.bf16.mxu0 0
      %739 = vmatpush1.bf16.msra.mxu0 0
      %740 = vmatprep.subr.bf16.mxu0 0
      %741 = vmatpush1.bf16.msra.mxu0 0
      %742 = vmatprep.subr.bf16.mxu0 0
      %743 = vmatpush1.bf16.msra.mxu0 0
      %744 = vmatprep.subr.bf16.mxu0 0
      %745 = vmatpush1.bf16.msra.mxu0 0
      %746 = vmatprep.subr.bf16.mxu0 0
      %747 = vmatpush1.bf16.msra.mxu0 0
      %748 = vmatprep.subr.bf16.mxu0 0
      %749 = vmatpush1.bf16.msra.mxu0 0
      %750 = vmatprep.subr.bf16.mxu0 0
      %751 = vmatpush1.bf16.msra.mxu0 0
      %752 = vmatprep.subr.bf16.mxu0 0
      %753 = vmatpush1.bf16.msra.mxu0 0
      %754 = vmatprep.mubr.bf16.mxu0 0
      %755 = vmatmul.mubr.bf16.gmra.mrb[0].mxu0 %v236
      %v756 = vpop.f32.mrb[0].mxu0
      %v757 = vadd.f32 %v460, %v756
      %v758 = vpop.f32.mrb[0].mxu0
      %v759 = vpop.f32.mrb[0].mxu0
      %v760 = vadd.f32 %v463, %v759
      %v761 = vpop.f32.mrb[0].mxu0
      %762 = vmatprep.mubr.bf16.mxu0 0
      %763 = vmatmul.mubr.bf16.gmra.mrb[0].mxu0 %v237
      %v764 = vpop.f32.mrb[0].mxu0
      %v765 = vadd.f32 %v468, %v764
      %v766 = vpop.f32.mrb[0].mxu0
      %v767 = vpop.f32.mrb[0].mxu0
      %v768 = vadd.f32 %v471, %v767
      %v769 = vpop.f32.mrb[0].mxu0
      %770 = vmatprep.mubr.bf16.mxu0 0
      %771 = vmatmul.mubr.bf16.gmra.mrb[0].mxu0 %v238
      %v772 = vpop.f32.mrb[0].mxu0
      %v773 = vadd.f32 %v476, %v772
      %v774 = vpop.f32.mrb[0].mxu0
      %v775 = vpop.f32.mrb[0].mxu0
      %v776 = vadd.f32 %v479, %v775
      %v777 = vpop.f32.mrb[0].mxu0
      %778 = vmatprep.mubr.bf16.mxu0 0
      %779 = vmatmul.mubr.bf16.gmra.mrb[0].mxu0 %v239
      %v780 = vpop.f32.mrb[0].mxu0
      %v781 = vadd.f32 %v484, %v780
      %v782 = vpop.f32.mrb[0].mxu0
      %v783 = vpop.f32.mrb[0].mxu0
      %v784 = vadd.f32 %v487, %v783
      %v785 = vpop.f32.mrb[0].mxu0
      %786 = vmatprep.mubr.bf16.mxu0 0
      %787 = vmatmul.mubr.bf16.gmra.mrb[0].mxu0 %v240
      %v788 = vpop.f32.mrb[0].mxu0
      %v789 = vadd.f32 %v492, %v788
      %v790 = vpop.f32.mrb[0].mxu0
      %v791 = vpop.f32.mrb[0].mxu0
      %v792 = vadd.f32 %v495, %v791
      %v793 = vpop.f32.mrb[0].mxu0
      %794 = vmatprep.mubr.bf16.mxu0 0
      %795 = vmatmul.mubr.bf16.gmra.mrb[0].mxu0 %v241
      %v796 = vpop.f32.mrb[0].mxu0
      %v797 = vadd.f32 %v500, %v796
      %v798 = vpop.f32.mrb[0].mxu0
      %v799 = vpop.f32.mrb[0].mxu0
      %v800 = vadd.f32 %v503, %v799
      %v801 = vpop.f32.mrb[0].mxu0
      %802 = vmatprep.mubr.bf16.mxu0 0
      %803 = vmatmul.mubr.bf16.gmra.mrb[0].mxu0 %v242
      %v804 = vpop.f32.mrb[0].mxu0
      %v805 = vadd.f32 %v508, %v804
      %v806 = vpop.f32.mrb[0].mxu0
      %v807 = vpop.f32.mrb[0].mxu0
      %v808 = vadd.f32 %v511, %v807
      %v809 = vpop.f32.mrb[0].mxu0
      %810 = vmatprep.mubr.bf16.mxu0 0
      %811 = vmatmul.mubr.bf16.gmra.mrb[0].mxu0 %v243
      %v812 = vpop.f32.mrb[0].mxu0
      %v813 = vadd.f32 %v516, %v812
      %v814 = vpop.f32.mrb[0].mxu0
      %v815 = vpop.f32.mrb[0].mxu0
      %v816 = vadd.f32 %v519, %v815
      %v817 = vpop.f32.mrb[0].mxu0
      %818 = vmatprep.mubr.bf16.mxu0 0
      %819 = vmatmul.mubr.bf16.gmra.mrb[0].mxu0 %v244
      %v820 = vpop.f32.mrb[0].mxu0
      %v821 = vadd.f32 %v524, %v820
      %v822 = vpop.f32.mrb[0].mxu0
      %v823 = vpop.f32.mrb[0].mxu0
      %v824 = vadd.f32 %v527, %v823
      %v825 = vpop.f32.mrb[0].mxu0
      %826 = vmatprep.mubr.bf16.mxu0 0
      %827 = vmatmul.mubr.bf16.gmra.mrb[0].mxu0 %v245
      %v828 = vpop.f32.mrb[0].mxu0
      %v829 = vadd.f32 %v532, %v828
      %v830 = vpop.f32.mrb[0].mxu0
      %v831 = vpop.f32.mrb[0].mxu0
      %v832 = vadd.f32 %v535, %v831
      %v833 = vpop.f32.mrb[0].mxu0
      %834 = vmatprep.mubr.bf16.mxu0 0
      %835 = vmatmul.mubr.bf16.gmra.mrb[0].mxu0 %v246
      %v836 = vpop.f32.mrb[0].mxu0
      %v837 = vadd.f32 %v540, %v836
      %v838 = vpop.f32.mrb[0].mxu0
      %v839 = vpop.f32.mrb[0].mxu0
      %v840 = vadd.f32 %v543, %v839
      %v841 = vpop.f32.mrb[0].mxu0
      %842 = vmatprep.mubr.bf16.mxu0 0
      %843 = vmatmul.mubr.bf16.gmra.mrb[0].mxu0 %v247
      %v844 = vpop.f32.mrb[0].mxu0
      %v845 = vadd.f32 %v548, %v844
      %v846 = vpop.f32.mrb[0].mxu0
      %v847 = vpop.f32.mrb[0].mxu0
      %v848 = vadd.f32 %v551, %v847
      %v849 = vpop.f32.mrb[0].mxu0
      %850 = vmatprep.mubr.bf16.mxu0 0
      %851 = vmatmul.mubr.bf16.gmra.mrb[0].mxu0 %v248
      %v852 = vpop.f32.mrb[0].mxu0
      %v853 = vadd.f32 %v556, %v852
      %v854 = vpop.f32.mrb[0].mxu0
      %v855 = vpop.f32.mrb[0].mxu0
      %v856 = vadd.f32 %v559, %v855
      %v857 = vpop.f32.mrb[0].mxu0
      %858 = vmatprep.mubr.bf16.mxu0 0
      %859 = vmatmul.mubr.bf16.gmra.mrb[0].mxu0 %v249
      %v860 = vpop.f32.mrb[0].mxu0
      %v861 = vadd.f32 %v564, %v860
      %v862 = vpop.f32.mrb[0].mxu0
      %v863 = vpop.f32.mrb[0].mxu0
      %v864 = vadd.f32 %v567, %v863
      %v865 = vpop.f32.mrb[0].mxu0
      %866 = vmatprep.mubr.bf16.mxu0 0
      %867 = vmatmul.mubr.bf16.gmra.mrb[0].mxu0 %v250
      %v868 = vpop.f32.mrb[0].mxu0
      %v869 = vadd.f32 %v572, %v868
      %v870 = vpop.f32.mrb[0].mxu0
      %v871 = vpop.f32.mrb[0].mxu0
      %v872 = vadd.f32 %v575, %v871
      %v873 = vpop.f32.mrb[0].mxu0
      %874 = vmatprep.mubr.bf16.mxu0 0
      %875 = vmatmul.mubr.bf16.gmra.mrb[0].mxu0 %v251
      %v876 = vpop.f32.mrb[0].mxu0
      %v877 = vadd.f32 %v580, %v876
      %v878 = vpop.f32.mrb[0].mxu0
      %v879 = vpop.f32.mrb[0].mxu0
      %v880 = vadd.f32 %v583, %v879
      %v881 = vpop.f32.mrb[0].mxu0
      %882 = vmatprep.mubr.bf16.mxu0 0
      %883 = vmatmul.mubr.bf16.gmra.mrb[0].mxu0 %v252
      %v884 = vpop.f32.mrb[0].mxu0
      %v885 = vadd.f32 %v588, %v884
      %v886 = vpop.f32.mrb[0].mxu0
      %v887 = vpop.f32.mrb[0].mxu0
      %v888 = vadd.f32 %v591, %v887
      %v889 = vpop.f32.mrb[0].mxu0
      %890 = vmatprep.mubr.bf16.mxu0 0
      %891 = vmatmul.mubr.bf16.gmra.mrb[0].mxu0 %v253
      %v892 = vpop.f32.mrb[0].mxu0
      %v893 = vadd.f32 %v596, %v892
      %v894 = vpop.f32.mrb[0].mxu0
      %v895 = vpop.f32.mrb[0].mxu0
      %v896 = vadd.f32 %v599, %v895
      %v897 = vpop.f32.mrb[0].mxu0
      %898 = vmatprep.mubr.bf16.mxu0 0
      %899 = vmatmul.mubr.bf16.gmra.mrb[0].mxu0 %v254
      %v900 = vpop.f32.mrb[0].mxu0
      %v901 = vadd.f32 %v604, %v900
      %v902 = vpop.f32.mrb[0].mxu0
      %v903 = vpop.f32.mrb[0].mxu0
      %v904 = vadd.f32 %v607, %v903
      %v905 = vpop.f32.mrb[0].mxu0
      %906 = vmatprep.mubr.bf16.mxu0 0
      %907 = vmatmul.mubr.bf16.gmra.mrb[0].mxu0 %v255
      %v908 = vpop.f32.mrb[0].mxu0
      %v909 = vadd.f32 %v612, %v908
      %v910 = vpop.f32.mrb[0].mxu0
      %v911 = vpop.f32.mrb[0].mxu0
      %v912 = vadd.f32 %v615, %v911
      %v913 = vpop.f32.mrb[0].mxu0
      %914 = vmatprep.mubr.bf16.mxu0 0
      %915 = vmatmul.mubr.bf16.gmra.mrb[0].mxu0 %v256
      %v916 = vpop.f32.mrb[0].mxu0
      %v917 = vadd.f32 %v620, %v916
      %v918 = vpop.f32.mrb[0].mxu0
      %v919 = vpop.f32.mrb[0].mxu0
      %v920 = vadd.f32 %v623, %v919
      %v921 = vpop.f32.mrb[0].mxu0
      %922 = vmatprep.mubr.bf16.mxu0 0
      %923 = vmatmul.mubr.bf16.gmra.mrb[0].mxu0 %v257
      %v924 = vpop.f32.mrb[0].mxu0
      %v925 = vadd.f32 %v628, %v924
      %v926 = vpop.f32.mrb[0].mxu0
      %v927 = vpop.f32.mrb[0].mxu0
      %v928 = vadd.f32 %v631, %v927
      %v929 = vpop.f32.mrb[0].mxu0
      %930 = vmatprep.mubr.bf16.mxu0 0
      %931 = vmatmul.mubr.bf16.gmra.mrb[0].mxu0 %v258
      %v932 = vpop.f32.mrb[0].mxu0
      %v933 = vadd.f32 %v636, %v932
      %v934 = vpop.f32.mrb[0].mxu0
      %v935 = vpop.f32.mrb[0].mxu0
      %v936 = vadd.f32 %v639, %v935
      %v937 = vpop.f32.mrb[0].mxu0
      %938 = vmatprep.mubr.bf16.mxu0 0
      %939 = vmatmul.mubr.bf16.gmra.mrb[0].mxu0 %v259
      %v940 = vpop.f32.mrb[0].mxu0
      %v941 = vadd.f32 %v644, %v940
      %v942 = vpop.f32.mrb[0].mxu0
      %v943 = vpop.f32.mrb[0].mxu0
      %v944 = vadd.f32 %v647, %v943
      %v945 = vpop.f32.mrb[0].mxu0
      %946 = vmatprep.mubr.bf16.mxu0 0
      %947 = vmatmul.mubr.bf16.gmra.mrb[0].mxu0 %v260
      %v948 = vpop.f32.mrb[0].mxu0
      %v949 = vadd.f32 %v652, %v948
      %v950 = vpop.f32.mrb[0].mxu0
      %v951 = vpop.f32.mrb[0].mxu0
      %v952 = vadd.f32 %v655, %v951
      %v953 = vpop.f32.mrb[0].mxu0
      %954 = vmatprep.mubr.bf16.mxu0 0
      %955 = vmatmul.mubr.bf16.gmra.mrb[0].mxu0 %v261
      %v956 = vpop.f32.mrb[0].mxu0
      %v957 = vadd.f32 %v660, %v956
      %v958 = vpop.f32.mrb[0].mxu0
      %v959 = vpop.f32.mrb[0].mxu0
      %v960 = vadd.f32 %v663, %v959
      %v961 = vpop.f32.mrb[0].mxu0
      %962 = vmatprep.mubr.bf16.mxu0 0
      %963 = vmatmul.mubr.bf16.gmra.mrb[0].mxu0 %v262
      %v964 = vpop.f32.mrb[0].mxu0
      %v965 = vadd.f32 %v668, %v964
      %v966 = vpop.f32.mrb[0].mxu0
      %v967 = vpop.f32.mrb[0].mxu0
      %v968 = vadd.f32 %v671, %v967
      %v969 = vpop.f32.mrb[0].mxu0
      %970 = vdwg.mxu0
      %v971 = vld [vmem:[%s168 + $0x2] sm:$0xff]
      %v972 = vld [vmem:[%s168 + $0xa] sm:$0xff]
      %v973 = vld [vmem:[%s168 + $0x12] sm:$0xff]
      %v974 = vld [vmem:[%s168 + $0x1a] sm:$0xff]
      %v975 = vld [vmem:[%s168 + $0x22] sm:$0xff]
      %v976 = vld [vmem:[%s168 + $0x2a] sm:$0xff]
      %v977 = vld [vmem:[%s168 + $0x32] sm:$0xff]
      %v978 = vld [vmem:[%s168 + $0x3a] sm:$0xff]
      %v979 = vld [vmem:[%s168 + $0x42] sm:$0xff]
      %v980 = vld [vmem:[%s168 + $0x4a] sm:$0xff]
      %v981 = vld [vmem:[%s168 + $0x52] sm:$0xff]
      %v982 = vld [vmem:[%s168 + $0x5a] sm:$0xff]
      %v983 = vld [vmem:[%s168 + $0x62] sm:$0xff]
      %v984 = vld [vmem:[%s168 + $0x6a] sm:$0xff]
      %v985 = vld [vmem:[%s168 + $0x72] sm:$0xff]
      %v986 = vld [vmem:[%s168 + $0x7a] sm:$0xff]
      %v987 = vld [vmem:[%s168 + $0x82] sm:$0xff]
      %v988 = vld [vmem:[%s168 + $0x8a] sm:$0xff]
      %v989 = vld [vmem:[%s168 + $0x92] sm:$0xff]
      %v990 = vld [vmem:[%s168 + $0x9a] sm:$0xff]
      %v991 = vld [vmem:[%s168 + $0xa2] sm:$0xff]
      %v992 = vld [vmem:[%s168 + $0xaa] sm:$0xff]
      %v993 = vld [vmem:[%s168 + $0xb2] sm:$0xff]
      %v994 = vld [vmem:[%s168 + $0xba] sm:$0xff]
      %v995 = vld [vmem:[%s168 + $0xc2] sm:$0xff]
      %v996 = vld [vmem:[%s168 + $0xca] sm:$0xff]
      %v997 = vld [vmem:[%s168 + $0xd2] sm:$0xff]
      %v998 = vld [vmem:[%s168 + $0xda] sm:$0xff]
      %v999 = vld [vmem:[%s168 + $0xe2] sm:$0xff]
      %v1000 = vld [vmem:[%s168 + $0xea] sm:$0xff]
      %v1001 = vld [vmem:[%s168 + $0xf2] sm:$0xff]
      %v1002 = vld [vmem:[%s168 + $0xfa] sm:$0xff]
      %v1003 = vld [vmem:[%s168 + $0x102] sm:$0xff]
      %v1004 = vld [vmem:[%s168 + $0x10a] sm:$0xff]
      %v1005 = vld [vmem:[%s168 + $0x112] sm:$0xff]
      %v1006 = vld [vmem:[%s168 + $0x11a] sm:$0xff]
      %v1007 = vld [vmem:[%s168 + $0x122] sm:$0xff]
      %v1008 = vld [vmem:[%s168 + $0x12a] sm:$0xff]
      %v1009 = vld [vmem:[%s168 + $0x132] sm:$0xff]
      %v1010 = vld [vmem:[%s168 + $0x13a] sm:$0xff]
      %v1011 = vld [vmem:[%s168 + $0x142] sm:$0xff]
      %v1012 = vld [vmem:[%s168 + $0x14a] sm:$0xff]
      %v1013 = vld [vmem:[%s168 + $0x152] sm:$0xff]
      %v1014 = vld [vmem:[%s168 + $0x15a] sm:$0xff]
      %v1015 = vld [vmem:[%s168 + $0x162] sm:$0xff]
      %v1016 = vld [vmem:[%s168 + $0x16a] sm:$0xff]
      %v1017 = vld [vmem:[%s168 + $0x172] sm:$0xff]
      %v1018 = vld [vmem:[%s168 + $0x17a] sm:$0xff]
      %v1019 = vld [vmem:[%s168 + $0x182] sm:$0xff]
      %v1020 = vld [vmem:[%s168 + $0x18a] sm:$0xff]
      %v1021 = vld [vmem:[%s168 + $0x192] sm:$0xff]
      %v1022 = vld [vmem:[%s168 + $0x19a] sm:$0xff]
      %v1023 = vld [vmem:[%s168 + $0x1a2] sm:$0xff]
      %v1024 = vld [vmem:[%s168 + $0x1aa] sm:$0xff]
      %v1025 = vpack.c.bf16 %v972, %v971
      %v1026 = vpack.c.bf16 %v974, %v973
      %v1027 = vpack.c.bf16 %v976, %v975
      %v1028 = vpack.c.bf16 %v978, %v977
      %v1029 = vpack.c.bf16 %v980, %v979
      %v1030 = vpack.c.bf16 %v982, %v981
      %v1031 = vpack.c.bf16 %v984, %v983
      %v1032 = vpack.c.bf16 %v986, %v985
      %v1033 = vpack.c.bf16 %v988, %v987
      %v1034 = vpack.c.bf16 %v990, %v989
      %v1035 = vpack.c.bf16 %v992, %v991
      %v1036 = vpack.c.bf16 %v994, %v993
      %v1037 = vpack.c.bf16 %v996, %v995
      %v1038 = vpack.c.bf16 %v998, %v997
      %v1039 = vpack.c.bf16 %v1000, %v999
      %v1040 = vpack.c.bf16 %v1002, %v1001
      %v1041 = vpack.c.bf16 %v1004, %v1003
      %v1042 = vpack.c.bf16 %v1006, %v1005
      %v1043 = vpack.c.bf16 %v1008, %v1007
      %v1044 = vpack.c.bf16 %v1010, %v1009
      %v1045 = vpack.c.bf16 %v1012, %v1011
      %v1046 = vpack.c.bf16 %v1014, %v1013
      %v1047 = vpack.c.bf16 %v1016, %v1015
      %v1048 = vpack.c.bf16 %v1018, %v1017
      %v1049 = vpack.c.bf16 %v1020, %v1019
      %v1050 = vpack.c.bf16 %v1022, %v1021
      %v1051 = vpack.c.bf16 %v1024, %v1023
      %s1052 = scalar_lea.vmem %s172, 128
      %v1053 = vld [vmem:[%s1052] sm:$0xf]
      %v1054 = vld [vmem:[%s1052 + $0x4] sm:$0xf]
      %v1055 = vld [vmem:[%s1052 + $0x8] sm:$0xf]
      %v1056 = vld [vmem:[%s1052 + $0xc] sm:$0xf]
      %v1057 = vld [vmem:[%s1052 + $0x10] sm:$0xf]
      %v1058 = vld [vmem:[%s1052 + $0x14] sm:$0xf]
      %v1059 = vld [vmem:[%s1052 + $0x18] sm:$0xf]
      %v1060 = vld [vmem:[%s1052 + $0x1c] sm:$0xf]
      %v1061 = vld [vmem:[%s1052 + $0x20] sm:$0xf]
      %v1062 = vld [vmem:[%s1052 + $0x24] sm:$0xf]
      %v1063 = vld [vmem:[%s1052 + $0x28] sm:$0xf]
      %v1064 = vld [vmem:[%s1052 + $0x2c] sm:$0xf]
      %v1065 = vld [vmem:[%s1052 + $0x30] sm:$0xf]
      %v1066 = vld [vmem:[%s1052 + $0x34] sm:$0xf]
      %v1067 = vld [vmem:[%s1052 + $0x38] sm:$0xf]
      %v1068 = vld [vmem:[%s1052 + $0x3c] sm:$0xf]
      %v1085 = vunpack.c.l.b16 %v1053
      %v1086 = vunpack.c.l.b16 %v1054
      %v1087 = vunpack.c.l.b16 %v1055
      %v1088 = vunpack.c.l.b16 %v1056
      %v1089 = vunpack.c.l.b16 %v1057
      %v1090 = vunpack.c.l.b16 %v1058
      %v1091 = vunpack.c.l.b16 %v1059
      %v1092 = vunpack.c.l.b16 %v1060
      %v1093 = vunpack.c.l.b16 %v1061
      %v1094 = vunpack.c.l.b16 %v1062
      %v1095 = vunpack.c.l.b16 %v1063
      %v1096 = vunpack.c.l.b16 %v1064
      %v1097 = vunpack.c.l.b16 %v1065
      %v1098 = vunpack.c.l.b16 %v1066
      %v1099 = vunpack.c.l.b16 %v1067
      %v1100 = vunpack.c.l.b16 %v1068
      %v1101 = vpack.c.b16 %v1086, %v1085
      %v1102 = vpack.c.b16 %v1088, %v1087
      %v1103 = vpack.c.b16 %v1090, %v1089
      %v1104 = vpack.c.b16 %v1092, %v1091
      %v1105 = vpack.c.b16 %v1094, %v1093
      %v1106 = vpack.c.b16 %v1096, %v1095
      %v1107 = vpack.c.b16 %v1098, %v1097
      %v1108 = vpack.c.b16 %v1100, %v1099
      %1117 = vmatprep.subr.bf16.mxu0 0
      %1118 = vmatpush1.bf16.msra.mxu0 %v1101
      %1119 = vmatprep.subr.bf16.mxu0 0
      %1120 = vmatpush1.bf16.msra.mxu0 %v1102
      %1121 = vmatprep.subr.bf16.mxu0 0
      %1122 = vmatpush1.bf16.msra.mxu0 %v1103
      %1123 = vmatprep.subr.bf16.mxu0 0
      %1124 = vmatpush1.bf16.msra.mxu0 %v1104
      %1125 = vmatprep.subr.bf16.mxu0 0
      %1126 = vmatpush1.bf16.msra.mxu0 %v1105
      %1127 = vmatprep.subr.bf16.mxu0 0
      %1128 = vmatpush1.bf16.msra.mxu0 %v1106
      %1129 = vmatprep.subr.bf16.mxu0 0
      %1130 = vmatpush1.bf16.msra.mxu0 %v1107
      %1131 = vmatprep.subr.bf16.mxu0 0
      %1132 = vmatpush1.bf16.msra.mxu0 %v1108
      %1133 = vmatprep.subr.bf16.mxu0 0
      %1134 = vmatpush1.bf16.msra.mxu0 0
      %1135 = vmatprep.subr.bf16.mxu0 0
      %1136 = vmatpush1.bf16.msra.mxu0 0
      %1137 = vmatprep.subr.bf16.mxu0 0
      %1138 = vmatpush1.bf16.msra.mxu0 0
      %1139 = vmatprep.subr.bf16.mxu0 0
      %1140 = vmatpush1.bf16.msra.mxu0 0
      %1141 = vmatprep.subr.bf16.mxu0 0
      %1142 = vmatpush1.bf16.msra.mxu0 0
      %1143 = vmatprep.subr.bf16.mxu0 0
      %1144 = vmatpush1.bf16.msra.mxu0 0
      %1145 = vmatprep.subr.bf16.mxu0 0
      %1146 = vmatpush1.bf16.msra.mxu0 0
      %1147 = vmatprep.subr.bf16.mxu0 0
      %1148 = vmatpush1.bf16.msra.mxu0 0
      %1149 = vmatprep.mubr.bf16.mxu0 0
      %1150 = vmatmul.mubr.bf16.gmra.mrb[0].mxu0 %v1025
      %v1151 = vpop.f32.mrb[0].mxu0
      %v1152 = vadd.f32 0.0, %v1151
      %v1153 = vpop.f32.mrb[0].mxu0
      %v1154 = vpop.f32.mrb[0].mxu0
      %v1155 = vadd.f32 0.0, %v1154
      %v1156 = vpop.f32.mrb[0].mxu0
      %1157 = vmatprep.mubr.bf16.mxu0 0
      %1158 = vmatmul.mubr.bf16.gmra.mrb[0].mxu0 %v1026
      %v1159 = vpop.f32.mrb[0].mxu0
      %v1160 = vadd.f32 0.0, %v1159
      %v1161 = vpop.f32.mrb[0].mxu0
      %v1162 = vpop.f32.mrb[0].mxu0
      %v1163 = vadd.f32 0.0, %v1162
      %v1164 = vpop.f32.mrb[0].mxu0
      %1165 = vmatprep.mubr.bf16.mxu0 0
      %1166 = vmatmul.mubr.bf16.gmra.mrb[0].mxu0 %v1027
      %v1167 = vpop.f32.mrb[0].mxu0
      %v1168 = vadd.f32 0.0, %v1167
      %v1169 = vpop.f32.mrb[0].mxu0
      %v1170 = vpop.f32.mrb[0].mxu0
      %v1171 = vadd.f32 0.0, %v1170
      %v1172 = vpop.f32.mrb[0].mxu0
      %1173 = vmatprep.mubr.bf16.mxu0 0
      %1174 = vmatmul.mubr.bf16.gmra.mrb[0].mxu0 %v1028
      %v1175 = vpop.f32.mrb[0].mxu0
      %v1176 = vadd.f32 0.0, %v1175
      %v1177 = vpop.f32.mrb[0].mxu0
      %v1178 = vpop.f32.mrb[0].mxu0
      %v1179 = vadd.f32 0.0, %v1178
      %v1180 = vpop.f32.mrb[0].mxu0
      %1181 = vmatprep.mubr.bf16.mxu0 0
      %1182 = vmatmul.mubr.bf16.gmra.mrb[0].mxu0 %v1029
      %v1183 = vpop.f32.mrb[0].mxu0
      %v1184 = vadd.f32 0.0, %v1183
      %v1185 = vpop.f32.mrb[0].mxu0
      %v1186 = vpop.f32.mrb[0].mxu0
      %v1187 = vadd.f32 0.0, %v1186
      %v1188 = vpop.f32.mrb[0].mxu0
      %1189 = vmatprep.mubr.bf16.mxu0 0
      %1190 = vmatmul.mubr.bf16.gmra.mrb[0].mxu0 %v1030
      %v1191 = vpop.f32.mrb[0].mxu0
      %v1192 = vadd.f32 0.0, %v1191
      %v1193 = vpop.f32.mrb[0].mxu0
      %v1194 = vpop.f32.mrb[0].mxu0
      %v1195 = vadd.f32 0.0, %v1194
      %v1196 = vpop.f32.mrb[0].mxu0
      %1197 = vmatprep.mubr.bf16.mxu0 0
      %1198 = vmatmul.mubr.bf16.gmra.mrb[0].mxu0 %v1031
      %v1199 = vpop.f32.mrb[0].mxu0
      %v1200 = vadd.f32 0.0, %v1199
      %v1201 = vpop.f32.mrb[0].mxu0
      %v1202 = vpop.f32.mrb[0].mxu0
      %v1203 = vadd.f32 0.0, %v1202
      %v1204 = vpop.f32.mrb[0].mxu0
      %1205 = vmatprep.mubr.bf16.mxu0 0
      %1206 = vmatmul.mubr.bf16.gmra.mrb[0].mxu0 %v1032
      %v1207 = vpop.f32.mrb[0].mxu0
      %v1208 = vadd.f32 0.0, %v1207
      %v1209 = vpop.f32.mrb[0].mxu0
      %v1210 = vpop.f32.mrb[0].mxu0
      %v1211 = vadd.f32 0.0, %v1210
      %v1212 = vpop.f32.mrb[0].mxu0
      %1213 = vmatprep.mubr.bf16.mxu0 0
      %1214 = vmatmul.mubr.bf16.gmra.mrb[0].mxu0 %v1033
      %v1215 = vpop.f32.mrb[0].mxu0
      %v1216 = vadd.f32 0.0, %v1215
      %v1217 = vpop.f32.mrb[0].mxu0
      %v1218 = vpop.f32.mrb[0].mxu0
      %v1219 = vadd.f32 0.0, %v1218
      %v1220 = vpop.f32.mrb[0].mxu0
      %1221 = vmatprep.mubr.bf16.mxu0 0
      %1222 = vmatmul.mubr.bf16.gmra.mrb[0].mxu0 %v1034
      %v1223 = vpop.f32.mrb[0].mxu0
      %v1224 = vadd.f32 0.0, %v1223
      %v1225 = vpop.f32.mrb[0].mxu0
      %v1226 = vpop.f32.mrb[0].mxu0
      %v1227 = vadd.f32 0.0, %v1226
      %v1228 = vpop.f32.mrb[0].mxu0
      %1229 = vmatprep.mubr.bf16.mxu0 0
      %1230 = vmatmul.mubr.bf16.gmra.mrb[0].mxu0 %v1035
      %v1231 = vpop.f32.mrb[0].mxu0
      %v1232 = vadd.f32 0.0, %v1231
      %v1233 = vpop.f32.mrb[0].mxu0
      %v1234 = vpop.f32.mrb[0].mxu0
      %v1235 = vadd.f32 0.0, %v1234
      %v1236 = vpop.f32.mrb[0].mxu0
      %1237 = vmatprep.mubr.bf16.mxu0 0
      %1238 = vmatmul.mubr.bf16.gmra.mrb[0].mxu0 %v1036
      %v1239 = vpop.f32.mrb[0].mxu0
      %v1240 = vadd.f32 0.0, %v1239
      %v1241 = vpop.f32.mrb[0].mxu0
      %v1242 = vpop.f32.mrb[0].mxu0
      %v1243 = vadd.f32 0.0, %v1242
      %v1244 = vpop.f32.mrb[0].mxu0
      %1245 = vmatprep.mubr.bf16.mxu0 0
      %1246 = vmatmul.mubr.bf16.gmra.mrb[0].mxu0 %v1037
      %v1247 = vpop.f32.mrb[0].mxu0
      %v1248 = vadd.f32 0.0, %v1247
      %v1249 = vpop.f32.mrb[0].mxu0
      %v1250 = vpop.f32.mrb[0].mxu0
      %v1251 = vadd.f32 0.0, %v1250
      %v1252 = vpop.f32.mrb[0].mxu0
      %1253 = vmatprep.mubr.bf16.mxu0 0
      %1254 = vmatmul.mubr.bf16.gmra.mrb[0].mxu0 %v1038
      %v1255 = vpop.f32.mrb[0].mxu0
      %v1256 = vadd.f32 0.0, %v1255
      %v1257 = vpop.f32.mrb[0].mxu0
      %v1258 = vpop.f32.mrb[0].mxu0
      %v1259 = vadd.f32 0.0, %v1258
      %v1260 = vpop.f32.mrb[0].mxu0
      %1261 = vmatprep.mubr.bf16.mxu0 0
      %1262 = vmatmul.mubr.bf16.gmra.mrb[0].mxu0 %v1039
      %v1263 = vpop.f32.mrb[0].mxu0
      %v1264 = vadd.f32 0.0, %v1263
      %v1265 = vpop.f32.mrb[0].mxu0
      %v1266 = vpop.f32.mrb[0].mxu0
      %v1267 = vadd.f32 0.0, %v1266
      %v1268 = vpop.f32.mrb[0].mxu0
      %1269 = vmatprep.mubr.bf16.mxu0 0
      %1270 = vmatmul.mubr.bf16.gmra.mrb[0].mxu0 %v1040
      %v1271 = vpop.f32.mrb[0].mxu0
      %v1272 = vadd.f32 0.0, %v1271
      %v1273 = vpop.f32.mrb[0].mxu0
      %v1274 = vpop.f32.mrb[0].mxu0
      %v1275 = vadd.f32 0.0, %v1274
      %v1276 = vpop.f32.mrb[0].mxu0
      %1277 = vmatprep.mubr.bf16.mxu0 0
      %1278 = vmatmul.mubr.bf16.gmra.mrb[0].mxu0 %v1041
      %v1279 = vpop.f32.mrb[0].mxu0
      %v1280 = vadd.f32 0.0, %v1279
      %v1281 = vpop.f32.mrb[0].mxu0
      %v1282 = vpop.f32.mrb[0].mxu0
      %v1283 = vadd.f32 0.0, %v1282
      %v1284 = vpop.f32.mrb[0].mxu0
      %1285 = vmatprep.mubr.bf16.mxu0 0
      %1286 = vmatmul.mubr.bf16.gmra.mrb[0].mxu0 %v1042
      %v1287 = vpop.f32.mrb[0].mxu0
      %v1288 = vadd.f32 0.0, %v1287
      %v1289 = vpop.f32.mrb[0].mxu0
      %v1290 = vpop.f32.mrb[0].mxu0
      %v1291 = vadd.f32 0.0, %v1290
      %v1292 = vpop.f32.mrb[0].mxu0
      %1293 = vmatprep.mubr.bf16.mxu0 0
      %1294 = vmatmul.mubr.bf16.gmra.mrb[0].mxu0 %v1043
      %v1295 = vpop.f32.mrb[0].mxu0
      %v1296 = vadd.f32 0.0, %v1295
      %v1297 = vpop.f32.mrb[0].mxu0
      %v1298 = vpop.f32.mrb[0].mxu0
      %v1299 = vadd.f32 0.0, %v1298
      %v1300 = vpop.f32.mrb[0].mxu0
      %1301 = vmatprep.mubr.bf16.mxu0 0
      %1302 = vmatmul.mubr.bf16.gmra.mrb[0].mxu0 %v1044
      %v1303 = vpop.f32.mrb[0].mxu0
      %v1304 = vadd.f32 0.0, %v1303
      %v1305 = vpop.f32.mrb[0].mxu0
      %v1306 = vpop.f32.mrb[0].mxu0
      %v1307 = vadd.f32 0.0, %v1306
      %v1308 = vpop.f32.mrb[0].mxu0
      %1309 = vmatprep.mubr.bf16.mxu0 0
      %1310 = vmatmul.mubr.bf16.gmra.mrb[0].mxu0 %v1045
      %v1311 = vpop.f32.mrb[0].mxu0
      %v1312 = vadd.f32 0.0, %v1311
      %v1313 = vpop.f32.mrb[0].mxu0
      %v1314 = vpop.f32.mrb[0].mxu0
      %v1315 = vadd.f32 0.0, %v1314
      %v1316 = vpop.f32.mrb[0].mxu0
      %1317 = vmatprep.mubr.bf16.mxu0 0
      %1318 = vmatmul.mubr.bf16.gmra.mrb[0].mxu0 %v1046
      %v1319 = vpop.f32.mrb[0].mxu0
      %v1320 = vadd.f32 0.0, %v1319
      %v1321 = vpop.f32.mrb[0].mxu0
      %v1322 = vpop.f32.mrb[0].mxu0
      %v1323 = vadd.f32 0.0, %v1322
      %v1324 = vpop.f32.mrb[0].mxu0
      %1325 = vmatprep.mubr.bf16.mxu0 0
      %1326 = vmatmul.mubr.bf16.gmra.mrb[0].mxu0 %v1047
      %v1327 = vpop.f32.mrb[0].mxu0
      %v1328 = vadd.f32 0.0, %v1327
      %v1329 = vpop.f32.mrb[0].mxu0
      %v1330 = vpop.f32.mrb[0].mxu0
      %v1331 = vadd.f32 0.0, %v1330
      %v1332 = vpop.f32.mrb[0].mxu0
      %1333 = vmatprep.mubr.bf16.mxu0 0
      %1334 = vmatmul.mubr.bf16.gmra.mrb[0].mxu0 %v1048
      %v1335 = vpop.f32.mrb[0].mxu0
      %v1336 = vadd.f32 0.0, %v1335
      %v1337 = vpop.f32.mrb[0].mxu0
      %v1338 = vpop.f32.mrb[0].mxu0
      %v1339 = vadd.f32 0.0, %v1338
      %v1340 = vpop.f32.mrb[0].mxu0
      %1341 = vmatprep.mubr.bf16.mxu0 0
      %1342 = vmatmul.mubr.bf16.gmra.mrb[0].mxu0 %v1049
      %v1343 = vpop.f32.mrb[0].mxu0
      %v1344 = vadd.f32 0.0, %v1343
      %v1345 = vpop.f32.mrb[0].mxu0
      %v1346 = vpop.f32.mrb[0].mxu0
      %v1347 = vadd.f32 0.0, %v1346
      %v1348 = vpop.f32.mrb[0].mxu0
      %1349 = vmatprep.mubr.bf16.mxu0 0
      %1350 = vmatmul.mubr.bf16.gmra.mrb[0].mxu0 %v1050
      %v1351 = vpop.f32.mrb[0].mxu0
      %v1352 = vadd.f32 0.0, %v1351
      %v1353 = vpop.f32.mrb[0].mxu0
      %v1354 = vpop.f32.mrb[0].mxu0
      %v1355 = vadd.f32 0.0, %v1354
      %v1356 = vpop.f32.mrb[0].mxu0
      %1357 = vmatprep.mubr.bf16.mxu0 0
      %1358 = vmatmul.mubr.bf16.gmra.mrb[0].mxu0 %v1051
      %v1359 = vpop.f32.mrb[0].mxu0
      %v1360 = vadd.f32 0.0, %v1359
      %v1361 = vpop.f32.mrb[0].mxu0
      %v1362 = vpop.f32.mrb[0].mxu0
      %v1363 = vadd.f32 0.0, %v1362
      %v1364 = vpop.f32.mrb[0].mxu0
      %1365 = vdwg.mxu0
      %v1366 = vadd.f32 %v757, %v1152
      %v1367 = vadd.f32 %v760, %v1155
      %v1368 = vadd.f32 %v765, %v1160
      %v1369 = vadd.f32 %v768, %v1163
      %v1370 = vadd.f32 %v773, %v1168
      %v1371 = vadd.f32 %v776, %v1171
      %v1372 = vadd.f32 %v781, %v1176
      %v1373 = vadd.f32 %v784, %v1179
      %v1374 = vadd.f32 %v789, %v1184
      %v1375 = vadd.f32 %v792, %v1187
      %v1376 = vadd.f32 %v797, %v1192
      %v1377 = vadd.f32 %v800, %v1195
      %v1378 = vadd.f32 %v805, %v1200
      %v1379 = vadd.f32 %v808, %v1203
      %v1380 = vadd.f32 %v813, %v1208
      %v1381 = vadd.f32 %v816, %v1211
      %v1382 = vadd.f32 %v821, %v1216
      %v1383 = vadd.f32 %v824, %v1219
      %v1384 = vadd.f32 %v829, %v1224
      %v1385 = vadd.f32 %v832, %v1227
      %v1386 = vadd.f32 %v837, %v1232
      %v1387 = vadd.f32 %v840, %v1235
      %v1388 = vadd.f32 %v845, %v1240
      %v1389 = vadd.f32 %v848, %v1243
      %v1390 = vadd.f32 %v853, %v1248
      %v1391 = vadd.f32 %v856, %v1251
      %v1392 = vadd.f32 %v861, %v1256
      %v1393 = vadd.f32 %v864, %v1259
      %v1394 = vadd.f32 %v869, %v1264
      %v1395 = vadd.f32 %v872, %v1267
      %v1396 = vadd.f32 %v877, %v1272
      %v1397 = vadd.f32 %v880, %v1275
      %v1398 = vadd.f32 %v885, %v1280
      %v1399 = vadd.f32 %v888, %v1283
      %v1400 = vadd.f32 %v893, %v1288
      %v1401 = vadd.f32 %v896, %v1291
      %v1402 = vadd.f32 %v901, %v1296
      %v1403 = vadd.f32 %v904, %v1299
      %v1404 = vadd.f32 %v909, %v1304
      %v1405 = vadd.f32 %v912, %v1307
      %v1406 = vadd.f32 %v917, %v1312
      %v1407 = vadd.f32 %v920, %v1315
      %v1408 = vadd.f32 %v925, %v1320
      %v1409 = vadd.f32 %v928, %v1323
      %v1410 = vadd.f32 %v933, %v1328
      %v1411 = vadd.f32 %v936, %v1331
      %v1412 = vadd.f32 %v941, %v1336
      %v1413 = vadd.f32 %v944, %v1339
      %v1414 = vadd.f32 %v949, %v1344
      %v1415 = vadd.f32 %v952, %v1347
      %v1416 = vadd.f32 %v957, %v1352
      %v1417 = vadd.f32 %v960, %v1355
      %v1418 = vadd.f32 %v965, %v1360
      %v1419 = vadd.f32 %v968, %v1363
      %v1420 = vld [vmem:[%s168 + $0x18] sm:$0xff]
      %v1421 = vld [vmem:[%s168 + $0x20] sm:$0xff]
      %v1422 = vld [vmem:[%s168 + $0x28] sm:$0xff]
      %v1423 = vld [vmem:[%s168 + $0x30] sm:$0xff]
      %v1424 = vld [vmem:[%s168 + $0x38] sm:$0xff]
      %v1425 = vld [vmem:[%s168 + $0x40] sm:$0xff]
      %v1426 = vld [vmem:[%s168 + $0x48] sm:$0xff]
      %v1427 = vld [vmem:[%s168 + $0x50] sm:$0xff]
      %v1428 = vld [vmem:[%s168 + $0x58] sm:$0xff]
      %v1429 = vld [vmem:[%s168 + $0x60] sm:$0xff]
      %v1430 = vld [vmem:[%s168 + $0x68] sm:$0xff]
      %v1431 = vld [vmem:[%s168 + $0x70] sm:$0xff]
      %v1432 = vld [vmem:[%s168 + $0x78] sm:$0xff]
      %v1433 = vld [vmem:[%s168 + $0x80] sm:$0xff]
      %v1434 = vld [vmem:[%s168 + $0x88] sm:$0xff]
      %v1435 = vld [vmem:[%s168 + $0x90] sm:$0xff]
      %v1436 = vld [vmem:[%s168 + $0x98] sm:$0xff]
      %v1437 = vld [vmem:[%s168 + $0xa0] sm:$0xff]
      %v1438 = vld [vmem:[%s168 + $0xa8] sm:$0xff]
      %v1439 = vld [vmem:[%s168 + $0xb0] sm:$0xff]
      %v1440 = vld [vmem:[%s168 + $0xb8] sm:$0xff]
      %v1441 = vld [vmem:[%s168 + $0xc0] sm:$0xff]
      %v1442 = vld [vmem:[%s168 + $0xc8] sm:$0xff]
      %v1443 = vld [vmem:[%s168 + $0xd0] sm:$0xff]
      %v1444 = vld [vmem:[%s168 + $0xd8] sm:$0xff]
      %v1445 = vld [vmem:[%s168 + $0xe0] sm:$0xff]
      %v1446 = vld [vmem:[%s168 + $0xe8] sm:$0xff]
      %v1447 = vld [vmem:[%s168 + $0xf0] sm:$0xff]
      %v1448 = vld [vmem:[%s168 + $0xf8] sm:$0xff]
      %v1449 = vld [vmem:[%s168 + $0x100] sm:$0xff]
      %v1450 = vld [vmem:[%s168 + $0x108] sm:$0xff]
      %v1451 = vld [vmem:[%s168 + $0x110] sm:$0xff]
      %v1452 = vld [vmem:[%s168 + $0x118] sm:$0xff]
      %v1453 = vld [vmem:[%s168 + $0x120] sm:$0xff]
      %v1454 = vld [vmem:[%s168 + $0x128] sm:$0xff]
      %v1455 = vld [vmem:[%s168 + $0x130] sm:$0xff]
      %v1456 = vld [vmem:[%s168 + $0x138] sm:$0xff]
      %v1457 = vld [vmem:[%s168 + $0x140] sm:$0xff]
      %v1458 = vld [vmem:[%s168 + $0x148] sm:$0xff]
      %v1459 = vld [vmem:[%s168 + $0x150] sm:$0xff]
      %v1460 = vld [vmem:[%s168 + $0x158] sm:$0xff]
      %v1461 = vld [vmem:[%s168 + $0x160] sm:$0xff]
      %v1462 = vld [vmem:[%s168 + $0x168] sm:$0xff]
      %v1463 = vld [vmem:[%s168 + $0x170] sm:$0xff]
      %v1464 = vld [vmem:[%s168 + $0x178] sm:$0xff]
      %v1465 = vld [vmem:[%s168 + $0x180] sm:$0xff]
      %v1466 = vld [vmem:[%s168 + $0x188] sm:$0xff]
      %v1467 = vld [vmem:[%s168 + $0x190] sm:$0xff]
      %v1468 = vld [vmem:[%s168 + $0x198] sm:$0xff]
      %v1469 = vld [vmem:[%s168 + $0x1a0] sm:$0xff]
      %v1470 = vld [vmem:[%s168 + $0x1a8] sm:$0xff]
      %v1471 = vld [vmem:[%s168 + $0x1b0] sm:$0xff]
      %v1472 = vld [vmem:[%s168 + $0x1b8] sm:$0xff]
      %v1473 = vld [vmem:[%s168 + $0x1c0] sm:$0xff]
      %v1474 = vpack.c.bf16 %v1421, %v1420
      %v1475 = vpack.c.bf16 %v1423, %v1422
      %v1476 = vpack.c.bf16 %v1425, %v1424
      %v1477 = vpack.c.bf16 %v1427, %v1426
      %v1478 = vpack.c.bf16 %v1429, %v1428
      %v1479 = vpack.c.bf16 %v1431, %v1430
      %v1480 = vpack.c.bf16 %v1433, %v1432
      %v1481 = vpack.c.bf16 %v1435, %v1434
      %v1482 = vpack.c.bf16 %v1437, %v1436
      %v1483 = vpack.c.bf16 %v1439, %v1438
      %v1484 = vpack.c.bf16 %v1441, %v1440
      %v1485 = vpack.c.bf16 %v1443, %v1442
      %v1486 = vpack.c.bf16 %v1445, %v1444
      %v1487 = vpack.c.bf16 %v1447, %v1446
      %v1488 = vpack.c.bf16 %v1449, %v1448
      %v1489 = vpack.c.bf16 %v1451, %v1450
      %v1490 = vpack.c.bf16 %v1453, %v1452
      %v1491 = vpack.c.bf16 %v1455, %v1454
      %v1492 = vpack.c.bf16 %v1457, %v1456
      %v1493 = vpack.c.bf16 %v1459, %v1458
      %v1494 = vpack.c.bf16 %v1461, %v1460
      %v1495 = vpack.c.bf16 %v1463, %v1462
      %v1496 = vpack.c.bf16 %v1465, %v1464
      %v1497 = vpack.c.bf16 %v1467, %v1466
      %v1498 = vpack.c.bf16 %v1469, %v1468
      %v1499 = vpack.c.bf16 %v1471, %v1470
      %v1500 = vpack.c.bf16 %v1473, %v1472
      %s1501 = scalar_lea.vmem %s172, 192
      %v1502 = vld [vmem:[%s1501] sm:$0xf]
      %v1503 = vld [vmem:[%s1501 + $0x4] sm:$0xf]
      %v1504 = vld [vmem:[%s1501 + $0x8] sm:$0xf]
      %v1505 = vld [vmem:[%s1501 + $0xc] sm:$0xf]
      %v1506 = vld [vmem:[%s1501 + $0x10] sm:$0xf]
      %v1507 = vld [vmem:[%s1501 + $0x14] sm:$0xf]
      %v1508 = vld [vmem:[%s1501 + $0x18] sm:$0xf]
      %v1509 = vld [vmem:[%s1501 + $0x1c] sm:$0xf]
      %v1510 = vld [vmem:[%s1501 + $0x20] sm:$0xf]
      %v1511 = vld [vmem:[%s1501 + $0x24] sm:$0xf]
      %v1512 = vld [vmem:[%s1501 + $0x28] sm:$0xf]
      %v1513 = vld [vmem:[%s1501 + $0x2c] sm:$0xf]
      %v1514 = vld [vmem:[%s1501 + $0x30] sm:$0xf]
      %v1515 = vld [vmem:[%s1501 + $0x34] sm:$0xf]
      %v1516 = vld [vmem:[%s1501 + $0x38] sm:$0xf]
      %v1517 = vld [vmem:[%s1501 + $0x3c] sm:$0xf]
      %v1534 = vunpack.c.l.b16 %v1502
      %v1535 = vunpack.c.l.b16 %v1503
      %v1536 = vunpack.c.l.b16 %v1504
      %v1537 = vunpack.c.l.b16 %v1505
      %v1538 = vunpack.c.l.b16 %v1506
      %v1539 = vunpack.c.l.b16 %v1507
      %v1540 = vunpack.c.l.b16 %v1508
      %v1541 = vunpack.c.l.b16 %v1509
      %v1542 = vunpack.c.l.b16 %v1510
      %v1543 = vunpack.c.l.b16 %v1511
      %v1544 = vunpack.c.l.b16 %v1512
      %v1545 = vunpack.c.l.b16 %v1513
      %v1546 = vunpack.c.l.b16 %v1514
      %v1547 = vunpack.c.l.b16 %v1515
      %v1548 = vunpack.c.l.b16 %v1516
      %v1549 = vunpack.c.l.b16 %v1517
      %v1550 = vpack.c.b16 %v1535, %v1534
      %v1551 = vpack.c.b16 %v1537, %v1536
      %v1552 = vpack.c.b16 %v1539, %v1538
      %v1553 = vpack.c.b16 %v1541, %v1540
      %v1554 = vpack.c.b16 %v1543, %v1542
      %v1555 = vpack.c.b16 %v1545, %v1544
      %v1556 = vpack.c.b16 %v1547, %v1546
      %v1557 = vpack.c.b16 %v1549, %v1548
      %1566 = vmatprep.subr.bf16.mxu0 0
      %1567 = vmatpush1.bf16.msra.mxu0 %v1550
      %1568 = vmatprep.subr.bf16.mxu0 0
      %1569 = vmatpush1.bf16.msra.mxu0 %v1551
      %1570 = vmatprep.subr.bf16.mxu0 0
      %1571 = vmatpush1.bf16.msra.mxu0 %v1552
      %1572 = vmatprep.subr.bf16.mxu0 0
      %1573 = vmatpush1.bf16.msra.mxu0 %v1553
      %1574 = vmatprep.subr.bf16.mxu0 0
      %1575 = vmatpush1.bf16.msra.mxu0 %v1554
      %1576 = vmatprep.subr.bf16.mxu0 0
      %1577 = vmatpush1.bf16.msra.mxu0 %v1555
      %1578 = vmatprep.subr.bf16.mxu0 0
      %1579 = vmatpush1.bf16.msra.mxu0 %v1556
      %1580 = vmatprep.subr.bf16.mxu0 0
      %1581 = vmatpush1.bf16.msra.mxu0 %v1557
      %1582 = vmatprep.subr.bf16.mxu0 0
      %1583 = vmatpush1.bf16.msra.mxu0 0
      %1584 = vmatprep.subr.bf16.mxu0 0
      %1585 = vmatpush1.bf16.msra.mxu0 0
      %1586 = vmatprep.subr.bf16.mxu0 0
      %1587 = vmatpush1.bf16.msra.mxu0 0
      %1588 = vmatprep.subr.bf16.mxu0 0
      %1589 = vmatpush1.bf16.msra.mxu0 0
      %1590 = vmatprep.subr.bf16.mxu0 0
      %1591 = vmatpush1.bf16.msra.mxu0 0
      %1592 = vmatprep.subr.bf16.mxu0 0
      %1593 = vmatpush1.bf16.msra.mxu0 0
      %1594 = vmatprep.subr.bf16.mxu0 0
      %1595 = vmatpush1.bf16.msra.mxu0 0
      %1596 = vmatprep.subr.bf16.mxu0 0
      %1597 = vmatpush1.bf16.msra.mxu0 0
      %1598 = vmatprep.mubr.bf16.mxu0 0
      %1599 = vmatmul.mubr.bf16.gmra.mrb[0].mxu0 %v1474
      %v1600 = vpop.f32.mrb[0].mxu0
      %v1601 = vadd.f32 0.0, %v1600
      %v1602 = vpop.f32.mrb[0].mxu0
      %v1603 = vpop.f32.mrb[0].mxu0
      %v1604 = vadd.f32 0.0, %v1603
      %v1605 = vpop.f32.mrb[0].mxu0
      %1606 = vmatprep.mubr.bf16.mxu0 0
      %1607 = vmatmul.mubr.bf16.gmra.mrb[0].mxu0 %v1475
      %v1608 = vpop.f32.mrb[0].mxu0
      %v1609 = vadd.f32 0.0, %v1608
      %v1610 = vpop.f32.mrb[0].mxu0
      %v1611 = vpop.f32.mrb[0].mxu0
      %v1612 = vadd.f32 0.0, %v1611
      %v1613 = vpop.f32.mrb[0].mxu0
      %1614 = vmatprep.mubr.bf16.mxu0 0
      %1615 = vmatmul.mubr.bf16.gmra.mrb[0].mxu0 %v1476
      %v1616 = vpop.f32.mrb[0].mxu0
      %v1617 = vadd.f32 0.0, %v1616
      %v1618 = vpop.f32.mrb[0].mxu0
      %v1619 = vpop.f32.mrb[0].mxu0
      %v1620 = vadd.f32 0.0, %v1619
      %v1621 = vpop.f32.mrb[0].mxu0
      %1622 = vmatprep.mubr.bf16.mxu0 0
      %1623 = vmatmul.mubr.bf16.gmra.mrb[0].mxu0 %v1477
      %v1624 = vpop.f32.mrb[0].mxu0
      %v1625 = vadd.f32 0.0, %v1624
      %v1626 = vpop.f32.mrb[0].mxu0
      %v1627 = vpop.f32.mrb[0].mxu0
      %v1628 = vadd.f32 0.0, %v1627
      %v1629 = vpop.f32.mrb[0].mxu0
      %1630 = vmatprep.mubr.bf16.mxu0 0
      %1631 = vmatmul.mubr.bf16.gmra.mrb[0].mxu0 %v1478
      %v1632 = vpop.f32.mrb[0].mxu0
      %v1633 = vadd.f32 0.0, %v1632
      %v1634 = vpop.f32.mrb[0].mxu0
      %v1635 = vpop.f32.mrb[0].mxu0
      %v1636 = vadd.f32 0.0, %v1635
      %v1637 = vpop.f32.mrb[0].mxu0
      %1638 = vmatprep.mubr.bf16.mxu0 0
      %1639 = vmatmul.mubr.bf16.gmra.mrb[0].mxu0 %v1479
      %v1640 = vpop.f32.mrb[0].mxu0
      %v1641 = vadd.f32 0.0, %v1640
      %v1642 = vpop.f32.mrb[0].mxu0
      %v1643 = vpop.f32.mrb[0].mxu0
      %v1644 = vadd.f32 0.0, %v1643
      %v1645 = vpop.f32.mrb[0].mxu0
      %1646 = vmatprep.mubr.bf16.mxu0 0
      %1647 = vmatmul.mubr.bf16.gmra.mrb[0].mxu0 %v1480
      %v1648 = vpop.f32.mrb[0].mxu0
      %v1649 = vadd.f32 0.0, %v1648
      %v1650 = vpop.f32.mrb[0].mxu0
      %v1651 = vpop.f32.mrb[0].mxu0
      %v1652 = vadd.f32 0.0, %v1651
      %v1653 = vpop.f32.mrb[0].mxu0
      %1654 = vmatprep.mubr.bf16.mxu0 0
      %1655 = vmatmul.mubr.bf16.gmra.mrb[0].mxu0 %v1481
      %v1656 = vpop.f32.mrb[0].mxu0
      %v1657 = vadd.f32 0.0, %v1656
      %v1658 = vpop.f32.mrb[0].mxu0
      %v1659 = vpop.f32.mrb[0].mxu0
      %v1660 = vadd.f32 0.0, %v1659
      %v1661 = vpop.f32.mrb[0].mxu0
      %1662 = vmatprep.mubr.bf16.mxu0 0
      %1663 = vmatmul.mubr.bf16.gmra.mrb[0].mxu0 %v1482
      %v1664 = vpop.f32.mrb[0].mxu0
      %v1665 = vadd.f32 0.0, %v1664
      %v1666 = vpop.f32.mrb[0].mxu0
      %v1667 = vpop.f32.mrb[0].mxu0
      %v1668 = vadd.f32 0.0, %v1667
      %v1669 = vpop.f32.mrb[0].mxu0
      %1670 = vmatprep.mubr.bf16.mxu0 0
      %1671 = vmatmul.mubr.bf16.gmra.mrb[0].mxu0 %v1483
      %v1672 = vpop.f32.mrb[0].mxu0
      %v1673 = vadd.f32 0.0, %v1672
      %v1674 = vpop.f32.mrb[0].mxu0
      %v1675 = vpop.f32.mrb[0].mxu0
      %v1676 = vadd.f32 0.0, %v1675
      %v1677 = vpop.f32.mrb[0].mxu0
      %1678 = vmatprep.mubr.bf16.mxu0 0
      %1679 = vmatmul.mubr.bf16.gmra.mrb[0].mxu0 %v1484
      %v1680 = vpop.f32.mrb[0].mxu0
      %v1681 = vadd.f32 0.0, %v1680
      %v1682 = vpop.f32.mrb[0].mxu0
      %v1683 = vpop.f32.mrb[0].mxu0
      %v1684 = vadd.f32 0.0, %v1683
      %v1685 = vpop.f32.mrb[0].mxu0
      %1686 = vmatprep.mubr.bf16.mxu0 0
      %1687 = vmatmul.mubr.bf16.gmra.mrb[0].mxu0 %v1485
      %v1688 = vpop.f32.mrb[0].mxu0
      %v1689 = vadd.f32 0.0, %v1688
      %v1690 = vpop.f32.mrb[0].mxu0
      %v1691 = vpop.f32.mrb[0].mxu0
      %v1692 = vadd.f32 0.0, %v1691
      %v1693 = vpop.f32.mrb[0].mxu0
      %1694 = vmatprep.mubr.bf16.mxu0 0
      %1695 = vmatmul.mubr.bf16.gmra.mrb[0].mxu0 %v1486
      %v1696 = vpop.f32.mrb[0].mxu0
      %v1697 = vadd.f32 0.0, %v1696
      %v1698 = vpop.f32.mrb[0].mxu0
      %v1699 = vpop.f32.mrb[0].mxu0
      %v1700 = vadd.f32 0.0, %v1699
      %v1701 = vpop.f32.mrb[0].mxu0
      %1702 = vmatprep.mubr.bf16.mxu0 0
      %1703 = vmatmul.mubr.bf16.gmra.mrb[0].mxu0 %v1487
      %v1704 = vpop.f32.mrb[0].mxu0
      %v1705 = vadd.f32 0.0, %v1704
      %v1706 = vpop.f32.mrb[0].mxu0
      %v1707 = vpop.f32.mrb[0].mxu0
      %v1708 = vadd.f32 0.0, %v1707
      %v1709 = vpop.f32.mrb[0].mxu0
      %1710 = vmatprep.mubr.bf16.mxu0 0
      %1711 = vmatmul.mubr.bf16.gmra.mrb[0].mxu0 %v1488
      %v1712 = vpop.f32.mrb[0].mxu0
      %v1713 = vadd.f32 0.0, %v1712
      %v1714 = vpop.f32.mrb[0].mxu0
      %v1715 = vpop.f32.mrb[0].mxu0
      %v1716 = vadd.f32 0.0, %v1715
      %v1717 = vpop.f32.mrb[0].mxu0
      %1718 = vmatprep.mubr.bf16.mxu0 0
      %1719 = vmatmul.mubr.bf16.gmra.mrb[0].mxu0 %v1489
      %v1720 = vpop.f32.mrb[0].mxu0
      %v1721 = vadd.f32 0.0, %v1720
      %v1722 = vpop.f32.mrb[0].mxu0
      %v1723 = vpop.f32.mrb[0].mxu0
      %v1724 = vadd.f32 0.0, %v1723
      %v1725 = vpop.f32.mrb[0].mxu0
      %1726 = vmatprep.mubr.bf16.mxu0 0
      %1727 = vmatmul.mubr.bf16.gmra.mrb[0].mxu0 %v1490
      %v1728 = vpop.f32.mrb[0].mxu0
      %v1729 = vadd.f32 0.0, %v1728
      %v1730 = vpop.f32.mrb[0].mxu0
      %v1731 = vpop.f32.mrb[0].mxu0
      %v1732 = vadd.f32 0.0, %v1731
      %v1733 = vpop.f32.mrb[0].mxu0
      %1734 = vmatprep.mubr.bf16.mxu0 0
      %1735 = vmatmul.mubr.bf16.gmra.mrb[0].mxu0 %v1491
      %v1736 = vpop.f32.mrb[0].mxu0
      %v1737 = vadd.f32 0.0, %v1736
      %v1738 = vpop.f32.mrb[0].mxu0
      %v1739 = vpop.f32.mrb[0].mxu0
      %v1740 = vadd.f32 0.0, %v1739
      %v1741 = vpop.f32.mrb[0].mxu0
      %1742 = vmatprep.mubr.bf16.mxu0 0
      %1743 = vmatmul.mubr.bf16.gmra.mrb[0].mxu0 %v1492
      %v1744 = vpop.f32.mrb[0].mxu0
      %v1745 = vadd.f32 0.0, %v1744
      %v1746 = vpop.f32.mrb[0].mxu0
      %v1747 = vpop.f32.mrb[0].mxu0
      %v1748 = vadd.f32 0.0, %v1747
      %v1749 = vpop.f32.mrb[0].mxu0
      %1750 = vmatprep.mubr.bf16.mxu0 0
      %1751 = vmatmul.mubr.bf16.gmra.mrb[0].mxu0 %v1493
      %v1752 = vpop.f32.mrb[0].mxu0
      %v1753 = vadd.f32 0.0, %v1752
      %v1754 = vpop.f32.mrb[0].mxu0
      %v1755 = vpop.f32.mrb[0].mxu0
      %v1756 = vadd.f32 0.0, %v1755
      %v1757 = vpop.f32.mrb[0].mxu0
      %1758 = vmatprep.mubr.bf16.mxu0 0
      %1759 = vmatmul.mubr.bf16.gmra.mrb[0].mxu0 %v1494
      %v1760 = vpop.f32.mrb[0].mxu0
      %v1761 = vadd.f32 0.0, %v1760
      %v1762 = vpop.f32.mrb[0].mxu0
      %v1763 = vpop.f32.mrb[0].mxu0
      %v1764 = vadd.f32 0.0, %v1763
      %v1765 = vpop.f32.mrb[0].mxu0
      %1766 = vmatprep.mubr.bf16.mxu0 0
      %1767 = vmatmul.mubr.bf16.gmra.mrb[0].mxu0 %v1495
      %v1768 = vpop.f32.mrb[0].mxu0
      %v1769 = vadd.f32 0.0, %v1768
      %v1770 = vpop.f32.mrb[0].mxu0
      %v1771 = vpop.f32.mrb[0].mxu0
      %v1772 = vadd.f32 0.0, %v1771
      %v1773 = vpop.f32.mrb[0].mxu0
      %1774 = vmatprep.mubr.bf16.mxu0 0
      %1775 = vmatmul.mubr.bf16.gmra.mrb[0].mxu0 %v1496
      %v1776 = vpop.f32.mrb[0].mxu0
      %v1777 = vadd.f32 0.0, %v1776
      %v1778 = vpop.f32.mrb[0].mxu0
      %v1779 = vpop.f32.mrb[0].mxu0
      %v1780 = vadd.f32 0.0, %v1779
      %v1781 = vpop.f32.mrb[0].mxu0
      %1782 = vmatprep.mubr.bf16.mxu0 0
      %1783 = vmatmul.mubr.bf16.gmra.mrb[0].mxu0 %v1497
      %v1784 = vpop.f32.mrb[0].mxu0
      %v1785 = vadd.f32 0.0, %v1784
      %v1786 = vpop.f32.mrb[0].mxu0
      %v1787 = vpop.f32.mrb[0].mxu0
      %v1788 = vadd.f32 0.0, %v1787
      %v1789 = vpop.f32.mrb[0].mxu0
      %1790 = vmatprep.mubr.bf16.mxu0 0
      %1791 = vmatmul.mubr.bf16.gmra.mrb[0].mxu0 %v1498
      %v1792 = vpop.f32.mrb[0].mxu0
      %v1793 = vadd.f32 0.0, %v1792
      %v1794 = vpop.f32.mrb[0].mxu0
      %v1795 = vpop.f32.mrb[0].mxu0
      %v1796 = vadd.f32 0.0, %v1795
      %v1797 = vpop.f32.mrb[0].mxu0
      %1798 = vmatprep.mubr.bf16.mxu0 0
      %1799 = vmatmul.mubr.bf16.gmra.mrb[0].mxu0 %v1499
      %v1800 = vpop.f32.mrb[0].mxu0
      %v1801 = vadd.f32 0.0, %v1800
      %v1802 = vpop.f32.mrb[0].mxu0
      %v1803 = vpop.f32.mrb[0].mxu0
      %v1804 = vadd.f32 0.0, %v1803
      %v1805 = vpop.f32.mrb[0].mxu0
      %1806 = vmatprep.mubr.bf16.mxu0 0
      %1807 = vmatmul.mubr.bf16.gmra.mrb[0].mxu0 %v1500
      %v1808 = vpop.f32.mrb[0].mxu0
      %v1809 = vadd.f32 0.0, %v1808
      %v1810 = vpop.f32.mrb[0].mxu0
      %v1811 = vpop.f32.mrb[0].mxu0
      %v1812 = vadd.f32 0.0, %v1811
      %v1813 = vpop.f32.mrb[0].mxu0
      %1814 = vdwg.mxu0
      %v1815 = vadd.f32 %v1366, %v1601
      %v1816 = vadd.f32 %v1367, %v1604
      %v1817 = vadd.f32 %v1368, %v1609
      %v1818 = vadd.f32 %v1369, %v1612
      %v1819 = vadd.f32 %v1370, %v1617
      %v1820 = vadd.f32 %v1371, %v1620
      %v1821 = vadd.f32 %v1372, %v1625
      %v1822 = vadd.f32 %v1373, %v1628
      %v1823 = vadd.f32 %v1374, %v1633
      %v1824 = vadd.f32 %v1375, %v1636
      %v1825 = vadd.f32 %v1376, %v1641
      %v1826 = vadd.f32 %v1377, %v1644
      %v1827 = vadd.f32 %v1378, %v1649
      %v1828 = vadd.f32 %v1379, %v1652
      %v1829 = vadd.f32 %v1380, %v1657
      %v1830 = vadd.f32 %v1381, %v1660
      %v1831 = vadd.f32 %v1382, %v1665
      %v1832 = vadd.f32 %v1383, %v1668
      %v1833 = vadd.f32 %v1384, %v1673
      %v1834 = vadd.f32 %v1385, %v1676
      %v1835 = vadd.f32 %v1386, %v1681
      %v1836 = vadd.f32 %v1387, %v1684
      %v1837 = vadd.f32 %v1388, %v1689
      %v1838 = vadd.f32 %v1389, %v1692
      %v1839 = vadd.f32 %v1390, %v1697
      %v1840 = vadd.f32 %v1391, %v1700
      %v1841 = vadd.f32 %v1392, %v1705
      %v1842 = vadd.f32 %v1393, %v1708
      %v1843 = vadd.f32 %v1394, %v1713
      %v1844 = vadd.f32 %v1395, %v1716
      %v1845 = vadd.f32 %v1396, %v1721
      %v1846 = vadd.f32 %v1397, %v1724
      %v1847 = vadd.f32 %v1398, %v1729
      %v1848 = vadd.f32 %v1399, %v1732
      %v1849 = vadd.f32 %v1400, %v1737
      %v1850 = vadd.f32 %v1401, %v1740
      %v1851 = vadd.f32 %v1402, %v1745
      %v1852 = vadd.f32 %v1403, %v1748
      %v1853 = vadd.f32 %v1404, %v1753
      %v1854 = vadd.f32 %v1405, %v1756
      %v1855 = vadd.f32 %v1406, %v1761
      %v1856 = vadd.f32 %v1407, %v1764
      %v1857 = vadd.f32 %v1408, %v1769
      %v1858 = vadd.f32 %v1409, %v1772
      %v1859 = vadd.f32 %v1410, %v1777
      %v1860 = vadd.f32 %v1411, %v1780
      %v1861 = vadd.f32 %v1412, %v1785
      %v1862 = vadd.f32 %v1413, %v1788
      %v1863 = vadd.f32 %v1414, %v1793
      %v1864 = vadd.f32 %v1415, %v1796
      %v1865 = vadd.f32 %v1416, %v1801
      %v1866 = vadd.f32 %v1417, %v1804
      %v1867 = vadd.f32 %v1418, %v1809
      %v1868 = vadd.f32 %v1419, %v1812
      %v1869 = vld [vmem:[%s168 + $0x19] sm:$0xff]
      %v1870 = vld [vmem:[%s168 + $0x21] sm:$0xff]
      %v1871 = vld [vmem:[%s168 + $0x29] sm:$0xff]
      %v1872 = vld [vmem:[%s168 + $0x31] sm:$0xff]
      %v1873 = vld [vmem:[%s168 + $0x39] sm:$0xff]
      %v1874 = vld [vmem:[%s168 + $0x41] sm:$0xff]
      %v1875 = vld [vmem:[%s168 + $0x49] sm:$0xff]
      %v1876 = vld [vmem:[%s168 + $0x51] sm:$0xff]
      %v1877 = vld [vmem:[%s168 + $0x59] sm:$0xff]
      %v1878 = vld [vmem:[%s168 + $0x61] sm:$0xff]
      %v1879 = vld [vmem:[%s168 + $0x69] sm:$0xff]
      %v1880 = vld [vmem:[%s168 + $0x71] sm:$0xff]
      %v1881 = vld [vmem:[%s168 + $0x79] sm:$0xff]
      %v1882 = vld [vmem:[%s168 + $0x81] sm:$0xff]
      %v1883 = vld [vmem:[%s168 + $0x89] sm:$0xff]
      %v1884 = vld [vmem:[%s168 + $0x91] sm:$0xff]
      %v1885 = vld [vmem:[%s168 + $0x99] sm:$0xff]
      %v1886 = vld [vmem:[%s168 + $0xa1] sm:$0xff]
      %v1887 = vld [vmem:[%s168 + $0xa9] sm:$0xff]
      %v1888 = vld [vmem:[%s168 + $0xb1] sm:$0xff]
      %v1889 = vld [vmem:[%s168 + $0xb9] sm:$0xff]
      %v1890 = vld [vmem:[%s168 + $0xc1] sm:$0xff]
      %v1891 = vld [vmem:[%s168 + $0xc9] sm:$0xff]
      %v1892 = vld [vmem:[%s168 + $0xd1] sm:$0xff]
      %v1893 = vld [vmem:[%s168 + $0xd9] sm:$0xff]
      %v1894 = vld [vmem:[%s168 + $0xe1] sm:$0xff]
      %v1895 = vld [vmem:[%s168 + $0xe9] sm:$0xff]
      %v1896 = vld [vmem:[%s168 + $0xf1] sm:$0xff]
      %v1897 = vld [vmem:[%s168 + $0xf9] sm:$0xff]
      %v1898 = vld [vmem:[%s168 + $0x101] sm:$0xff]
      %v1899 = vld [vmem:[%s168 + $0x109] sm:$0xff]
      %v1900 = vld [vmem:[%s168 + $0x111] sm:$0xff]
      %v1901 = vld [vmem:[%s168 + $0x119] sm:$0xff]
      %v1902 = vld [vmem:[%s168 + $0x121] sm:$0xff]
      %v1903 = vld [vmem:[%s168 + $0x129] sm:$0xff]
      %v1904 = vld [vmem:[%s168 + $0x131] sm:$0xff]
      %v1905 = vld [vmem:[%s168 + $0x139] sm:$0xff]
      %v1906 = vld [vmem:[%s168 + $0x141] sm:$0xff]
      %v1907 = vld [vmem:[%s168 + $0x149] sm:$0xff]
      %v1908 = vld [vmem:[%s168 + $0x151] sm:$0xff]
      %v1909 = vld [vmem:[%s168 + $0x159] sm:$0xff]
      %v1910 = vld [vmem:[%s168 + $0x161] sm:$0xff]
      %v1911 = vld [vmem:[%s168 + $0x169] sm:$0xff]
      %v1912 = vld [vmem:[%s168 + $0x171] sm:$0xff]
      %v1913 = vld [vmem:[%s168 + $0x179] sm:$0xff]
      %v1914 = vld [vmem:[%s168 + $0x181] sm:$0xff]
      %v1915 = vld [vmem:[%s168 + $0x189] sm:$0xff]
      %v1916 = vld [vmem:[%s168 + $0x191] sm:$0xff]
      %v1917 = vld [vmem:[%s168 + $0x199] sm:$0xff]
      %v1918 = vld [vmem:[%s168 + $0x1a1] sm:$0xff]
      %v1919 = vld [vmem:[%s168 + $0x1a9] sm:$0xff]
      %v1920 = vld [vmem:[%s168 + $0x1b1] sm:$0xff]
      %v1921 = vld [vmem:[%s168 + $0x1b9] sm:$0xff]
      %v1922 = vld [vmem:[%s168 + $0x1c1] sm:$0xff]
      %v1923 = vpack.c.bf16 %v1870, %v1869
      %v1924 = vpack.c.bf16 %v1872, %v1871
      %v1925 = vpack.c.bf16 %v1874, %v1873
      %v1926 = vpack.c.bf16 %v1876, %v1875
      %v1927 = vpack.c.bf16 %v1878, %v1877
      %v1928 = vpack.c.bf16 %v1880, %v1879
      %v1929 = vpack.c.bf16 %v1882, %v1881
      %v1930 = vpack.c.bf16 %v1884, %v1883
      %v1931 = vpack.c.bf16 %v1886, %v1885
      %v1932 = vpack.c.bf16 %v1888, %v1887
      %v1933 = vpack.c.bf16 %v1890, %v1889
      %v1934 = vpack.c.bf16 %v1892, %v1891
      %v1935 = vpack.c.bf16 %v1894, %v1893
      %v1936 = vpack.c.bf16 %v1896, %v1895
      %v1937 = vpack.c.bf16 %v1898, %v1897
      %v1938 = vpack.c.bf16 %v1900, %v1899
      %v1939 = vpack.c.bf16 %v1902, %v1901
      %v1940 = vpack.c.bf16 %v1904, %v1903
      %v1941 = vpack.c.bf16 %v1906, %v1905
      %v1942 = vpack.c.bf16 %v1908, %v1907
      %v1943 = vpack.c.bf16 %v1910, %v1909
      %v1944 = vpack.c.bf16 %v1912, %v1911
      %v1945 = vpack.c.bf16 %v1914, %v1913
      %v1946 = vpack.c.bf16 %v1916, %v1915
      %v1947 = vpack.c.bf16 %v1918, %v1917
      %v1948 = vpack.c.bf16 %v1920, %v1919
      %v1949 = vpack.c.bf16 %v1922, %v1921
      %s1950 = scalar_lea.vmem %s172, 256
      %v1951 = vld [vmem:[%s1950] sm:$0xf]
      %v1952 = vld [vmem:[%s1950 + $0x4] sm:$0xf]
      %v1953 = vld [vmem:[%s1950 + $0x8] sm:$0xf]
      %v1954 = vld [vmem:[%s1950 + $0xc] sm:$0xf]
      %v1955 = vld [vmem:[%s1950 + $0x10] sm:$0xf]
      %v1956 = vld [vmem:[%s1950 + $0x14] sm:$0xf]
      %v1957 = vld [vmem:[%s1950 + $0x18] sm:$0xf]
      %v1958 = vld [vmem:[%s1950 + $0x1c] sm:$0xf]
      %v1959 = vld [vmem:[%s1950 + $0x20] sm:$0xf]
      %v1960 = vld [vmem:[%s1950 + $0x24] sm:$0xf]
      %v1961 = vld [vmem:[%s1950 + $0x28] sm:$0xf]
      %v1962 = vld [vmem:[%s1950 + $0x2c] sm:$0xf]
      %v1963 = vld [vmem:[%s1950 + $0x30] sm:$0xf]
      %v1964 = vld [vmem:[%s1950 + $0x34] sm:$0xf]
      %v1965 = vld [vmem:[%s1950 + $0x38] sm:$0xf]
      %v1966 = vld [vmem:[%s1950 + $0x3c] sm:$0xf]
      %v1983 = vunpack.c.l.b16 %v1951
      %v1984 = vunpack.c.l.b16 %v1952
      %v1985 = vunpack.c.l.b16 %v1953
      %v1986 = vunpack.c.l.b16 %v1954
      %v1987 = vunpack.c.l.b16 %v1955
      %v1988 = vunpack.c.l.b16 %v1956
      %v1989 = vunpack.c.l.b16 %v1957
      %v1990 = vunpack.c.l.b16 %v1958
      %v1991 = vunpack.c.l.b16 %v1959
      %v1992 = vunpack.c.l.b16 %v1960
      %v1993 = vunpack.c.l.b16 %v1961
      %v1994 = vunpack.c.l.b16 %v1962
      %v1995 = vunpack.c.l.b16 %v1963
      %v1996 = vunpack.c.l.b16 %v1964
      %v1997 = vunpack.c.l.b16 %v1965
      %v1998 = vunpack.c.l.b16 %v1966
      %v1999 = vpack.c.b16 %v1984, %v1983
      %v2000 = vpack.c.b16 %v1986, %v1985
      %v2001 = vpack.c.b16 %v1988, %v1987
      %v2002 = vpack.c.b16 %v1990, %v1989
      %v2003 = vpack.c.b16 %v1992, %v1991
      %v2004 = vpack.c.b16 %v1994, %v1993
      %v2005 = vpack.c.b16 %v1996, %v1995
      %v2006 = vpack.c.b16 %v1998, %v1997
      %2015 = vmatprep.subr.bf16.mxu0 0
      %2016 = vmatpush1.bf16.msra.mxu0 %v1999
      %2017 = vmatprep.subr.bf16.mxu0 0
      %2018 = vmatpush1.bf16.msra.mxu0 %v2000
      %2019 = vmatprep.subr.bf16.mxu0 0
      %2020 = vmatpush1.bf16.msra.mxu0 %v2001
      %2021 = vmatprep.subr.bf16.mxu0 0
      %2022 = vmatpush1.bf16.msra.mxu0 %v2002
      %2023 = vmatprep.subr.bf16.mxu0 0
      %2024 = vmatpush1.bf16.msra.mxu0 %v2003
      %2025 = vmatprep.subr.bf16.mxu0 0
      %2026 = vmatpush1.bf16.msra.mxu0 %v2004
      %2027 = vmatprep.subr.bf16.mxu0 0
      %2028 = vmatpush1.bf16.msra.mxu0 %v2005
      %2029 = vmatprep.subr.bf16.mxu0 0
      %2030 = vmatpush1.bf16.msra.mxu0 %v2006
      %2031 = vmatprep.subr.bf16.mxu0 0
      %2032 = vmatpush1.bf16.msra.mxu0 0
      %2033 = vmatprep.subr.bf16.mxu0 0
      %2034 = vmatpush1.bf16.msra.mxu0 0
      %2035 = vmatprep.subr.bf16.mxu0 0
      %2036 = vmatpush1.bf16.msra.mxu0 0
      %2037 = vmatprep.subr.bf16.mxu0 0
      %2038 = vmatpush1.bf16.msra.mxu0 0
      %2039 = vmatprep.subr.bf16.mxu0 0
      %2040 = vmatpush1.bf16.msra.mxu0 0
      %2041 = vmatprep.subr.bf16.mxu0 0
      %2042 = vmatpush1.bf16.msra.mxu0 0
      %2043 = vmatprep.subr.bf16.mxu0 0
      %2044 = vmatpush1.bf16.msra.mxu0 0
      %2045 = vmatprep.subr.bf16.mxu0 0
      %2046 = vmatpush1.bf16.msra.mxu0 0
      %2047 = vmatprep.mubr.bf16.mxu0 0
      %2048 = vmatmul.mubr.bf16.gmra.mrb[0].mxu0 %v1923
      %v2049 = vpop.f32.mrb[0].mxu0
      %v2050 = vadd.f32 0.0, %v2049
      %v2051 = vpop.f32.mrb[0].mxu0
      %v2052 = vpop.f32.mrb[0].mxu0
      %v2053 = vadd.f32 0.0, %v2052
      %v2054 = vpop.f32.mrb[0].mxu0
      %2055 = vmatprep.mubr.bf16.mxu0 0
      %2056 = vmatmul.mubr.bf16.gmra.mrb[0].mxu0 %v1924
      %v2057 = vpop.f32.mrb[0].mxu0
      %v2058 = vadd.f32 0.0, %v2057
      %v2059 = vpop.f32.mrb[0].mxu0
      %v2060 = vpop.f32.mrb[0].mxu0
      %v2061 = vadd.f32 0.0, %v2060
      %v2062 = vpop.f32.mrb[0].mxu0
      %2063 = vmatprep.mubr.bf16.mxu0 0
      %2064 = vmatmul.mubr.bf16.gmra.mrb[0].mxu0 %v1925
      %v2065 = vpop.f32.mrb[0].mxu0
      %v2066 = vadd.f32 0.0, %v2065
      %v2067 = vpop.f32.mrb[0].mxu0
      %v2068 = vpop.f32.mrb[0].mxu0
      %v2069 = vadd.f32 0.0, %v2068
      %v2070 = vpop.f32.mrb[0].mxu0
      %2071 = vmatprep.mubr.bf16.mxu0 0
      %2072 = vmatmul.mubr.bf16.gmra.mrb[0].mxu0 %v1926
      %v2073 = vpop.f32.mrb[0].mxu0
      %v2074 = vadd.f32 0.0, %v2073
      %v2075 = vpop.f32.mrb[0].mxu0
      %v2076 = vpop.f32.mrb[0].mxu0
      %v2077 = vadd.f32 0.0, %v2076
      %v2078 = vpop.f32.mrb[0].mxu0
      %2079 = vmatprep.mubr.bf16.mxu0 0
      %2080 = vmatmul.mubr.bf16.gmra.mrb[0].mxu0 %v1927
      %v2081 = vpop.f32.mrb[0].mxu0
      %v2082 = vadd.f32 0.0, %v2081
      %v2083 = vpop.f32.mrb[0].mxu0
      %v2084 = vpop.f32.mrb[0].mxu0
      %v2085 = vadd.f32 0.0, %v2084
      %v2086 = vpop.f32.mrb[0].mxu0
      %2087 = vmatprep.mubr.bf16.mxu0 0
      %2088 = vmatmul.mubr.bf16.gmra.mrb[0].mxu0 %v1928
      %v2089 = vpop.f32.mrb[0].mxu0
      %v2090 = vadd.f32 0.0, %v2089
      %v2091 = vpop.f32.mrb[0].mxu0
      %v2092 = vpop.f32.mrb[0].mxu0
      %v2093 = vadd.f32 0.0, %v2092
      %v2094 = vpop.f32.mrb[0].mxu0
      %2095 = vmatprep.mubr.bf16.mxu0 0
      %2096 = vmatmul.mubr.bf16.gmra.mrb[0].mxu0 %v1929
      %v2097 = vpop.f32.mrb[0].mxu0
      %v2098 = vadd.f32 0.0, %v2097
      %v2099 = vpop.f32.mrb[0].mxu0
      %v2100 = vpop.f32.mrb[0].mxu0
      %v2101 = vadd.f32 0.0, %v2100
      %v2102 = vpop.f32.mrb[0].mxu0
      %2103 = vmatprep.mubr.bf16.mxu0 0
      %2104 = vmatmul.mubr.bf16.gmra.mrb[0].mxu0 %v1930
      %v2105 = vpop.f32.mrb[0].mxu0
      %v2106 = vadd.f32 0.0, %v2105
      %v2107 = vpop.f32.mrb[0].mxu0
      %v2108 = vpop.f32.mrb[0].mxu0
      %v2109 = vadd.f32 0.0, %v2108
      %v2110 = vpop.f32.mrb[0].mxu0
      %2111 = vmatprep.mubr.bf16.mxu0 0
      %2112 = vmatmul.mubr.bf16.gmra.mrb[0].mxu0 %v1931
      %v2113 = vpop.f32.mrb[0].mxu0
      %v2114 = vadd.f32 0.0, %v2113
      %v2115 = vpop.f32.mrb[0].mxu0
      %v2116 = vpop.f32.mrb[0].mxu0
      %v2117 = vadd.f32 0.0, %v2116
      %v2118 = vpop.f32.mrb[0].mxu0
      %2119 = vmatprep.mubr.bf16.mxu0 0
      %2120 = vmatmul.mubr.bf16.gmra.mrb[0].mxu0 %v1932
      %v2121 = vpop.f32.mrb[0].mxu0
      %v2122 = vadd.f32 0.0, %v2121
      %v2123 = vpop.f32.mrb[0].mxu0
      %v2124 = vpop.f32.mrb[0].mxu0
      %v2125 = vadd.f32 0.0, %v2124
      %v2126 = vpop.f32.mrb[0].mxu0
      %2127 = vmatprep.mubr.bf16.mxu0 0
      %2128 = vmatmul.mubr.bf16.gmra.mrb[0].mxu0 %v1933
      %v2129 = vpop.f32.mrb[0].mxu0
      %v2130 = vadd.f32 0.0, %v2129
      %v2131 = vpop.f32.mrb[0].mxu0
      %v2132 = vpop.f32.mrb[0].mxu0
      %v2133 = vadd.f32 0.0, %v2132
      %v2134 = vpop.f32.mrb[0].mxu0
      %2135 = vmatprep.mubr.bf16.mxu0 0
      %2136 = vmatmul.mubr.bf16.gmra.mrb[0].mxu0 %v1934
      %v2137 = vpop.f32.mrb[0].mxu0
      %v2138 = vadd.f32 0.0, %v2137
      %v2139 = vpop.f32.mrb[0].mxu0
      %v2140 = vpop.f32.mrb[0].mxu0
      %v2141 = vadd.f32 0.0, %v2140
      %v2142 = vpop.f32.mrb[0].mxu0
      %2143 = vmatprep.mubr.bf16.mxu0 0
      %2144 = vmatmul.mubr.bf16.gmra.mrb[0].mxu0 %v1935
      %v2145 = vpop.f32.mrb[0].mxu0
      %v2146 = vadd.f32 0.0, %v2145
      %v2147 = vpop.f32.mrb[0].mxu0
      %v2148 = vpop.f32.mrb[0].mxu0
      %v2149 = vadd.f32 0.0, %v2148
      %v2150 = vpop.f32.mrb[0].mxu0
      %2151 = vmatprep.mubr.bf16.mxu0 0
      %2152 = vmatmul.mubr.bf16.gmra.mrb[0].mxu0 %v1936
      %v2153 = vpop.f32.mrb[0].mxu0
      %v2154 = vadd.f32 0.0, %v2153
      %v2155 = vpop.f32.mrb[0].mxu0
      %v2156 = vpop.f32.mrb[0].mxu0
      %v2157 = vadd.f32 0.0, %v2156
      %v2158 = vpop.f32.mrb[0].mxu0
      %2159 = vmatprep.mubr.bf16.mxu0 0
      %2160 = vmatmul.mubr.bf16.gmra.mrb[0].mxu0 %v1937
      %v2161 = vpop.f32.mrb[0].mxu0
      %v2162 = vadd.f32 0.0, %v2161
      %v2163 = vpop.f32.mrb[0].mxu0
      %v2164 = vpop.f32.mrb[0].mxu0
      %v2165 = vadd.f32 0.0, %v2164
      %v2166 = vpop.f32.mrb[0].mxu0
      %2167 = vmatprep.mubr.bf16.mxu0 0
      %2168 = vmatmul.mubr.bf16.gmra.mrb[0].mxu0 %v1938
      %v2169 = vpop.f32.mrb[0].mxu0
      %v2170 = vadd.f32 0.0, %v2169
      %v2171 = vpop.f32.mrb[0].mxu0
      %v2172 = vpop.f32.mrb[0].mxu0
      %v2173 = vadd.f32 0.0, %v2172
      %v2174 = vpop.f32.mrb[0].mxu0
      %2175 = vmatprep.mubr.bf16.mxu0 0
      %2176 = vmatmul.mubr.bf16.gmra.mrb[0].mxu0 %v1939
      %v2177 = vpop.f32.mrb[0].mxu0
      %v2178 = vadd.f32 0.0, %v2177
      %v2179 = vpop.f32.mrb[0].mxu0
      %v2180 = vpop.f32.mrb[0].mxu0
      %v2181 = vadd.f32 0.0, %v2180
      %v2182 = vpop.f32.mrb[0].mxu0
      %2183 = vmatprep.mubr.bf16.mxu0 0
      %2184 = vmatmul.mubr.bf16.gmra.mrb[0].mxu0 %v1940
      %v2185 = vpop.f32.mrb[0].mxu0
      %v2186 = vadd.f32 0.0, %v2185
      %v2187 = vpop.f32.mrb[0].mxu0
      %v2188 = vpop.f32.mrb[0].mxu0
      %v2189 = vadd.f32 0.0, %v2188
      %v2190 = vpop.f32.mrb[0].mxu0
      %2191 = vmatprep.mubr.bf16.mxu0 0
      %2192 = vmatmul.mubr.bf16.gmra.mrb[0].mxu0 %v1941
      %v2193 = vpop.f32.mrb[0].mxu0
      %v2194 = vadd.f32 0.0, %v2193
      %v2195 = vpop.f32.mrb[0].mxu0
      %v2196 = vpop.f32.mrb[0].mxu0
      %v2197 = vadd.f32 0.0, %v2196
      %v2198 = vpop.f32.mrb[0].mxu0
      %2199 = vmatprep.mubr.bf16.mxu0 0
      %2200 = vmatmul.mubr.bf16.gmra.mrb[0].mxu0 %v1942
      %v2201 = vpop.f32.mrb[0].mxu0
      %v2202 = vadd.f32 0.0, %v2201
      %v2203 = vpop.f32.mrb[0].mxu0
      %v2204 = vpop.f32.mrb[0].mxu0
      %v2205 = vadd.f32 0.0, %v2204
      %v2206 = vpop.f32.mrb[0].mxu0
      %2207 = vmatprep.mubr.bf16.mxu0 0
      %2208 = vmatmul.mubr.bf16.gmra.mrb[0].mxu0 %v1943
      %v2209 = vpop.f32.mrb[0].mxu0
      %v2210 = vadd.f32 0.0, %v2209
      %v2211 = vpop.f32.mrb[0].mxu0
      %v2212 = vpop.f32.mrb[0].mxu0
      %v2213 = vadd.f32 0.0, %v2212
      %v2214 = vpop.f32.mrb[0].mxu0
      %2215 = vmatprep.mubr.bf16.mxu0 0
      %2216 = vmatmul.mubr.bf16.gmra.mrb[0].mxu0 %v1944
      %v2217 = vpop.f32.mrb[0].mxu0
      %v2218 = vadd.f32 0.0, %v2217
      %v2219 = vpop.f32.mrb[0].mxu0
      %v2220 = vpop.f32.mrb[0].mxu0
      %v2221 = vadd.f32 0.0, %v2220
      %v2222 = vpop.f32.mrb[0].mxu0
      %2223 = vmatprep.mubr.bf16.mxu0 0
      %2224 = vmatmul.mubr.bf16.gmra.mrb[0].mxu0 %v1945
      %v2225 = vpop.f32.mrb[0].mxu0
      %v2226 = vadd.f32 0.0, %v2225
      %v2227 = vpop.f32.mrb[0].mxu0
      %v2228 = vpop.f32.mrb[0].mxu0
      %v2229 = vadd.f32 0.0, %v2228
      %v2230 = vpop.f32.mrb[0].mxu0
      %2231 = vmatprep.mubr.bf16.mxu0 0
      %2232 = vmatmul.mubr.bf16.gmra.mrb[0].mxu0 %v1946
      %v2233 = vpop.f32.mrb[0].mxu0
      %v2234 = vadd.f32 0.0, %v2233
      %v2235 = vpop.f32.mrb[0].mxu0
      %v2236 = vpop.f32.mrb[0].mxu0
      %v2237 = vadd.f32 0.0, %v2236
      %v2238 = vpop.f32.mrb[0].mxu0
      %2239 = vmatprep.mubr.bf16.mxu0 0
      %2240 = vmatmul.mubr.bf16.gmra.mrb[0].mxu0 %v1947
      %v2241 = vpop.f32.mrb[0].mxu0
      %v2242 = vadd.f32 0.0, %v2241
      %v2243 = vpop.f32.mrb[0].mxu0
      %v2244 = vpop.f32.mrb[0].mxu0
      %v2245 = vadd.f32 0.0, %v2244
      %v2246 = vpop.f32.mrb[0].mxu0
      %2247 = vmatprep.mubr.bf16.mxu0 0
      %2248 = vmatmul.mubr.bf16.gmra.mrb[0].mxu0 %v1948
      %v2249 = vpop.f32.mrb[0].mxu0
      %v2250 = vadd.f32 0.0, %v2249
      %v2251 = vpop.f32.mrb[0].mxu0
      %v2252 = vpop.f32.mrb[0].mxu0
      %v2253 = vadd.f32 0.0, %v2252
      %v2254 = vpop.f32.mrb[0].mxu0
      %2255 = vmatprep.mubr.bf16.mxu0 0
      %2256 = vmatmul.mubr.bf16.gmra.mrb[0].mxu0 %v1949
      %v2257 = vpop.f32.mrb[0].mxu0
      %v2258 = vadd.f32 0.0, %v2257
      %v2259 = vpop.f32.mrb[0].mxu0
      %v2260 = vpop.f32.mrb[0].mxu0
      %v2261 = vadd.f32 0.0, %v2260
      %v2262 = vpop.f32.mrb[0].mxu0
      %2263 = vdwg.mxu0
      %v2264 = vadd.f32 %v1815, %v2050
      %v2265 = vadd.f32 %v1816, %v2053
      %v2266 = vadd.f32 %v1817, %v2058
      %v2267 = vadd.f32 %v1818, %v2061
      %v2268 = vadd.f32 %v1819, %v2066
      %v2269 = vadd.f32 %v1820, %v2069
      %v2270 = vadd.f32 %v1821, %v2074
      %v2271 = vadd.f32 %v1822, %v2077
      %v2272 = vadd.f32 %v1823, %v2082
      %v2273 = vadd.f32 %v1824, %v2085
      %v2274 = vadd.f32 %v1825, %v2090
      %v2275 = vadd.f32 %v1826, %v2093
      %v2276 = vadd.f32 %v1827, %v2098
      %v2277 = vadd.f32 %v1828, %v2101
      %v2278 = vadd.f32 %v1829, %v2106
      %v2279 = vadd.f32 %v1830, %v2109
      %v2280 = vadd.f32 %v1831, %v2114
      %v2281 = vadd.f32 %v1832, %v2117
      %v2282 = vadd.f32 %v1833, %v2122
      %v2283 = vadd.f32 %v1834, %v2125
      %v2284 = vadd.f32 %v1835, %v2130
      %v2285 = vadd.f32 %v1836, %v2133
      %v2286 = vadd.f32 %v1837, %v2138
      %v2287 = vadd.f32 %v1838, %v2141
      %v2288 = vadd.f32 %v1839, %v2146
      %v2289 = vadd.f32 %v1840, %v2149
      %v2290 = vadd.f32 %v1841, %v2154
      %v2291 = vadd.f32 %v1842, %v2157
      %v2292 = vadd.f32 %v1843, %v2162
      %v2293 = vadd.f32 %v1844, %v2165
      %v2294 = vadd.f32 %v1845, %v2170
      %v2295 = vadd.f32 %v1846, %v2173
      %v2296 = vadd.f32 %v1847, %v2178
      %v2297 = vadd.f32 %v1848, %v2181
      %v2298 = vadd.f32 %v1849, %v2186
      %v2299 = vadd.f32 %v1850, %v2189
      %v2300 = vadd.f32 %v1851, %v2194
      %v2301 = vadd.f32 %v1852, %v2197
      %v2302 = vadd.f32 %v1853, %v2202
      %v2303 = vadd.f32 %v1854, %v2205
      %v2304 = vadd.f32 %v1855, %v2210
      %v2305 = vadd.f32 %v1856, %v2213
      %v2306 = vadd.f32 %v1857, %v2218
      %v2307 = vadd.f32 %v1858, %v2221
      %v2308 = vadd.f32 %v1859, %v2226
      %v2309 = vadd.f32 %v1860, %v2229
      %v2310 = vadd.f32 %v1861, %v2234
      %v2311 = vadd.f32 %v1862, %v2237
      %v2312 = vadd.f32 %v1863, %v2242
      %v2313 = vadd.f32 %v1864, %v2245
      %v2314 = vadd.f32 %v1865, %v2250
      %v2315 = vadd.f32 %v1866, %v2253
      %v2316 = vadd.f32 %v1867, %v2258
      %v2317 = vadd.f32 %v1868, %v2261
      %v2318 = vld [vmem:[%s168 + $0x1a] sm:$0xff]
      %v2319 = vld [vmem:[%s168 + $0x22] sm:$0xff]
      %v2320 = vld [vmem:[%s168 + $0x2a] sm:$0xff]
      %v2321 = vld [vmem:[%s168 + $0x32] sm:$0xff]
      %v2322 = vld [vmem:[%s168 + $0x3a] sm:$0xff]
      %v2323 = vld [vmem:[%s168 + $0x42] sm:$0xff]
      %v2324 = vld [vmem:[%s168 + $0x4a] sm:$0xff]
      %v2325 = vld [vmem:[%s168 + $0x52] sm:$0xff]
      %v2326 = vld [vmem:[%s168 + $0x5a] sm:$0xff]
      %v2327 = vld [vmem:[%s168 + $0x62] sm:$0xff]
      %v2328 = vld [vmem:[%s168 + $0x6a] sm:$0xff]
      %v2329 = vld [vmem:[%s168 + $0x72] sm:$0xff]
      %v2330 = vld [vmem:[%s168 + $0x7a] sm:$0xff]
      %v2331 = vld [vmem:[%s168 + $0x82] sm:$0xff]
      %v2332 = vld [vmem:[%s168 + $0x8a] sm:$0xff]
      %v2333 = vld [vmem:[%s168 + $0x92] sm:$0xff]
      %v2334 = vld [vmem:[%s168 + $0x9a] sm:$0xff]
      %v2335 = vld [vmem:[%s168 + $0xa2] sm:$0xff]
      %v2336 = vld [vmem:[%s168 + $0xaa] sm:$0xff]
      %v2337 = vld [vmem:[%s168 + $0xb2] sm:$0xff]
      %v2338 = vld [vmem:[%s168 + $0xba] sm:$0xff]
      %v2339 = vld [vmem:[%s168 + $0xc2] sm:$0xff]
      %v2340 = vld [vmem:[%s168 + $0xca] sm:$0xff]
      %v2341 = vld [vmem:[%s168 + $0xd2] sm:$0xff]
      %v2342 = vld [vmem:[%s168 + $0xda] sm:$0xff]
      %v2343 = vld [vmem:[%s168 + $0xe2] sm:$0xff]
      %v2344 = vld [vmem:[%s168 + $0xea] sm:$0xff]
      %v2345 = vld [vmem:[%s168 + $0xf2] sm:$0xff]
      %v2346 = vld [vmem:[%s168 + $0xfa] sm:$0xff]
      %v2347 = vld [vmem:[%s168 + $0x102] sm:$0xff]
      %v2348 = vld [vmem:[%s168 + $0x10a] sm:$0xff]
      %v2349 = vld [vmem:[%s168 + $0x112] sm:$0xff]
      %v2350 = vld [vmem:[%s168 + $0x11a] sm:$0xff]
      %v2351 = vld [vmem:[%s168 + $0x122] sm:$0xff]
      %v2352 = vld [vmem:[%s168 + $0x12a] sm:$0xff]
      %v2353 = vld [vmem:[%s168 + $0x132] sm:$0xff]
      %v2354 = vld [vmem:[%s168 + $0x13a] sm:$0xff]
      %v2355 = vld [vmem:[%s168 + $0x142] sm:$0xff]
      %v2356 = vld [vmem:[%s168 + $0x14a] sm:$0xff]
      %v2357 = vld [vmem:[%s168 + $0x152] sm:$0xff]
      %v2358 = vld [vmem:[%s168 + $0x15a] sm:$0xff]
      %v2359 = vld [vmem:[%s168 + $0x162] sm:$0xff]
      %v2360 = vld [vmem:[%s168 + $0x16a] sm:$0xff]
      %v2361 = vld [vmem:[%s168 + $0x172] sm:$0xff]
      %v2362 = vld [vmem:[%s168 + $0x17a] sm:$0xff]
      %v2363 = vld [vmem:[%s168 + $0x182] sm:$0xff]
      %v2364 = vld [vmem:[%s168 + $0x18a] sm:$0xff]
      %v2365 = vld [vmem:[%s168 + $0x192] sm:$0xff]
      %v2366 = vld [vmem:[%s168 + $0x19a] sm:$0xff]
      %v2367 = vld [vmem:[%s168 + $0x1a2] sm:$0xff]
      %v2368 = vld [vmem:[%s168 + $0x1aa] sm:$0xff]
      %v2369 = vld [vmem:[%s168 + $0x1b2] sm:$0xff]
      %v2370 = vld [vmem:[%s168 + $0x1ba] sm:$0xff]
      %v2371 = vld [vmem:[%s168 + $0x1c2] sm:$0xff]
      %v2372 = vpack.c.bf16 %v2319, %v2318
      %v2373 = vpack.c.bf16 %v2321, %v2320
      %v2374 = vpack.c.bf16 %v2323, %v2322
      %v2375 = vpack.c.bf16 %v2325, %v2324
      %v2376 = vpack.c.bf16 %v2327, %v2326
      %v2377 = vpack.c.bf16 %v2329, %v2328
      %v2378 = vpack.c.bf16 %v2331, %v2330
      %v2379 = vpack.c.bf16 %v2333, %v2332
      %v2380 = vpack.c.bf16 %v2335, %v2334
      %v2381 = vpack.c.bf16 %v2337, %v2336
      %v2382 = vpack.c.bf16 %v2339, %v2338
      %v2383 = vpack.c.bf16 %v2341, %v2340
      %v2384 = vpack.c.bf16 %v2343, %v2342
      %v2385 = vpack.c.bf16 %v2345, %v2344
      %v2386 = vpack.c.bf16 %v2347, %v2346
      %v2387 = vpack.c.bf16 %v2349, %v2348
      %v2388 = vpack.c.bf16 %v2351, %v2350
      %v2389 = vpack.c.bf16 %v2353, %v2352
      %v2390 = vpack.c.bf16 %v2355, %v2354
      %v2391 = vpack.c.bf16 %v2357, %v2356
      %v2392 = vpack.c.bf16 %v2359, %v2358
      %v2393 = vpack.c.bf16 %v2361, %v2360
      %v2394 = vpack.c.bf16 %v2363, %v2362
      %v2395 = vpack.c.bf16 %v2365, %v2364
      %v2396 = vpack.c.bf16 %v2367, %v2366
      %v2397 = vpack.c.bf16 %v2369, %v2368
      %v2398 = vpack.c.bf16 %v2371, %v2370
      %s2399 = scalar_lea.vmem %s172, 320
      %v2400 = vld [vmem:[%s2399] sm:$0xf]
      %v2401 = vld [vmem:[%s2399 + $0x4] sm:$0xf]
      %v2402 = vld [vmem:[%s2399 + $0x8] sm:$0xf]
      %v2403 = vld [vmem:[%s2399 + $0xc] sm:$0xf]
      %v2404 = vld [vmem:[%s2399 + $0x10] sm:$0xf]
      %v2405 = vld [vmem:[%s2399 + $0x14] sm:$0xf]
      %v2406 = vld [vmem:[%s2399 + $0x18] sm:$0xf]
      %v2407 = vld [vmem:[%s2399 + $0x1c] sm:$0xf]
      %v2408 = vld [vmem:[%s2399 + $0x20] sm:$0xf]
      %v2409 = vld [vmem:[%s2399 + $0x24] sm:$0xf]
      %v2410 = vld [vmem:[%s2399 + $0x28] sm:$0xf]
      %v2411 = vld [vmem:[%s2399 + $0x2c] sm:$0xf]
      %v2412 = vld [vmem:[%s2399 + $0x30] sm:$0xf]
      %v2413 = vld [vmem:[%s2399 + $0x34] sm:$0xf]
      %v2414 = vld [vmem:[%s2399 + $0x38] sm:$0xf]
      %v2415 = vld [vmem:[%s2399 + $0x3c] sm:$0xf]
      %v2432 = vunpack.c.l.b16 %v2400
      %v2433 = vunpack.c.l.b16 %v2401
      %v2434 = vunpack.c.l.b16 %v2402
      %v2435 = vunpack.c.l.b16 %v2403
      %v2436 = vunpack.c.l.b16 %v2404
      %v2437 = vunpack.c.l.b16 %v2405
      %v2438 = vunpack.c.l.b16 %v2406
      %v2439 = vunpack.c.l.b16 %v2407
      %v2440 = vunpack.c.l.b16 %v2408
      %v2441 = vunpack.c.l.b16 %v2409
      %v2442 = vunpack.c.l.b16 %v2410
      %v2443 = vunpack.c.l.b16 %v2411
      %v2444 = vunpack.c.l.b16 %v2412
      %v2445 = vunpack.c.l.b16 %v2413
      %v2446 = vunpack.c.l.b16 %v2414
      %v2447 = vunpack.c.l.b16 %v2415
      %v2448 = vpack.c.b16 %v2433, %v2432
      %v2449 = vpack.c.b16 %v2435, %v2434
      %v2450 = vpack.c.b16 %v2437, %v2436
      %v2451 = vpack.c.b16 %v2439, %v2438
      %v2452 = vpack.c.b16 %v2441, %v2440
      %v2453 = vpack.c.b16 %v2443, %v2442
      %v2454 = vpack.c.b16 %v2445, %v2444
      %v2455 = vpack.c.b16 %v2447, %v2446
      %2464 = vmatprep.subr.bf16.mxu0 0
      %2465 = vmatpush1.bf16.msra.mxu0 %v2448
      %2466 = vmatprep.subr.bf16.mxu0 0
      %2467 = vmatpush1.bf16.msra.mxu0 %v2449
      %2468 = vmatprep.subr.bf16.mxu0 0
      %2469 = vmatpush1.bf16.msra.mxu0 %v2450
      %2470 = vmatprep.subr.bf16.mxu0 0
      %2471 = vmatpush1.bf16.msra.mxu0 %v2451
      %2472 = vmatprep.subr.bf16.mxu0 0
      %2473 = vmatpush1.bf16.msra.mxu0 %v2452
      %2474 = vmatprep.subr.bf16.mxu0 0
      %2475 = vmatpush1.bf16.msra.mxu0 %v2453
      %2476 = vmatprep.subr.bf16.mxu0 0
      %2477 = vmatpush1.bf16.msra.mxu0 %v2454
      %2478 = vmatprep.subr.bf16.mxu0 0
      %2479 = vmatpush1.bf16.msra.mxu0 %v2455
      %2480 = vmatprep.subr.bf16.mxu0 0
      %2481 = vmatpush1.bf16.msra.mxu0 0
      %2482 = vmatprep.subr.bf16.mxu0 0
      %2483 = vmatpush1.bf16.msra.mxu0 0
      %2484 = vmatprep.subr.bf16.mxu0 0
      %2485 = vmatpush1.bf16.msra.mxu0 0
      %2486 = vmatprep.subr.bf16.mxu0 0
      %2487 = vmatpush1.bf16.msra.mxu0 0
      %2488 = vmatprep.subr.bf16.mxu0 0
      %2489 = vmatpush1.bf16.msra.mxu0 0
      %2490 = vmatprep.subr.bf16.mxu0 0
      %2491 = vmatpush1.bf16.msra.mxu0 0
      %2492 = vmatprep.subr.bf16.mxu0 0
      %2493 = vmatpush1.bf16.msra.mxu0 0
      %2494 = vmatprep.subr.bf16.mxu0 0
      %2495 = vmatpush1.bf16.msra.mxu0 0
      %2496 = vmatprep.mubr.bf16.mxu0 0
      %2497 = vmatmul.mubr.bf16.gmra.mrb[0].mxu0 %v2372
      %v2498 = vpop.f32.mrb[0].mxu0
      %v2499 = vadd.f32 0.0, %v2498
      %v2500 = vpop.f32.mrb[0].mxu0
      %v2501 = vpop.f32.mrb[0].mxu0
      %v2502 = vadd.f32 0.0, %v2501
      %v2503 = vpop.f32.mrb[0].mxu0
      %2504 = vmatprep.mubr.bf16.mxu0 0
      %2505 = vmatmul.mubr.bf16.gmra.mrb[0].mxu0 %v2373
      %v2506 = vpop.f32.mrb[0].mxu0
      %v2507 = vadd.f32 0.0, %v2506
      %v2508 = vpop.f32.mrb[0].mxu0
      %v2509 = vpop.f32.mrb[0].mxu0
      %v2510 = vadd.f32 0.0, %v2509
      %v2511 = vpop.f32.mrb[0].mxu0
      %2512 = vmatprep.mubr.bf16.mxu0 0
      %2513 = vmatmul.mubr.bf16.gmra.mrb[0].mxu0 %v2374
      %v2514 = vpop.f32.mrb[0].mxu0
      %v2515 = vadd.f32 0.0, %v2514
      %v2516 = vpop.f32.mrb[0].mxu0
      %v2517 = vpop.f32.mrb[0].mxu0
      %v2518 = vadd.f32 0.0, %v2517
      %v2519 = vpop.f32.mrb[0].mxu0
      %2520 = vmatprep.mubr.bf16.mxu0 0
      %2521 = vmatmul.mubr.bf16.gmra.mrb[0].mxu0 %v2375
      %v2522 = vpop.f32.mrb[0].mxu0
      %v2523 = vadd.f32 0.0, %v2522
      %v2524 = vpop.f32.mrb[0].mxu0
      %v2525 = vpop.f32.mrb[0].mxu0
      %v2526 = vadd.f32 0.0, %v2525
      %v2527 = vpop.f32.mrb[0].mxu0
      %2528 = vmatprep.mubr.bf16.mxu0 0
      %2529 = vmatmul.mubr.bf16.gmra.mrb[0].mxu0 %v2376
      %v2530 = vpop.f32.mrb[0].mxu0
      %v2531 = vadd.f32 0.0, %v2530
      %v2532 = vpop.f32.mrb[0].mxu0
      %v2533 = vpop.f32.mrb[0].mxu0
      %v2534 = vadd.f32 0.0, %v2533
      %v2535 = vpop.f32.mrb[0].mxu0
      %2536 = vmatprep.mubr.bf16.mxu0 0
      %2537 = vmatmul.mubr.bf16.gmra.mrb[0].mxu0 %v2377
      %v2538 = vpop.f32.mrb[0].mxu0
      %v2539 = vadd.f32 0.0, %v2538
      %v2540 = vpop.f32.mrb[0].mxu0
      %v2541 = vpop.f32.mrb[0].mxu0
      %v2542 = vadd.f32 0.0, %v2541
      %v2543 = vpop.f32.mrb[0].mxu0
      %2544 = vmatprep.mubr.bf16.mxu0 0
      %2545 = vmatmul.mubr.bf16.gmra.mrb[0].mxu0 %v2378
      %v2546 = vpop.f32.mrb[0].mxu0
      %v2547 = vadd.f32 0.0, %v2546
      %v2548 = vpop.f32.mrb[0].mxu0
      %v2549 = vpop.f32.mrb[0].mxu0
      %v2550 = vadd.f32 0.0, %v2549
      %v2551 = vpop.f32.mrb[0].mxu0
      %2552 = vmatprep.mubr.bf16.mxu0 0
      %2553 = vmatmul.mubr.bf16.gmra.mrb[0].mxu0 %v2379
      %v2554 = vpop.f32.mrb[0].mxu0
      %v2555 = vadd.f32 0.0, %v2554
      %v2556 = vpop.f32.mrb[0].mxu0
      %v2557 = vpop.f32.mrb[0].mxu0
      %v2558 = vadd.f32 0.0, %v2557
      %v2559 = vpop.f32.mrb[0].mxu0
      %2560 = vmatprep.mubr.bf16.mxu0 0
      %2561 = vmatmul.mubr.bf16.gmra.mrb[0].mxu0 %v2380
      %v2562 = vpop.f32.mrb[0].mxu0
      %v2563 = vadd.f32 0.0, %v2562
      %v2564 = vpop.f32.mrb[0].mxu0
      %v2565 = vpop.f32.mrb[0].mxu0
      %v2566 = vadd.f32 0.0, %v2565
      %v2567 = vpop.f32.mrb[0].mxu0
      %2568 = vmatprep.mubr.bf16.mxu0 0
      %2569 = vmatmul.mubr.bf16.gmra.mrb[0].mxu0 %v2381
      %v2570 = vpop.f32.mrb[0].mxu0
      %v2571 = vadd.f32 0.0, %v2570
      %v2572 = vpop.f32.mrb[0].mxu0
      %v2573 = vpop.f32.mrb[0].mxu0
      %v2574 = vadd.f32 0.0, %v2573
      %v2575 = vpop.f32.mrb[0].mxu0
      %2576 = vmatprep.mubr.bf16.mxu0 0
      %2577 = vmatmul.mubr.bf16.gmra.mrb[0].mxu0 %v2382
      %v2578 = vpop.f32.mrb[0].mxu0
      %v2579 = vadd.f32 0.0, %v2578
      %v2580 = vpop.f32.mrb[0].mxu0
      %v2581 = vpop.f32.mrb[0].mxu0
      %v2582 = vadd.f32 0.0, %v2581
      %v2583 = vpop.f32.mrb[0].mxu0
      %2584 = vmatprep.mubr.bf16.mxu0 0
      %2585 = vmatmul.mubr.bf16.gmra.mrb[0].mxu0 %v2383
      %v2586 = vpop.f32.mrb[0].mxu0
      %v2587 = vadd.f32 0.0, %v2586
      %v2588 = vpop.f32.mrb[0].mxu0
      %v2589 = vpop.f32.mrb[0].mxu0
      %v2590 = vadd.f32 0.0, %v2589
      %v2591 = vpop.f32.mrb[0].mxu0
      %2592 = vmatprep.mubr.bf16.mxu0 0
      %2593 = vmatmul.mubr.bf16.gmra.mrb[0].mxu0 %v2384
      %v2594 = vpop.f32.mrb[0].mxu0
      %v2595 = vadd.f32 0.0, %v2594
      %v2596 = vpop.f32.mrb[0].mxu0
      %v2597 = vpop.f32.mrb[0].mxu0
      %v2598 = vadd.f32 0.0, %v2597
      %v2599 = vpop.f32.mrb[0].mxu0
      %2600 = vmatprep.mubr.bf16.mxu0 0
      %2601 = vmatmul.mubr.bf16.gmra.mrb[0].mxu0 %v2385
      %v2602 = vpop.f32.mrb[0].mxu0
      %v2603 = vadd.f32 0.0, %v2602
      %v2604 = vpop.f32.mrb[0].mxu0
      %v2605 = vpop.f32.mrb[0].mxu0
      %v2606 = vadd.f32 0.0, %v2605
      %v2607 = vpop.f32.mrb[0].mxu0
      %2608 = vmatprep.mubr.bf16.mxu0 0
      %2609 = vmatmul.mubr.bf16.gmra.mrb[0].mxu0 %v2386
      %v2610 = vpop.f32.mrb[0].mxu0
      %v2611 = vadd.f32 0.0, %v2610
      %v2612 = vpop.f32.mrb[0].mxu0
      %v2613 = vpop.f32.mrb[0].mxu0
      %v2614 = vadd.f32 0.0, %v2613
      %v2615 = vpop.f32.mrb[0].mxu0
      %2616 = vmatprep.mubr.bf16.mxu0 0
      %2617 = vmatmul.mubr.bf16.gmra.mrb[0].mxu0 %v2387
      %v2618 = vpop.f32.mrb[0].mxu0
      %v2619 = vadd.f32 0.0, %v2618
      %v2620 = vpop.f32.mrb[0].mxu0
      %v2621 = vpop.f32.mrb[0].mxu0
      %v2622 = vadd.f32 0.0, %v2621
      %v2623 = vpop.f32.mrb[0].mxu0
      %2624 = vmatprep.mubr.bf16.mxu0 0
      %2625 = vmatmul.mubr.bf16.gmra.mrb[0].mxu0 %v2388
      %v2626 = vpop.f32.mrb[0].mxu0
      %v2627 = vadd.f32 0.0, %v2626
      %v2628 = vpop.f32.mrb[0].mxu0
      %v2629 = vpop.f32.mrb[0].mxu0
      %v2630 = vadd.f32 0.0, %v2629
      %v2631 = vpop.f32.mrb[0].mxu0
      %2632 = vmatprep.mubr.bf16.mxu0 0
      %2633 = vmatmul.mubr.bf16.gmra.mrb[0].mxu0 %v2389
      %v2634 = vpop.f32.mrb[0].mxu0
      %v2635 = vadd.f32 0.0, %v2634
      %v2636 = vpop.f32.mrb[0].mxu0
      %v2637 = vpop.f32.mrb[0].mxu0
      %v2638 = vadd.f32 0.0, %v2637
      %v2639 = vpop.f32.mrb[0].mxu0
      %2640 = vmatprep.mubr.bf16.mxu0 0
      %2641 = vmatmul.mubr.bf16.gmra.mrb[0].mxu0 %v2390
      %v2642 = vpop.f32.mrb[0].mxu0
      %v2643 = vadd.f32 0.0, %v2642
      %v2644 = vpop.f32.mrb[0].mxu0
      %v2645 = vpop.f32.mrb[0].mxu0
      %v2646 = vadd.f32 0.0, %v2645
      %v2647 = vpop.f32.mrb[0].mxu0
      %2648 = vmatprep.mubr.bf16.mxu0 0
      %2649 = vmatmul.mubr.bf16.gmra.mrb[0].mxu0 %v2391
      %v2650 = vpop.f32.mrb[0].mxu0
      %v2651 = vadd.f32 0.0, %v2650
      %v2652 = vpop.f32.mrb[0].mxu0
      %v2653 = vpop.f32.mrb[0].mxu0
      %v2654 = vadd.f32 0.0, %v2653
      %v2655 = vpop.f32.mrb[0].mxu0
      %2656 = vmatprep.mubr.bf16.mxu0 0
      %2657 = vmatmul.mubr.bf16.gmra.mrb[0].mxu0 %v2392
      %v2658 = vpop.f32.mrb[0].mxu0
      %v2659 = vadd.f32 0.0, %v2658
      %v2660 = vpop.f32.mrb[0].mxu0
      %v2661 = vpop.f32.mrb[0].mxu0
      %v2662 = vadd.f32 0.0, %v2661
      %v2663 = vpop.f32.mrb[0].mxu0
      %2664 = vmatprep.mubr.bf16.mxu0 0
      %2665 = vmatmul.mubr.bf16.gmra.mrb[0].mxu0 %v2393
      %v2666 = vpop.f32.mrb[0].mxu0
      %v2667 = vadd.f32 0.0, %v2666
      %v2668 = vpop.f32.mrb[0].mxu0
      %v2669 = vpop.f32.mrb[0].mxu0
      %v2670 = vadd.f32 0.0, %v2669
      %v2671 = vpop.f32.mrb[0].mxu0
      %2672 = vmatprep.mubr.bf16.mxu0 0
      %2673 = vmatmul.mubr.bf16.gmra.mrb[0].mxu0 %v2394
      %v2674 = vpop.f32.mrb[0].mxu0
      %v2675 = vadd.f32 0.0, %v2674
      %v2676 = vpop.f32.mrb[0].mxu0
      %v2677 = vpop.f32.mrb[0].mxu0
      %v2678 = vadd.f32 0.0, %v2677
      %v2679 = vpop.f32.mrb[0].mxu0
      %2680 = vmatprep.mubr.bf16.mxu0 0
      %2681 = vmatmul.mubr.bf16.gmra.mrb[0].mxu0 %v2395
      %v2682 = vpop.f32.mrb[0].mxu0
      %v2683 = vadd.f32 0.0, %v2682
      %v2684 = vpop.f32.mrb[0].mxu0
      %v2685 = vpop.f32.mrb[0].mxu0
      %v2686 = vadd.f32 0.0, %v2685
      %v2687 = vpop.f32.mrb[0].mxu0
      %2688 = vmatprep.mubr.bf16.mxu0 0
      %2689 = vmatmul.mubr.bf16.gmra.mrb[0].mxu0 %v2396
      %v2690 = vpop.f32.mrb[0].mxu0
      %v2691 = vadd.f32 0.0, %v2690
      %v2692 = vpop.f32.mrb[0].mxu0
      %v2693 = vpop.f32.mrb[0].mxu0
      %v2694 = vadd.f32 0.0, %v2693
      %v2695 = vpop.f32.mrb[0].mxu0
      %2696 = vmatprep.mubr.bf16.mxu0 0
      %2697 = vmatmul.mubr.bf16.gmra.mrb[0].mxu0 %v2397
      %v2698 = vpop.f32.mrb[0].mxu0
      %v2699 = vadd.f32 0.0, %v2698
      %v2700 = vpop.f32.mrb[0].mxu0
      %v2701 = vpop.f32.mrb[0].mxu0
      %v2702 = vadd.f32 0.0, %v2701
      %v2703 = vpop.f32.mrb[0].mxu0
      %2704 = vmatprep.mubr.bf16.mxu0 0
      %2705 = vmatmul.mubr.bf16.gmra.mrb[0].mxu0 %v2398
      %v2706 = vpop.f32.mrb[0].mxu0
      %v2707 = vadd.f32 0.0, %v2706
      %v2708 = vpop.f32.mrb[0].mxu0
      %v2709 = vpop.f32.mrb[0].mxu0
      %v2710 = vadd.f32 0.0, %v2709
      %v2711 = vpop.f32.mrb[0].mxu0
      %2712 = vdwg.mxu0
      %v2713 = vadd.f32 %v2264, %v2499
      %v2714 = vadd.f32 %v2265, %v2502
      %v2715 = vadd.f32 %v2266, %v2507
      %v2716 = vadd.f32 %v2267, %v2510
      %v2717 = vadd.f32 %v2268, %v2515
      %v2718 = vadd.f32 %v2269, %v2518
      %v2719 = vadd.f32 %v2270, %v2523
      %v2720 = vadd.f32 %v2271, %v2526
      %v2721 = vadd.f32 %v2272, %v2531
      %v2722 = vadd.f32 %v2273, %v2534
      %v2723 = vadd.f32 %v2274, %v2539
      %v2724 = vadd.f32 %v2275, %v2542
      %v2725 = vadd.f32 %v2276, %v2547
      %v2726 = vadd.f32 %v2277, %v2550
      %v2727 = vadd.f32 %v2278, %v2555
      %v2728 = vadd.f32 %v2279, %v2558
      %v2729 = vadd.f32 %v2280, %v2563
      %v2730 = vadd.f32 %v2281, %v2566
      %v2731 = vadd.f32 %v2282, %v2571
      %v2732 = vadd.f32 %v2283, %v2574
      %v2733 = vadd.f32 %v2284, %v2579
      %v2734 = vadd.f32 %v2285, %v2582
      %v2735 = vadd.f32 %v2286, %v2587
      %v2736 = vadd.f32 %v2287, %v2590
      %v2737 = vadd.f32 %v2288, %v2595
      %v2738 = vadd.f32 %v2289, %v2598
      %v2739 = vadd.f32 %v2290, %v2603
      %v2740 = vadd.f32 %v2291, %v2606
      %v2741 = vadd.f32 %v2292, %v2611
      %v2742 = vadd.f32 %v2293, %v2614
      %v2743 = vadd.f32 %v2294, %v2619
      %v2744 = vadd.f32 %v2295, %v2622
      %v2745 = vadd.f32 %v2296, %v2627
      %v2746 = vadd.f32 %v2297, %v2630
      %v2747 = vadd.f32 %v2298, %v2635
      %v2748 = vadd.f32 %v2299, %v2638
      %v2749 = vadd.f32 %v2300, %v2643
      %v2750 = vadd.f32 %v2301, %v2646
      %v2751 = vadd.f32 %v2302, %v2651
      %v2752 = vadd.f32 %v2303, %v2654
      %v2753 = vadd.f32 %v2304, %v2659
      %v2754 = vadd.f32 %v2305, %v2662
      %v2755 = vadd.f32 %v2306, %v2667
      %v2756 = vadd.f32 %v2307, %v2670
      %v2757 = vadd.f32 %v2308, %v2675
      %v2758 = vadd.f32 %v2309, %v2678
      %v2759 = vadd.f32 %v2310, %v2683
      %v2760 = vadd.f32 %v2311, %v2686
      %v2761 = vadd.f32 %v2312, %v2691
      %v2762 = vadd.f32 %v2313, %v2694
      %v2763 = vadd.f32 %v2314, %v2699
      %v2764 = vadd.f32 %v2315, %v2702
      %v2765 = vadd.f32 %v2316, %v2707
      %v2766 = vadd.f32 %v2317, %v2710
      %v2767 = vld [vmem:[%s168 + $0x30] sm:$0xff]
      %v2768 = vld [vmem:[%s168 + $0x38] sm:$0xff]
      %v2769 = vld [vmem:[%s168 + $0x40] sm:$0xff]
      %v2770 = vld [vmem:[%s168 + $0x48] sm:$0xff]
      %v2771 = vld [vmem:[%s168 + $0x50] sm:$0xff]
      %v2772 = vld [vmem:[%s168 + $0x58] sm:$0xff]
      %v2773 = vld [vmem:[%s168 + $0x60] sm:$0xff]
      %v2774 = vld [vmem:[%s168 + $0x68] sm:$0xff]
      %v2775 = vld [vmem:[%s168 + $0x70] sm:$0xff]
      %v2776 = vld [vmem:[%s168 + $0x78] sm:$0xff]
      %v2777 = vld [vmem:[%s168 + $0x80] sm:$0xff]
      %v2778 = vld [vmem:[%s168 + $0x88] sm:$0xff]
      %v2779 = vld [vmem:[%s168 + $0x90] sm:$0xff]
      %v2780 = vld [vmem:[%s168 + $0x98] sm:$0xff]
      %v2781 = vld [vmem:[%s168 + $0xa0] sm:$0xff]
      %v2782 = vld [vmem:[%s168 + $0xa8] sm:$0xff]
      %v2783 = vld [vmem:[%s168 + $0xb0] sm:$0xff]
      %v2784 = vld [vmem:[%s168 + $0xb8] sm:$0xff]
      %v2785 = vld [vmem:[%s168 + $0xc0] sm:$0xff]
      %v2786 = vld [vmem:[%s168 + $0xc8] sm:$0xff]
      %v2787 = vld [vmem:[%s168 + $0xd0] sm:$0xff]
      %v2788 = vld [vmem:[%s168 + $0xd8] sm:$0xff]
      %v2789 = vld [vmem:[%s168 + $0xe0] sm:$0xff]
      %v2790 = vld [vmem:[%s168 + $0xe8] sm:$0xff]
      %v2791 = vld [vmem:[%s168 + $0xf0] sm:$0xff]
      %v2792 = vld [vmem:[%s168 + $0xf8] sm:$0xff]
      %v2793 = vld [vmem:[%s168 + $0x100] sm:$0xff]
      %v2794 = vld [vmem:[%s168 + $0x108] sm:$0xff]
      %v2795 = vld [vmem:[%s168 + $0x110] sm:$0xff]
      %v2796 = vld [vmem:[%s168 + $0x118] sm:$0xff]
      %v2797 = vld [vmem:[%s168 + $0x120] sm:$0xff]
      %v2798 = vld [vmem:[%s168 + $0x128] sm:$0xff]
      %v2799 = vld [vmem:[%s168 + $0x130] sm:$0xff]
      %v2800 = vld [vmem:[%s168 + $0x138] sm:$0xff]
      %v2801 = vld [vmem:[%s168 + $0x140] sm:$0xff]
      %v2802 = vld [vmem:[%s168 + $0x148] sm:$0xff]
      %v2803 = vld [vmem:[%s168 + $0x150] sm:$0xff]
      %v2804 = vld [vmem:[%s168 + $0x158] sm:$0xff]
      %v2805 = vld [vmem:[%s168 + $0x160] sm:$0xff]
      %v2806 = vld [vmem:[%s168 + $0x168] sm:$0xff]
      %v2807 = vld [vmem:[%s168 + $0x170] sm:$0xff]
      %v2808 = vld [vmem:[%s168 + $0x178] sm:$0xff]
      %v2809 = vld [vmem:[%s168 + $0x180] sm:$0xff]
      %v2810 = vld [vmem:[%s168 + $0x188] sm:$0xff]
      %v2811 = vld [vmem:[%s168 + $0x190] sm:$0xff]
      %v2812 = vld [vmem:[%s168 + $0x198] sm:$0xff]
      %v2813 = vld [vmem:[%s168 + $0x1a0] sm:$0xff]
      %v2814 = vld [vmem:[%s168 + $0x1a8] sm:$0xff]
      %v2815 = vld [vmem:[%s168 + $0x1b0] sm:$0xff]
      %v2816 = vld [vmem:[%s168 + $0x1b8] sm:$0xff]
      %v2817 = vld [vmem:[%s168 + $0x1c0] sm:$0xff]
      %v2818 = vld [vmem:[%s168 + $0x1c8] sm:$0xff]
      %v2819 = vld [vmem:[%s168 + $0x1d0] sm:$0xff]
      %v2820 = vld [vmem:[%s168 + $0x1d8] sm:$0xff]
      %v2821 = vpack.c.bf16 %v2768, %v2767
      %v2822 = vpack.c.bf16 %v2770, %v2769
      %v2823 = vpack.c.bf16 %v2772, %v2771
      %v2824 = vpack.c.bf16 %v2774, %v2773
      %v2825 = vpack.c.bf16 %v2776, %v2775
      %v2826 = vpack.c.bf16 %v2778, %v2777
      %v2827 = vpack.c.bf16 %v2780, %v2779
      %v2828 = vpack.c.bf16 %v2782, %v2781
      %v2829 = vpack.c.bf16 %v2784, %v2783
      %v2830 = vpack.c.bf16 %v2786, %v2785
      %v2831 = vpack.c.bf16 %v2788, %v2787
      %v2832 = vpack.c.bf16 %v2790, %v2789
      %v2833 = vpack.c.bf16 %v2792, %v2791
      %v2834 = vpack.c.bf16 %v2794, %v2793
      %v2835 = vpack.c.bf16 %v2796, %v2795
      %v2836 = vpack.c.bf16 %v2798, %v2797
      %v2837 = vpack.c.bf16 %v2800, %v2799
      %v2838 = vpack.c.bf16 %v2802, %v2801
      %v2839 = vpack.c.bf16 %v2804, %v2803
      %v2840 = vpack.c.bf16 %v2806, %v2805
      %v2841 = vpack.c.bf16 %v2808, %v2807
      %v2842 = vpack.c.bf16 %v2810, %v2809
      %v2843 = vpack.c.bf16 %v2812, %v2811
      %v2844 = vpack.c.bf16 %v2814, %v2813
      %v2845 = vpack.c.bf16 %v2816, %v2815
      %v2846 = vpack.c.bf16 %v2818, %v2817
      %v2847 = vpack.c.bf16 %v2820, %v2819
      %s2848 = scalar_lea.vmem %s172, 384
      %v2849 = vld [vmem:[%s2848] sm:$0xf]
      %v2850 = vld [vmem:[%s2848 + $0x4] sm:$0xf]
      %v2851 = vld [vmem:[%s2848 + $0x8] sm:$0xf]
      %v2852 = vld [vmem:[%s2848 + $0xc] sm:$0xf]
      %v2853 = vld [vmem:[%s2848 + $0x10] sm:$0xf]
      %v2854 = vld [vmem:[%s2848 + $0x14] sm:$0xf]
      %v2855 = vld [vmem:[%s2848 + $0x18] sm:$0xf]
      %v2856 = vld [vmem:[%s2848 + $0x1c] sm:$0xf]
      %v2857 = vld [vmem:[%s2848 + $0x20] sm:$0xf]
      %v2858 = vld [vmem:[%s2848 + $0x24] sm:$0xf]
      %v2859 = vld [vmem:[%s2848 + $0x28] sm:$0xf]
      %v2860 = vld [vmem:[%s2848 + $0x2c] sm:$0xf]
      %v2861 = vld [vmem:[%s2848 + $0x30] sm:$0xf]
      %v2862 = vld [vmem:[%s2848 + $0x34] sm:$0xf]
      %v2863 = vld [vmem:[%s2848 + $0x38] sm:$0xf]
      %v2864 = vld [vmem:[%s2848 + $0x3c] sm:$0xf]
      %v2881 = vunpack.c.l.b16 %v2849
      %v2882 = vunpack.c.l.b16 %v2850
      %v2883 = vunpack.c.l.b16 %v2851
      %v2884 = vunpack.c.l.b16 %v2852
      %v2885 = vunpack.c.l.b16 %v2853
      %v2886 = vunpack.c.l.b16 %v2854
      %v2887 = vunpack.c.l.b16 %v2855
      %v2888 = vunpack.c.l.b16 %v2856
      %v2889 = vunpack.c.l.b16 %v2857
      %v2890 = vunpack.c.l.b16 %v2858
      %v2891 = vunpack.c.l.b16 %v2859
      %v2892 = vunpack.c.l.b16 %v2860
      %v2893 = vunpack.c.l.b16 %v2861
      %v2894 = vunpack.c.l.b16 %v2862
      %v2895 = vunpack.c.l.b16 %v2863
      %v2896 = vunpack.c.l.b16 %v2864
      %v2897 = vpack.c.b16 %v2882, %v2881
      %v2898 = vpack.c.b16 %v2884, %v2883
      %v2899 = vpack.c.b16 %v2886, %v2885
      %v2900 = vpack.c.b16 %v2888, %v2887
      %v2901 = vpack.c.b16 %v2890, %v2889
      %v2902 = vpack.c.b16 %v2892, %v2891
      %v2903 = vpack.c.b16 %v2894, %v2893
      %v2904 = vpack.c.b16 %v2896, %v2895
      %2913 = vmatprep.subr.bf16.mxu0 0
      %2914 = vmatpush1.bf16.msra.mxu0 %v2897
      %2915 = vmatprep.subr.bf16.mxu0 0
      %2916 = vmatpush1.bf16.msra.mxu0 %v2898
      %2917 = vmatprep.subr.bf16.mxu0 0
      %2918 = vmatpush1.bf16.msra.mxu0 %v2899
      %2919 = vmatprep.subr.bf16.mxu0 0
      %2920 = vmatpush1.bf16.msra.mxu0 %v2900
      %2921 = vmatprep.subr.bf16.mxu0 0
      %2922 = vmatpush1.bf16.msra.mxu0 %v2901
      %2923 = vmatprep.subr.bf16.mxu0 0
      %2924 = vmatpush1.bf16.msra.mxu0 %v2902
      %2925 = vmatprep.subr.bf16.mxu0 0
      %2926 = vmatpush1.bf16.msra.mxu0 %v2903
      %2927 = vmatprep.subr.bf16.mxu0 0
      %2928 = vmatpush1.bf16.msra.mxu0 %v2904
      %2929 = vmatprep.subr.bf16.mxu0 0
      %2930 = vmatpush1.bf16.msra.mxu0 0
      %2931 = vmatprep.subr.bf16.mxu0 0
      %2932 = vmatpush1.bf16.msra.mxu0 0
      %2933 = vmatprep.subr.bf16.mxu0 0
      %2934 = vmatpush1.bf16.msra.mxu0 0
      %2935 = vmatprep.subr.bf16.mxu0 0
      %2936 = vmatpush1.bf16.msra.mxu0 0
      %2937 = vmatprep.subr.bf16.mxu0 0
      %2938 = vmatpush1.bf16.msra.mxu0 0
      %2939 = vmatprep.subr.bf16.mxu0 0
      %2940 = vmatpush1.bf16.msra.mxu0 0
      %2941 = vmatprep.subr.bf16.mxu0 0
      %2942 = vmatpush1.bf16.msra.mxu0 0
      %2943 = vmatprep.subr.bf16.mxu0 0
      %2944 = vmatpush1.bf16.msra.mxu0 0
      %2945 = vmatprep.mubr.bf16.mxu0 0
      %2946 = vmatmul.mubr.bf16.gmra.mrb[0].mxu0 %v2821
      %v2947 = vpop.f32.mrb[0].mxu0
      %v2948 = vadd.f32 0.0, %v2947
      %v2949 = vpop.f32.mrb[0].mxu0
      %v2950 = vpop.f32.mrb[0].mxu0
      %v2951 = vadd.f32 0.0, %v2950
      %v2952 = vpop.f32.mrb[0].mxu0
      %2953 = vmatprep.mubr.bf16.mxu0 0
      %2954 = vmatmul.mubr.bf16.gmra.mrb[0].mxu0 %v2822
      %v2955 = vpop.f32.mrb[0].mxu0
      %v2956 = vadd.f32 0.0, %v2955
      %v2957 = vpop.f32.mrb[0].mxu0
      %v2958 = vpop.f32.mrb[0].mxu0
      %v2959 = vadd.f32 0.0, %v2958
      %v2960 = vpop.f32.mrb[0].mxu0
      %2961 = vmatprep.mubr.bf16.mxu0 0
      %2962 = vmatmul.mubr.bf16.gmra.mrb[0].mxu0 %v2823
      %v2963 = vpop.f32.mrb[0].mxu0
      %v2964 = vadd.f32 0.0, %v2963
      %v2965 = vpop.f32.mrb[0].mxu0
      %v2966 = vpop.f32.mrb[0].mxu0
      %v2967 = vadd.f32 0.0, %v2966
      %v2968 = vpop.f32.mrb[0].mxu0
      %2969 = vmatprep.mubr.bf16.mxu0 0
      %2970 = vmatmul.mubr.bf16.gmra.mrb[0].mxu0 %v2824
      %v2971 = vpop.f32.mrb[0].mxu0
      %v2972 = vadd.f32 0.0, %v2971
      %v2973 = vpop.f32.mrb[0].mxu0
      %v2974 = vpop.f32.mrb[0].mxu0
      %v2975 = vadd.f32 0.0, %v2974
      %v2976 = vpop.f32.mrb[0].mxu0
      %2977 = vmatprep.mubr.bf16.mxu0 0
      %2978 = vmatmul.mubr.bf16.gmra.mrb[0].mxu0 %v2825
      %v2979 = vpop.f32.mrb[0].mxu0
      %v2980 = vadd.f32 0.0, %v2979
      %v2981 = vpop.f32.mrb[0].mxu0
      %v2982 = vpop.f32.mrb[0].mxu0
      %v2983 = vadd.f32 0.0, %v2982
      %v2984 = vpop.f32.mrb[0].mxu0
      %2985 = vmatprep.mubr.bf16.mxu0 0
      %2986 = vmatmul.mubr.bf16.gmra.mrb[0].mxu0 %v2826
      %v2987 = vpop.f32.mrb[0].mxu0
      %v2988 = vadd.f32 0.0, %v2987
      %v2989 = vpop.f32.mrb[0].mxu0
      %v2990 = vpop.f32.mrb[0].mxu0
      %v2991 = vadd.f32 0.0, %v2990
      %v2992 = vpop.f32.mrb[0].mxu0
      %2993 = vmatprep.mubr.bf16.mxu0 0
      %2994 = vmatmul.mubr.bf16.gmra.mrb[0].mxu0 %v2827
      %v2995 = vpop.f32.mrb[0].mxu0
      %v2996 = vadd.f32 0.0, %v2995
      %v2997 = vpop.f32.mrb[0].mxu0
      %v2998 = vpop.f32.mrb[0].mxu0
      %v2999 = vadd.f32 0.0, %v2998
      %v3000 = vpop.f32.mrb[0].mxu0
      %3001 = vmatprep.mubr.bf16.mxu0 0
      %3002 = vmatmul.mubr.bf16.gmra.mrb[0].mxu0 %v2828
      %v3003 = vpop.f32.mrb[0].mxu0
      %v3004 = vadd.f32 0.0, %v3003
      %v3005 = vpop.f32.mrb[0].mxu0
      %v3006 = vpop.f32.mrb[0].mxu0
      %v3007 = vadd.f32 0.0, %v3006
      %v3008 = vpop.f32.mrb[0].mxu0
      %3009 = vmatprep.mubr.bf16.mxu0 0
      %3010 = vmatmul.mubr.bf16.gmra.mrb[0].mxu0 %v2829
      %v3011 = vpop.f32.mrb[0].mxu0
      %v3012 = vadd.f32 0.0, %v3011
      %v3013 = vpop.f32.mrb[0].mxu0
      %v3014 = vpop.f32.mrb[0].mxu0
      %v3015 = vadd.f32 0.0, %v3014
      %v3016 = vpop.f32.mrb[0].mxu0
      %3017 = vmatprep.mubr.bf16.mxu0 0
      %3018 = vmatmul.mubr.bf16.gmra.mrb[0].mxu0 %v2830
      %v3019 = vpop.f32.mrb[0].mxu0
      %v3020 = vadd.f32 0.0, %v3019
      %v3021 = vpop.f32.mrb[0].mxu0
      %v3022 = vpop.f32.mrb[0].mxu0
      %v3023 = vadd.f32 0.0, %v3022
      %v3024 = vpop.f32.mrb[0].mxu0
      %3025 = vmatprep.mubr.bf16.mxu0 0
      %3026 = vmatmul.mubr.bf16.gmra.mrb[0].mxu0 %v2831
      %v3027 = vpop.f32.mrb[0].mxu0
      %v3028 = vadd.f32 0.0, %v3027
      %v3029 = vpop.f32.mrb[0].mxu0
      %v3030 = vpop.f32.mrb[0].mxu0
      %v3031 = vadd.f32 0.0, %v3030
      %v3032 = vpop.f32.mrb[0].mxu0
      %3033 = vmatprep.mubr.bf16.mxu0 0
      %3034 = vmatmul.mubr.bf16.gmra.mrb[0].mxu0 %v2832
      %v3035 = vpop.f32.mrb[0].mxu0
      %v3036 = vadd.f32 0.0, %v3035
      %v3037 = vpop.f32.mrb[0].mxu0
      %v3038 = vpop.f32.mrb[0].mxu0
      %v3039 = vadd.f32 0.0, %v3038
      %v3040 = vpop.f32.mrb[0].mxu0
      %3041 = vmatprep.mubr.bf16.mxu0 0
      %3042 = vmatmul.mubr.bf16.gmra.mrb[0].mxu0 %v2833
      %v3043 = vpop.f32.mrb[0].mxu0
      %v3044 = vadd.f32 0.0, %v3043
      %v3045 = vpop.f32.mrb[0].mxu0
      %v3046 = vpop.f32.mrb[0].mxu0
      %v3047 = vadd.f32 0.0, %v3046
      %v3048 = vpop.f32.mrb[0].mxu0
      %3049 = vmatprep.mubr.bf16.mxu0 0
      %3050 = vmatmul.mubr.bf16.gmra.mrb[0].mxu0 %v2834
      %v3051 = vpop.f32.mrb[0].mxu0
      %v3052 = vadd.f32 0.0, %v3051
      %v3053 = vpop.f32.mrb[0].mxu0
      %v3054 = vpop.f32.mrb[0].mxu0
      %v3055 = vadd.f32 0.0, %v3054
      %v3056 = vpop.f32.mrb[0].mxu0
      %3057 = vmatprep.mubr.bf16.mxu0 0
      %3058 = vmatmul.mubr.bf16.gmra.mrb[0].mxu0 %v2835
      %v3059 = vpop.f32.mrb[0].mxu0
      %v3060 = vadd.f32 0.0, %v3059
      %v3061 = vpop.f32.mrb[0].mxu0
      %v3062 = vpop.f32.mrb[0].mxu0
      %v3063 = vadd.f32 0.0, %v3062
      %v3064 = vpop.f32.mrb[0].mxu0
      %3065 = vmatprep.mubr.bf16.mxu0 0
      %3066 = vmatmul.mubr.bf16.gmra.mrb[0].mxu0 %v2836
      %v3067 = vpop.f32.mrb[0].mxu0
      %v3068 = vadd.f32 0.0, %v3067
      %v3069 = vpop.f32.mrb[0].mxu0
      %v3070 = vpop.f32.mrb[0].mxu0
      %v3071 = vadd.f32 0.0, %v3070
      %v3072 = vpop.f32.mrb[0].mxu0
      %3073 = vmatprep.mubr.bf16.mxu0 0
      %3074 = vmatmul.mubr.bf16.gmra.mrb[0].mxu0 %v2837
      %v3075 = vpop.f32.mrb[0].mxu0
      %v3076 = vadd.f32 0.0, %v3075
      %v3077 = vpop.f32.mrb[0].mxu0
      %v3078 = vpop.f32.mrb[0].mxu0
      %v3079 = vadd.f32 0.0, %v3078
      %v3080 = vpop.f32.mrb[0].mxu0
      %3081 = vmatprep.mubr.bf16.mxu0 0
      %3082 = vmatmul.mubr.bf16.gmra.mrb[0].mxu0 %v2838
      %v3083 = vpop.f32.mrb[0].mxu0
      %v3084 = vadd.f32 0.0, %v3083
      %v3085 = vpop.f32.mrb[0].mxu0
      %v3086 = vpop.f32.mrb[0].mxu0
      %v3087 = vadd.f32 0.0, %v3086
      %v3088 = vpop.f32.mrb[0].mxu0
      %3089 = vmatprep.mubr.bf16.mxu0 0
      %3090 = vmatmul.mubr.bf16.gmra.mrb[0].mxu0 %v2839
      %v3091 = vpop.f32.mrb[0].mxu0
      %v3092 = vadd.f32 0.0, %v3091
      %v3093 = vpop.f32.mrb[0].mxu0
      %v3094 = vpop.f32.mrb[0].mxu0
      %v3095 = vadd.f32 0.0, %v3094
      %v3096 = vpop.f32.mrb[0].mxu0
      %3097 = vmatprep.mubr.bf16.mxu0 0
      %3098 = vmatmul.mubr.bf16.gmra.mrb[0].mxu0 %v2840
      %v3099 = vpop.f32.mrb[0].mxu0
      %v3100 = vadd.f32 0.0, %v3099
      %v3101 = vpop.f32.mrb[0].mxu0
      %v3102 = vpop.f32.mrb[0].mxu0
      %v3103 = vadd.f32 0.0, %v3102
      %v3104 = vpop.f32.mrb[0].mxu0
      %3105 = vmatprep.mubr.bf16.mxu0 0
      %3106 = vmatmul.mubr.bf16.gmra.mrb[0].mxu0 %v2841
      %v3107 = vpop.f32.mrb[0].mxu0
      %v3108 = vadd.f32 0.0, %v3107
      %v3109 = vpop.f32.mrb[0].mxu0
      %v3110 = vpop.f32.mrb[0].mxu0
      %v3111 = vadd.f32 0.0, %v3110
      %v3112 = vpop.f32.mrb[0].mxu0
      %3113 = vmatprep.mubr.bf16.mxu0 0
      %3114 = vmatmul.mubr.bf16.gmra.mrb[0].mxu0 %v2842
      %v3115 = vpop.f32.mrb[0].mxu0
      %v3116 = vadd.f32 0.0, %v3115
      %v3117 = vpop.f32.mrb[0].mxu0
      %v3118 = vpop.f32.mrb[0].mxu0
      %v3119 = vadd.f32 0.0, %v3118
      %v3120 = vpop.f32.mrb[0].mxu0
      %3121 = vmatprep.mubr.bf16.mxu0 0
      %3122 = vmatmul.mubr.bf16.gmra.mrb[0].mxu0 %v2843
      %v3123 = vpop.f32.mrb[0].mxu0
      %v3124 = vadd.f32 0.0, %v3123
      %v3125 = vpop.f32.mrb[0].mxu0
      %v3126 = vpop.f32.mrb[0].mxu0
      %v3127 = vadd.f32 0.0, %v3126
      %v3128 = vpop.f32.mrb[0].mxu0
      %3129 = vmatprep.mubr.bf16.mxu0 0
      %3130 = vmatmul.mubr.bf16.gmra.mrb[0].mxu0 %v2844
      %v3131 = vpop.f32.mrb[0].mxu0
      %v3132 = vadd.f32 0.0, %v3131
      %v3133 = vpop.f32.mrb[0].mxu0
      %v3134 = vpop.f32.mrb[0].mxu0
      %v3135 = vadd.f32 0.0, %v3134
      %v3136 = vpop.f32.mrb[0].mxu0
      %3137 = vmatprep.mubr.bf16.mxu0 0
      %3138 = vmatmul.mubr.bf16.gmra.mrb[0].mxu0 %v2845
      %v3139 = vpop.f32.mrb[0].mxu0
      %v3140 = vadd.f32 0.0, %v3139
      %v3141 = vpop.f32.mrb[0].mxu0
      %v3142 = vpop.f32.mrb[0].mxu0
      %v3143 = vadd.f32 0.0, %v3142
      %v3144 = vpop.f32.mrb[0].mxu0
      %3145 = vmatprep.mubr.bf16.mxu0 0
      %3146 = vmatmul.mubr.bf16.gmra.mrb[0].mxu0 %v2846
      %v3147 = vpop.f32.mrb[0].mxu0
      %v3148 = vadd.f32 0.0, %v3147
      %v3149 = vpop.f32.mrb[0].mxu0
      %v3150 = vpop.f32.mrb[0].mxu0
      %v3151 = vadd.f32 0.0, %v3150
      %v3152 = vpop.f32.mrb[0].mxu0
      %3153 = vmatprep.mubr.bf16.mxu0 0
      %3154 = vmatmul.mubr.bf16.gmra.mrb[0].mxu0 %v2847
      %v3155 = vpop.f32.mrb[0].mxu0
      %v3156 = vadd.f32 0.0, %v3155
      %v3157 = vpop.f32.mrb[0].mxu0
      %v3158 = vpop.f32.mrb[0].mxu0
      %v3159 = vadd.f32 0.0, %v3158
      %v3160 = vpop.f32.mrb[0].mxu0
      %3161 = vdwg.mxu0
      %v3162 = vadd.f32 %v2713, %v2948
      %v3163 = vadd.f32 %v2714, %v2951
      %v3164 = vadd.f32 %v2715, %v2956
      %v3165 = vadd.f32 %v2716, %v2959
      %v3166 = vadd.f32 %v2717, %v2964
      %v3167 = vadd.f32 %v2718, %v2967
      %v3168 = vadd.f32 %v2719, %v2972
      %v3169 = vadd.f32 %v2720, %v2975
      %v3170 = vadd.f32 %v2721, %v2980
      %v3171 = vadd.f32 %v2722, %v2983
      %v3172 = vadd.f32 %v2723, %v2988
      %v3173 = vadd.f32 %v2724, %v2991
      %v3174 = vadd.f32 %v2725, %v2996
      %v3175 = vadd.f32 %v2726, %v2999
      %v3176 = vadd.f32 %v2727, %v3004
      %v3177 = vadd.f32 %v2728, %v3007
      %v3178 = vadd.f32 %v2729, %v3012
      %v3179 = vadd.f32 %v2730, %v3015
      %v3180 = vadd.f32 %v2731, %v3020
      %v3181 = vadd.f32 %v2732, %v3023
      %v3182 = vadd.f32 %v2733, %v3028
      %v3183 = vadd.f32 %v2734, %v3031
      %v3184 = vadd.f32 %v2735, %v3036
      %v3185 = vadd.f32 %v2736, %v3039
      %v3186 = vadd.f32 %v2737, %v3044
      %v3187 = vadd.f32 %v2738, %v3047
      %v3188 = vadd.f32 %v2739, %v3052
      %v3189 = vadd.f32 %v2740, %v3055
      %v3190 = vadd.f32 %v2741, %v3060
      %v3191 = vadd.f32 %v2742, %v3063
      %v3192 = vadd.f32 %v2743, %v3068
      %v3193 = vadd.f32 %v2744, %v3071
      %v3194 = vadd.f32 %v2745, %v3076
      %v3195 = vadd.f32 %v2746, %v3079
      %v3196 = vadd.f32 %v2747, %v3084
      %v3197 = vadd.f32 %v2748, %v3087
      %v3198 = vadd.f32 %v2749, %v3092
      %v3199 = vadd.f32 %v2750, %v3095
      %v3200 = vadd.f32 %v2751, %v3100
      %v3201 = vadd.f32 %v2752, %v3103
      %v3202 = vadd.f32 %v2753, %v3108
      %v3203 = vadd.f32 %v2754, %v3111
      %v3204 = vadd.f32 %v2755, %v3116
      %v3205 = vadd.f32 %v2756, %v3119
      %v3206 = vadd.f32 %v2757, %v3124
      %v3207 = vadd.f32 %v2758, %v3127
      %v3208 = vadd.f32 %v2759, %v3132
      %v3209 = vadd.f32 %v2760, %v3135
      %v3210 = vadd.f32 %v2761, %v3140
      %v3211 = vadd.f32 %v2762, %v3143
      %v3212 = vadd.f32 %v2763, %v3148
      %v3213 = vadd.f32 %v2764, %v3151
      %v3214 = vadd.f32 %v2765, %v3156
      %v3215 = vadd.f32 %v2766, %v3159
      %v3216 = vld [vmem:[%s168 + $0x31] sm:$0xff]
      %v3217 = vld [vmem:[%s168 + $0x39] sm:$0xff]
      %v3218 = vld [vmem:[%s168 + $0x41] sm:$0xff]
      %v3219 = vld [vmem:[%s168 + $0x49] sm:$0xff]
      %v3220 = vld [vmem:[%s168 + $0x51] sm:$0xff]
      %v3221 = vld [vmem:[%s168 + $0x59] sm:$0xff]
      %v3222 = vld [vmem:[%s168 + $0x61] sm:$0xff]
      %v3223 = vld [vmem:[%s168 + $0x69] sm:$0xff]
      %v3224 = vld [vmem:[%s168 + $0x71] sm:$0xff]
      %v3225 = vld [vmem:[%s168 + $0x79] sm:$0xff]
      %v3226 = vld [vmem:[%s168 + $0x81] sm:$0xff]
      %v3227 = vld [vmem:[%s168 + $0x89] sm:$0xff]
      %v3228 = vld [vmem:[%s168 + $0x91] sm:$0xff]
      %v3229 = vld [vmem:[%s168 + $0x99] sm:$0xff]
      %v3230 = vld [vmem:[%s168 + $0xa1] sm:$0xff]
      %v3231 = vld [vmem:[%s168 + $0xa9] sm:$0xff]
      %v3232 = vld [vmem:[%s168 + $0xb1] sm:$0xff]
      %v3233 = vld [vmem:[%s168 + $0xb9] sm:$0xff]
      %v3234 = vld [vmem:[%s168 + $0xc1] sm:$0xff]
      %v3235 = vld [vmem:[%s168 + $0xc9] sm:$0xff]
      %v3236 = vld [vmem:[%s168 + $0xd1] sm:$0xff]
      %v3237 = vld [vmem:[%s168 + $0xd9] sm:$0xff]
      %v3238 = vld [vmem:[%s168 + $0xe1] sm:$0xff]
      %v3239 = vld [vmem:[%s168 + $0xe9] sm:$0xff]
      %v3240 = vld [vmem:[%s168 + $0xf1] sm:$0xff]
      %v3241 = vld [vmem:[%s168 + $0xf9] sm:$0xff]
      %v3242 = vld [vmem:[%s168 + $0x101] sm:$0xff]
      %v3243 = vld [vmem:[%s168 + $0x109] sm:$0xff]
      %v3244 = vld [vmem:[%s168 + $0x111] sm:$0xff]
      %v3245 = vld [vmem:[%s168 + $0x119] sm:$0xff]
      %v3246 = vld [vmem:[%s168 + $0x121] sm:$0xff]
      %v3247 = vld [vmem:[%s168 + $0x129] sm:$0xff]
      %v3248 = vld [vmem:[%s168 + $0x131] sm:$0xff]
      %v3249 = vld [vmem:[%s168 + $0x139] sm:$0xff]
      %v3250 = vld [vmem:[%s168 + $0x141] sm:$0xff]
      %v3251 = vld [vmem:[%s168 + $0x149] sm:$0xff]
      %v3252 = vld [vmem:[%s168 + $0x151] sm:$0xff]
      %v3253 = vld [vmem:[%s168 + $0x159] sm:$0xff]
      %v3254 = vld [vmem:[%s168 + $0x161] sm:$0xff]
      %v3255 = vld [vmem:[%s168 + $0x169] sm:$0xff]
      %v3256 = vld [vmem:[%s168 + $0x171] sm:$0xff]
      %v3257 = vld [vmem:[%s168 + $0x179] sm:$0xff]
      %v3258 = vld [vmem:[%s168 + $0x181] sm:$0xff]
      %v3259 = vld [vmem:[%s168 + $0x189] sm:$0xff]
      %v3260 = vld [vmem:[%s168 + $0x191] sm:$0xff]
      %v3261 = vld [vmem:[%s168 + $0x199] sm:$0xff]
      %v3262 = vld [vmem:[%s168 + $0x1a1] sm:$0xff]
      %v3263 = vld [vmem:[%s168 + $0x1a9] sm:$0xff]
      %v3264 = vld [vmem:[%s168 + $0x1b1] sm:$0xff]
      %v3265 = vld [vmem:[%s168 + $0x1b9] sm:$0xff]
      %v3266 = vld [vmem:[%s168 + $0x1c1] sm:$0xff]
      %v3267 = vld [vmem:[%s168 + $0x1c9] sm:$0xff]
      %v3268 = vld [vmem:[%s168 + $0x1d1] sm:$0xff]
      %v3269 = vld [vmem:[%s168 + $0x1d9] sm:$0xff]
      %v3270 = vpack.c.bf16 %v3217, %v3216
      %v3271 = vpack.c.bf16 %v3219, %v3218
      %v3272 = vpack.c.bf16 %v3221, %v3220
      %v3273 = vpack.c.bf16 %v3223, %v3222
      %v3274 = vpack.c.bf16 %v3225, %v3224
      %v3275 = vpack.c.bf16 %v3227, %v3226
      %v3276 = vpack.c.bf16 %v3229, %v3228
      %v3277 = vpack.c.bf16 %v3231, %v3230
      %v3278 = vpack.c.bf16 %v3233, %v3232
      %v3279 = vpack.c.bf16 %v3235, %v3234
      %v3280 = vpack.c.bf16 %v3237, %v3236
      %v3281 = vpack.c.bf16 %v3239, %v3238
      %v3282 = vpack.c.bf16 %v3241, %v3240
      %v3283 = vpack.c.bf16 %v3243, %v3242
      %v3284 = vpack.c.bf16 %v3245, %v3244
      %v3285 = vpack.c.bf16 %v3247, %v3246
      %v3286 = vpack.c.bf16 %v3249, %v3248
      %v3287 = vpack.c.bf16 %v3251, %v3250
      %v3288 = vpack.c.bf16 %v3253, %v3252
      %v3289 = vpack.c.bf16 %v3255, %v3254
      %v3290 = vpack.c.bf16 %v3257, %v3256
      %v3291 = vpack.c.bf16 %v3259, %v3258
      %v3292 = vpack.c.bf16 %v3261, %v3260
      %v3293 = vpack.c.bf16 %v3263, %v3262
      %v3294 = vpack.c.bf16 %v3265, %v3264
      %v3295 = vpack.c.bf16 %v3267, %v3266
      %v3296 = vpack.c.bf16 %v3269, %v3268
      %s3297 = scalar_lea.vmem %s172, 448
      %v3298 = vld [vmem:[%s3297] sm:$0xf]
      %v3299 = vld [vmem:[%s3297 + $0x4] sm:$0xf]
      %v3300 = vld [vmem:[%s3297 + $0x8] sm:$0xf]
      %v3301 = vld [vmem:[%s3297 + $0xc] sm:$0xf]
      %v3302 = vld [vmem:[%s3297 + $0x10] sm:$0xf]
      %v3303 = vld [vmem:[%s3297 + $0x14] sm:$0xf]
      %v3304 = vld [vmem:[%s3297 + $0x18] sm:$0xf]
      %v3305 = vld [vmem:[%s3297 + $0x1c] sm:$0xf]
      %v3306 = vld [vmem:[%s3297 + $0x20] sm:$0xf]
      %v3307 = vld [vmem:[%s3297 + $0x24] sm:$0xf]
      %v3308 = vld [vmem:[%s3297 + $0x28] sm:$0xf]
      %v3309 = vld [vmem:[%s3297 + $0x2c] sm:$0xf]
      %v3310 = vld [vmem:[%s3297 + $0x30] sm:$0xf]
      %v3311 = vld [vmem:[%s3297 + $0x34] sm:$0xf]
      %v3312 = vld [vmem:[%s3297 + $0x38] sm:$0xf]
      %v3313 = vld [vmem:[%s3297 + $0x3c] sm:$0xf]
      %v3330 = vunpack.c.l.b16 %v3298
      %v3331 = vunpack.c.l.b16 %v3299
      %v3332 = vunpack.c.l.b16 %v3300
      %v3333 = vunpack.c.l.b16 %v3301
      %v3334 = vunpack.c.l.b16 %v3302
      %v3335 = vunpack.c.l.b16 %v3303
      %v3336 = vunpack.c.l.b16 %v3304
      %v3337 = vunpack.c.l.b16 %v3305
      %v3338 = vunpack.c.l.b16 %v3306
      %v3339 = vunpack.c.l.b16 %v3307
      %v3340 = vunpack.c.l.b16 %v3308
      %v3341 = vunpack.c.l.b16 %v3309
      %v3342 = vunpack.c.l.b16 %v3310
      %v3343 = vunpack.c.l.b16 %v3311
      %v3344 = vunpack.c.l.b16 %v3312
      %v3345 = vunpack.c.l.b16 %v3313
      %v3346 = vpack.c.b16 %v3331, %v3330
      %v3347 = vpack.c.b16 %v3333, %v3332
      %v3348 = vpack.c.b16 %v3335, %v3334
      %v3349 = vpack.c.b16 %v3337, %v3336
      %v3350 = vpack.c.b16 %v3339, %v3338
      %v3351 = vpack.c.b16 %v3341, %v3340
      %v3352 = vpack.c.b16 %v3343, %v3342
      %v3353 = vpack.c.b16 %v3345, %v3344
      %3362 = vmatprep.subr.bf16.mxu0 0
      %3363 = vmatpush1.bf16.msra.mxu0 %v3346
      %3364 = vmatprep.subr.bf16.mxu0 0
      %3365 = vmatpush1.bf16.msra.mxu0 %v3347
      %3366 = vmatprep.subr.bf16.mxu0 0
      %3367 = vmatpush1.bf16.msra.mxu0 %v3348
      %3368 = vmatprep.subr.bf16.mxu0 0
      %3369 = vmatpush1.bf16.msra.mxu0 %v3349
      %3370 = vmatprep.subr.bf16.mxu0 0
      %3371 = vmatpush1.bf16.msra.mxu0 %v3350
      %3372 = vmatprep.subr.bf16.mxu0 0
      %3373 = vmatpush1.bf16.msra.mxu0 %v3351
      %3374 = vmatprep.subr.bf16.mxu0 0
      %3375 = vmatpush1.bf16.msra.mxu0 %v3352
      %3376 = vmatprep.subr.bf16.mxu0 0
      %3377 = vmatpush1.bf16.msra.mxu0 %v3353
      %3378 = vmatprep.subr.bf16.mxu0 0
      %3379 = vmatpush1.bf16.msra.mxu0 0
      %3380 = vmatprep.subr.bf16.mxu0 0
      %3381 = vmatpush1.bf16.msra.mxu0 0
      %3382 = vmatprep.subr.bf16.mxu0 0
      %3383 = vmatpush1.bf16.msra.mxu0 0
      %3384 = vmatprep.subr.bf16.mxu0 0
      %3385 = vmatpush1.bf16.msra.mxu0 0
      %3386 = vmatprep.subr.bf16.mxu0 0
      %3387 = vmatpush1.bf16.msra.mxu0 0
      %3388 = vmatprep.subr.bf16.mxu0 0
      %3389 = vmatpush1.bf16.msra.mxu0 0
      %3390 = vmatprep.subr.bf16.mxu0 0
      %3391 = vmatpush1.bf16.msra.mxu0 0
      %3392 = vmatprep.subr.bf16.mxu0 0
      %3393 = vmatpush1.bf16.msra.mxu0 0
      %3394 = vmatprep.mubr.bf16.mxu0 0
      %3395 = vmatmul.mubr.bf16.gmra.mrb[0].mxu0 %v3270
      %v3396 = vpop.f32.mrb[0].mxu0
      %v3397 = vadd.f32 0.0, %v3396
      %v3398 = vpop.f32.mrb[0].mxu0
      %v3399 = vpop.f32.mrb[0].mxu0
      %v3400 = vadd.f32 0.0, %v3399
      %v3401 = vpop.f32.mrb[0].mxu0
      %3402 = vmatprep.mubr.bf16.mxu0 0
      %3403 = vmatmul.mubr.bf16.gmra.mrb[0].mxu0 %v3271
      %v3404 = vpop.f32.mrb[0].mxu0
      %v3405 = vadd.f32 0.0, %v3404
      %v3406 = vpop.f32.mrb[0].mxu0
      %v3407 = vpop.f32.mrb[0].mxu0
      %v3408 = vadd.f32 0.0, %v3407
      %v3409 = vpop.f32.mrb[0].mxu0
      %3410 = vmatprep.mubr.bf16.mxu0 0
      %3411 = vmatmul.mubr.bf16.gmra.mrb[0].mxu0 %v3272
      %v3412 = vpop.f32.mrb[0].mxu0
      %v3413 = vadd.f32 0.0, %v3412
      %v3414 = vpop.f32.mrb[0].mxu0
      %v3415 = vpop.f32.mrb[0].mxu0
      %v3416 = vadd.f32 0.0, %v3415
      %v3417 = vpop.f32.mrb[0].mxu0
      %3418 = vmatprep.mubr.bf16.mxu0 0
      %3419 = vmatmul.mubr.bf16.gmra.mrb[0].mxu0 %v3273
      %v3420 = vpop.f32.mrb[0].mxu0
      %v3421 = vadd.f32 0.0, %v3420
      %v3422 = vpop.f32.mrb[0].mxu0
      %v3423 = vpop.f32.mrb[0].mxu0
      %v3424 = vadd.f32 0.0, %v3423
      %v3425 = vpop.f32.mrb[0].mxu0
      %3426 = vmatprep.mubr.bf16.mxu0 0
      %3427 = vmatmul.mubr.bf16.gmra.mrb[0].mxu0 %v3274
      %v3428 = vpop.f32.mrb[0].mxu0
      %v3429 = vadd.f32 0.0, %v3428
      %v3430 = vpop.f32.mrb[0].mxu0
      %v3431 = vpop.f32.mrb[0].mxu0
      %v3432 = vadd.f32 0.0, %v3431
      %v3433 = vpop.f32.mrb[0].mxu0
      %3434 = vmatprep.mubr.bf16.mxu0 0
      %3435 = vmatmul.mubr.bf16.gmra.mrb[0].mxu0 %v3275
      %v3436 = vpop.f32.mrb[0].mxu0
      %v3437 = vadd.f32 0.0, %v3436
      %v3438 = vpop.f32.mrb[0].mxu0
      %v3439 = vpop.f32.mrb[0].mxu0
      %v3440 = vadd.f32 0.0, %v3439
      %v3441 = vpop.f32.mrb[0].mxu0
      %3442 = vmatprep.mubr.bf16.mxu0 0
      %3443 = vmatmul.mubr.bf16.gmra.mrb[0].mxu0 %v3276
      %v3444 = vpop.f32.mrb[0].mxu0
      %v3445 = vadd.f32 0.0, %v3444
      %v3446 = vpop.f32.mrb[0].mxu0
      %v3447 = vpop.f32.mrb[0].mxu0
      %v3448 = vadd.f32 0.0, %v3447
      %v3449 = vpop.f32.mrb[0].mxu0
      %3450 = vmatprep.mubr.bf16.mxu0 0
      %3451 = vmatmul.mubr.bf16.gmra.mrb[0].mxu0 %v3277
      %v3452 = vpop.f32.mrb[0].mxu0
      %v3453 = vadd.f32 0.0, %v3452
      %v3454 = vpop.f32.mrb[0].mxu0
      %v3455 = vpop.f32.mrb[0].mxu0
      %v3456 = vadd.f32 0.0, %v3455
      %v3457 = vpop.f32.mrb[0].mxu0
      %3458 = vmatprep.mubr.bf16.mxu0 0
      %3459 = vmatmul.mubr.bf16.gmra.mrb[0].mxu0 %v3278
      %v3460 = vpop.f32.mrb[0].mxu0
      %v3461 = vadd.f32 0.0, %v3460
      %v3462 = vpop.f32.mrb[0].mxu0
      %v3463 = vpop.f32.mrb[0].mxu0
      %v3464 = vadd.f32 0.0, %v3463
      %v3465 = vpop.f32.mrb[0].mxu0
      %3466 = vmatprep.mubr.bf16.mxu0 0
      %3467 = vmatmul.mubr.bf16.gmra.mrb[0].mxu0 %v3279
      %v3468 = vpop.f32.mrb[0].mxu0
      %v3469 = vadd.f32 0.0, %v3468
      %v3470 = vpop.f32.mrb[0].mxu0
      %v3471 = vpop.f32.mrb[0].mxu0
      %v3472 = vadd.f32 0.0, %v3471
      %v3473 = vpop.f32.mrb[0].mxu0
      %3474 = vmatprep.mubr.bf16.mxu0 0
      %3475 = vmatmul.mubr.bf16.gmra.mrb[0].mxu0 %v3280
      %v3476 = vpop.f32.mrb[0].mxu0
      %v3477 = vadd.f32 0.0, %v3476
      %v3478 = vpop.f32.mrb[0].mxu0
      %v3479 = vpop.f32.mrb[0].mxu0
      %v3480 = vadd.f32 0.0, %v3479
      %v3481 = vpop.f32.mrb[0].mxu0
      %3482 = vmatprep.mubr.bf16.mxu0 0
      %3483 = vmatmul.mubr.bf16.gmra.mrb[0].mxu0 %v3281
      %v3484 = vpop.f32.mrb[0].mxu0
      %v3485 = vadd.f32 0.0, %v3484
      %v3486 = vpop.f32.mrb[0].mxu0
      %v3487 = vpop.f32.mrb[0].mxu0
      %v3488 = vadd.f32 0.0, %v3487
      %v3489 = vpop.f32.mrb[0].mxu0
      %3490 = vmatprep.mubr.bf16.mxu0 0
      %3491 = vmatmul.mubr.bf16.gmra.mrb[0].mxu0 %v3282
      %v3492 = vpop.f32.mrb[0].mxu0
      %v3493 = vadd.f32 0.0, %v3492
      %v3494 = vpop.f32.mrb[0].mxu0
      %v3495 = vpop.f32.mrb[0].mxu0
      %v3496 = vadd.f32 0.0, %v3495
      %v3497 = vpop.f32.mrb[0].mxu0
      %3498 = vmatprep.mubr.bf16.mxu0 0
      %3499 = vmatmul.mubr.bf16.gmra.mrb[0].mxu0 %v3283
      %v3500 = vpop.f32.mrb[0].mxu0
      %v3501 = vadd.f32 0.0, %v3500
      %v3502 = vpop.f32.mrb[0].mxu0
      %v3503 = vpop.f32.mrb[0].mxu0
      %v3504 = vadd.f32 0.0, %v3503
      %v3505 = vpop.f32.mrb[0].mxu0
      %3506 = vmatprep.mubr.bf16.mxu0 0
      %3507 = vmatmul.mubr.bf16.gmra.mrb[0].mxu0 %v3284
      %v3508 = vpop.f32.mrb[0].mxu0
      %v3509 = vadd.f32 0.0, %v3508
      %v3510 = vpop.f32.mrb[0].mxu0
      %v3511 = vpop.f32.mrb[0].mxu0
      %v3512 = vadd.f32 0.0, %v3511
      %v3513 = vpop.f32.mrb[0].mxu0
      %3514 = vmatprep.mubr.bf16.mxu0 0
      %3515 = vmatmul.mubr.bf16.gmra.mrb[0].mxu0 %v3285
      %v3516 = vpop.f32.mrb[0].mxu0
      %v3517 = vadd.f32 0.0, %v3516
      %v3518 = vpop.f32.mrb[0].mxu0
      %v3519 = vpop.f32.mrb[0].mxu0
      %v3520 = vadd.f32 0.0, %v3519
      %v3521 = vpop.f32.mrb[0].mxu0
      %3522 = vmatprep.mubr.bf16.mxu0 0
      %3523 = vmatmul.mubr.bf16.gmra.mrb[0].mxu0 %v3286
      %v3524 = vpop.f32.mrb[0].mxu0
      %v3525 = vadd.f32 0.0, %v3524
      %v3526 = vpop.f32.mrb[0].mxu0
      %v3527 = vpop.f32.mrb[0].mxu0
      %v3528 = vadd.f32 0.0, %v3527
      %v3529 = vpop.f32.mrb[0].mxu0
      %3530 = vmatprep.mubr.bf16.mxu0 0
      %3531 = vmatmul.mubr.bf16.gmra.mrb[0].mxu0 %v3287
      %v3532 = vpop.f32.mrb[0].mxu0
      %v3533 = vadd.f32 0.0, %v3532
      %v3534 = vpop.f32.mrb[0].mxu0
      %v3535 = vpop.f32.mrb[0].mxu0
      %v3536 = vadd.f32 0.0, %v3535
      %v3537 = vpop.f32.mrb[0].mxu0
      %3538 = vmatprep.mubr.bf16.mxu0 0
      %3539 = vmatmul.mubr.bf16.gmra.mrb[0].mxu0 %v3288
      %v3540 = vpop.f32.mrb[0].mxu0
      %v3541 = vadd.f32 0.0, %v3540
      %v3542 = vpop.f32.mrb[0].mxu0
      %v3543 = vpop.f32.mrb[0].mxu0
      %v3544 = vadd.f32 0.0, %v3543
      %v3545 = vpop.f32.mrb[0].mxu0
      %3546 = vmatprep.mubr.bf16.mxu0 0
      %3547 = vmatmul.mubr.bf16.gmra.mrb[0].mxu0 %v3289
      %v3548 = vpop.f32.mrb[0].mxu0
      %v3549 = vadd.f32 0.0, %v3548
      %v3550 = vpop.f32.mrb[0].mxu0
      %v3551 = vpop.f32.mrb[0].mxu0
      %v3552 = vadd.f32 0.0, %v3551
      %v3553 = vpop.f32.mrb[0].mxu0
      %3554 = vmatprep.mubr.bf16.mxu0 0
      %3555 = vmatmul.mubr.bf16.gmra.mrb[0].mxu0 %v3290
      %v3556 = vpop.f32.mrb[0].mxu0
      %v3557 = vadd.f32 0.0, %v3556
      %v3558 = vpop.f32.mrb[0].mxu0
      %v3559 = vpop.f32.mrb[0].mxu0
      %v3560 = vadd.f32 0.0, %v3559
      %v3561 = vpop.f32.mrb[0].mxu0
      %3562 = vmatprep.mubr.bf16.mxu0 0
      %3563 = vmatmul.mubr.bf16.gmra.mrb[0].mxu0 %v3291
      %v3564 = vpop.f32.mrb[0].mxu0
      %v3565 = vadd.f32 0.0, %v3564
      %v3566 = vpop.f32.mrb[0].mxu0
      %v3567 = vpop.f32.mrb[0].mxu0
      %v3568 = vadd.f32 0.0, %v3567
      %v3569 = vpop.f32.mrb[0].mxu0
      %3570 = vmatprep.mubr.bf16.mxu0 0
      %3571 = vmatmul.mubr.bf16.gmra.mrb[0].mxu0 %v3292
      %v3572 = vpop.f32.mrb[0].mxu0
      %v3573 = vadd.f32 0.0, %v3572
      %v3574 = vpop.f32.mrb[0].mxu0
      %v3575 = vpop.f32.mrb[0].mxu0
      %v3576 = vadd.f32 0.0, %v3575
      %v3577 = vpop.f32.mrb[0].mxu0
      %3578 = vmatprep.mubr.bf16.mxu0 0
      %3579 = vmatmul.mubr.bf16.gmra.mrb[0].mxu0 %v3293
      %v3580 = vpop.f32.mrb[0].mxu0
      %v3581 = vadd.f32 0.0, %v3580
      %v3582 = vpop.f32.mrb[0].mxu0
      %v3583 = vpop.f32.mrb[0].mxu0
      %v3584 = vadd.f32 0.0, %v3583
      %v3585 = vpop.f32.mrb[0].mxu0
      %3586 = vmatprep.mubr.bf16.mxu0 0
      %3587 = vmatmul.mubr.bf16.gmra.mrb[0].mxu0 %v3294
      %v3588 = vpop.f32.mrb[0].mxu0
      %v3589 = vadd.f32 0.0, %v3588
      %v3590 = vpop.f32.mrb[0].mxu0
      %v3591 = vpop.f32.mrb[0].mxu0
      %v3592 = vadd.f32 0.0, %v3591
      %v3593 = vpop.f32.mrb[0].mxu0
      %3594 = vmatprep.mubr.bf16.mxu0 0
      %3595 = vmatmul.mubr.bf16.gmra.mrb[0].mxu0 %v3295
      %v3596 = vpop.f32.mrb[0].mxu0
      %v3597 = vadd.f32 0.0, %v3596
      %v3598 = vpop.f32.mrb[0].mxu0
      %v3599 = vpop.f32.mrb[0].mxu0
      %v3600 = vadd.f32 0.0, %v3599
      %v3601 = vpop.f32.mrb[0].mxu0
      %3602 = vmatprep.mubr.bf16.mxu0 0
      %3603 = vmatmul.mubr.bf16.gmra.mrb[0].mxu0 %v3296
      %v3604 = vpop.f32.mrb[0].mxu0
      %v3605 = vadd.f32 0.0, %v3604
      %v3606 = vpop.f32.mrb[0].mxu0
      %v3607 = vpop.f32.mrb[0].mxu0
      %v3608 = vadd.f32 0.0, %v3607
      %v3609 = vpop.f32.mrb[0].mxu0
      %3610 = vdwg.mxu0
      %v3611 = vadd.f32 %v3162, %v3397
      %v3612 = vadd.f32 %v3163, %v3400
      %v3613 = vadd.f32 %v3164, %v3405
      %v3614 = vadd.f32 %v3165, %v3408
      %v3615 = vadd.f32 %v3166, %v3413
      %v3616 = vadd.f32 %v3167, %v3416
      %v3617 = vadd.f32 %v3168, %v3421
      %v3618 = vadd.f32 %v3169, %v3424
      %v3619 = vadd.f32 %v3170, %v3429
      %v3620 = vadd.f32 %v3171, %v3432
      %v3621 = vadd.f32 %v3172, %v3437
      %v3622 = vadd.f32 %v3173, %v3440
      %v3623 = vadd.f32 %v3174, %v3445
      %v3624 = vadd.f32 %v3175, %v3448
      %v3625 = vadd.f32 %v3176, %v3453
      %v3626 = vadd.f32 %v3177, %v3456
      %v3627 = vadd.f32 %v3178, %v3461
      %v3628 = vadd.f32 %v3179, %v3464
      %v3629 = vadd.f32 %v3180, %v3469
      %v3630 = vadd.f32 %v3181, %v3472
      %v3631 = vadd.f32 %v3182, %v3477
      %v3632 = vadd.f32 %v3183, %v3480
      %v3633 = vadd.f32 %v3184, %v3485
      %v3634 = vadd.f32 %v3185, %v3488
      %v3635 = vadd.f32 %v3186, %v3493
      %v3636 = vadd.f32 %v3187, %v3496
      %v3637 = vadd.f32 %v3188, %v3501
      %v3638 = vadd.f32 %v3189, %v3504
      %v3639 = vadd.f32 %v3190, %v3509
      %v3640 = vadd.f32 %v3191, %v3512
      %v3641 = vadd.f32 %v3192, %v3517
      %v3642 = vadd.f32 %v3193, %v3520
      %v3643 = vadd.f32 %v3194, %v3525
      %v3644 = vadd.f32 %v3195, %v3528
      %v3645 = vadd.f32 %v3196, %v3533
      %v3646 = vadd.f32 %v3197, %v3536
      %v3647 = vadd.f32 %v3198, %v3541
      %v3648 = vadd.f32 %v3199, %v3544
      %v3649 = vadd.f32 %v3200, %v3549
      %v3650 = vadd.f32 %v3201, %v3552
      %v3651 = vadd.f32 %v3202, %v3557
      %v3652 = vadd.f32 %v3203, %v3560
      %v3653 = vadd.f32 %v3204, %v3565
      %v3654 = vadd.f32 %v3205, %v3568
      %v3655 = vadd.f32 %v3206, %v3573
      %v3656 = vadd.f32 %v3207, %v3576
      %v3657 = vadd.f32 %v3208, %v3581
      %v3658 = vadd.f32 %v3209, %v3584
      %v3659 = vadd.f32 %v3210, %v3589
      %v3660 = vadd.f32 %v3211, %v3592
      %v3661 = vadd.f32 %v3212, %v3597
      %v3662 = vadd.f32 %v3213, %v3600
      %v3663 = vadd.f32 %v3214, %v3605
      %v3664 = vadd.f32 %v3215, %v3608
      %v3665 = vld [vmem:[%s168 + $0x32] sm:$0xff]
      %v3666 = vld [vmem:[%s168 + $0x3a] sm:$0xff]
      %v3667 = vld [vmem:[%s168 + $0x42] sm:$0xff]
      %v3668 = vld [vmem:[%s168 + $0x4a] sm:$0xff]
      %v3669 = vld [vmem:[%s168 + $0x52] sm:$0xff]
      %v3670 = vld [vmem:[%s168 + $0x5a] sm:$0xff]
      %v3671 = vld [vmem:[%s168 + $0x62] sm:$0xff]
      %v3672 = vld [vmem:[%s168 + $0x6a] sm:$0xff]
      %v3673 = vld [vmem:[%s168 + $0x72] sm:$0xff]
      %v3674 = vld [vmem:[%s168 + $0x7a] sm:$0xff]
      %v3675 = vld [vmem:[%s168 + $0x82] sm:$0xff]
      %v3676 = vld [vmem:[%s168 + $0x8a] sm:$0xff]
      %v3677 = vld [vmem:[%s168 + $0x92] sm:$0xff]
      %v3678 = vld [vmem:[%s168 + $0x9a] sm:$0xff]
      %v3679 = vld [vmem:[%s168 + $0xa2] sm:$0xff]
      %v3680 = vld [vmem:[%s168 + $0xaa] sm:$0xff]
      %v3681 = vld [vmem:[%s168 + $0xb2] sm:$0xff]
      %v3682 = vld [vmem:[%s168 + $0xba] sm:$0xff]
      %v3683 = vld [vmem:[%s168 + $0xc2] sm:$0xff]
      %v3684 = vld [vmem:[%s168 + $0xca] sm:$0xff]
      %v3685 = vld [vmem:[%s168 + $0xd2] sm:$0xff]
      %v3686 = vld [vmem:[%s168 + $0xda] sm:$0xff]
      %v3687 = vld [vmem:[%s168 + $0xe2] sm:$0xff]
      %v3688 = vld [vmem:[%s168 + $0xea] sm:$0xff]
      %v3689 = vld [vmem:[%s168 + $0xf2] sm:$0xff]
      %v3690 = vld [vmem:[%s168 + $0xfa] sm:$0xff]
      %v3691 = vld [vmem:[%s168 + $0x102] sm:$0xff]
      %v3692 = vld [vmem:[%s168 + $0x10a] sm:$0xff]
      %v3693 = vld [vmem:[%s168 + $0x112] sm:$0xff]
      %v3694 = vld [vmem:[%s168 + $0x11a] sm:$0xff]
      %v3695 = vld [vmem:[%s168 + $0x122] sm:$0xff]
      %v3696 = vld [vmem:[%s168 + $0x12a] sm:$0xff]
      %v3697 = vld [vmem:[%s168 + $0x132] sm:$0xff]
      %v3698 = vld [vmem:[%s168 + $0x13a] sm:$0xff]
      %v3699 = vld [vmem:[%s168 + $0x142] sm:$0xff]
      %v3700 = vld [vmem:[%s168 + $0x14a] sm:$0xff]
      %v3701 = vld [vmem:[%s168 + $0x152] sm:$0xff]
      %v3702 = vld [vmem:[%s168 + $0x15a] sm:$0xff]
      %v3703 = vld [vmem:[%s168 + $0x162] sm:$0xff]
      %v3704 = vld [vmem:[%s168 + $0x16a] sm:$0xff]
      %v3705 = vld [vmem:[%s168 + $0x172] sm:$0xff]
      %v3706 = vld [vmem:[%s168 + $0x17a] sm:$0xff]
      %v3707 = vld [vmem:[%s168 + $0x182] sm:$0xff]
      %v3708 = vld [vmem:[%s168 + $0x18a] sm:$0xff]
      %v3709 = vld [vmem:[%s168 + $0x192] sm:$0xff]
      %v3710 = vld [vmem:[%s168 + $0x19a] sm:$0xff]
      %v3711 = vld [vmem:[%s168 + $0x1a2] sm:$0xff]
      %v3712 = vld [vmem:[%s168 + $0x1aa] sm:$0xff]
      %v3713 = vld [vmem:[%s168 + $0x1b2] sm:$0xff]
      %v3714 = vld [vmem:[%s168 + $0x1ba] sm:$0xff]
      %v3715 = vld [vmem:[%s168 + $0x1c2] sm:$0xff]
      %v3716 = vld [vmem:[%s168 + $0x1ca] sm:$0xff]
      %v3717 = vld [vmem:[%s168 + $0x1d2] sm:$0xff]
      %v3718 = vld [vmem:[%s168 + $0x1da] sm:$0xff]
      %v3719 = vpack.c.bf16 %v3666, %v3665
      %v3720 = vpack.c.bf16 %v3668, %v3667
      %v3721 = vpack.c.bf16 %v3670, %v3669
      %v3722 = vpack.c.bf16 %v3672, %v3671
      %v3723 = vpack.c.bf16 %v3674, %v3673
      %v3724 = vpack.c.bf16 %v3676, %v3675
      %v3725 = vpack.c.bf16 %v3678, %v3677
      %v3726 = vpack.c.bf16 %v3680, %v3679
      %v3727 = vpack.c.bf16 %v3682, %v3681
      %v3728 = vpack.c.bf16 %v3684, %v3683
      %v3729 = vpack.c.bf16 %v3686, %v3685
      %v3730 = vpack.c.bf16 %v3688, %v3687
      %v3731 = vpack.c.bf16 %v3690, %v3689
      %v3732 = vpack.c.bf16 %v3692, %v3691
      %v3733 = vpack.c.bf16 %v3694, %v3693
      %v3734 = vpack.c.bf16 %v3696, %v3695
      %v3735 = vpack.c.bf16 %v3698, %v3697
      %v3736 = vpack.c.bf16 %v3700, %v3699
      %v3737 = vpack.c.bf16 %v3702, %v3701
      %v3738 = vpack.c.bf16 %v3704, %v3703
      %v3739 = vpack.c.bf16 %v3706, %v3705
      %v3740 = vpack.c.bf16 %v3708, %v3707
      %v3741 = vpack.c.bf16 %v3710, %v3709
      %v3742 = vpack.c.bf16 %v3712, %v3711
      %v3743 = vpack.c.bf16 %v3714, %v3713
      %v3744 = vpack.c.bf16 %v3716, %v3715
      %v3745 = vpack.c.bf16 %v3718, %v3717
      %s3746 = scalar_lea.vmem %s172, 512
      %v3747 = vld [vmem:[%s3746] sm:$0xf]
      %v3748 = vld [vmem:[%s3746 + $0x4] sm:$0xf]
      %v3749 = vld [vmem:[%s3746 + $0x8] sm:$0xf]
      %v3750 = vld [vmem:[%s3746 + $0xc] sm:$0xf]
      %v3751 = vld [vmem:[%s3746 + $0x10] sm:$0xf]
      %v3752 = vld [vmem:[%s3746 + $0x14] sm:$0xf]
      %v3753 = vld [vmem:[%s3746 + $0x18] sm:$0xf]
      %v3754 = vld [vmem:[%s3746 + $0x1c] sm:$0xf]
      %v3755 = vld [vmem:[%s3746 + $0x20] sm:$0xf]
      %v3756 = vld [vmem:[%s3746 + $0x24] sm:$0xf]
      %v3757 = vld [vmem:[%s3746 + $0x28] sm:$0xf]
      %v3758 = vld [vmem:[%s3746 + $0x2c] sm:$0xf]
      %v3759 = vld [vmem:[%s3746 + $0x30] sm:$0xf]
      %v3760 = vld [vmem:[%s3746 + $0x34] sm:$0xf]
      %v3761 = vld [vmem:[%s3746 + $0x38] sm:$0xf]
      %v3762 = vld [vmem:[%s3746 + $0x3c] sm:$0xf]
      %v3779 = vunpack.c.l.b16 %v3747
      %v3780 = vunpack.c.l.b16 %v3748
      %v3781 = vunpack.c.l.b16 %v3749
      %v3782 = vunpack.c.l.b16 %v3750
      %v3783 = vunpack.c.l.b16 %v3751
      %v3784 = vunpack.c.l.b16 %v3752
      %v3785 = vunpack.c.l.b16 %v3753
      %v3786 = vunpack.c.l.b16 %v3754
      %v3787 = vunpack.c.l.b16 %v3755
      %v3788 = vunpack.c.l.b16 %v3756
      %v3789 = vunpack.c.l.b16 %v3757
      %v3790 = vunpack.c.l.b16 %v3758
      %v3791 = vunpack.c.l.b16 %v3759
      %v3792 = vunpack.c.l.b16 %v3760
      %v3793 = vunpack.c.l.b16 %v3761
      %v3794 = vunpack.c.l.b16 %v3762
      %v3795 = vpack.c.b16 %v3780, %v3779
      %v3796 = vpack.c.b16 %v3782, %v3781
      %v3797 = vpack.c.b16 %v3784, %v3783
      %v3798 = vpack.c.b16 %v3786, %v3785
      %v3799 = vpack.c.b16 %v3788, %v3787
      %v3800 = vpack.c.b16 %v3790, %v3789
      %v3801 = vpack.c.b16 %v3792, %v3791
      %v3802 = vpack.c.b16 %v3794, %v3793
      %3811 = vmatprep.subr.bf16.mxu0 0
      %3812 = vmatpush1.bf16.msra.mxu0 %v3795
      %3813 = vmatprep.subr.bf16.mxu0 0
      %3814 = vmatpush1.bf16.msra.mxu0 %v3796
      %3815 = vmatprep.subr.bf16.mxu0 0
      %3816 = vmatpush1.bf16.msra.mxu0 %v3797
      %3817 = vmatprep.subr.bf16.mxu0 0
      %3818 = vmatpush1.bf16.msra.mxu0 %v3798
      %3819 = vmatprep.subr.bf16.mxu0 0
      %3820 = vmatpush1.bf16.msra.mxu0 %v3799
      %3821 = vmatprep.subr.bf16.mxu0 0
      %3822 = vmatpush1.bf16.msra.mxu0 %v3800
      %3823 = vmatprep.subr.bf16.mxu0 0
      %3824 = vmatpush1.bf16.msra.mxu0 %v3801
      %3825 = vmatprep.subr.bf16.mxu0 0
      %3826 = vmatpush1.bf16.msra.mxu0 %v3802
      %3827 = vmatprep.subr.bf16.mxu0 0
      %3828 = vmatpush1.bf16.msra.mxu0 0
      %3829 = vmatprep.subr.bf16.mxu0 0
      %3830 = vmatpush1.bf16.msra.mxu0 0
      %3831 = vmatprep.subr.bf16.mxu0 0
      %3832 = vmatpush1.bf16.msra.mxu0 0
      %3833 = vmatprep.subr.bf16.mxu0 0
      %3834 = vmatpush1.bf16.msra.mxu0 0
      %3835 = vmatprep.subr.bf16.mxu0 0
      %3836 = vmatpush1.bf16.msra.mxu0 0
      %3837 = vmatprep.subr.bf16.mxu0 0
      %3838 = vmatpush1.bf16.msra.mxu0 0
      %3839 = vmatprep.subr.bf16.mxu0 0
      %3840 = vmatpush1.bf16.msra.mxu0 0
      %3841 = vmatprep.subr.bf16.mxu0 0
      %3842 = vmatpush1.bf16.msra.mxu0 0
      %3843 = vmatprep.mubr.bf16.mxu0 0
      %3844 = vmatmul.mubr.bf16.gmra.mrb[0].mxu0 %v3719
      %v3845 = vpop.f32.mrb[0].mxu0
      %v3846 = vadd.f32 0.0, %v3845
      %v3847 = vpop.f32.mrb[0].mxu0
      %v3848 = vpop.f32.mrb[0].mxu0
      %v3849 = vadd.f32 0.0, %v3848
      %v3850 = vpop.f32.mrb[0].mxu0
      %3851 = vmatprep.mubr.bf16.mxu0 0
      %3852 = vmatmul.mubr.bf16.gmra.mrb[0].mxu0 %v3720
      %v3853 = vpop.f32.mrb[0].mxu0
      %v3854 = vadd.f32 0.0, %v3853
      %v3855 = vpop.f32.mrb[0].mxu0
      %v3856 = vpop.f32.mrb[0].mxu0
      %v3857 = vadd.f32 0.0, %v3856
      %v3858 = vpop.f32.mrb[0].mxu0
      %3859 = vmatprep.mubr.bf16.mxu0 0
      %3860 = vmatmul.mubr.bf16.gmra.mrb[0].mxu0 %v3721
      %v3861 = vpop.f32.mrb[0].mxu0
      %v3862 = vadd.f32 0.0, %v3861
      %v3863 = vpop.f32.mrb[0].mxu0
      %v3864 = vpop.f32.mrb[0].mxu0
      %v3865 = vadd.f32 0.0, %v3864
      %v3866 = vpop.f32.mrb[0].mxu0
      %3867 = vmatprep.mubr.bf16.mxu0 0
      %3868 = vmatmul.mubr.bf16.gmra.mrb[0].mxu0 %v3722
      %v3869 = vpop.f32.mrb[0].mxu0
      %v3870 = vadd.f32 0.0, %v3869
      %v3871 = vpop.f32.mrb[0].mxu0
      %v3872 = vpop.f32.mrb[0].mxu0
      %v3873 = vadd.f32 0.0, %v3872
      %v3874 = vpop.f32.mrb[0].mxu0
      %3875 = vmatprep.mubr.bf16.mxu0 0
      %3876 = vmatmul.mubr.bf16.gmra.mrb[0].mxu0 %v3723
      %v3877 = vpop.f32.mrb[0].mxu0
      %v3878 = vadd.f32 0.0, %v3877
      %v3879 = vpop.f32.mrb[0].mxu0
      %v3880 = vpop.f32.mrb[0].mxu0
      %v3881 = vadd.f32 0.0, %v3880
      %v3882 = vpop.f32.mrb[0].mxu0
      %3883 = vmatprep.mubr.bf16.mxu0 0
      %3884 = vmatmul.mubr.bf16.gmra.mrb[0].mxu0 %v3724
      %v3885 = vpop.f32.mrb[0].mxu0
      %v3886 = vadd.f32 0.0, %v3885
      %v3887 = vpop.f32.mrb[0].mxu0
      %v3888 = vpop.f32.mrb[0].mxu0
      %v3889 = vadd.f32 0.0, %v3888
      %v3890 = vpop.f32.mrb[0].mxu0
      %3891 = vmatprep.mubr.bf16.mxu0 0
      %3892 = vmatmul.mubr.bf16.gmra.mrb[0].mxu0 %v3725
      %v3893 = vpop.f32.mrb[0].mxu0
      %v3894 = vadd.f32 0.0, %v3893
      %v3895 = vpop.f32.mrb[0].mxu0
      %v3896 = vpop.f32.mrb[0].mxu0
      %v3897 = vadd.f32 0.0, %v3896
      %v3898 = vpop.f32.mrb[0].mxu0
      %3899 = vmatprep.mubr.bf16.mxu0 0
      %3900 = vmatmul.mubr.bf16.gmra.mrb[0].mxu0 %v3726
      %v3901 = vpop.f32.mrb[0].mxu0
      %v3902 = vadd.f32 0.0, %v3901
      %v3903 = vpop.f32.mrb[0].mxu0
      %v3904 = vpop.f32.mrb[0].mxu0
      %v3905 = vadd.f32 0.0, %v3904
      %v3906 = vpop.f32.mrb[0].mxu0
      %3907 = vmatprep.mubr.bf16.mxu0 0
      %3908 = vmatmul.mubr.bf16.gmra.mrb[0].mxu0 %v3727
      %v3909 = vpop.f32.mrb[0].mxu0
      %v3910 = vadd.f32 0.0, %v3909
      %v3911 = vpop.f32.mrb[0].mxu0
      %v3912 = vpop.f32.mrb[0].mxu0
      %v3913 = vadd.f32 0.0, %v3912
      %v3914 = vpop.f32.mrb[0].mxu0
      %3915 = vmatprep.mubr.bf16.mxu0 0
      %3916 = vmatmul.mubr.bf16.gmra.mrb[0].mxu0 %v3728
      %v3917 = vpop.f32.mrb[0].mxu0
      %v3918 = vadd.f32 0.0, %v3917
      %v3919 = vpop.f32.mrb[0].mxu0
      %v3920 = vpop.f32.mrb[0].mxu0
      %v3921 = vadd.f32 0.0, %v3920
      %v3922 = vpop.f32.mrb[0].mxu0
      %3923 = vmatprep.mubr.bf16.mxu0 0
      %3924 = vmatmul.mubr.bf16.gmra.mrb[0].mxu0 %v3729
      %v3925 = vpop.f32.mrb[0].mxu0
      %v3926 = vadd.f32 0.0, %v3925
      %v3927 = vpop.f32.mrb[0].mxu0
      %v3928 = vpop.f32.mrb[0].mxu0
      %v3929 = vadd.f32 0.0, %v3928
      %v3930 = vpop.f32.mrb[0].mxu0
      %3931 = vmatprep.mubr.bf16.mxu0 0
      %3932 = vmatmul.mubr.bf16.gmra.mrb[0].mxu0 %v3730
      %v3933 = vpop.f32.mrb[0].mxu0
      %v3934 = vadd.f32 0.0, %v3933
      %v3935 = vpop.f32.mrb[0].mxu0
      %v3936 = vpop.f32.mrb[0].mxu0
      %v3937 = vadd.f32 0.0, %v3936
      %v3938 = vpop.f32.mrb[0].mxu0
      %3939 = vmatprep.mubr.bf16.mxu0 0
      %3940 = vmatmul.mubr.bf16.gmra.mrb[0].mxu0 %v3731
      %v3941 = vpop.f32.mrb[0].mxu0
      %v3942 = vadd.f32 0.0, %v3941
      %v3943 = vpop.f32.mrb[0].mxu0
      %v3944 = vpop.f32.mrb[0].mxu0
      %v3945 = vadd.f32 0.0, %v3944
      %v3946 = vpop.f32.mrb[0].mxu0
      %3947 = vmatprep.mubr.bf16.mxu0 0
      %3948 = vmatmul.mubr.bf16.gmra.mrb[0].mxu0 %v3732
      %v3949 = vpop.f32.mrb[0].mxu0
      %v3950 = vadd.f32 0.0, %v3949
      %v3951 = vpop.f32.mrb[0].mxu0
      %v3952 = vpop.f32.mrb[0].mxu0
      %v3953 = vadd.f32 0.0, %v3952
      %v3954 = vpop.f32.mrb[0].mxu0
      %3955 = vmatprep.mubr.bf16.mxu0 0
      %3956 = vmatmul.mubr.bf16.gmra.mrb[0].mxu0 %v3733
      %v3957 = vpop.f32.mrb[0].mxu0
      %v3958 = vadd.f32 0.0, %v3957
      %v3959 = vpop.f32.mrb[0].mxu0
      %v3960 = vpop.f32.mrb[0].mxu0
      %v3961 = vadd.f32 0.0, %v3960
      %v3962 = vpop.f32.mrb[0].mxu0
      %3963 = vmatprep.mubr.bf16.mxu0 0
      %3964 = vmatmul.mubr.bf16.gmra.mrb[0].mxu0 %v3734
      %v3965 = vpop.f32.mrb[0].mxu0
      %v3966 = vadd.f32 0.0, %v3965
      %v3967 = vpop.f32.mrb[0].mxu0
      %v3968 = vpop.f32.mrb[0].mxu0
      %v3969 = vadd.f32 0.0, %v3968
      %v3970 = vpop.f32.mrb[0].mxu0
      %3971 = vmatprep.mubr.bf16.mxu0 0
      %3972 = vmatmul.mubr.bf16.gmra.mrb[0].mxu0 %v3735
      %v3973 = vpop.f32.mrb[0].mxu0
      %v3974 = vadd.f32 0.0, %v3973
      %v3975 = vpop.f32.mrb[0].mxu0
      %v3976 = vpop.f32.mrb[0].mxu0
      %v3977 = vadd.f32 0.0, %v3976
      %v3978 = vpop.f32.mrb[0].mxu0
      %3979 = vmatprep.mubr.bf16.mxu0 0
      %3980 = vmatmul.mubr.bf16.gmra.mrb[0].mxu0 %v3736
      %v3981 = vpop.f32.mrb[0].mxu0
      %v3982 = vadd.f32 0.0, %v3981
      %v3983 = vpop.f32.mrb[0].mxu0
      %v3984 = vpop.f32.mrb[0].mxu0
      %v3985 = vadd.f32 0.0, %v3984
      %v3986 = vpop.f32.mrb[0].mxu0
      %3987 = vmatprep.mubr.bf16.mxu0 0
      %3988 = vmatmul.mubr.bf16.gmra.mrb[0].mxu0 %v3737
      %v3989 = vpop.f32.mrb[0].mxu0
      %v3990 = vadd.f32 0.0, %v3989
      %v3991 = vpop.f32.mrb[0].mxu0
      %v3992 = vpop.f32.mrb[0].mxu0
      %v3993 = vadd.f32 0.0, %v3992
      %v3994 = vpop.f32.mrb[0].mxu0
      %3995 = vmatprep.mubr.bf16.mxu0 0
      %3996 = vmatmul.mubr.bf16.gmra.mrb[0].mxu0 %v3738
      %v3997 = vpop.f32.mrb[0].mxu0
      %v3998 = vadd.f32 0.0, %v3997
      %v3999 = vpop.f32.mrb[0].mxu0
      %v4000 = vpop.f32.mrb[0].mxu0
      %v4001 = vadd.f32 0.0, %v4000
      %v4002 = vpop.f32.mrb[0].mxu0
      %4003 = vmatprep.mubr.bf16.mxu0 0
      %4004 = vmatmul.mubr.bf16.gmra.mrb[0].mxu0 %v3739
      %v4005 = vpop.f32.mrb[0].mxu0
      %v4006 = vadd.f32 0.0, %v4005
      %v4007 = vpop.f32.mrb[0].mxu0
      %v4008 = vpop.f32.mrb[0].mxu0
      %v4009 = vadd.f32 0.0, %v4008
      %v4010 = vpop.f32.mrb[0].mxu0
      %4011 = vmatprep.mubr.bf16.mxu0 0
      %4012 = vmatmul.mubr.bf16.gmra.mrb[0].mxu0 %v3740
      %v4013 = vpop.f32.mrb[0].mxu0
      %v4014 = vadd.f32 0.0, %v4013
      %v4015 = vpop.f32.mrb[0].mxu0
      %v4016 = vpop.f32.mrb[0].mxu0
      %v4017 = vadd.f32 0.0, %v4016
      %v4018 = vpop.f32.mrb[0].mxu0
      %4019 = vmatprep.mubr.bf16.mxu0 0
      %4020 = vmatmul.mubr.bf16.gmra.mrb[0].mxu0 %v3741
      %v4021 = vpop.f32.mrb[0].mxu0
      %v4022 = vadd.f32 0.0, %v4021
      %v4023 = vpop.f32.mrb[0].mxu0
      %v4024 = vpop.f32.mrb[0].mxu0
      %v4025 = vadd.f32 0.0, %v4024
      %v4026 = vpop.f32.mrb[0].mxu0
      %4027 = vmatprep.mubr.bf16.mxu0 0
      %4028 = vmatmul.mubr.bf16.gmra.mrb[0].mxu0 %v3742
      %v4029 = vpop.f32.mrb[0].mxu0
      %v4030 = vadd.f32 0.0, %v4029
      %v4031 = vpop.f32.mrb[0].mxu0
      %v4032 = vpop.f32.mrb[0].mxu0
      %v4033 = vadd.f32 0.0, %v4032
      %v4034 = vpop.f32.mrb[0].mxu0
      %4035 = vmatprep.mubr.bf16.mxu0 0
      %4036 = vmatmul.mubr.bf16.gmra.mrb[0].mxu0 %v3743
      %v4037 = vpop.f32.mrb[0].mxu0
      %v4038 = vadd.f32 0.0, %v4037
      %v4039 = vpop.f32.mrb[0].mxu0
      %v4040 = vpop.f32.mrb[0].mxu0
      %v4041 = vadd.f32 0.0, %v4040
      %v4042 = vpop.f32.mrb[0].mxu0
      %4043 = vmatprep.mubr.bf16.mxu0 0
      %4044 = vmatmul.mubr.bf16.gmra.mrb[0].mxu0 %v3744
      %v4045 = vpop.f32.mrb[0].mxu0
      %v4046 = vadd.f32 0.0, %v4045
      %v4047 = vpop.f32.mrb[0].mxu0
      %v4048 = vpop.f32.mrb[0].mxu0
      %v4049 = vadd.f32 0.0, %v4048
      %v4050 = vpop.f32.mrb[0].mxu0
      %4051 = vmatprep.mubr.bf16.mxu0 0
      %4052 = vmatmul.mubr.bf16.gmra.mrb[0].mxu0 %v3745
      %v4053 = vpop.f32.mrb[0].mxu0
      %v4054 = vadd.f32 0.0, %v4053
      %v4055 = vpop.f32.mrb[0].mxu0
      %v4056 = vpop.f32.mrb[0].mxu0
      %v4057 = vadd.f32 0.0, %v4056
      %v4058 = vpop.f32.mrb[0].mxu0
      %4059 = vdwg.mxu0
      %v4060 = vadd.f32 %v3611, %v3846
      %v4061 = vadd.f32 %v3612, %v3849
      %v4062 = vadd.f32 %v3613, %v3854
      %v4063 = vadd.f32 %v3614, %v3857
      %v4064 = vadd.f32 %v3615, %v3862
      %v4065 = vadd.f32 %v3616, %v3865
      %v4066 = vadd.f32 %v3617, %v3870
      %v4067 = vadd.f32 %v3618, %v3873
      %v4068 = vadd.f32 %v3619, %v3878
      %v4069 = vadd.f32 %v3620, %v3881
      %v4070 = vadd.f32 %v3621, %v3886
      %v4071 = vadd.f32 %v3622, %v3889
      %v4072 = vadd.f32 %v3623, %v3894
      %v4073 = vadd.f32 %v3624, %v3897
      %v4074 = vadd.f32 %v3625, %v3902
      %v4075 = vadd.f32 %v3626, %v3905
      %v4076 = vadd.f32 %v3627, %v3910
      %v4077 = vadd.f32 %v3628, %v3913
      %v4078 = vadd.f32 %v3629, %v3918
      %v4079 = vadd.f32 %v3630, %v3921
      %v4080 = vadd.f32 %v3631, %v3926
      %v4081 = vadd.f32 %v3632, %v3929
      %v4082 = vadd.f32 %v3633, %v3934
      %v4083 = vadd.f32 %v3634, %v3937
      %v4084 = vadd.f32 %v3635, %v3942
      %v4085 = vadd.f32 %v3636, %v3945
      %v4086 = vadd.f32 %v3637, %v3950
      %v4087 = vadd.f32 %v3638, %v3953
      %v4088 = vadd.f32 %v3639, %v3958
      %v4089 = vadd.f32 %v3640, %v3961
      %v4090 = vadd.f32 %v3641, %v3966
      %v4091 = vadd.f32 %v3642, %v3969
      %v4092 = vadd.f32 %v3643, %v3974
      %v4093 = vadd.f32 %v3644, %v3977
      %v4094 = vadd.f32 %v3645, %v3982
      %v4095 = vadd.f32 %v3646, %v3985
      %v4096 = vadd.f32 %v3647, %v3990
      %v4097 = vadd.f32 %v3648, %v3993
      %v4098 = vadd.f32 %v3649, %v3998
      %v4099 = vadd.f32 %v3650, %v4001
      %v4100 = vadd.f32 %v3651, %v4006
      %v4101 = vadd.f32 %v3652, %v4009
      %v4102 = vadd.f32 %v3653, %v4014
      %v4103 = vadd.f32 %v3654, %v4017
      %v4104 = vadd.f32 %v3655, %v4022
      %v4105 = vadd.f32 %v3656, %v4025
      %v4106 = vadd.f32 %v3657, %v4030
      %v4107 = vadd.f32 %v3658, %v4033
      %v4108 = vadd.f32 %v3659, %v4038
      %v4109 = vadd.f32 %v3660, %v4041
      %v4110 = vadd.f32 %v3661, %v4046
      %v4111 = vadd.f32 %v3662, %v4049
      %v4112 = vadd.f32 %v3663, %v4054
      %v4113 = vadd.f32 %v3664, %v4057
      %4114 = vst [vmem:[%s180] sm:$0xff] %v4060
      %4115 = vst [vmem:[%s180 + $0x8] sm:$0xff] %v4061
      %4116 = vst [vmem:[%s180 + $0x10] sm:$0xff] %v4062
      %4117 = vst [vmem:[%s180 + $0x18] sm:$0xff] %v4063
      %4118 = vst [vmem:[%s180 + $0x20] sm:$0xff] %v4064
      %4119 = vst [vmem:[%s180 + $0x28] sm:$0xff] %v4065
      %4120 = vst [vmem:[%s180 + $0x30] sm:$0xff] %v4066
      %4121 = vst [vmem:[%s180 + $0x38] sm:$0xff] %v4067
      %4122 = vst [vmem:[%s180 + $0x40] sm:$0xff] %v4068
      %4123 = vst [vmem:[%s180 + $0x48] sm:$0xff] %v4069
      %4124 = vst [vmem:[%s180 + $0x50] sm:$0xff] %v4070
      %4125 = vst [vmem:[%s180 + $0x58] sm:$0xff] %v4071
      %4126 = vst [vmem:[%s180 + $0x60] sm:$0xff] %v4072
      %4127 = vst [vmem:[%s180 + $0x68] sm:$0xff] %v4073
      %4128 = vst [vmem:[%s180 + $0x70] sm:$0xff] %v4074
      %4129 = vst [vmem:[%s180 + $0x78] sm:$0xff] %v4075
      %4130 = vst [vmem:[%s180 + $0x80] sm:$0xff] %v4076
      %4131 = vst [vmem:[%s180 + $0x88] sm:$0xff] %v4077
      %4132 = vst [vmem:[%s180 + $0x90] sm:$0xff] %v4078
      %4133 = vst [vmem:[%s180 + $0x98] sm:$0xff] %v4079
      %4134 = vst [vmem:[%s180 + $0xa0] sm:$0xff] %v4080
      %4135 = vst [vmem:[%s180 + $0xa8] sm:$0xff] %v4081
      %4136 = vst [vmem:[%s180 + $0xb0] sm:$0xff] %v4082
      %4137 = vst [vmem:[%s180 + $0xb8] sm:$0xff] %v4083
      %4138 = vst [vmem:[%s180 + $0xc0] sm:$0xff] %v4084
      %4139 = vst [vmem:[%s180 + $0xc8] sm:$0xff] %v4085
      %4140 = vst [vmem:[%s180 + $0xd0] sm:$0xff] %v4086
      %4141 = vst [vmem:[%s180 + $0xd8] sm:$0xff] %v4087
      %4142 = vst [vmem:[%s180 + $0xe0] sm:$0xff] %v4088
      %4143 = vst [vmem:[%s180 + $0xe8] sm:$0xff] %v4089
      %4144 = vst [vmem:[%s180 + $0xf0] sm:$0xff] %v4090
      %4145 = vst [vmem:[%s180 + $0xf8] sm:$0xff] %v4091
      %4146 = vst [vmem:[%s180 + $0x100] sm:$0xff] %v4092
      %4147 = vst [vmem:[%s180 + $0x108] sm:$0xff] %v4093
      %4148 = vst [vmem:[%s180 + $0x110] sm:$0xff] %v4094
      %4149 = vst [vmem:[%s180 + $0x118] sm:$0xff] %v4095
      %4150 = vst [vmem:[%s180 + $0x120] sm:$0xff] %v4096
      %4151 = vst [vmem:[%s180 + $0x128] sm:$0xff] %v4097
      %4152 = vst [vmem:[%s180 + $0x130] sm:$0xff] %v4098
      %4153 = vst [vmem:[%s180 + $0x138] sm:$0xff] %v4099
      %4154 = vst [vmem:[%s180 + $0x140] sm:$0xff] %v4100
      %4155 = vst [vmem:[%s180 + $0x148] sm:$0xff] %v4101
      %4156 = vst [vmem:[%s180 + $0x150] sm:$0xff] %v4102
      %4157 = vst [vmem:[%s180 + $0x158] sm:$0xff] %v4103
      %4158 = vst [vmem:[%s180 + $0x160] sm:$0xff] %v4104
      %4159 = vst [vmem:[%s180 + $0x168] sm:$0xff] %v4105
      %4160 = vst [vmem:[%s180 + $0x170] sm:$0xff] %v4106
      %4161 = vst [vmem:[%s180 + $0x178] sm:$0xff] %v4107
      %4162 = vst [vmem:[%s180 + $0x180] sm:$0xff] %v4108
      %4163 = vst [vmem:[%s180 + $0x188] sm:$0xff] %v4109
      %4164 = vst [vmem:[%s180 + $0x190] sm:$0xff] %v4110
      %4165 = vst [vmem:[%s180 + $0x198] sm:$0xff] %v4111
      %4166 = vst [vmem:[%s180 + $0x1a0] sm:$0xff] %v4112
      %4167 = vst [vmem:[%s180 + $0x1a8] sm:$0xff] %v4113
      %p4168 = scmp.lt.s32.totalorder %s17, 1
      %s4169 = scalar_select %p4168, %s17, 1
      %p4170 = scmp.lt.s32.totalorder %s18, 0
      %s4171 = scalar_select %p4170, %s18, 0
      %s4172 = smul.addr %s4169, 54
      %s4173 = sadd.s32 %s4171, %s4172
      %s4174 = smul.addr %s4173, 8
      %s4175 = scalar_lea.vmem %s2, %s4174
      // Predicated region
      $region29: #{block_deform_forward.6} parent=27 // pred_check
        %p4176 = pneg %p97
      $region30: #{block_deform_forward.6} parent=27 // pred_check_branch
        %4178 = sbr.rel (%p4176) target = $region32
      $region31: #{block_deform_forward.6} parent=27 // pred_region
        _
      $region32: #{block_deform_forward.6} parent=27 // pred_fallthru
        _
    $region28: #{block_deform_forward.6} parent=5 // pred_fallthru
      _
    %p4179 = scmp.le.s32.totalorder 2, %s8
    // Predicated region
    $region33: #{block_deform_forward.6} parent=5 // pred_check
      %p4180 = pneg %p4179
    $region34: #{block_deform_forward.6} parent=5 // pred_check_branch
      %4182 = sbr.rel (%p4180) target = $region36
    $region35: #{block_deform_forward.6} parent=5 // pred_region
      %s4183 = ssub.s32 %s8, 2
      // Predicated region
      $region37: #{block_deform_forward.6} parent=35 // pred_check
        %p4184 = pneg %p103
      $region38: #{block_deform_forward.6} parent=35 // pred_check_branch
        %4186 = sbr.rel (%p4184) target = $region40
      $region39: #{block_deform_forward.6} parent=35 // pred_region
        %p4187 = scmp.lt.s32.totalorder %s19, 1
        %s4188 = scalar_select %p4187, %s19, 1
        %p4189 = scmp.lt.s32.totalorder %s20, 0
        %s4190 = scalar_select %p4189, %s20, 0
        %s4191 = smul.addr %s4188, 54
        %s4192 = sadd.s32 %s4190, %s4191
        %s4193 = smul.addr %s4192, 8
        %s4194 = scalar_lea.vmem %s2, %s4193
      $region40: #{block_deform_forward.6} parent=35 // pred_fallthru
        _
    $region36: #{block_deform_forward.6} parent=5 // pred_fallthru
      _
  $region6: #{block_deform_forward.6} parent=0 // loop_footer
    %s12 = sadd.s32 1, %s8
  $region7: #{block_deform_forward.6} parent=0 // loop_footer_branch
    %7 = sbr.rel target = $region3
  $region8: #{block_deform_forward.6} parent=0 // loop_exit
    _

// kernel: block_deform_forward.7
$region0: #{block_deform_forward.7}
  #allocation0 [shape = 'u32[]', space=smem, size = 0x4, offset = 0x4, fixed_abs, tag = 'smem constant byte address 0x4 - core index']
  #allocation1 [shape = 'u32[144,128]{1,0:T(1,128)}', space=vmem, size = 0x12000, scoped, tag = 'internal scratch']
  %s0 = inlined_call_operand.vmem [shape: f32[512,128], index: 0, kind: input, shape index: {}]
  %s1 = inlined_call_operand.vmem [shape: f32[1,128], index: 1, kind: input, shape index: {}]
  %s2 = inlined_call_operand.vmem [shape: f32[1,128], index: 2, kind: input, shape index: {}]
  %s3 = inlined_call_operand.vmem [shape: bf16[128,128], index: 3, kind: input, shape index: {}]
  %s4 = inlined_call_operand.vmem [shape: f32[1,128], index: 4, kind: input, shape index: {}]
  %s5 = inlined_call_operand.vmem [shape: f32[1,128], index: 5, kind: input, shape index: {}]
  %s6 = inlined_call_operand.vmem [shape: f32[512,128], index: 6, kind: output, shape index: {}]
  %s7 = sld [smem:[#allocation0]]
  $region57: #{block_deform_forward.7} parent=0
    _
  %s9 = ssub.s32 1, %s7
  %s10 = scalar_select 0, %s9, %s7
  loop: start=0, step=1, limit=4
  $region2: #{block_deform_forward.7} parent=0 // loop_pre_header
    _
  $region3: #{block_deform_forward.7} parent=0 // loop_header
    %s12 = sphi 0, %s16
    %p13 = scmp.ge.s32.totalorder %s12, 4
    %s22 = sphi 0, %s24
    %s25 = sphi 0, %s22
    %s26 = sphi 0, %s25
    %s42 = sphi 0, %s26
    %s46 = sphi 0, %s46
    %s48 = sphi 0, %s46
    %s49 = sphi 0, %s48
    %s63 = sphi 0, %s49
    %s67 = sphi 0, %s67
    %s69 = sphi 0, %s67
    %s70 = sphi 0, %s69
    %s84 = sphi 0, %s70
    %s88 = sphi 0, %s88
    %s90 = sphi 0, %s88
    %s91 = sphi 0, %s90
    %s105 = sphi 0, %s91
    %s109 = sphi 0, %s109
    %s111 = sphi 0, %s109
    %s112 = sphi 0, %s111
    %s126 = sphi 0, %s112
    %s130 = sphi 0, %s130
    %s132 = sphi 0, %s130
    %s133 = sphi 0, %s132
    %s147 = sphi 0, %s133
    %s153 = sphi 0, %s155
    %s156 = sphi 0, %s153
    %s157 = sphi 0, %s156
    %s173 = sphi 0, %s157
  $region4: #{block_deform_forward.7} parent=0 // loop_header_branch
    %15 = sbr.rel (%p13) target = $region8
  $region5: #{block_deform_forward.7} parent=0 // loop_body
    %s17 = ssub.s32 %s12, 1
    %s18 = ssub.s32 %s12, 2
    %s19 = sadd.s32 %s12, 1
    %s20 = ssub.s32 %s12, %s19
    %p21 = scmp.eq.s32.totalorder %s20, 0
    %s23 = sadd.s32 %s22, 1
    %s24 = scalar_select %p21, %s22, %s23
    %p27 = pneg %p21
    %p28 = scmp.eq.s32.totalorder %s12, 1
    %p29 = por %p27, %p28
    %p30 = scmp.ne.s32.totalorder %s22, %s25
    %p31 = scmp.eq.s32.totalorder %s12, 0
    %p32 = por %p30, %p31
    %p33 = scmp.ne.s32.totalorder %s22, %s25
    %p34 = scmp.eq.s32.totalorder %s17, 1
    %p35 = por %p33, %p34
    %p36 = scmp.ne.s32.totalorder %s25, %s26
    %p37 = scmp.eq.s32.totalorder %s17, 0
    %p38 = por %p36, %p37
    %p39 = scmp.ne.s32.totalorder %s25, %s26
    %p40 = scmp.eq.s32.totalorder %s18, 1
    %p41 = por %p39, %p40
    %p43 = scmp.ne.s32.totalorder %s26, %s42
    %p44 = scmp.eq.s32.totalorder %s18, 0
    %p45 = por %p43, %p44
    %s47 = sadd.s32 %s46, 1
    %p50 = scmp.eq.s32.totalorder %s12, 1
    %p51 = scmp.ne.s32.totalorder %s46, %s48
    %p52 = scmp.eq.s32.totalorder %s12, 0
    %p53 = por %p51, %p52
    %p54 = scmp.ne.s32.totalorder %s46, %s48
    %p55 = scmp.eq.s32.totalorder %s17, 1
    %p56 = por %p54, %p55
    %p57 = scmp.ne.s32.totalorder %s48, %s49
    %p58 = scmp.eq.s32.totalorder %s17, 0
    %p59 = por %p57, %p58
    %p60 = scmp.ne.s32.totalorder %s48, %s49
    %p61 = scmp.eq.s32.totalorder %s18, 1
    %p62 = por %p60, %p61
    %p64 = scmp.ne.s32.totalorder %s49, %s63
    %p65 = scmp.eq.s32.totalorder %s18, 0
    %p66 = por %p64, %p65
    %s68 = sadd.s32 %s67, 1
    %p71 = scmp.eq.s32.totalorder %s12, 1
    %p72 = scmp.ne.s32.totalorder %s67, %s69
    %p73 = scmp.eq.s32.totalorder %s12, 0
    %p74 = por %p72, %p73
    %p75 = scmp.ne.s32.totalorder %s67, %s69
    %p76 = scmp.eq.s32.totalorder %s17, 1
    %p77 = por %p75, %p76
    %p78 = scmp.ne.s32.totalorder %s69, %s70
    %p79 = scmp.eq.s32.totalorder %s17, 0
    %p80 = por %p78, %p79
    %p81 = scmp.ne.s32.totalorder %s69, %s70
    %p82 = scmp.eq.s32.totalorder %s18, 1
    %p83 = por %p81, %p82
    %p85 = scmp.ne.s32.totalorder %s70, %s84
    %p86 = scmp.eq.s32.totalorder %s18, 0
    %p87 = por %p85, %p86
    %s89 = sadd.s32 %s88, 1
    %p92 = scmp.eq.s32.totalorder %s12, 1
    %p93 = scmp.ne.s32.totalorder %s88, %s90
    %p94 = scmp.eq.s32.totalorder %s12, 0
    %p95 = por %p93, %p94
    %p96 = scmp.ne.s32.totalorder %s88, %s90
    %p97 = scmp.eq.s32.totalorder %s17, 1
    %p98 = por %p96, %p97
    %p99 = scmp.ne.s32.totalorder %s90, %s91
    %p100 = scmp.eq.s32.totalorder %s17, 0
    %p101 = por %p99, %p100
    %p102 = scmp.ne.s32.totalorder %s90, %s91
    %p103 = scmp.eq.s32.totalorder %s18, 1
    %p104 = por %p102, %p103
    %p106 = scmp.ne.s32.totalorder %s91, %s105
    %p107 = scmp.eq.s32.totalorder %s18, 0
    %p108 = por %p106, %p107
    %s110 = sadd.s32 %s109, 1
    %p113 = scmp.eq.s32.totalorder %s12, 1
    %p114 = scmp.ne.s32.totalorder %s109, %s111
    %p115 = scmp.eq.s32.totalorder %s12, 0
    %p116 = por %p114, %p115
    %p117 = scmp.ne.s32.totalorder %s109, %s111
    %p118 = scmp.eq.s32.totalorder %s17, 1
    %p119 = por %p117, %p118
    %p120 = scmp.ne.s32.totalorder %s111, %s112
    %p121 = scmp.eq.s32.totalorder %s17, 0
    %p122 = por %p120, %p121
    %p123 = scmp.ne.s32.totalorder %s111, %s112
    %p124 = scmp.eq.s32.totalorder %s18, 1
    %p125 = por %p123, %p124
    %p127 = scmp.ne.s32.totalorder %s112, %s126
    %p128 = scmp.eq.s32.totalorder %s18, 0
    %p129 = por %p127, %p128
    %s131 = sadd.s32 %s130, 1
    %p134 = scmp.eq.s32.totalorder %s12, 1
    %p135 = scmp.ne.s32.totalorder %s130, %s132
    %p136 = scmp.eq.s32.totalorder %s12, 0
    %p137 = por %p135, %p136
    %p138 = scmp.ne.s32.totalorder %s130, %s132
    %p139 = scmp.eq.s32.totalorder %s17, 1
    %p140 = por %p138, %p139
    %p141 = scmp.ne.s32.totalorder %s132, %s133
    %p142 = scmp.eq.s32.totalorder %s17, 0
    %p143 = por %p141, %p142
    %p144 = scmp.ne.s32.totalorder %s132, %s133
    %p145 = scmp.eq.s32.totalorder %s18, 1
    %p146 = por %p144, %p145
    %p148 = scmp.ne.s32.totalorder %s133, %s147
    %p149 = scmp.eq.s32.totalorder %s18, 0
    %p150 = por %p148, %p149
    %s151 = ssub.s32 %s12, %s19
    %p152 = scmp.eq.s32.totalorder %s151, 0
    %s154 = sadd.s32 %s153, 1
    %s155 = scalar_select %p152, %s153, %s154
    %p158 = pneg %p152
    %p159 = scmp.eq.s32.totalorder %s12, 1
    %p160 = por %p158, %p159
    %p161 = scmp.ne.s32.totalorder %s153, %s156
    %p162 = scmp.eq.s32.totalorder %s12, 0
    %p163 = por %p161, %p162
    %p164 = scmp.ne.s32.totalorder %s153, %s156
    %p165 = scmp.eq.s32.totalorder %s17, 1
    %p166 = por %p164, %p165
    %p167 = scmp.ne.s32.totalorder %s156, %s157
    %p168 = scmp.eq.s32.totalorder %s17, 0
    %p169 = por %p167, %p168
    %p170 = scmp.ne.s32.totalorder %s156, %s157
    %p171 = scmp.eq.s32.totalorder %s18, 1
    %p172 = por %p170, %p171
    %p174 = scmp.ne.s32.totalorder %s157, %s173
    %p175 = scmp.eq.s32.totalorder %s18, 0
    %p176 = por %p174, %p175
    %p177 = scmp.le.s32.totalorder 1, %s12
    %p178 = scmp.lt.s32.totalorder %s12, 3
    %p179 = pnand %p177, %p178
    %p180 = pneg %p179
    // Predicated region
    $region9: #{block_deform_forward.7} parent=5 // pred_check
      _
    $region10: #{block_deform_forward.7} parent=5 // pred_check_branch
      %182 = sbr.rel (%p179) target = $region12
    $region11: #{block_deform_forward.7} parent=5 // pred_region
      %s183 = ssub.s32 %s12, 1
      // Predicated region
      $region13: #{block_deform_forward.7} parent=11 // pred_check
        %p184 = pneg %p59
      $region14: #{block_deform_forward.7} parent=11 // pred_check_branch
        %186 = sbr.rel (%p184) target = $region16
      $region15: #{block_deform_forward.7} parent=11 // pred_region
        _
      $region16: #{block_deform_forward.7} parent=11 // pred_fallthru
        _
      // Predicated region
      $region17: #{block_deform_forward.7} parent=11 // pred_check
        %p187 = pneg %p80
      $region18: #{block_deform_forward.7} parent=11 // pred_check_branch
        %189 = sbr.rel (%p187) target = $region20
      $region19: #{block_deform_forward.7} parent=11 // pred_region
        _
      $region20: #{block_deform_forward.7} parent=11 // pred_fallthru
        _
      // Predicated region
      $region21: #{block_deform_forward.7} parent=11 // pred_check
        %p190 = pneg %p101
      $region22: #{block_deform_forward.7} parent=11 // pred_check_branch
        %192 = sbr.rel (%p190) target = $region24
      $region23: #{block_deform_forward.7} parent=11 // pred_region
        _
      $region24: #{block_deform_forward.7} parent=11 // pred_fallthru
        _
      // Predicated region
      $region25: #{block_deform_forward.7} parent=11 // pred_check
        %p193 = pneg %p122
      $region26: #{block_deform_forward.7} parent=11 // pred_check_branch
        %195 = sbr.rel (%p193) target = $region28
      $region27: #{block_deform_forward.7} parent=11 // pred_region
        _
      $region28: #{block_deform_forward.7} parent=11 // pred_fallthru
        _
      // Predicated region
      $region29: #{block_deform_forward.7} parent=11 // pred_check
        %p196 = pneg %p143
      $region30: #{block_deform_forward.7} parent=11 // pred_check_branch
        %198 = sbr.rel (%p196) target = $region32
      $region31: #{block_deform_forward.7} parent=11 // pred_region
        _
      $region32: #{block_deform_forward.7} parent=11 // pred_fallthru
        _
    $region12: #{block_deform_forward.7} parent=5 // pred_fallthru
      _
    %p199 = scmp.lt.s32.totalorder %s12, 2
    // Predicated region
    $region33: #{block_deform_forward.7} parent=5 // pred_check
      %p200 = pneg %p199
    $region34: #{block_deform_forward.7} parent=5 // pred_check_branch
      %202 = sbr.rel (%p200) target = $region36
    $region35: #{block_deform_forward.7} parent=5 // pred_region
      // Predicated region
      $region37: #{block_deform_forward.7} parent=35 // pred_check
        %p203 = pneg %p32
      $region38: #{block_deform_forward.7} parent=35 // pred_check_branch
        %205 = sbr.rel (%p203) target = $region40
      $region39: #{block_deform_forward.7} parent=35 // pred_region
        %s206 = smul.u32 32, %s12
        %p207 = scmp.lt.s32.totalorder %s206, 63
        %s208 = scalar_select %p207, %s206, 63
        %s209 = smul.addr %s208, 8
        %s210 = scalar_lea.vmem %s0, %s209
        %s211 = smul.u32 32, %s12
      $region40: #{block_deform_forward.7} parent=35 // pred_fallthru
        _
    $region36: #{block_deform_forward.7} parent=5 // pred_fallthru
      _
    %p212 = scmp.le.s32.totalorder 1, %s12
    %p213 = scmp.lt.s32.totalorder %s12, 3
    %p214 = pnand %p212, %p213
    %p215 = pneg %p214
    // Predicated region
    $region41: #{block_deform_forward.7} parent=5 // pred_check
      _
    $region42: #{block_deform_forward.7} parent=5 // pred_check_branch
      %217 = sbr.rel (%p214) target = $region44
    $region43: #{block_deform_forward.7} parent=5 // pred_region
      %s218 = ssub.s32 %s12, 1
      %s219 = smul.u32 32, %s17
      %p220 = scmp.lt.s32.totalorder %s219, 63
      %s221 = scalar_select %p220, %s219, 63
      %s222 = smul.addr %s221, 8
      %s223 = scalar_lea.vmem %s0, %s222
      %p224 = pneg %p38
      %p225 = pneg %p35
      %p226 = pneg %p59
      %p227 = pneg %p56
      %p228 = pneg %p80
      %p229 = pneg %p77
      %p230 = pneg %p101
      %p231 = pneg %p98
      %p232 = pneg %p122
      %p233 = pneg %p119
      %p234 = pneg %p143
      %p235 = pneg %p140
      %p236 = pneg %p169
      %p237 = pneg %p166
      %s238 = smul.u32 32, %s17
      %p239 = scmp.lt.s32.totalorder %s238, 63
      %s240 = scalar_select %p239, %s238, 63
      %s241 = smul.addr %s240, 8
      %s242 = scalar_lea.vmem %s6, %s241
      %s243 = smul.u32 32, %s17
      %p244 = scmp.lt.s32.totalorder %s243, 63
      %s245 = scalar_select %p244, %s243, 63
      %s246 = smul.addr %s245, 8
      %s247 = scalar_lea.vmem %s0, %s246
      %s248 = smul.u32 32, %s17
      %s249 = smul.u32 32, %s17
      %p250 = scmp.lt.s32.totalorder %s249, 63
      %s251 = scalar_select %p250, %s249, 63
      %s252 = smul.addr %s251, 8
      %s253 = scalar_lea.vmem %s6, %s252
      %s254 = smul.u32 32, %s17
      %v256 = vld [vmem:[%s247] sm:$0xff]
      %v257 = vld [vmem:[%s247 + $0x8] sm:$0xff]
      %v258 = vld [vmem:[%s247 + $0x10] sm:$0xff]
      %v259 = vld [vmem:[%s247 + $0x18] sm:$0xff]
      %v260 = vld [vmem:[%s247 + $0x20] sm:$0xff]
      %v261 = vld [vmem:[%s247 + $0x28] sm:$0xff]
      %v262 = vld [vmem:[%s247 + $0x30] sm:$0xff]
      %v263 = vld [vmem:[%s247 + $0x38] sm:$0xff]
      %v264 = vld [vmem:[%s247 + $0x40] sm:$0xff]
      %v265 = vld [vmem:[%s247 + $0x48] sm:$0xff]
      %v266 = vld [vmem:[%s247 + $0x50] sm:$0xff]
      %v267 = vld [vmem:[%s247 + $0x58] sm:$0xff]
      %v268 = vld [vmem:[%s247 + $0x60] sm:$0xff]
      %v269 = vld [vmem:[%s247 + $0x68] sm:$0xff]
      %v270 = vld [vmem:[%s247 + $0x70] sm:$0xff]
      %v271 = vld [vmem:[%s247 + $0x78] sm:$0xff]
      %v272 = vld [vmem:[%s247 + $0x80] sm:$0xff]
      %v273 = vld [vmem:[%s247 + $0x88] sm:$0xff]
      %v274 = vld [vmem:[%s247 + $0x90] sm:$0xff]
      %v275 = vld [vmem:[%s247 + $0x98] sm:$0xff]
      %v276 = vld [vmem:[%s247 + $0xa0] sm:$0xff]
      %v277 = vld [vmem:[%s247 + $0xa8] sm:$0xff]
      %v278 = vld [vmem:[%s247 + $0xb0] sm:$0xff]
      %v279 = vld [vmem:[%s247 + $0xb8] sm:$0xff]
      %v280 = vld [vmem:[%s247 + $0xc0] sm:$0xff]
      %v281 = vld [vmem:[%s247 + $0xc8] sm:$0xff]
      %v282 = vld [vmem:[%s247 + $0xd0] sm:$0xff]
      %v283 = vld [vmem:[%s247 + $0xd8] sm:$0xff]
      %v284 = vld [vmem:[%s247 + $0xe0] sm:$0xff]
      %v285 = vld [vmem:[%s247 + $0xe8] sm:$0xff]
      %v286 = vld [vmem:[%s247 + $0xf0] sm:$0xff]
      %v287 = vld [vmem:[%s247 + $0xf8] sm:$0xff]
      %v288 = vld [vmem:[%s1] sm:$0x1]
      %v290 = vlaneseq
      %v291 = vshrl.u32 %v290, 7
      %v292 = vsub.s32 0, %v291
      %v293 = vrot.slane %v288, %v292
      %v295 = vmul.f32 %v256, %v293
      %v296 = vmul.f32 %v257, %v293
      %v297 = vmul.f32 %v258, %v293
      %v298 = vmul.f32 %v259, %v293
      %v299 = vmul.f32 %v260, %v293
      %v300 = vmul.f32 %v261, %v293
      %v301 = vmul.f32 %v262, %v293
      %v302 = vmul.f32 %v263, %v293
      %v303 = vmul.f32 %v264, %v293
      %v304 = vmul.f32 %v265, %v293
      %v305 = vmul.f32 %v266, %v293
      %v306 = vmul.f32 %v267, %v293
      %v307 = vmul.f32 %v268, %v293
      %v308 = vmul.f32 %v269, %v293
      %v309 = vmul.f32 %v270, %v293
      %v310 = vmul.f32 %v271, %v293
      %v311 = vmul.f32 %v272, %v293
      %v312 = vmul.f32 %v273, %v293
      %v313 = vmul.f32 %v274, %v293
      %v314 = vmul.f32 %v275, %v293
      %v315 = vmul.f32 %v276, %v293
      %v316 = vmul.f32 %v277, %v293
      %v317 = vmul.f32 %v278, %v293
      %v318 = vmul.f32 %v279, %v293
      %v319 = vmul.f32 %v280, %v293
      %v320 = vmul.f32 %v281, %v293
      %v321 = vmul.f32 %v282, %v293
      %v322 = vmul.f32 %v283, %v293
      %v323 = vmul.f32 %v284, %v293
      %v324 = vmul.f32 %v285, %v293
      %v325 = vmul.f32 %v286, %v293
      %v326 = vmul.f32 %v287, %v293
      %v327 = vld [vmem:[%s2] sm:$0x1]
      %v329 = vlaneseq
      %v330 = vshrl.u32 %v329, 7
      %v331 = vsub.s32 0, %v330
      %v332 = vrot.slane %v327, %v331
      %v334 = vadd.f32 %v295, %v332
      %v335 = vadd.f32 %v296, %v332
      %v336 = vadd.f32 %v297, %v332
      %v337 = vadd.f32 %v298, %v332
      %v338 = vadd.f32 %v299, %v332
      %v339 = vadd.f32 %v300, %v332
      %v340 = vadd.f32 %v301, %v332
      %v341 = vadd.f32 %v302, %v332
      %v342 = vadd.f32 %v303, %v332
      %v343 = vadd.f32 %v304, %v332
      %v344 = vadd.f32 %v305, %v332
      %v345 = vadd.f32 %v306, %v332
      %v346 = vadd.f32 %v307, %v332
      %v347 = vadd.f32 %v308, %v332
      %v348 = vadd.f32 %v309, %v332
      %v349 = vadd.f32 %v310, %v332
      %v350 = vadd.f32 %v311, %v332
      %v351 = vadd.f32 %v312, %v332
      %v352 = vadd.f32 %v313, %v332
      %v353 = vadd.f32 %v314, %v332
      %v354 = vadd.f32 %v315, %v332
      %v355 = vadd.f32 %v316, %v332
      %v356 = vadd.f32 %v317, %v332
      %v357 = vadd.f32 %v318, %v332
      %v358 = vadd.f32 %v319, %v332
      %v359 = vadd.f32 %v320, %v332
      %v360 = vadd.f32 %v321, %v332
      %v361 = vadd.f32 %v322, %v332
      %v362 = vadd.f32 %v323, %v332
      %v363 = vadd.f32 %v324, %v332
      %v364 = vadd.f32 %v325, %v332
      %v365 = vadd.f32 %v326, %v332
      %v366 = vmax.f32 %v334, 0.0
      %v367 = vmax.f32 %v335, 0.0
      %v368 = vmax.f32 %v336, 0.0
      %v369 = vmax.f32 %v337, 0.0
      %v370 = vmax.f32 %v338, 0.0
      %v371 = vmax.f32 %v339, 0.0
      %v372 = vmax.f32 %v340, 0.0
      %v373 = vmax.f32 %v341, 0.0
      %v374 = vmax.f32 %v342, 0.0
      %v375 = vmax.f32 %v343, 0.0
      %v376 = vmax.f32 %v344, 0.0
      %v377 = vmax.f32 %v345, 0.0
      %v378 = vmax.f32 %v346, 0.0
      %v379 = vmax.f32 %v347, 0.0
      %v380 = vmax.f32 %v348, 0.0
      %v381 = vmax.f32 %v349, 0.0
      %v382 = vmax.f32 %v350, 0.0
      %v383 = vmax.f32 %v351, 0.0
      %v384 = vmax.f32 %v352, 0.0
      %v385 = vmax.f32 %v353, 0.0
      %v386 = vmax.f32 %v354, 0.0
      %v387 = vmax.f32 %v355, 0.0
      %v388 = vmax.f32 %v356, 0.0
      %v389 = vmax.f32 %v357, 0.0
      %v390 = vmax.f32 %v358, 0.0
      %v391 = vmax.f32 %v359, 0.0
      %v392 = vmax.f32 %v360, 0.0
      %v393 = vmax.f32 %v361, 0.0
      %v394 = vmax.f32 %v362, 0.0
      %v395 = vmax.f32 %v363, 0.0
      %v396 = vmax.f32 %v364, 0.0
      %v397 = vmax.f32 %v365, 0.0
      %v398 = vpack.c.bf16 %v367, %v366
      %v399 = vpack.c.bf16 %v369, %v368
      %v400 = vpack.c.bf16 %v371, %v370
      %v401 = vpack.c.bf16 %v373, %v372
      %v402 = vpack.c.bf16 %v375, %v374
      %v403 = vpack.c.bf16 %v377, %v376
      %v404 = vpack.c.bf16 %v379, %v378
      %v405 = vpack.c.bf16 %v381, %v380
      %v406 = vpack.c.bf16 %v383, %v382
      %v407 = vpack.c.bf16 %v385, %v384
      %v408 = vpack.c.bf16 %v387, %v386
      %v409 = vpack.c.bf16 %v389, %v388
      %v410 = vpack.c.bf16 %v391, %v390
      %v411 = vpack.c.bf16 %v393, %v392
      %v412 = vpack.c.bf16 %v395, %v394
      %v413 = vpack.c.bf16 %v397, %v396
      %v414 = vld [vmem:[%s3] sm:$0xf]
      %v415 = vld [vmem:[%s3 + $0x4] sm:$0xf]
      %v416 = vld [vmem:[%s3 + $0x8] sm:$0xf]
      %v417 = vld [vmem:[%s3 + $0xc] sm:$0xf]
      %v418 = vld [vmem:[%s3 + $0x10] sm:$0xf]
      %v419 = vld [vmem:[%s3 + $0x14] sm:$0xf]
      %v420 = vld [vmem:[%s3 + $0x18] sm:$0xf]
      %v421 = vld [vmem:[%s3 + $0x1c] sm:$0xf]
      %v422 = vld [vmem:[%s3 + $0x20] sm:$0xf]
      %v423 = vld [vmem:[%s3 + $0x24] sm:$0xf]
      %v424 = vld [vmem:[%s3 + $0x28] sm:$0xf]
      %v425 = vld [vmem:[%s3 + $0x2c] sm:$0xf]
      %v426 = vld [vmem:[%s3 + $0x30] sm:$0xf]
      %v427 = vld [vmem:[%s3 + $0x34] sm:$0xf]
      %v428 = vld [vmem:[%s3 + $0x38] sm:$0xf]
      %v429 = vld [vmem:[%s3 + $0x3c] sm:$0xf]
      %v446 = vunpack.c.l.b16 %v414
      %v447 = vunpack.c.l.b16 %v415
      %v448 = vunpack.c.l.b16 %v416
      %v449 = vunpack.c.l.b16 %v417
      %v450 = vunpack.c.l.b16 %v418
      %v451 = vunpack.c.l.b16 %v419
      %v452 = vunpack.c.l.b16 %v420
      %v453 = vunpack.c.l.b16 %v421
      %v454 = vunpack.c.l.b16 %v422
      %v455 = vunpack.c.l.b16 %v423
      %v456 = vunpack.c.l.b16 %v424
      %v457 = vunpack.c.l.b16 %v425
      %v458 = vunpack.c.l.b16 %v426
      %v459 = vunpack.c.l.b16 %v427
      %v460 = vunpack.c.l.b16 %v428
      %v461 = vunpack.c.l.b16 %v429
      %v462 = vpack.c.b16 %v447, %v446
      %v463 = vpack.c.b16 %v449, %v448
      %v464 = vpack.c.b16 %v451, %v450
      %v465 = vpack.c.b16 %v453, %v452
      %v466 = vpack.c.b16 %v455, %v454
      %v467 = vpack.c.b16 %v457, %v456
      %v468 = vpack.c.b16 %v459, %v458
      %v469 = vpack.c.b16 %v461, %v460
      %478 = vmatprep.subr.bf16.mxu0 0
      %479 = vmatpush1.bf16.msra.mxu0 %v462
      %480 = vmatprep.subr.bf16.mxu0 0
      %481 = vmatpush1.bf16.msra.mxu0 %v463
      %482 = vmatprep.subr.bf16.mxu0 0
      %483 = vmatpush1.bf16.msra.mxu0 %v464
      %484 = vmatprep.subr.bf16.mxu0 0
      %485 = vmatpush1.bf16.msra.mxu0 %v465
      %486 = vmatprep.subr.bf16.mxu0 0
      %487 = vmatpush1.bf16.msra.mxu0 %v466
      %488 = vmatprep.subr.bf16.mxu0 0
      %489 = vmatpush1.bf16.msra.mxu0 %v467
      %490 = vmatprep.subr.bf16.mxu0 0
      %491 = vmatpush1.bf16.msra.mxu0 %v468
      %492 = vmatprep.subr.bf16.mxu0 0
      %493 = vmatpush1.bf16.msra.mxu0 %v469
      %494 = vmatprep.subr.bf16.mxu0 0
      %495 = vmatpush1.bf16.msra.mxu0 0
      %496 = vmatprep.subr.bf16.mxu0 0
      %497 = vmatpush1.bf16.msra.mxu0 0
      %498 = vmatprep.subr.bf16.mxu0 0
      %499 = vmatpush1.bf16.msra.mxu0 0
      %500 = vmatprep.subr.bf16.mxu0 0
      %501 = vmatpush1.bf16.msra.mxu0 0
      %502 = vmatprep.subr.bf16.mxu0 0
      %503 = vmatpush1.bf16.msra.mxu0 0
      %504 = vmatprep.subr.bf16.mxu0 0
      %505 = vmatpush1.bf16.msra.mxu0 0
      %506 = vmatprep.subr.bf16.mxu0 0
      %507 = vmatpush1.bf16.msra.mxu0 0
      %508 = vmatprep.subr.bf16.mxu0 0
      %509 = vmatpush1.bf16.msra.mxu0 0
      %510 = vmatprep.mubr.bf16.mxu0 0
      %511 = vmatmul.mubr.bf16.gmra.mrb[0].mxu0 %v398
      %v512 = vpop.f32.mrb[0].mxu0
      %v513 = vadd.f32 0.0, %v512
      %v514 = vpop.f32.mrb[0].mxu0
      %v515 = vpop.f32.mrb[0].mxu0
      %v516 = vadd.f32 0.0, %v515
      %v517 = vpop.f32.mrb[0].mxu0
      %518 = vmatprep.mubr.bf16.mxu0 0
      %519 = vmatmul.mubr.bf16.gmra.mrb[0].mxu0 %v399
      %v520 = vpop.f32.mrb[0].mxu0
      %v521 = vadd.f32 0.0, %v520
      %v522 = vpop.f32.mrb[0].mxu0
      %v523 = vpop.f32.mrb[0].mxu0
      %v524 = vadd.f32 0.0, %v523
      %v525 = vpop.f32.mrb[0].mxu0
      %526 = vmatprep.mubr.bf16.mxu0 0
      %527 = vmatmul.mubr.bf16.gmra.mrb[0].mxu0 %v400
      %v528 = vpop.f32.mrb[0].mxu0
      %v529 = vadd.f32 0.0, %v528
      %v530 = vpop.f32.mrb[0].mxu0
      %v531 = vpop.f32.mrb[0].mxu0
      %v532 = vadd.f32 0.0, %v531
      %v533 = vpop.f32.mrb[0].mxu0
      %534 = vmatprep.mubr.bf16.mxu0 0
      %535 = vmatmul.mubr.bf16.gmra.mrb[0].mxu0 %v401
      %v536 = vpop.f32.mrb[0].mxu0
      %v537 = vadd.f32 0.0, %v536
      %v538 = vpop.f32.mrb[0].mxu0
      %v539 = vpop.f32.mrb[0].mxu0
      %v540 = vadd.f32 0.0, %v539
      %v541 = vpop.f32.mrb[0].mxu0
      %542 = vmatprep.mubr.bf16.mxu0 0
      %543 = vmatmul.mubr.bf16.gmra.mrb[0].mxu0 %v402
      %v544 = vpop.f32.mrb[0].mxu0
      %v545 = vadd.f32 0.0, %v544
      %v546 = vpop.f32.mrb[0].mxu0
      %v547 = vpop.f32.mrb[0].mxu0
      %v548 = vadd.f32 0.0, %v547
      %v549 = vpop.f32.mrb[0].mxu0
      %550 = vmatprep.mubr.bf16.mxu0 0
      %551 = vmatmul.mubr.bf16.gmra.mrb[0].mxu0 %v403
      %v552 = vpop.f32.mrb[0].mxu0
      %v553 = vadd.f32 0.0, %v552
      %v554 = vpop.f32.mrb[0].mxu0
      %v555 = vpop.f32.mrb[0].mxu0
      %v556 = vadd.f32 0.0, %v555
      %v557 = vpop.f32.mrb[0].mxu0
      %558 = vmatprep.mubr.bf16.mxu0 0
      %559 = vmatmul.mubr.bf16.gmra.mrb[0].mxu0 %v404
      %v560 = vpop.f32.mrb[0].mxu0
      %v561 = vadd.f32 0.0, %v560
      %v562 = vpop.f32.mrb[0].mxu0
      %v563 = vpop.f32.mrb[0].mxu0
      %v564 = vadd.f32 0.0, %v563
      %v565 = vpop.f32.mrb[0].mxu0
      %566 = vmatprep.mubr.bf16.mxu0 0
      %567 = vmatmul.mubr.bf16.gmra.mrb[0].mxu0 %v405
      %v568 = vpop.f32.mrb[0].mxu0
      %v569 = vadd.f32 0.0, %v568
      %v570 = vpop.f32.mrb[0].mxu0
      %v571 = vpop.f32.mrb[0].mxu0
      %v572 = vadd.f32 0.0, %v571
      %v573 = vpop.f32.mrb[0].mxu0
      %574 = vmatprep.mubr.bf16.mxu0 0
      %575 = vmatmul.mubr.bf16.gmra.mrb[0].mxu0 %v406
      %v576 = vpop.f32.mrb[0].mxu0
      %v577 = vadd.f32 0.0, %v576
      %v578 = vpop.f32.mrb[0].mxu0
      %v579 = vpop.f32.mrb[0].mxu0
      %v580 = vadd.f32 0.0, %v579
      %v581 = vpop.f32.mrb[0].mxu0
      %582 = vmatprep.mubr.bf16.mxu0 0
      %583 = vmatmul.mubr.bf16.gmra.mrb[0].mxu0 %v407
      %v584 = vpop.f32.mrb[0].mxu0
      %v585 = vadd.f32 0.0, %v584
      %v586 = vpop.f32.mrb[0].mxu0
      %v587 = vpop.f32.mrb[0].mxu0
      %v588 = vadd.f32 0.0, %v587
      %v589 = vpop.f32.mrb[0].mxu0
      %590 = vmatprep.mubr.bf16.mxu0 0
      %591 = vmatmul.mubr.bf16.gmra.mrb[0].mxu0 %v408
      %v592 = vpop.f32.mrb[0].mxu0
      %v593 = vadd.f32 0.0, %v592
      %v594 = vpop.f32.mrb[0].mxu0
      %v595 = vpop.f32.mrb[0].mxu0
      %v596 = vadd.f32 0.0, %v595
      %v597 = vpop.f32.mrb[0].mxu0
      %598 = vmatprep.mubr.bf16.mxu0 0
      %599 = vmatmul.mubr.bf16.gmra.mrb[0].mxu0 %v409
      %v600 = vpop.f32.mrb[0].mxu0
      %v601 = vadd.f32 0.0, %v600
      %v602 = vpop.f32.mrb[0].mxu0
      %v603 = vpop.f32.mrb[0].mxu0
      %v604 = vadd.f32 0.0, %v603
      %v605 = vpop.f32.mrb[0].mxu0
      %606 = vmatprep.mubr.bf16.mxu0 0
      %607 = vmatmul.mubr.bf16.gmra.mrb[0].mxu0 %v410
      %v608 = vpop.f32.mrb[0].mxu0
      %v609 = vadd.f32 0.0, %v608
      %v610 = vpop.f32.mrb[0].mxu0
      %v611 = vpop.f32.mrb[0].mxu0
      %v612 = vadd.f32 0.0, %v611
      %v613 = vpop.f32.mrb[0].mxu0
      %614 = vmatprep.mubr.bf16.mxu0 0
      %615 = vmatmul.mubr.bf16.gmra.mrb[0].mxu0 %v411
      %v616 = vpop.f32.mrb[0].mxu0
      %v617 = vadd.f32 0.0, %v616
      %v618 = vpop.f32.mrb[0].mxu0
      %v619 = vpop.f32.mrb[0].mxu0
      %v620 = vadd.f32 0.0, %v619
      %v621 = vpop.f32.mrb[0].mxu0
      %622 = vmatprep.mubr.bf16.mxu0 0
      %623 = vmatmul.mubr.bf16.gmra.mrb[0].mxu0 %v412
      %v624 = vpop.f32.mrb[0].mxu0
      %v625 = vadd.f32 0.0, %v624
      %v626 = vpop.f32.mrb[0].mxu0
      %v627 = vpop.f32.mrb[0].mxu0
      %v628 = vadd.f32 0.0, %v627
      %v629 = vpop.f32.mrb[0].mxu0
      %630 = vmatprep.mubr.bf16.mxu0 0
      %631 = vmatmul.mubr.bf16.gmra.mrb[0].mxu0 %v413
      %v632 = vpop.f32.mrb[0].mxu0
      %v633 = vadd.f32 0.0, %v632
      %v634 = vpop.f32.mrb[0].mxu0
      %v635 = vpop.f32.mrb[0].mxu0
      %v636 = vadd.f32 0.0, %v635
      %v637 = vpop.f32.mrb[0].mxu0
      %638 = vdwg.mxu0
      %v639 = vld [vmem:[%s4] sm:$0x1]
      %v641 = vlaneseq
      %v642 = vshrl.u32 %v641, 7
      %v643 = vsub.s32 0, %v642
      %v644 = vrot.slane %v639, %v643
      %v646 = vmul.f32 %v513, %v644
      %v647 = vmul.f32 %v516, %v644
      %v648 = vmul.f32 %v521, %v644
      %v649 = vmul.f32 %v524, %v644
      %v650 = vmul.f32 %v529, %v644
      %v651 = vmul.f32 %v532, %v644
      %v652 = vmul.f32 %v537, %v644
      %v653 = vmul.f32 %v540, %v644
      %v654 = vmul.f32 %v545, %v644
      %v655 = vmul.f32 %v548, %v644
      %v656 = vmul.f32 %v553, %v644
      %v657 = vmul.f32 %v556, %v644
      %v658 = vmul.f32 %v561, %v644
      %v659 = vmul.f32 %v564, %v644
      %v660 = vmul.f32 %v569, %v644
      %v661 = vmul.f32 %v572, %v644
      %v662 = vmul.f32 %v577, %v644
      %v663 = vmul.f32 %v580, %v644
      %v664 = vmul.f32 %v585, %v644
      %v665 = vmul.f32 %v588, %v644
      %v666 = vmul.f32 %v593, %v644
      %v667 = vmul.f32 %v596, %v644
      %v668 = vmul.f32 %v601, %v644
      %v669 = vmul.f32 %v604, %v644
      %v670 = vmul.f32 %v609, %v644
      %v671 = vmul.f32 %v612, %v644
      %v672 = vmul.f32 %v617, %v644
      %v673 = vmul.f32 %v620, %v644
      %v674 = vmul.f32 %v625, %v644
      %v675 = vmul.f32 %v628, %v644
      %v676 = vmul.f32 %v633, %v644
      %v677 = vmul.f32 %v636, %v644
      %v678 = vld [vmem:[%s5] sm:$0x1]
      %v680 = vlaneseq
      %v681 = vshrl.u32 %v680, 7
      %v682 = vsub.s32 0, %v681
      %v683 = vrot.slane %v678, %v682
      %v685 = vadd.f32 %v646, %v683
      %v686 = vadd.f32 %v647, %v683
      %v687 = vadd.f32 %v648, %v683
      %v688 = vadd.f32 %v649, %v683
      %v689 = vadd.f32 %v650, %v683
      %v690 = vadd.f32 %v651, %v683
      %v691 = vadd.f32 %v652, %v683
      %v692 = vadd.f32 %v653, %v683
      %v693 = vadd.f32 %v654, %v683
      %v694 = vadd.f32 %v655, %v683
      %v695 = vadd.f32 %v656, %v683
      %v696 = vadd.f32 %v657, %v683
      %v697 = vadd.f32 %v658, %v683
      %v698 = vadd.f32 %v659, %v683
      %v699 = vadd.f32 %v660, %v683
      %v700 = vadd.f32 %v661, %v683
      %v701 = vadd.f32 %v662, %v683
      %v702 = vadd.f32 %v663, %v683
      %v703 = vadd.f32 %v664, %v683
      %v704 = vadd.f32 %v665, %v683
      %v705 = vadd.f32 %v666, %v683
      %v706 = vadd.f32 %v667, %v683
      %v707 = vadd.f32 %v668, %v683
      %v708 = vadd.f32 %v669, %v683
      %v709 = vadd.f32 %v670, %v683
      %v710 = vadd.f32 %v671, %v683
      %v711 = vadd.f32 %v672, %v683
      %v712 = vadd.f32 %v673, %v683
      %v713 = vadd.f32 %v674, %v683
      %v714 = vadd.f32 %v675, %v683
      %v715 = vadd.f32 %v676, %v683
      %v716 = vadd.f32 %v677, %v683
      %v717 = vmax.f32 %v685, 0.0
      %v718 = vmax.f32 %v686, 0.0
      %v719 = vmax.f32 %v687, 0.0
      %v720 = vmax.f32 %v688, 0.0
      %v721 = vmax.f32 %v689, 0.0
      %v722 = vmax.f32 %v690, 0.0
      %v723 = vmax.f32 %v691, 0.0
      %v724 = vmax.f32 %v692, 0.0
      %v725 = vmax.f32 %v693, 0.0
      %v726 = vmax.f32 %v694, 0.0
      %v727 = vmax.f32 %v695, 0.0
      %v728 = vmax.f32 %v696, 0.0
      %v729 = vmax.f32 %v697, 0.0
      %v730 = vmax.f32 %v698, 0.0
      %v731 = vmax.f32 %v699, 0.0
      %v732 = vmax.f32 %v700, 0.0
      %v733 = vmax.f32 %v701, 0.0
      %v734 = vmax.f32 %v702, 0.0
      %v735 = vmax.f32 %v703, 0.0
      %v736 = vmax.f32 %v704, 0.0
      %v737 = vmax.f32 %v705, 0.0
      %v738 = vmax.f32 %v706, 0.0
      %v739 = vmax.f32 %v707, 0.0
      %v740 = vmax.f32 %v708, 0.0
      %v741 = vmax.f32 %v709, 0.0
      %v742 = vmax.f32 %v710, 0.0
      %v743 = vmax.f32 %v711, 0.0
      %v744 = vmax.f32 %v712, 0.0
      %v745 = vmax.f32 %v713, 0.0
      %v746 = vmax.f32 %v714, 0.0
      %v747 = vmax.f32 %v715, 0.0
      %v748 = vmax.f32 %v716, 0.0
      %749 = vst [vmem:[%s253] sm:$0xff] %v717
      %750 = vst [vmem:[%s253 + $0x8] sm:$0xff] %v718
      %751 = vst [vmem:[%s253 + $0x10] sm:$0xff] %v719
      %752 = vst [vmem:[%s253 + $0x18] sm:$0xff] %v720
      %753 = vst [vmem:[%s253 + $0x20] sm:$0xff] %v721
      %754 = vst [vmem:[%s253 + $0x28] sm:$0xff] %v722
      %755 = vst [vmem:[%s253 + $0x30] sm:$0xff] %v723
      %756 = vst [vmem:[%s253 + $0x38] sm:$0xff] %v724
      %757 = vst [vmem:[%s253 + $0x40] sm:$0xff] %v725
      %758 = vst [vmem:[%s253 + $0x48] sm:$0xff] %v726
      %759 = vst [vmem:[%s253 + $0x50] sm:$0xff] %v727
      %760 = vst [vmem:[%s253 + $0x58] sm:$0xff] %v728
      %761 = vst [vmem:[%s253 + $0x60] sm:$0xff] %v729
      %762 = vst [vmem:[%s253 + $0x68] sm:$0xff] %v730
      %763 = vst [vmem:[%s253 + $0x70] sm:$0xff] %v731
      %764 = vst [vmem:[%s253 + $0x78] sm:$0xff] %v732
      %765 = vst [vmem:[%s253 + $0x80] sm:$0xff] %v733
      %766 = vst [vmem:[%s253 + $0x88] sm:$0xff] %v734
      %767 = vst [vmem:[%s253 + $0x90] sm:$0xff] %v735
      %768 = vst [vmem:[%s253 + $0x98] sm:$0xff] %v736
      %769 = vst [vmem:[%s253 + $0xa0] sm:$0xff] %v737
      %770 = vst [vmem:[%s253 + $0xa8] sm:$0xff] %v738
      %771 = vst [vmem:[%s253 + $0xb0] sm:$0xff] %v739
      %772 = vst [vmem:[%s253 + $0xb8] sm:$0xff] %v740
      %773 = vst [vmem:[%s253 + $0xc0] sm:$0xff] %v741
      %774 = vst [vmem:[%s253 + $0xc8] sm:$0xff] %v742
      %775 = vst [vmem:[%s253 + $0xd0] sm:$0xff] %v743
      %776 = vst [vmem:[%s253 + $0xd8] sm:$0xff] %v744
      %777 = vst [vmem:[%s253 + $0xe0] sm:$0xff] %v745
      %778 = vst [vmem:[%s253 + $0xe8] sm:$0xff] %v746
      %779 = vst [vmem:[%s253 + $0xf0] sm:$0xff] %v747
      %780 = vst [vmem:[%s253 + $0xf8] sm:$0xff] %v748
      %s781 = smul.u32 32, %s17
      %p782 = scmp.lt.s32.totalorder %s781, 63
      %s783 = scalar_select %p782, %s781, 63
      %s784 = smul.addr %s783, 8
      %s785 = scalar_lea.vmem %s6, %s784
      // Predicated region
      $region45: #{block_deform_forward.7} parent=43 // pred_check
        %p786 = pneg %p166
      $region46: #{block_deform_forward.7} parent=43 // pred_check_branch
        %788 = sbr.rel (%p786) target = $region48
      $region47: #{block_deform_forward.7} parent=43 // pred_region
        %s789 = smul.u32 32, %s17
      $region48: #{block_deform_forward.7} parent=43 // pred_fallthru
        _
    $region44: #{block_deform_forward.7} parent=5 // pred_fallthru
      _
    %p790 = scmp.le.s32.totalorder 2, %s12
    // Predicated region
    $region49: #{block_deform_forward.7} parent=5 // pred_check
      %p791 = pneg %p790
    $region50: #{block_deform_forward.7} parent=5 // pred_check_branch
      %793 = sbr.rel (%p791) target = $region52
    $region51: #{block_deform_forward.7} parent=5 // pred_region
      %s794 = ssub.s32 %s12, 2
      // Predicated region
      $region53: #{block_deform_forward.7} parent=51 // pred_check
        %p795 = pneg %p172
      $region54: #{block_deform_forward.7} parent=51 // pred_check_branch
        %797 = sbr.rel (%p795) target = $region56
      $region55: #{block_deform_forward.7} parent=51 // pred_region
        %s798 = smul.u32 32, %s18
        %p799 = scmp.lt.s32.totalorder %s798, 63
        %s800 = scalar_select %p799, %s798, 63
        %s801 = smul.addr %s800, 8
        %s802 = scalar_lea.vmem %s6, %s801
      $region56: #{block_deform_forward.7} parent=51 // pred_fallthru
        _
    $region52: #{block_deform_forward.7} parent=5 // pred_fallthru
      _
  $region6: #{block_deform_forward.7} parent=0 // loop_footer
    %s16 = sadd.s32 1, %s12
  $region7: #{block_deform_forward.7} parent=0 // loop_footer_branch
    %11 = sbr.rel target = $region3
  $region8: #{block_deform_forward.7} parent=0 // loop_exit
    _

// kernel: block_deform_forward.11
$region0: #{block_deform_forward.11}
  #allocation0 [shape = 'u32[]', space=smem, size = 0x4, offset = 0x4, fixed_abs, tag = 'smem constant byte address 0x4 - core index']
  #allocation1 [shape = 'u32[144,128]{1,0:T(1,128)}', space=vmem, size = 0x12000, scoped, tag = 'internal scratch']
  %s0 = inlined_call_operand.vmem [shape: f32[512,128], index: 0, kind: input, shape index: {}]
  %s1 = inlined_call_operand.vmem [shape: f32[1,128], index: 1, kind: input, shape index: {}]
  %s2 = inlined_call_operand.vmem [shape: f32[1,128], index: 2, kind: input, shape index: {}]
  %s3 = inlined_call_operand.vmem [shape: bf16[128,128], index: 3, kind: input, shape index: {}]
  %s4 = inlined_call_operand.vmem [shape: f32[1,128], index: 4, kind: input, shape index: {}]
  %s5 = inlined_call_operand.vmem [shape: f32[1,128], index: 5, kind: input, shape index: {}]
  %s6 = inlined_call_operand.vmem [shape: f32[512,128], index: 6, kind: input, shape index: {}, may-alias: {6,7}]
  %s7 = inlined_call_operand.vmem [shape: f32[512,128], index: 7, kind: output, shape index: {}, may-alias: {6,7}]
  %s8 = sld [smem:[#allocation0]]
  $region61: #{block_deform_forward.11} parent=0
    _
  %s10 = ssub.s32 1, %s8
  %s11 = scalar_select 0, %s10, %s8
  loop: start=0, step=1, limit=4
  $region2: #{block_deform_forward.11} parent=0 // loop_pre_header
    _
  $region3: #{block_deform_forward.11} parent=0 // loop_header
    %s13 = sphi 0, %s17
    %p14 = scmp.ge.s32.totalorder %s13, 4
    %s23 = sphi 0, %s25
    %s26 = sphi 0, %s23
    %s27 = sphi 0, %s26
    %s43 = sphi 0, %s27
    %s47 = sphi 0, %s47
    %s49 = sphi 0, %s47
    %s50 = sphi 0, %s49
    %s64 = sphi 0, %s50
    %s68 = sphi 0, %s68
    %s70 = sphi 0, %s68
    %s71 = sphi 0, %s70
    %s85 = sphi 0, %s71
    %s89 = sphi 0, %s89
    %s91 = sphi 0, %s89
    %s92 = sphi 0, %s91
    %s106 = sphi 0, %s92
    %s110 = sphi 0, %s110
    %s112 = sphi 0, %s110
    %s113 = sphi 0, %s112
    %s127 = sphi 0, %s113
    %s131 = sphi 0, %s131
    %s133 = sphi 0, %s131
    %s134 = sphi 0, %s133
    %s148 = sphi 0, %s134
    %s154 = sphi 0, %s156
    %s157 = sphi 0, %s154
    %s158 = sphi 0, %s157
    %s174 = sphi 0, %s158
    %s180 = sphi 0, %s182
    %s183 = sphi 0, %s180
    %s184 = sphi 0, %s183
    %s200 = sphi 0, %s184
  $region4: #{block_deform_forward.11} parent=0 // loop_header_branch
    %16 = sbr.rel (%p14) target = $region8
  $region5: #{block_deform_forward.11} parent=0 // loop_body
    %s18 = ssub.s32 %s13, 1
    %s19 = ssub.s32 %s13, 2
    %s20 = sadd.s32 %s13, 1
    %s21 = ssub.s32 %s13, %s20
    %p22 = scmp.eq.s32.totalorder %s21, 0
    %s24 = sadd.s32 %s23, 1
    %s25 = scalar_select %p22, %s23, %s24
    %p28 = pneg %p22
    %p29 = scmp.eq.s32.totalorder %s13, 1
    %p30 = por %p28, %p29
    %p31 = scmp.ne.s32.totalorder %s23, %s26
    %p32 = scmp.eq.s32.totalorder %s13, 0
    %p33 = por %p31, %p32
    %p34 = scmp.ne.s32.totalorder %s23, %s26
    %p35 = scmp.eq.s32.totalorder %s18, 1
    %p36 = por %p34, %p35
    %p37 = scmp.ne.s32.totalorder %s26, %s27
    %p38 = scmp.eq.s32.totalorder %s18, 0
    %p39 = por %p37, %p38
    %p40 = scmp.ne.s32.totalorder %s26, %s27
    %p41 = scmp.eq.s32.totalorder %s19, 1
    %p42 = por %p40, %p41
    %p44 = scmp.ne.s32.totalorder %s27, %s43
    %p45 = scmp.eq.s32.totalorder %s19, 0
    %p46 = por %p44, %p45
    %s48 = sadd.s32 %s47, 1
    %p51 = scmp.eq.s32.totalorder %s13, 1
    %p52 = scmp.ne.s32.totalorder %s47, %s49
    %p53 = scmp.eq.s32.totalorder %s13, 0
    %p54 = por %p52, %p53
    %p55 = scmp.ne.s32.totalorder %s47, %s49
    %p56 = scmp.eq.s32.totalorder %s18, 1
    %p57 = por %p55, %p56
    %p58 = scmp.ne.s32.totalorder %s49, %s50
    %p59 = scmp.eq.s32.totalorder %s18, 0
    %p60 = por %p58, %p59
    %p61 = scmp.ne.s32.totalorder %s49, %s50
    %p62 = scmp.eq.s32.totalorder %s19, 1
    %p63 = por %p61, %p62
    %p65 = scmp.ne.s32.totalorder %s50, %s64
    %p66 = scmp.eq.s32.totalorder %s19, 0
    %p67 = por %p65, %p66
    %s69 = sadd.s32 %s68, 1
    %p72 = scmp.eq.s32.totalorder %s13, 1
    %p73 = scmp.ne.s32.totalorder %s68, %s70
    %p74 = scmp.eq.s32.totalorder %s13, 0
    %p75 = por %p73, %p74
    %p76 = scmp.ne.s32.totalorder %s68, %s70
    %p77 = scmp.eq.s32.totalorder %s18, 1
    %p78 = por %p76, %p77
    %p79 = scmp.ne.s32.totalorder %s70, %s71
    %p80 = scmp.eq.s32.totalorder %s18, 0
    %p81 = por %p79, %p80
    %p82 = scmp.ne.s32.totalorder %s70, %s71
    %p83 = scmp.eq.s32.totalorder %s19, 1
    %p84 = por %p82, %p83
    %p86 = scmp.ne.s32.totalorder %s71, %s85
    %p87 = scmp.eq.s32.totalorder %s19, 0
    %p88 = por %p86, %p87
    %s90 = sadd.s32 %s89, 1
    %p93 = scmp.eq.s32.totalorder %s13, 1
    %p94 = scmp.ne.s32.totalorder %s89, %s91
    %p95 = scmp.eq.s32.totalorder %s13, 0
    %p96 = por %p94, %p95
    %p97 = scmp.ne.s32.totalorder %s89, %s91
    %p98 = scmp.eq.s32.totalorder %s18, 1
    %p99 = por %p97, %p98
    %p100 = scmp.ne.s32.totalorder %s91, %s92
    %p101 = scmp.eq.s32.totalorder %s18, 0
    %p102 = por %p100, %p101
    %p103 = scmp.ne.s32.totalorder %s91, %s92
    %p104 = scmp.eq.s32.totalorder %s19, 1
    %p105 = por %p103, %p104
    %p107 = scmp.ne.s32.totalorder %s92, %s106
    %p108 = scmp.eq.s32.totalorder %s19, 0
    %p109 = por %p107, %p108
    %s111 = sadd.s32 %s110, 1
    %p114 = scmp.eq.s32.totalorder %s13, 1
    %p115 = scmp.ne.s32.totalorder %s110, %s112
    %p116 = scmp.eq.s32.totalorder %s13, 0
    %p117 = por %p115, %p116
    %p118 = scmp.ne.s32.totalorder %s110, %s112
    %p119 = scmp.eq.s32.totalorder %s18, 1
    %p120 = por %p118, %p119
    %p121 = scmp.ne.s32.totalorder %s112, %s113
    %p122 = scmp.eq.s32.totalorder %s18, 0
    %p123 = por %p121, %p122
    %p124 = scmp.ne.s32.totalorder %s112, %s113
    %p125 = scmp.eq.s32.totalorder %s19, 1
    %p126 = por %p124, %p125
    %p128 = scmp.ne.s32.totalorder %s113, %s127
    %p129 = scmp.eq.s32.totalorder %s19, 0
    %p130 = por %p128, %p129
    %s132 = sadd.s32 %s131, 1
    %p135 = scmp.eq.s32.totalorder %s13, 1
    %p136 = scmp.ne.s32.totalorder %s131, %s133
    %p137 = scmp.eq.s32.totalorder %s13, 0
    %p138 = por %p136, %p137
    %p139 = scmp.ne.s32.totalorder %s131, %s133
    %p140 = scmp.eq.s32.totalorder %s18, 1
    %p141 = por %p139, %p140
    %p142 = scmp.ne.s32.totalorder %s133, %s134
    %p143 = scmp.eq.s32.totalorder %s18, 0
    %p144 = por %p142, %p143
    %p145 = scmp.ne.s32.totalorder %s133, %s134
    %p146 = scmp.eq.s32.totalorder %s19, 1
    %p147 = por %p145, %p146
    %p149 = scmp.ne.s32.totalorder %s134, %s148
    %p150 = scmp.eq.s32.totalorder %s19, 0
    %p151 = por %p149, %p150
    %s152 = ssub.s32 %s13, %s20
    %p153 = scmp.eq.s32.totalorder %s152, 0
    %s155 = sadd.s32 %s154, 1
    %s156 = scalar_select %p153, %s154, %s155
    %p159 = pneg %p153
    %p160 = scmp.eq.s32.totalorder %s13, 1
    %p161 = por %p159, %p160
    %p162 = scmp.ne.s32.totalorder %s154, %s157
    %p163 = scmp.eq.s32.totalorder %s13, 0
    %p164 = por %p162, %p163
    %p165 = scmp.ne.s32.totalorder %s154, %s157
    %p166 = scmp.eq.s32.totalorder %s18, 1
    %p167 = por %p165, %p166
    %p168 = scmp.ne.s32.totalorder %s157, %s158
    %p169 = scmp.eq.s32.totalorder %s18, 0
    %p170 = por %p168, %p169
    %p171 = scmp.ne.s32.totalorder %s157, %s158
    %p172 = scmp.eq.s32.totalorder %s19, 1
    %p173 = por %p171, %p172
    %p175 = scmp.ne.s32.totalorder %s158, %s174
    %p176 = scmp.eq.s32.totalorder %s19, 0
    %p177 = por %p175, %p176
    %s178 = ssub.s32 %s13, %s20
    %p179 = scmp.eq.s32.totalorder %s178, 0
    %s181 = sadd.s32 %s180, 1
    %s182 = scalar_select %p179, %s180, %s181
    %p185 = pneg %p179
    %p186 = scmp.eq.s32.totalorder %s13, 1
    %p187 = por %p185, %p186
    %p188 = scmp.ne.s32.totalorder %s180, %s183
    %p189 = scmp.eq.s32.totalorder %s13, 0
    %p190 = por %p188, %p189
    %p191 = scmp.ne.s32.totalorder %s180, %s183
    %p192 = scmp.eq.s32.totalorder %s18, 1
    %p193 = por %p191, %p192
    %p194 = scmp.ne.s32.totalorder %s183, %s184
    %p195 = scmp.eq.s32.totalorder %s18, 0
    %p196 = por %p194, %p195
    %p197 = scmp.ne.s32.totalorder %s183, %s184
    %p198 = scmp.eq.s32.totalorder %s19, 1
    %p199 = por %p197, %p198
    %p201 = scmp.ne.s32.totalorder %s184, %s200
    %p202 = scmp.eq.s32.totalorder %s19, 0
    %p203 = por %p201, %p202
    %p204 = scmp.le.s32.totalorder 1, %s13
    %p205 = scmp.lt.s32.totalorder %s13, 3
    %p206 = pnand %p204, %p205
    %p207 = pneg %p206
    // Predicated region
    $region9: #{block_deform_forward.11} parent=5 // pred_check
      _
    $region10: #{block_deform_forward.11} parent=5 // pred_check_branch
      %209 = sbr.rel (%p206) target = $region12
    $region11: #{block_deform_forward.11} parent=5 // pred_region
      %s210 = ssub.s32 %s13, 1
      // Predicated region
      $region13: #{block_deform_forward.11} parent=11 // pred_check
        %p211 = pneg %p60
      $region14: #{block_deform_forward.11} parent=11 // pred_check_branch
        %213 = sbr.rel (%p211) target = $region16
      $region15: #{block_deform_forward.11} parent=11 // pred_region
        _
      $region16: #{block_deform_forward.11} parent=11 // pred_fallthru
        _
      // Predicated region
      $region17: #{block_deform_forward.11} parent=11 // pred_check
        %p214 = pneg %p81
      $region18: #{block_deform_forward.11} parent=11 // pred_check_branch
        %216 = sbr.rel (%p214) target = $region20
      $region19: #{block_deform_forward.11} parent=11 // pred_region
        _
      $region20: #{block_deform_forward.11} parent=11 // pred_fallthru
        _
      // Predicated region
      $region21: #{block_deform_forward.11} parent=11 // pred_check
        %p217 = pneg %p102
      $region22: #{block_deform_forward.11} parent=11 // pred_check_branch
        %219 = sbr.rel (%p217) target = $region24
      $region23: #{block_deform_forward.11} parent=11 // pred_region
        _
      $region24: #{block_deform_forward.11} parent=11 // pred_fallthru
        _
      // Predicated region
      $region25: #{block_deform_forward.11} parent=11 // pred_check
        %p220 = pneg %p123
      $region26: #{block_deform_forward.11} parent=11 // pred_check_branch
        %222 = sbr.rel (%p220) target = $region28
      $region27: #{block_deform_forward.11} parent=11 // pred_region
        _
      $region28: #{block_deform_forward.11} parent=11 // pred_fallthru
        _
      // Predicated region
      $region29: #{block_deform_forward.11} parent=11 // pred_check
        %p223 = pneg %p144
      $region30: #{block_deform_forward.11} parent=11 // pred_check_branch
        %225 = sbr.rel (%p223) target = $region32
      $region31: #{block_deform_forward.11} parent=11 // pred_region
        _
      $region32: #{block_deform_forward.11} parent=11 // pred_fallthru
        _
    $region12: #{block_deform_forward.11} parent=5 // pred_fallthru
      _
    %p226 = scmp.lt.s32.totalorder %s13, 2
    // Predicated region
    $region33: #{block_deform_forward.11} parent=5 // pred_check
      %p227 = pneg %p226
    $region34: #{block_deform_forward.11} parent=5 // pred_check_branch
      %229 = sbr.rel (%p227) target = $region36
    $region35: #{block_deform_forward.11} parent=5 // pred_region
      // Predicated region
      $region37: #{block_deform_forward.11} parent=35 // pred_check
        %p230 = pneg %p33
      $region38: #{block_deform_forward.11} parent=35 // pred_check_branch
        %232 = sbr.rel (%p230) target = $region40
      $region39: #{block_deform_forward.11} parent=35 // pred_region
        %s233 = smul.u32 32, %s13
        %p234 = scmp.lt.s32.totalorder %s233, 63
        %s235 = scalar_select %p234, %s233, 63
        %s236 = smul.addr %s235, 8
        %s237 = scalar_lea.vmem %s0, %s236
        %s238 = smul.u32 32, %s13
      $region40: #{block_deform_forward.11} parent=35 // pred_fallthru
        _
      // Predicated region
      $region41: #{block_deform_forward.11} parent=35 // pred_check
        %p239 = pneg %p164
      $region42: #{block_deform_forward.11} parent=35 // pred_check_branch
        %241 = sbr.rel (%p239) target = $region44
      $region43: #{block_deform_forward.11} parent=35 // pred_region
        %s242 = smul.u32 32, %s13
        %p243 = scmp.lt.s32.totalorder %s242, 63
        %s244 = scalar_select %p243, %s242, 63
        %s245 = smul.addr %s244, 8
        %s246 = scalar_lea.vmem %s6, %s245
        %s247 = smul.u32 32, %s13
      $region44: #{block_deform_forward.11} parent=35 // pred_fallthru
        _
    $region36: #{block_deform_forward.11} parent=5 // pred_fallthru
      _
    %p248 = scmp.le.s32.totalorder 1, %s13
    %p249 = scmp.lt.s32.totalorder %s13, 3
    %p250 = pnand %p248, %p249
    %p251 = pneg %p250
    // Predicated region
    $region45: #{block_deform_forward.11} parent=5 // pred_check
      _
    $region46: #{block_deform_forward.11} parent=5 // pred_check_branch
      %253 = sbr.rel (%p250) target = $region48
    $region47: #{block_deform_forward.11} parent=5 // pred_region
      %s254 = ssub.s32 %s13, 1
      %s255 = smul.u32 32, %s18
      %p256 = scmp.lt.s32.totalorder %s255, 63
      %s257 = scalar_select %p256, %s255, 63
      %s258 = smul.addr %s257, 8
      %s259 = scalar_lea.vmem %s0, %s258
      %p260 = pneg %p39
      %p261 = pneg %p36
      %p262 = pneg %p60
      %p263 = pneg %p57
      %p264 = pneg %p81
      %p265 = pneg %p78
      %p266 = pneg %p102
      %p267 = pneg %p99
      %p268 = pneg %p123
      %p269 = pneg %p120
      %p270 = pneg %p144
      %p271 = pneg %p141
      %s272 = smul.u32 32, %s18
      %p273 = scmp.lt.s32.totalorder %s272, 63
      %s274 = scalar_select %p273, %s272, 63
      %s275 = smul.addr %s274, 8
      %s276 = scalar_lea.vmem %s6, %s275
      %p277 = pneg %p170
      %p278 = pneg %p167
      %p279 = pneg %p196
      %p280 = pneg %p193
      %s281 = smul.u32 32, %s18
      %p282 = scmp.lt.s32.totalorder %s281, 63
      %s283 = scalar_select %p282, %s281, 63
      %s284 = smul.addr %s283, 8
      %s285 = scalar_lea.vmem %s7, %s284
      %s286 = smul.u32 32, %s18
      %p287 = scmp.lt.s32.totalorder %s286, 63
      %s288 = scalar_select %p287, %s286, 63
      %s289 = smul.addr %s288, 8
      %s290 = scalar_lea.vmem %s0, %s289
      %s291 = smul.u32 32, %s18
      %s292 = smul.u32 32, %s18
      %p293 = scmp.lt.s32.totalorder %s292, 63
      %s294 = scalar_select %p293, %s292, 63
      %s295 = smul.addr %s294, 8
      %s296 = scalar_lea.vmem %s6, %s295
      %s297 = smul.u32 32, %s18
      %s298 = smul.u32 32, %s18
      %p299 = scmp.lt.s32.totalorder %s298, 63
      %s300 = scalar_select %p299, %s298, 63
      %s301 = smul.addr %s300, 8
      %s302 = scalar_lea.vmem %s7, %s301
      %s303 = smul.u32 32, %s18
      %v305 = vld [vmem:[%s290] sm:$0xff]
      %v306 = vld [vmem:[%s290 + $0x8] sm:$0xff]
      %v307 = vld [vmem:[%s290 + $0x10] sm:$0xff]
      %v308 = vld [vmem:[%s290 + $0x18] sm:$0xff]
      %v309 = vld [vmem:[%s290 + $0x20] sm:$0xff]
      %v310 = vld [vmem:[%s290 + $0x28] sm:$0xff]
      %v311 = vld [vmem:[%s290 + $0x30] sm:$0xff]
      %v312 = vld [vmem:[%s290 + $0x38] sm:$0xff]
      %v313 = vld [vmem:[%s290 + $0x40] sm:$0xff]
      %v314 = vld [vmem:[%s290 + $0x48] sm:$0xff]
      %v315 = vld [vmem:[%s290 + $0x50] sm:$0xff]
      %v316 = vld [vmem:[%s290 + $0x58] sm:$0xff]
      %v317 = vld [vmem:[%s290 + $0x60] sm:$0xff]
      %v318 = vld [vmem:[%s290 + $0x68] sm:$0xff]
      %v319 = vld [vmem:[%s290 + $0x70] sm:$0xff]
      %v320 = vld [vmem:[%s290 + $0x78] sm:$0xff]
      %v321 = vld [vmem:[%s290 + $0x80] sm:$0xff]
      %v322 = vld [vmem:[%s290 + $0x88] sm:$0xff]
      %v323 = vld [vmem:[%s290 + $0x90] sm:$0xff]
      %v324 = vld [vmem:[%s290 + $0x98] sm:$0xff]
      %v325 = vld [vmem:[%s290 + $0xa0] sm:$0xff]
      %v326 = vld [vmem:[%s290 + $0xa8] sm:$0xff]
      %v327 = vld [vmem:[%s290 + $0xb0] sm:$0xff]
      %v328 = vld [vmem:[%s290 + $0xb8] sm:$0xff]
      %v329 = vld [vmem:[%s290 + $0xc0] sm:$0xff]
      %v330 = vld [vmem:[%s290 + $0xc8] sm:$0xff]
      %v331 = vld [vmem:[%s290 + $0xd0] sm:$0xff]
      %v332 = vld [vmem:[%s290 + $0xd8] sm:$0xff]
      %v333 = vld [vmem:[%s290 + $0xe0] sm:$0xff]
      %v334 = vld [vmem:[%s290 + $0xe8] sm:$0xff]
      %v335 = vld [vmem:[%s290 + $0xf0] sm:$0xff]
      %v336 = vld [vmem:[%s290 + $0xf8] sm:$0xff]
      %v337 = vld [vmem:[%s1] sm:$0x1]
      %v339 = vlaneseq
      %v340 = vshrl.u32 %v339, 7
      %v341 = vsub.s32 0, %v340
      %v342 = vrot.slane %v337, %v341
      %v344 = vmul.f32 %v305, %v342
      %v345 = vmul.f32 %v306, %v342
      %v346 = vmul.f32 %v307, %v342
      %v347 = vmul.f32 %v308, %v342
      %v348 = vmul.f32 %v309, %v342
      %v349 = vmul.f32 %v310, %v342
      %v350 = vmul.f32 %v311, %v342
      %v351 = vmul.f32 %v312, %v342
      %v352 = vmul.f32 %v313, %v342
      %v353 = vmul.f32 %v314, %v342
      %v354 = vmul.f32 %v315, %v342
      %v355 = vmul.f32 %v316, %v342
      %v356 = vmul.f32 %v317, %v342
      %v357 = vmul.f32 %v318, %v342
      %v358 = vmul.f32 %v319, %v342
      %v359 = vmul.f32 %v320, %v342
      %v360 = vmul.f32 %v321, %v342
      %v361 = vmul.f32 %v322, %v342
      %v362 = vmul.f32 %v323, %v342
      %v363 = vmul.f32 %v324, %v342
      %v364 = vmul.f32 %v325, %v342
      %v365 = vmul.f32 %v326, %v342
      %v366 = vmul.f32 %v327, %v342
      %v367 = vmul.f32 %v328, %v342
      %v368 = vmul.f32 %v329, %v342
      %v369 = vmul.f32 %v330, %v342
      %v370 = vmul.f32 %v331, %v342
      %v371 = vmul.f32 %v332, %v342
      %v372 = vmul.f32 %v333, %v342
      %v373 = vmul.f32 %v334, %v342
      %v374 = vmul.f32 %v335, %v342
      %v375 = vmul.f32 %v336, %v342
      %v376 = vld [vmem:[%s2] sm:$0x1]
      %v378 = vlaneseq
      %v379 = vshrl.u32 %v378, 7
      %v380 = vsub.s32 0, %v379
      %v381 = vrot.slane %v376, %v380
      %v383 = vadd.f32 %v344, %v381
      %v384 = vadd.f32 %v345, %v381
      %v385 = vadd.f32 %v346, %v381
      %v386 = vadd.f32 %v347, %v381
      %v387 = vadd.f32 %v348, %v381
      %v388 = vadd.f32 %v349, %v381
      %v389 = vadd.f32 %v350, %v381
      %v390 = vadd.f32 %v351, %v381
      %v391 = vadd.f32 %v352, %v381
      %v392 = vadd.f32 %v353, %v381
      %v393 = vadd.f32 %v354, %v381
      %v394 = vadd.f32 %v355, %v381
      %v395 = vadd.f32 %v356, %v381
      %v396 = vadd.f32 %v357, %v381
      %v397 = vadd.f32 %v358, %v381
      %v398 = vadd.f32 %v359, %v381
      %v399 = vadd.f32 %v360, %v381
      %v400 = vadd.f32 %v361, %v381
      %v401 = vadd.f32 %v362, %v381
      %v402 = vadd.f32 %v363, %v381
      %v403 = vadd.f32 %v364, %v381
      %v404 = vadd.f32 %v365, %v381
      %v405 = vadd.f32 %v366, %v381
      %v406 = vadd.f32 %v367, %v381
      %v407 = vadd.f32 %v368, %v381
      %v408 = vadd.f32 %v369, %v381
      %v409 = vadd.f32 %v370, %v381
      %v410 = vadd.f32 %v371, %v381
      %v411 = vadd.f32 %v372, %v381
      %v412 = vadd.f32 %v373, %v381
      %v413 = vadd.f32 %v374, %v381
      %v414 = vadd.f32 %v375, %v381
      %v415 = vmax.f32 %v383, 0.0
      %v416 = vmax.f32 %v384, 0.0
      %v417 = vmax.f32 %v385, 0.0
      %v418 = vmax.f32 %v386, 0.0
      %v419 = vmax.f32 %v387, 0.0
      %v420 = vmax.f32 %v388, 0.0
      %v421 = vmax.f32 %v389, 0.0
      %v422 = vmax.f32 %v390, 0.0
      %v423 = vmax.f32 %v391, 0.0
      %v424 = vmax.f32 %v392, 0.0
      %v425 = vmax.f32 %v393, 0.0
      %v426 = vmax.f32 %v394, 0.0
      %v427 = vmax.f32 %v395, 0.0
      %v428 = vmax.f32 %v396, 0.0
      %v429 = vmax.f32 %v397, 0.0
      %v430 = vmax.f32 %v398, 0.0
      %v431 = vmax.f32 %v399, 0.0
      %v432 = vmax.f32 %v400, 0.0
      %v433 = vmax.f32 %v401, 0.0
      %v434 = vmax.f32 %v402, 0.0
      %v435 = vmax.f32 %v403, 0.0
      %v436 = vmax.f32 %v404, 0.0
      %v437 = vmax.f32 %v405, 0.0
      %v438 = vmax.f32 %v406, 0.0
      %v439 = vmax.f32 %v407, 0.0
      %v440 = vmax.f32 %v408, 0.0
      %v441 = vmax.f32 %v409, 0.0
      %v442 = vmax.f32 %v410, 0.0
      %v443 = vmax.f32 %v411, 0.0
      %v444 = vmax.f32 %v412, 0.0
      %v445 = vmax.f32 %v413, 0.0
      %v446 = vmax.f32 %v414, 0.0
      %v447 = vpack.c.bf16 %v416, %v415
      %v448 = vpack.c.bf16 %v418, %v417
      %v449 = vpack.c.bf16 %v420, %v419
      %v450 = vpack.c.bf16 %v422, %v421
      %v451 = vpack.c.bf16 %v424, %v423
      %v452 = vpack.c.bf16 %v426, %v425
      %v453 = vpack.c.bf16 %v428, %v427
      %v454 = vpack.c.bf16 %v430, %v429
      %v455 = vpack.c.bf16 %v432, %v431
      %v456 = vpack.c.bf16 %v434, %v433
      %v457 = vpack.c.bf16 %v436, %v435
      %v458 = vpack.c.bf16 %v438, %v437
      %v459 = vpack.c.bf16 %v440, %v439
      %v460 = vpack.c.bf16 %v442, %v441
      %v461 = vpack.c.bf16 %v444, %v443
      %v462 = vpack.c.bf16 %v446, %v445
      %v463 = vld [vmem:[%s3] sm:$0xf]
      %v464 = vld [vmem:[%s3 + $0x4] sm:$0xf]
      %v465 = vld [vmem:[%s3 + $0x8] sm:$0xf]
      %v466 = vld [vmem:[%s3 + $0xc] sm:$0xf]
      %v467 = vld [vmem:[%s3 + $0x10] sm:$0xf]
      %v468 = vld [vmem:[%s3 + $0x14] sm:$0xf]
      %v469 = vld [vmem:[%s3 + $0x18] sm:$0xf]
      %v470 = vld [vmem:[%s3 + $0x1c] sm:$0xf]
      %v471 = vld [vmem:[%s3 + $0x20] sm:$0xf]
      %v472 = vld [vmem:[%s3 + $0x24] sm:$0xf]
      %v473 = vld [vmem:[%s3 + $0x28] sm:$0xf]
      %v474 = vld [vmem:[%s3 + $0x2c] sm:$0xf]
      %v475 = vld [vmem:[%s3 + $0x30] sm:$0xf]
      %v476 = vld [vmem:[%s3 + $0x34] sm:$0xf]
      %v477 = vld [vmem:[%s3 + $0x38] sm:$0xf]
      %v478 = vld [vmem:[%s3 + $0x3c] sm:$0xf]
      %v495 = vunpack.c.l.b16 %v463
      %v496 = vunpack.c.l.b16 %v464
      %v497 = vunpack.c.l.b16 %v465
      %v498 = vunpack.c.l.b16 %v466
      %v499 = vunpack.c.l.b16 %v467
      %v500 = vunpack.c.l.b16 %v468
      %v501 = vunpack.c.l.b16 %v469
      %v502 = vunpack.c.l.b16 %v470
      %v503 = vunpack.c.l.b16 %v471
      %v504 = vunpack.c.l.b16 %v472
      %v505 = vunpack.c.l.b16 %v473
      %v506 = vunpack.c.l.b16 %v474
      %v507 = vunpack.c.l.b16 %v475
      %v508 = vunpack.c.l.b16 %v476
      %v509 = vunpack.c.l.b16 %v477
      %v510 = vunpack.c.l.b16 %v478
      %v511 = vpack.c.b16 %v496, %v495
      %v512 = vpack.c.b16 %v498, %v497
      %v513 = vpack.c.b16 %v500, %v499
      %v514 = vpack.c.b16 %v502, %v501
      %v515 = vpack.c.b16 %v504, %v503
      %v516 = vpack.c.b16 %v506, %v505
      %v517 = vpack.c.b16 %v508, %v507
      %v518 = vpack.c.b16 %v510, %v509
      %527 = vmatprep.subr.bf16.mxu0 0
      %528 = vmatpush1.bf16.msra.mxu0 %v511
      %529 = vmatprep.subr.bf16.mxu0 0
      %530 = vmatpush1.bf16.msra.mxu0 %v512
      %531 = vmatprep.subr.bf16.mxu0 0
      %532 = vmatpush1.bf16.msra.mxu0 %v513
      %533 = vmatprep.subr.bf16.mxu0 0
      %534 = vmatpush1.bf16.msra.mxu0 %v514
      %535 = vmatprep.subr.bf16.mxu0 0
      %536 = vmatpush1.bf16.msra.mxu0 %v515
      %537 = vmatprep.subr.bf16.mxu0 0
      %538 = vmatpush1.bf16.msra.mxu0 %v516
      %539 = vmatprep.subr.bf16.mxu0 0
      %540 = vmatpush1.bf16.msra.mxu0 %v517
      %541 = vmatprep.subr.bf16.mxu0 0
      %542 = vmatpush1.bf16.msra.mxu0 %v518
      %543 = vmatprep.subr.bf16.mxu0 0
      %544 = vmatpush1.bf16.msra.mxu0 0
      %545 = vmatprep.subr.bf16.mxu0 0
      %546 = vmatpush1.bf16.msra.mxu0 0
      %547 = vmatprep.subr.bf16.mxu0 0
      %548 = vmatpush1.bf16.msra.mxu0 0
      %549 = vmatprep.subr.bf16.mxu0 0
      %550 = vmatpush1.bf16.msra.mxu0 0
      %551 = vmatprep.subr.bf16.mxu0 0
      %552 = vmatpush1.bf16.msra.mxu0 0
      %553 = vmatprep.subr.bf16.mxu0 0
      %554 = vmatpush1.bf16.msra.mxu0 0
      %555 = vmatprep.subr.bf16.mxu0 0
      %556 = vmatpush1.bf16.msra.mxu0 0
      %557 = vmatprep.subr.bf16.mxu0 0
      %558 = vmatpush1.bf16.msra.mxu0 0
      %559 = vmatprep.mubr.bf16.mxu0 0
      %560 = vmatmul.mubr.bf16.gmra.mrb[0].mxu0 %v447
      %v561 = vpop.f32.mrb[0].mxu0
      %v562 = vadd.f32 0.0, %v561
      %v563 = vpop.f32.mrb[0].mxu0
      %v564 = vpop.f32.mrb[0].mxu0
      %v565 = vadd.f32 0.0, %v564
      %v566 = vpop.f32.mrb[0].mxu0
      %567 = vmatprep.mubr.bf16.mxu0 0
      %568 = vmatmul.mubr.bf16.gmra.mrb[0].mxu0 %v448
      %v569 = vpop.f32.mrb[0].mxu0
      %v570 = vadd.f32 0.0, %v569
      %v571 = vpop.f32.mrb[0].mxu0
      %v572 = vpop.f32.mrb[0].mxu0
      %v573 = vadd.f32 0.0, %v572
      %v574 = vpop.f32.mrb[0].mxu0
      %575 = vmatprep.mubr.bf16.mxu0 0
      %576 = vmatmul.mubr.bf16.gmra.mrb[0].mxu0 %v449
      %v577 = vpop.f32.mrb[0].mxu0
      %v578 = vadd.f32 0.0, %v577
      %v579 = vpop.f32.mrb[0].mxu0
      %v580 = vpop.f32.mrb[0].mxu0
      %v581 = vadd.f32 0.0, %v580
      %v582 = vpop.f32.mrb[0].mxu0
      %583 = vmatprep.mubr.bf16.mxu0 0
      %584 = vmatmul.mubr.bf16.gmra.mrb[0].mxu0 %v450
      %v585 = vpop.f32.mrb[0].mxu0
      %v586 = vadd.f32 0.0, %v585
      %v587 = vpop.f32.mrb[0].mxu0
      %v588 = vpop.f32.mrb[0].mxu0
      %v589 = vadd.f32 0.0, %v588
      %v590 = vpop.f32.mrb[0].mxu0
      %591 = vmatprep.mubr.bf16.mxu0 0
      %592 = vmatmul.mubr.bf16.gmra.mrb[0].mxu0 %v451
      %v593 = vpop.f32.mrb[0].mxu0
      %v594 = vadd.f32 0.0, %v593
      %v595 = vpop.f32.mrb[0].mxu0
      %v596 = vpop.f32.mrb[0].mxu0
      %v597 = vadd.f32 0.0, %v596
      %v598 = vpop.f32.mrb[0].mxu0
      %599 = vmatprep.mubr.bf16.mxu0 0
      %600 = vmatmul.mubr.bf16.gmra.mrb[0].mxu0 %v452
      %v601 = vpop.f32.mrb[0].mxu0
      %v602 = vadd.f32 0.0, %v601
      %v603 = vpop.f32.mrb[0].mxu0
      %v604 = vpop.f32.mrb[0].mxu0
      %v605 = vadd.f32 0.0, %v604
      %v606 = vpop.f32.mrb[0].mxu0
      %607 = vmatprep.mubr.bf16.mxu0 0
      %608 = vmatmul.mubr.bf16.gmra.mrb[0].mxu0 %v453
      %v609 = vpop.f32.mrb[0].mxu0
      %v610 = vadd.f32 0.0, %v609
      %v611 = vpop.f32.mrb[0].mxu0
      %v612 = vpop.f32.mrb[0].mxu0
      %v613 = vadd.f32 0.0, %v612
      %v614 = vpop.f32.mrb[0].mxu0
      %615 = vmatprep.mubr.bf16.mxu0 0
      %616 = vmatmul.mubr.bf16.gmra.mrb[0].mxu0 %v454
      %v617 = vpop.f32.mrb[0].mxu0
      %v618 = vadd.f32 0.0, %v617
      %v619 = vpop.f32.mrb[0].mxu0
      %v620 = vpop.f32.mrb[0].mxu0
      %v621 = vadd.f32 0.0, %v620
      %v622 = vpop.f32.mrb[0].mxu0
      %623 = vmatprep.mubr.bf16.mxu0 0
      %624 = vmatmul.mubr.bf16.gmra.mrb[0].mxu0 %v455
      %v625 = vpop.f32.mrb[0].mxu0
      %v626 = vadd.f32 0.0, %v625
      %v627 = vpop.f32.mrb[0].mxu0
      %v628 = vpop.f32.mrb[0].mxu0
      %v629 = vadd.f32 0.0, %v628
      %v630 = vpop.f32.mrb[0].mxu0
      %631 = vmatprep.mubr.bf16.mxu0 0
      %632 = vmatmul.mubr.bf16.gmra.mrb[0].mxu0 %v456
      %v633 = vpop.f32.mrb[0].mxu0
      %v634 = vadd.f32 0.0, %v633
      %v635 = vpop.f32.mrb[0].mxu0
      %v636 = vpop.f32.mrb[0].mxu0
      %v637 = vadd.f32 0.0, %v636
      %v638 = vpop.f32.mrb[0].mxu0
      %639 = vmatprep.mubr.bf16.mxu0 0
      %640 = vmatmul.mubr.bf16.gmra.mrb[0].mxu0 %v457
      %v641 = vpop.f32.mrb[0].mxu0
      %v642 = vadd.f32 0.0, %v641
      %v643 = vpop.f32.mrb[0].mxu0
      %v644 = vpop.f32.mrb[0].mxu0
      %v645 = vadd.f32 0.0, %v644
      %v646 = vpop.f32.mrb[0].mxu0
      %647 = vmatprep.mubr.bf16.mxu0 0
      %648 = vmatmul.mubr.bf16.gmra.mrb[0].mxu0 %v458
      %v649 = vpop.f32.mrb[0].mxu0
      %v650 = vadd.f32 0.0, %v649
      %v651 = vpop.f32.mrb[0].mxu0
      %v652 = vpop.f32.mrb[0].mxu0
      %v653 = vadd.f32 0.0, %v652
      %v654 = vpop.f32.mrb[0].mxu0
      %655 = vmatprep.mubr.bf16.mxu0 0
      %656 = vmatmul.mubr.bf16.gmra.mrb[0].mxu0 %v459
      %v657 = vpop.f32.mrb[0].mxu0
      %v658 = vadd.f32 0.0, %v657
      %v659 = vpop.f32.mrb[0].mxu0
      %v660 = vpop.f32.mrb[0].mxu0
      %v661 = vadd.f32 0.0, %v660
      %v662 = vpop.f32.mrb[0].mxu0
      %663 = vmatprep.mubr.bf16.mxu0 0
      %664 = vmatmul.mubr.bf16.gmra.mrb[0].mxu0 %v460
      %v665 = vpop.f32.mrb[0].mxu0
      %v666 = vadd.f32 0.0, %v665
      %v667 = vpop.f32.mrb[0].mxu0
      %v668 = vpop.f32.mrb[0].mxu0
      %v669 = vadd.f32 0.0, %v668
      %v670 = vpop.f32.mrb[0].mxu0
      %671 = vmatprep.mubr.bf16.mxu0 0
      %672 = vmatmul.mubr.bf16.gmra.mrb[0].mxu0 %v461
      %v673 = vpop.f32.mrb[0].mxu0
      %v674 = vadd.f32 0.0, %v673
      %v675 = vpop.f32.mrb[0].mxu0
      %v676 = vpop.f32.mrb[0].mxu0
      %v677 = vadd.f32 0.0, %v676
      %v678 = vpop.f32.mrb[0].mxu0
      %679 = vmatprep.mubr.bf16.mxu0 0
      %680 = vmatmul.mubr.bf16.gmra.mrb[0].mxu0 %v462
      %v681 = vpop.f32.mrb[0].mxu0
      %v682 = vadd.f32 0.0, %v681
      %v683 = vpop.f32.mrb[0].mxu0
      %v684 = vpop.f32.mrb[0].mxu0
      %v685 = vadd.f32 0.0, %v684
      %v686 = vpop.f32.mrb[0].mxu0
      %687 = vdwg.mxu0
      %v688 = vld [vmem:[%s4] sm:$0x1]
      %v690 = vlaneseq
      %v691 = vshrl.u32 %v690, 7
      %v692 = vsub.s32 0, %v691
      %v693 = vrot.slane %v688, %v692
      %v695 = vmul.f32 %v562, %v693
      %v696 = vmul.f32 %v565, %v693
      %v697 = vmul.f32 %v570, %v693
      %v698 = vmul.f32 %v573, %v693
      %v699 = vmul.f32 %v578, %v693
      %v700 = vmul.f32 %v581, %v693
      %v701 = vmul.f32 %v586, %v693
      %v702 = vmul.f32 %v589, %v693
      %v703 = vmul.f32 %v594, %v693
      %v704 = vmul.f32 %v597, %v693
      %v705 = vmul.f32 %v602, %v693
      %v706 = vmul.f32 %v605, %v693
      %v707 = vmul.f32 %v610, %v693
      %v708 = vmul.f32 %v613, %v693
      %v709 = vmul.f32 %v618, %v693
      %v710 = vmul.f32 %v621, %v693
      %v711 = vmul.f32 %v626, %v693
      %v712 = vmul.f32 %v629, %v693
      %v713 = vmul.f32 %v634, %v693
      %v714 = vmul.f32 %v637, %v693
      %v715 = vmul.f32 %v642, %v693
      %v716 = vmul.f32 %v645, %v693
      %v717 = vmul.f32 %v650, %v693
      %v718 = vmul.f32 %v653, %v693
      %v719 = vmul.f32 %v658, %v693
      %v720 = vmul.f32 %v661, %v693
      %v721 = vmul.f32 %v666, %v693
      %v722 = vmul.f32 %v669, %v693
      %v723 = vmul.f32 %v674, %v693
      %v724 = vmul.f32 %v677, %v693
      %v725 = vmul.f32 %v682, %v693
      %v726 = vmul.f32 %v685, %v693
      %v727 = vld [vmem:[%s5] sm:$0x1]
      %v729 = vlaneseq
      %v730 = vshrl.u32 %v729, 7
      %v731 = vsub.s32 0, %v730
      %v732 = vrot.slane %v727, %v731
      %v734 = vadd.f32 %v695, %v732
      %v735 = vadd.f32 %v696, %v732
      %v736 = vadd.f32 %v697, %v732
      %v737 = vadd.f32 %v698, %v732
      %v738 = vadd.f32 %v699, %v732
      %v739 = vadd.f32 %v700, %v732
      %v740 = vadd.f32 %v701, %v732
      %v741 = vadd.f32 %v702, %v732
      %v742 = vadd.f32 %v703, %v732
      %v743 = vadd.f32 %v704, %v732
      %v744 = vadd.f32 %v705, %v732
      %v745 = vadd.f32 %v706, %v732
      %v746 = vadd.f32 %v707, %v732
      %v747 = vadd.f32 %v708, %v732
      %v748 = vadd.f32 %v709, %v732
      %v749 = vadd.f32 %v710, %v732
      %v750 = vadd.f32 %v711, %v732
      %v751 = vadd.f32 %v712, %v732
      %v752 = vadd.f32 %v713, %v732
      %v753 = vadd.f32 %v714, %v732
      %v754 = vadd.f32 %v715, %v732
      %v755 = vadd.f32 %v716, %v732
      %v756 = vadd.f32 %v717, %v732
      %v757 = vadd.f32 %v718, %v732
      %v758 = vadd.f32 %v719, %v732
      %v759 = vadd.f32 %v720, %v732
      %v760 = vadd.f32 %v721, %v732
      %v761 = vadd.f32 %v722, %v732
      %v762 = vadd.f32 %v723, %v732
      %v763 = vadd.f32 %v724, %v732
      %v764 = vadd.f32 %v725, %v732
      %v765 = vadd.f32 %v726, %v732
      %v766 = vld [vmem:[%s296] sm:$0xff]
      %v767 = vld [vmem:[%s296 + $0x8] sm:$0xff]
      %v768 = vld [vmem:[%s296 + $0x10] sm:$0xff]
      %v769 = vld [vmem:[%s296 + $0x18] sm:$0xff]
      %v770 = vld [vmem:[%s296 + $0x20] sm:$0xff]
      %v771 = vld [vmem:[%s296 + $0x28] sm:$0xff]
      %v772 = vld [vmem:[%s296 + $0x30] sm:$0xff]
      %v773 = vld [vmem:[%s296 + $0x38] sm:$0xff]
      %v774 = vld [vmem:[%s296 + $0x40] sm:$0xff]
      %v775 = vld [vmem:[%s296 + $0x48] sm:$0xff]
      %v776 = vld [vmem:[%s296 + $0x50] sm:$0xff]
      %v777 = vld [vmem:[%s296 + $0x58] sm:$0xff]
      %v778 = vld [vmem:[%s296 + $0x60] sm:$0xff]
      %v779 = vld [vmem:[%s296 + $0x68] sm:$0xff]
      %v780 = vld [vmem:[%s296 + $0x70] sm:$0xff]
      %v781 = vld [vmem:[%s296 + $0x78] sm:$0xff]
      %v782 = vld [vmem:[%s296 + $0x80] sm:$0xff]
      %v783 = vld [vmem:[%s296 + $0x88] sm:$0xff]
      %v784 = vld [vmem:[%s296 + $0x90] sm:$0xff]
      %v785 = vld [vmem:[%s296 + $0x98] sm:$0xff]
      %v786 = vld [vmem:[%s296 + $0xa0] sm:$0xff]
      %v787 = vld [vmem:[%s296 + $0xa8] sm:$0xff]
      %v788 = vld [vmem:[%s296 + $0xb0] sm:$0xff]
      %v789 = vld [vmem:[%s296 + $0xb8] sm:$0xff]
      %v790 = vld [vmem:[%s296 + $0xc0] sm:$0xff]
      %v791 = vld [vmem:[%s296 + $0xc8] sm:$0xff]
      %v792 = vld [vmem:[%s296 + $0xd0] sm:$0xff]
      %v793 = vld [vmem:[%s296 + $0xd8] sm:$0xff]
      %v794 = vld [vmem:[%s296 + $0xe0] sm:$0xff]
      %v795 = vld [vmem:[%s296 + $0xe8] sm:$0xff]
      %v796 = vld [vmem:[%s296 + $0xf0] sm:$0xff]
      %v797 = vld [vmem:[%s296 + $0xf8] sm:$0xff]
      %v798 = vadd.f32 %v734, %v766
      %v799 = vadd.f32 %v735, %v767
      %v800 = vadd.f32 %v736, %v768
      %v801 = vadd.f32 %v737, %v769
      %v802 = vadd.f32 %v738, %v770
      %v803 = vadd.f32 %v739, %v771
      %v804 = vadd.f32 %v740, %v772
      %v805 = vadd.f32 %v741, %v773
      %v806 = vadd.f32 %v742, %v774
      %v807 = vadd.f32 %v743, %v775
      %v808 = vadd.f32 %v744, %v776
      %v809 = vadd.f32 %v745, %v777
      %v810 = vadd.f32 %v746, %v778
      %v811 = vadd.f32 %v747, %v779
      %v812 = vadd.f32 %v748, %v780
      %v813 = vadd.f32 %v749, %v781
      %v814 = vadd.f32 %v750, %v782
      %v815 = vadd.f32 %v751, %v783
      %v816 = vadd.f32 %v752, %v784
      %v817 = vadd.f32 %v753, %v785
      %v818 = vadd.f32 %v754, %v786
      %v819 = vadd.f32 %v755, %v787
      %v820 = vadd.f32 %v756, %v788
      %v821 = vadd.f32 %v757, %v789
      %v822 = vadd.f32 %v758, %v790
      %v823 = vadd.f32 %v759, %v791
      %v824 = vadd.f32 %v760, %v792
      %v825 = vadd.f32 %v761, %v793
      %v826 = vadd.f32 %v762, %v794
      %v827 = vadd.f32 %v763, %v795
      %v828 = vadd.f32 %v764, %v796
      %v829 = vadd.f32 %v765, %v797
      %830 = vst [vmem:[%s302] sm:$0xff] %v798
      %831 = vst [vmem:[%s302 + $0x8] sm:$0xff] %v799
      %832 = vst [vmem:[%s302 + $0x10] sm:$0xff] %v800
      %833 = vst [vmem:[%s302 + $0x18] sm:$0xff] %v801
      %834 = vst [vmem:[%s302 + $0x20] sm:$0xff] %v802
      %835 = vst [vmem:[%s302 + $0x28] sm:$0xff] %v803
      %836 = vst [vmem:[%s302 + $0x30] sm:$0xff] %v804
      %837 = vst [vmem:[%s302 + $0x38] sm:$0xff] %v805
      %838 = vst [vmem:[%s302 + $0x40] sm:$0xff] %v806
      %839 = vst [vmem:[%s302 + $0x48] sm:$0xff] %v807
      %840 = vst [vmem:[%s302 + $0x50] sm:$0xff] %v808
      %841 = vst [vmem:[%s302 + $0x58] sm:$0xff] %v809
      %842 = vst [vmem:[%s302 + $0x60] sm:$0xff] %v810
      %843 = vst [vmem:[%s302 + $0x68] sm:$0xff] %v811
      %844 = vst [vmem:[%s302 + $0x70] sm:$0xff] %v812
      %845 = vst [vmem:[%s302 + $0x78] sm:$0xff] %v813
      %846 = vst [vmem:[%s302 + $0x80] sm:$0xff] %v814
      %847 = vst [vmem:[%s302 + $0x88] sm:$0xff] %v815
      %848 = vst [vmem:[%s302 + $0x90] sm:$0xff] %v816
      %849 = vst [vmem:[%s302 + $0x98] sm:$0xff] %v817
      %850 = vst [vmem:[%s302 + $0xa0] sm:$0xff] %v818
      %851 = vst [vmem:[%s302 + $0xa8] sm:$0xff] %v819
      %852 = vst [vmem:[%s302 + $0xb0] sm:$0xff] %v820
      %853 = vst [vmem:[%s302 + $0xb8] sm:$0xff] %v821
      %854 = vst [vmem:[%s302 + $0xc0] sm:$0xff] %v822
      %855 = vst [vmem:[%s302 + $0xc8] sm:$0xff] %v823
      %856 = vst [vmem:[%s302 + $0xd0] sm:$0xff] %v824
      %857 = vst [vmem:[%s302 + $0xd8] sm:$0xff] %v825
      %858 = vst [vmem:[%s302 + $0xe0] sm:$0xff] %v826
      %859 = vst [vmem:[%s302 + $0xe8] sm:$0xff] %v827
      %860 = vst [vmem:[%s302 + $0xf0] sm:$0xff] %v828
      %861 = vst [vmem:[%s302 + $0xf8] sm:$0xff] %v829
      %s862 = smul.u32 32, %s18
      %p863 = scmp.lt.s32.totalorder %s862, 63
      %s864 = scalar_select %p863, %s862, 63
      %s865 = smul.addr %s864, 8
      %s866 = scalar_lea.vmem %s7, %s865
      // Predicated region
      $region49: #{block_deform_forward.11} parent=47 // pred_check
        %p867 = pneg %p193
      $region50: #{block_deform_forward.11} parent=47 // pred_check_branch
        %869 = sbr.rel (%p867) target = $region52
      $region51: #{block_deform_forward.11} parent=47 // pred_region
        %s870 = smul.u32 32, %s18
      $region52: #{block_deform_forward.11} parent=47 // pred_fallthru
        _
    $region48: #{block_deform_forward.11} parent=5 // pred_fallthru
      _
    %p871 = scmp.le.s32.totalorder 2, %s13
    // Predicated region
    $region53: #{block_deform_forward.11} parent=5 // pred_check
      %p872 = pneg %p871
    $region54: #{block_deform_forward.11} parent=5 // pred_check_branch
      %874 = sbr.rel (%p872) target = $region56
    $region55: #{block_deform_forward.11} parent=5 // pred_region
      %s875 = ssub.s32 %s13, 2
      // Predicated region
      $region57: #{block_deform_forward.11} parent=55 // pred_check
        %p876 = pneg %p199
      $region58: #{block_deform_forward.11} parent=55 // pred_check_branch
        %878 = sbr.rel (%p876) target = $region60
      $region59: #{block_deform_forward.11} parent=55 // pred_region
        %s879 = smul.u32 32, %s19
        %p880 = scmp.lt.s32.totalorder %s879, 63
        %s881 = scalar_select %p880, %s879, 63
        %s882 = smul.addr %s881, 8
        %s883 = scalar_lea.vmem %s7, %s882
      $region60: #{block_deform_forward.11} parent=55 // pred_fallthru
        _
    $region56: #{block_deform_forward.11} parent=5 // pred_fallthru
      _
  $region6: #{block_deform_forward.11} parent=0 // loop_footer
    %s17 = sadd.s32 1, %s13
  $region7: #{block_deform_forward.11} parent=0 // loop_footer_branch
    %12 = sbr.rel target = $region3
  $region8: #{block_deform_forward.11} parent=0 // loop_exit
    _

</llo_original>
